<compile_context>
chip_gen: v5e
topology: v5e:2x2
jax: 0.10.0
libtpu: 0.0.40
codegen_flags: <defaults>
</compile_context>

<pallas_src>
import numpy as np

import jax
import jax.numpy as jnp
from jax.experimental import pallas as pl
from jax.experimental.pallas import tpu as pltpu


# ---------------------------------------------------------------------------
# Row-count constants for the row-flattened conv pipeline (period = input W).
#   conv1 out : 26x26x32, row r = i*26 + j, all rows valid.
#   conv2 out : rows kept [0, 622): last valid row 23*26 + 23 = 621.
#   pool1     : window-max rows [0, 595): last selected row 52*11 + 2*11 = 594.
#   conv3 out : rows kept [0, 118): conv4 reads up to row 9*12 + 9 = 117.
#   conv4 out : rows kept [0, 92):  last valid row 7*12 + 7 = 91.
#   pool2     : window-max rows [0, 79): last selected row 24*3 + 2*3 = 78.
# ---------------------------------------------------------------------------
_R2, _T1, _R3, _R4, _T2 = 622, 595, 118, 92, 79


# ---------------------------------------------------------------------------
# Pallas kernels
# ---------------------------------------------------------------------------
def _conv_stack_kernel(a1_ref, w2_ref, b2_ref, s1_ref, w3_ref, b3_ref,
                       w4_ref, b4_ref, s2_ref, o_ref,
                       a2_scr, p1_scr, a3_scr, a4_scr):
    """conv2 -> pool -> conv3+ReLU -> conv4+ReLU -> pool -> (16,64) flat map."""
    f32 = jnp.float32
    bf16 = jnp.bfloat16

    # ---- conv2 (bias, no ReLU): 9 shifted-tap GEMMs, K = Cin = 32 ----
    acc = jnp.zeros((_R2, 32), f32)
    for dy in range(3):
        for dx in range(3):
            acc += jnp.dot(a1_ref[pl.ds(dy * 26 + dx, _R2), :],
                           w2_ref[dy * 3 + dx],
                           preferred_element_type=f32)
    a2_scr[...] = acc + b2_ref[...]

    # ---- maxpool 2x2 #1: 4-way shifted max, then 0/1 row-selection GEMM ----
    t1 = jnp.maximum(
        jnp.maximum(a2_scr[pl.ds(0, _T1), :], a2_scr[pl.ds(1, _T1), :]),
        jnp.maximum(a2_scr[pl.ds(26, _T1), :], a2_scr[pl.ds(27, _T1), :]))
    p1_scr[...] = jnp.dot(s1_ref[...], t1.astype(bf16),
                          preferred_element_type=f32).astype(bf16)   # (144, 32)

    # ---- conv3 + ReLU (12x12x32 -> 10x10x64, row period 12) ----
    acc = jnp.zeros((_R3, 64), f32)
    for dy in range(3):
        for dx in range(3):
            acc += jnp.dot(p1_scr[pl.ds(dy * 12 + dx, _R3), :],
                           w3_ref[dy * 3 + dx],
                           preferred_element_type=f32)
    a3_scr[...] = jnp.maximum(acc + b3_ref[...], 0.0).astype(bf16)

    # ---- conv4 + ReLU (10x10x64 -> 8x8x64) ----
    acc = jnp.zeros((_R4, 64), f32)
    for dy in range(3):
        for dx in range(3):
            acc += jnp.dot(a3_scr[pl.ds(dy * 12 + dx, _R4), :],
                           w4_ref[dy * 3 + dx],
                           preferred_element_type=f32)
    a4_scr[...] = jnp.maximum(acc + b4_ref[...], 0.0)

    # ---- maxpool 2x2 #2 + compacting flatten to (16 spatial, 64 ch) ----
    t2 = jnp.maximum(
        jnp.maximum(a4_scr[pl.ds(0, _T2), :], a4_scr[pl.ds(1, _T2), :]),
        jnp.maximum(a4_scr[pl.ds(12, _T2), :], a4_scr[pl.ds(13, _T2), :]))
    o_ref[...] = jnp.dot(s2_ref[...], t2.astype(bf16),
                         preferred_element_type=f32).astype(o_ref.dtype)


def _mlp_kernel(x_ref, w1_ref, b1_ref, w2_ref, b2_ref, w3_ref, b3_ref, o_ref):
    """dense1+ReLU -> dense2+ReLU -> dense3, fully VMEM-resident, 256-padded."""
    f32 = jnp.float32
    h = jnp.dot(x_ref[...], w1_ref[...], preferred_element_type=f32)
    h = jnp.maximum(h + b1_ref[...], 0.0)
    h = jnp.dot(h.astype(jnp.bfloat16), w2_ref[...], preferred_element_type=f32)
    h = jnp.maximum(h + b2_ref[...], 0.0)
    y = jnp.dot(h.astype(jnp.bfloat16), w3_ref[...], preferred_element_type=f32)
    o_ref[...] = (y + b3_ref[...]).astype(o_ref.dtype)


# ---------------------------------------------------------------------------
# Pallas wrappers
# ---------------------------------------------------------------------------
def _full_spec(shape):
    return pl.BlockSpec(shape, lambda *_, __s=len(shape): (0,) * __s)


def conv_stack(a1, p):
    """a1: (N, 676, 32) bf16 conv1 output (row-flattened) -> (N, 16, 64) bf16."""
    n = a1.shape[0]
    return pl.pallas_call(
        _conv_stack_kernel,
        out_shape=jax.ShapeDtypeStruct((n, 16, 64), jnp.bfloat16),
        grid=(n,),
        in_specs=[
            pl.BlockSpec((None, 676, 32), lambda b: (b, 0, 0)),
            _full_spec((9, 32, 32)), _full_spec((1, 32)),
            _full_spec((144, _T1)),
            _full_spec((9, 32, 64)), _full_spec((1, 64)),
            _full_spec((9, 64, 64)), _full_spec((1, 64)),
            _full_spec((16, _T2)),
        ],
        out_specs=pl.BlockSpec((None, 16, 64), lambda b: (b, 0, 0)),
        scratch_shapes=[
            pltpu.VMEM((_R2, 32), jnp.float32),    # conv2 output (pre-pool)
            pltpu.VMEM((144, 32), jnp.bfloat16),   # pooled 12x12x32
            pltpu.VMEM((_R3, 64), jnp.bfloat16),   # conv3 output
            pltpu.VMEM((_R4, 64), jnp.float32),    # conv4 output (pre-pool)
        ],
        compiler_params=pltpu.CompilerParams(dimension_semantics=("parallel",)),
    )(a1, p["w2"], p["b2"], p["s1"], p["w3"], p["b3"], p["w4"], p["b4"], p["s2"])


def fused_mlp(xf, p):
    """xf: (N, 1024) bf16 (spatial-major flatten) -> (N, 10) f32 logits."""
    n = xf.shape[0]
    bm = n if n <= 256 else 256
    assert n % bm == 0
    return pl.pallas_call(
        _mlp_kernel,
        out_shape=jax.ShapeDtypeStruct((n, 10), jnp.float32),
        grid=(n // bm,),
        in_specs=[
            pl.BlockSpec((bm, 1024), lambda i: (i, 0)),
            _full_spec((1024, 256)), _full_spec((1, 256)),
            _full_spec((256, 256)), _full_spec((1, 256)),
            _full_spec((256, 10)), _full_spec((1, 10)),
        ],
        out_specs=pl.BlockSpec((bm, 10), lambda i: (i, 0)),
        compiler_params=pltpu.CompilerParams(dimension_semantics=("parallel",)),
    )(xf, p["w5"], p["b5"], p["w6"], p["b6"], p["w7"], p["b7"])


# ---------------------------------------------------------------------------
# XLA prologue: conv1 as 9 shifted VPU FMAs (Cin=1 -> keep off the MXU)
# ---------------------------------------------------------------------------
def _conv1_xla(x, w1p, b1p):
    """x: (N,1,28,28) f32, w1p: (9,32), b1p: (32,) -> (N, 676, 32) bf16."""
    xs = x[:, 0, :, :]
    acc = jnp.zeros((xs.shape[0], 26, 26, 32), jnp.float32)
    for dy in range(3):
        for dx in range(3):
            acc = acc + xs[:, dy:dy + 26, dx:dx + 26, None] * w1p[dy * 3 + dx]
    h1 = jnp.maximum(acc + b1p, 0.0).astype(jnp.bfloat16)
    return h1.reshape(xs.shape[0], 676, 32)


# ---------------------------------------------------------------------------
# Net.forward (traced / jitted; consumes pre-packed params only)
# ---------------------------------------------------------------------------
def net_forward(x, packed):
    a1 = _conv1_xla(x, packed["w1"], packed["b1"])     # (N, 676, 32) bf16
    f = conv_stack(a1, packed)                         # (N, 16, 64)  bf16
    xf = f.reshape(f.shape[0], 1024)                   # free reshape (s*64 + c)
    return fused_mlp(xf, packed)                       # (N, 10) f32


# ---------------------------------------------------------------------------
# One-time parameter packing (outside the traced forward)
# ---------------------------------------------------------------------------
def _pool_select(pw, period, t_rows):
    """0/1 matrix selecting row 2*p*period + 2*q into compact row p*pw + q."""
    s = np.zeros((pw * pw, t_rows), np.float32)
    for pi in range(pw):
        for qi in range(pw):
            s[pi * pw + qi, 2 * pi * period + 2 * qi] = 1.0
    return s


def pack_params(params):
    bf16, f32 = jnp.bfloat16, jnp.float32

    def conv_taps(w):  # (Cout, Cin, 3, 3) -> (9, Cin, Cout), tap = dy*3 + dx
        return jnp.transpose(w, (2, 3, 1, 0)).reshape(9, w.shape[1], w.shape[0])

    p = {}
    # conv1 stays f32 (runs as shifted VPU FMAs in XLA on the f32 input).
    p["w1"] = jnp.transpose(params["conv1_w"][:, 0], (1, 2, 0)).reshape(9, 32)
    p["b1"] = params["conv1_b"].astype(f32)
    p["w2"] = conv_taps(params["conv2_w"]).astype(bf16)
    p["b2"] = params["conv2_b"].reshape(1, 32).astype(f32)
    p["w3"] = conv_taps(params["conv3_w"]).astype(bf16)
    p["b3"] = params["conv3_b"].reshape(1, 64).astype(f32)
    p["w4"] = conv_taps(params["conv4_w"]).astype(bf16)
    p["b4"] = params["conv4_b"].reshape(1, 64).astype(f32)

    # Max-pool row-selection matrices (exact in bf16).
    p["s1"] = jnp.asarray(_pool_select(12, 26, _T1), bf16)
    p["s2"] = jnp.asarray(_pool_select(4, 12, _T2), bf16)

    # fc1: permute rows from torch's (c*16 + s) flatten to our (s*64 + c)
    # flatten; zero-pad hidden dims 200 -> 256 for dense tiles.
    w5 = params["fc1_w"].reshape(200, 64, 16).transpose(2, 1, 0).reshape(1024, 200)
    p["w5"] = jnp.pad(w5, ((0, 0), (0, 56))).astype(bf16)
    p["b5"] = jnp.pad(params["fc1_b"], (0, 56)).reshape(1, 256).astype(f32)
    p["w6"] = jnp.pad(params["fc2_w"].T, ((0, 56), (0, 56))).astype(bf16)
    p["b6"] = jnp.pad(params["fc2_b"], (0, 56)).reshape(1, 256).astype(f32)
    p["w7"] = jnp.pad(params["fc3_w"].T, ((0, 56), (0, 0))).astype(bf16)
    p["b7"] = params["fc3_b"].reshape(1, 10).astype(f32)
    return p


# ---------------------------------------------------------------------------
# Parameter init (PyTorch layouts / fan-in uniform init)
# ---------------------------------------------------------------------------
def init_params(key):
    ks = jax.random.split(key, 14)

    def conv(kw, kb, cin, cout):
        bound = (cin * 9) ** -0.5
        w = jax.random.uniform(kw, (cout, cin, 3, 3), jnp.float32, -bound, bound)
        b = jax.random.uniform(kb, (cout,), jnp.float32, -bound, bound)
        return w, b

    def lin(kw, kb, fin, fout):
        bound = fin ** -0.5
        w = jax.random.uniform(kw, (fout, fin), jnp.float32, -bound, bound)
        b = jax.random.uniform(kb, (fout,), jnp.float32, -bound, bound)
        return w, b

    w1, b1 = conv(ks[0], ks[1], 1, 32)
    w2, b2 = conv(ks[2], ks[3], 32, 32)
    w3, b3 = conv(ks[4], ks[5], 32, 64)
    w4, b4 = conv(ks[6], ks[7], 64, 64)
    w5, b5 = lin(ks[8], ks[9], 1024, 200)
    w6, b6 = lin(ks[10], ks[11], 200, 200)
    w7, b7 = lin(ks[12], ks[13], 200, 10)
    return {
        "conv1_w": w1, "conv1_b": b1, "conv2_w": w2, "conv2_b": b2,
        "conv3_w": w3, "conv3_b": b3, "conv4_w": w4, "conv4_b": b4,
        "fc1_w": w5, "fc1_b": b5, "fc2_w": w6, "fc2_b": b6,
        "fc3_w": w7, "fc3_b": b7,
    }


if __name__ == "__main__":
    key = jax.random.PRNGKey(0)
    pkey, xkey = jax.random.split(key)
    params = init_params(pkey)
    packed = pack_params(params)               # one-time repack, outside jit
    # dense_1 expects 1024 = 64*4*4 features, which implies 28x28x1 input.
    x = jax.random.normal(xkey, (2, 1, 28, 28), jnp.float32)

    fwd = jax.jit(net_forward)
    out = jax.block_until_ready(fwd(x, packed))
    assert out.shape == (2, 10)
    assert bool(jnp.all(jnp.isfinite(out)))
    print("KERNEL_OK")
</pallas_src>

<mosaic_0001>
module attributes {stable_mosaic.version = 11 : i64} {
  func.func @_conv_stack_kernel(%arg0: i32, %arg1: memref<1x676x32xbf16, #tpu.memory_space<vmem>>, %arg2: memref<9x32x32xbf16, #tpu.memory_space<vmem>>, %arg3: memref<1x32xf32, #tpu.memory_space<vmem>>, %arg4: memref<144x595xbf16, #tpu.memory_space<vmem>>, %arg5: memref<9x32x64xbf16, #tpu.memory_space<vmem>>, %arg6: memref<1x64xf32, #tpu.memory_space<vmem>>, %arg7: memref<9x64x64xbf16, #tpu.memory_space<vmem>>, %arg8: memref<1x64xf32, #tpu.memory_space<vmem>>, %arg9: memref<16x79xbf16, #tpu.memory_space<vmem>>, %arg10: memref<1x16x64xbf16, #tpu.memory_space<vmem>>, %arg11: memref<622x32xf32, #tpu.memory_space<vmem>>, %arg12: memref<144x32xbf16, #tpu.memory_space<vmem>>, %arg13: memref<118x64xbf16, #tpu.memory_space<vmem>>, %arg14: memref<92x64xf32, #tpu.memory_space<vmem>>) attributes {dimension_semantics = [#tpu.dimension_semantics<parallel>], iteration_bounds = array<i64: 2>, scalar_prefetch = 0 : i64, scratch_operands = 4 : i64, tpu.core_type = #tpu.core_type<tc>, window_params = [{transform_indices = @transform_0, window_bounds = array<i64: 1, 676, 32>}, {pipeline_mode = #tpu.pipeline_mode<synchronous>, transform_indices = @transform_1, window_bounds = array<i64: 9, 32, 32>}, {pipeline_mode = #tpu.pipeline_mode<synchronous>, transform_indices = @transform_2, window_bounds = array<i64: 1, 32>}, {pipeline_mode = #tpu.pipeline_mode<synchronous>, transform_indices = @transform_3, window_bounds = array<i64: 144, 595>}, {pipeline_mode = #tpu.pipeline_mode<synchronous>, transform_indices = @transform_4, window_bounds = array<i64: 9, 32, 64>}, {pipeline_mode = #tpu.pipeline_mode<synchronous>, transform_indices = @transform_5, window_bounds = array<i64: 1, 64>}, {pipeline_mode = #tpu.pipeline_mode<synchronous>, transform_indices = @transform_6, window_bounds = array<i64: 9, 64, 64>}, {pipeline_mode = #tpu.pipeline_mode<synchronous>, transform_indices = @transform_7, window_bounds = array<i64: 1, 64>}, {pipeline_mode = #tpu.pipeline_mode<synchronous>, transform_indices = @transform_8, window_bounds = array<i64: 16, 79>}, {transform_indices = @transform_9, window_bounds = array<i64: 1, 16, 64>}]} {
    %cst = arith.constant 0.000000e+00 : f32
    %0 = vector.broadcast %cst : f32 to vector<622x32xf32>
    %c0 = arith.constant 0 : index
    %c0_0 = arith.constant 0 : index
    %c0_1 = arith.constant 0 : index
    %1 = vector.load %arg1[%c0, %c0_0, %c0_1] : memref<1x676x32xbf16, #tpu.memory_space<vmem>>, vector<1x622x32xbf16>
    %2 = vector.shape_cast %1 : vector<1x622x32xbf16> to vector<622x32xbf16>
    %c0_2 = arith.constant 0 : index
    %c0_3 = arith.constant 0 : index
    %c0_4 = arith.constant 0 : index
    %3 = vector.load %arg2[%c0_2, %c0_3, %c0_4] : memref<9x32x32xbf16, #tpu.memory_space<vmem>>, vector<1x32x32xbf16>
    %4 = vector.shape_cast %3 : vector<1x32x32xbf16> to vector<32x32xbf16>
    %cst_5 = arith.constant dense<0.000000e+00> : vector<622x32xf32>
    %5 = tpu.matmul %2, %4, %cst_5 {dimension_numbers = #tpu.dot_dimension_numbers<[1], [0], [0], [1], [0, 0, 1, 1], [], []>} : vector<622x32xbf16>, vector<32x32xbf16>, vector<622x32xf32> -> vector<622x32xf32>
    %6 = arith.addf %0, %5 : vector<622x32xf32>
    %c0_6 = arith.constant 0 : index
    %c1 = arith.constant 1 : index
    %c0_7 = arith.constant 0 : index
    %7 = vector.load %arg1[%c0_6, %c1, %c0_7] : memref<1x676x32xbf16, #tpu.memory_space<vmem>>, vector<1x622x32xbf16>
    %8 = vector.shape_cast %7 : vector<1x622x32xbf16> to vector<622x32xbf16>
    %c1_8 = arith.constant 1 : index
    %c0_9 = arith.constant 0 : index
    %c0_10 = arith.constant 0 : index
    %9 = vector.load %arg2[%c1_8, %c0_9, %c0_10] : memref<9x32x32xbf16, #tpu.memory_space<vmem>>, vector<1x32x32xbf16>
    %10 = vector.shape_cast %9 : vector<1x32x32xbf16> to vector<32x32xbf16>
    %cst_11 = arith.constant dense<0.000000e+00> : vector<622x32xf32>
    %11 = tpu.matmul %8, %10, %cst_11 {dimension_numbers = #tpu.dot_dimension_numbers<[1], [0], [0], [1], [0, 0, 1, 1], [], []>} : vector<622x32xbf16>, vector<32x32xbf16>, vector<622x32xf32> -> vector<622x32xf32>
    %12 = arith.addf %6, %11 : vector<622x32xf32>
    %c0_12 = arith.constant 0 : index
    %c2 = arith.constant 2 : index
    %c0_13 = arith.constant 0 : index
    %13 = vector.load %arg1[%c0_12, %c2, %c0_13] : memref<1x676x32xbf16, #tpu.memory_space<vmem>>, vector<1x622x32xbf16>
    %14 = vector.shape_cast %13 : vector<1x622x32xbf16> to vector<622x32xbf16>
    %c2_14 = arith.constant 2 : index
    %c0_15 = arith.constant 0 : index
    %c0_16 = arith.constant 0 : index
    %15 = vector.load %arg2[%c2_14, %c0_15, %c0_16] : memref<9x32x32xbf16, #tpu.memory_space<vmem>>, vector<1x32x32xbf16>
    %16 = vector.shape_cast %15 : vector<1x32x32xbf16> to vector<32x32xbf16>
    %cst_17 = arith.constant dense<0.000000e+00> : vector<622x32xf32>
    %17 = tpu.matmul %14, %16, %cst_17 {dimension_numbers = #tpu.dot_dimension_numbers<[1], [0], [0], [1], [0, 0, 1, 1], [], []>} : vector<622x32xbf16>, vector<32x32xbf16>, vector<622x32xf32> -> vector<622x32xf32>
    %18 = arith.addf %12, %17 : vector<622x32xf32>
    %c0_18 = arith.constant 0 : index
    %c26 = arith.constant 26 : index
    %c0_19 = arith.constant 0 : index
    %19 = vector.load %arg1[%c0_18, %c26, %c0_19] : memref<1x676x32xbf16, #tpu.memory_space<vmem>>, vector<1x622x32xbf16>
    %20 = vector.shape_cast %19 : vector<1x622x32xbf16> to vector<622x32xbf16>
    %c3 = arith.constant 3 : index
    %c0_20 = arith.constant 0 : index
    %c0_21 = arith.constant 0 : index
    %21 = vector.load %arg2[%c3, %c0_20, %c0_21] : memref<9x32x32xbf16, #tpu.memory_space<vmem>>, vector<1x32x32xbf16>
    %22 = vector.shape_cast %21 : vector<1x32x32xbf16> to vector<32x32xbf16>
    %cst_22 = arith.constant dense<0.000000e+00> : vector<622x32xf32>
    %23 = tpu.matmul %20, %22, %cst_22 {dimension_numbers = #tpu.dot_dimension_numbers<[1], [0], [0], [1], [0, 0, 1, 1], [], []>} : vector<622x32xbf16>, vector<32x32xbf16>, vector<622x32xf32> -> vector<622x32xf32>
    %24 = arith.addf %18, %23 : vector<622x32xf32>
    %c0_23 = arith.constant 0 : index
    %c27 = arith.constant 27 : index
    %c0_24 = arith.constant 0 : index
    %25 = vector.load %arg1[%c0_23, %c27, %c0_24] : memref<1x676x32xbf16, #tpu.memory_space<vmem>>, vector<1x622x32xbf16>
    %26 = vector.shape_cast %25 : vector<1x622x32xbf16> to vector<622x32xbf16>
    %c4 = arith.constant 4 : index
    %c0_25 = arith.constant 0 : index
    %c0_26 = arith.constant 0 : index
    %27 = vector.load %arg2[%c4, %c0_25, %c0_26] : memref<9x32x32xbf16, #tpu.memory_space<vmem>>, vector<1x32x32xbf16>
    %28 = vector.shape_cast %27 : vector<1x32x32xbf16> to vector<32x32xbf16>
    %cst_27 = arith.constant dense<0.000000e+00> : vector<622x32xf32>
    %29 = tpu.matmul %26, %28, %cst_27 {dimension_numbers = #tpu.dot_dimension_numbers<[1], [0], [0], [1], [0, 0, 1, 1], [], []>} : vector<622x32xbf16>, vector<32x32xbf16>, vector<622x32xf32> -> vector<622x32xf32>
    %30 = arith.addf %24, %29 : vector<622x32xf32>
    %c0_28 = arith.constant 0 : index
    %c28 = arith.constant 28 : index
    %c0_29 = arith.constant 0 : index
    %31 = vector.load %arg1[%c0_28, %c28, %c0_29] : memref<1x676x32xbf16, #tpu.memory_space<vmem>>, vector<1x622x32xbf16>
    %32 = vector.shape_cast %31 : vector<1x622x32xbf16> to vector<622x32xbf16>
    %c5 = arith.constant 5 : index
    %c0_30 = arith.constant 0 : index
    %c0_31 = arith.constant 0 : index
    %33 = vector.load %arg2[%c5, %c0_30, %c0_31] : memref<9x32x32xbf16, #tpu.memory_space<vmem>>, vector<1x32x32xbf16>
    %34 = vector.shape_cast %33 : vector<1x32x32xbf16> to vector<32x32xbf16>
    %cst_32 = arith.constant dense<0.000000e+00> : vector<622x32xf32>
    %35 = tpu.matmul %32, %34, %cst_32 {dimension_numbers = #tpu.dot_dimension_numbers<[1], [0], [0], [1], [0, 0, 1, 1], [], []>} : vector<622x32xbf16>, vector<32x32xbf16>, vector<622x32xf32> -> vector<622x32xf32>
    %36 = arith.addf %30, %35 : vector<622x32xf32>
    %c0_33 = arith.constant 0 : index
    %c52 = arith.constant 52 : index
    %c0_34 = arith.constant 0 : index
    %37 = vector.load %arg1[%c0_33, %c52, %c0_34] : memref<1x676x32xbf16, #tpu.memory_space<vmem>>, vector<1x622x32xbf16>
    %38 = vector.shape_cast %37 : vector<1x622x32xbf16> to vector<622x32xbf16>
    %c6 = arith.constant 6 : index
    %c0_35 = arith.constant 0 : index
    %c0_36 = arith.constant 0 : index
    %39 = vector.load %arg2[%c6, %c0_35, %c0_36] : memref<9x32x32xbf16, #tpu.memory_space<vmem>>, vector<1x32x32xbf16>
    %40 = vector.shape_cast %39 : vector<1x32x32xbf16> to vector<32x32xbf16>
    %cst_37 = arith.constant dense<0.000000e+00> : vector<622x32xf32>
    %41 = tpu.matmul %38, %40, %cst_37 {dimension_numbers = #tpu.dot_dimension_numbers<[1], [0], [0], [1], [0, 0, 1, 1], [], []>} : vector<622x32xbf16>, vector<32x32xbf16>, vector<622x32xf32> -> vector<622x32xf32>
    %42 = arith.addf %36, %41 : vector<622x32xf32>
    %c0_38 = arith.constant 0 : index
    %c53 = arith.constant 53 : index
    %c0_39 = arith.constant 0 : index
    %43 = vector.load %arg1[%c0_38, %c53, %c0_39] : memref<1x676x32xbf16, #tpu.memory_space<vmem>>, vector<1x622x32xbf16>
    %44 = vector.shape_cast %43 : vector<1x622x32xbf16> to vector<622x32xbf16>
    %c7 = arith.constant 7 : index
    %c0_40 = arith.constant 0 : index
    %c0_41 = arith.constant 0 : index
    %45 = vector.load %arg2[%c7, %c0_40, %c0_41] : memref<9x32x32xbf16, #tpu.memory_space<vmem>>, vector<1x32x32xbf16>
    %46 = vector.shape_cast %45 : vector<1x32x32xbf16> to vector<32x32xbf16>
    %cst_42 = arith.constant dense<0.000000e+00> : vector<622x32xf32>
    %47 = tpu.matmul %44, %46, %cst_42 {dimension_numbers = #tpu.dot_dimension_numbers<[1], [0], [0], [1], [0, 0, 1, 1], [], []>} : vector<622x32xbf16>, vector<32x32xbf16>, vector<622x32xf32> -> vector<622x32xf32>
    %48 = arith.addf %42, %47 : vector<622x32xf32>
    %c0_43 = arith.constant 0 : index
    %c54 = arith.constant 54 : index
    %c0_44 = arith.constant 0 : index
    %49 = vector.load %arg1[%c0_43, %c54, %c0_44] : memref<1x676x32xbf16, #tpu.memory_space<vmem>>, vector<1x622x32xbf16>
    %50 = vector.shape_cast %49 : vector<1x622x32xbf16> to vector<622x32xbf16>
    %c8 = arith.constant 8 : index
    %c0_45 = arith.constant 0 : index
    %c0_46 = arith.constant 0 : index
    %51 = vector.load %arg2[%c8, %c0_45, %c0_46] : memref<9x32x32xbf16, #tpu.memory_space<vmem>>, vector<1x32x32xbf16>
    %52 = vector.shape_cast %51 : vector<1x32x32xbf16> to vector<32x32xbf16>
    %cst_47 = arith.constant dense<0.000000e+00> : vector<622x32xf32>
    %53 = tpu.matmul %50, %52, %cst_47 {dimension_numbers = #tpu.dot_dimension_numbers<[1], [0], [0], [1], [0, 0, 1, 1], [], []>} : vector<622x32xbf16>, vector<32x32xbf16>, vector<622x32xf32> -> vector<622x32xf32>
    %54 = arith.addf %48, %53 : vector<622x32xf32>
    %c0_48 = arith.constant 0 : index
    %c0_49 = arith.constant 0 : index
    %55 = vector.load %arg3[%c0_48, %c0_49] : memref<1x32xf32, #tpu.memory_space<vmem>>, vector<1x32xf32>
    %56 = vector.broadcast %55 : vector<1x32xf32> to vector<622x32xf32>
    %57 = arith.addf %54, %56 : vector<622x32xf32>
    %c0_50 = arith.constant 0 : index
    %c0_51 = arith.constant 0 : index
    %58 = vector.load %arg11[%c0_50, %c0_51] : memref<622x32xf32, #tpu.memory_space<vmem>>, vector<622x32xf32>
    tpu.vector_store %arg11[%c0_50, %c0_51], %57 {strides = array<i32>} : memref<622x32xf32, #tpu.memory_space<vmem>>, vector<622x32xf32>,
    %c0_52 = arith.constant 0 : index
    %c0_53 = arith.constant 0 : index
    %59 = vector.load %arg11[%c0_52, %c0_53] : memref<622x32xf32, #tpu.memory_space<vmem>>, vector<595x32xf32>
    %c1_54 = arith.constant 1 : index
    %c0_55 = arith.constant 0 : index
    %60 = vector.load %arg11[%c1_54, %c0_55] : memref<622x32xf32, #tpu.memory_space<vmem>>, vector<595x32xf32>
    %61 = arith.maximumf %59, %60 : vector<595x32xf32>
    %c26_56 = arith.constant 26 : index
    %c0_57 = arith.constant 0 : index
    %62 = vector.load %arg11[%c26_56, %c0_57] : memref<622x32xf32, #tpu.memory_space<vmem>>, vector<595x32xf32>
    %c27_58 = arith.constant 27 : index
    %c0_59 = arith.constant 0 : index
    %63 = vector.load %arg11[%c27_58, %c0_59] : memref<622x32xf32, #tpu.memory_space<vmem>>, vector<595x32xf32>
    %64 = arith.maximumf %62, %63 : vector<595x32xf32>
    %65 = arith.maximumf %61, %64 : vector<595x32xf32>
    %c0_60 = arith.constant 0 : index
    %c0_61 = arith.constant 0 : index
    %66 = vector.load %arg4[%c0_60, %c0_61] : memref<144x595xbf16, #tpu.memory_space<vmem>>, vector<144x595xbf16>
    %67 = arith.truncf %65 : vector<595x32xf32> to vector<595x32xbf16>
    %cst_62 = arith.constant dense<0.000000e+00> : vector<144x32xf32>
    %68 = tpu.matmul %66, %67, %cst_62 {dimension_numbers = #tpu.dot_dimension_numbers<[1], [0], [0], [1], [0, 0, 1, 1], [], []>} : vector<144x595xbf16>, vector<595x32xbf16>, vector<144x32xf32> -> vector<144x32xf32>
    %69 = arith.truncf %68 : vector<144x32xf32> to vector<144x32xbf16>
    %c0_63 = arith.constant 0 : index
    %c0_64 = arith.constant 0 : index
    %70 = vector.load %arg12[%c0_63, %c0_64] : memref<144x32xbf16, #tpu.memory_space<vmem>>, vector<144x32xbf16>
    tpu.vector_store %arg12[%c0_63, %c0_64], %69 {strides = array<i32>} : memref<144x32xbf16, #tpu.memory_space<vmem>>, vector<144x32xbf16>,
    %cst_65 = arith.constant 0.000000e+00 : f32
    %71 = vector.broadcast %cst_65 : f32 to vector<118x64xf32>
    %c0_66 = arith.constant 0 : index
    %c0_67 = arith.constant 0 : index
    %72 = vector.load %arg12[%c0_66, %c0_67] : memref<144x32xbf16, #tpu.memory_space<vmem>>, vector<118x32xbf16>
    %c0_68 = arith.constant 0 : index
    %c0_69 = arith.constant 0 : index
    %c0_70 = arith.constant 0 : index
    %73 = vector.load %arg5[%c0_68, %c0_69, %c0_70] : memref<9x32x64xbf16, #tpu.memory_space<vmem>>, vector<1x32x64xbf16>
    %74 = vector.shape_cast %73 : vector<1x32x64xbf16> to vector<32x64xbf16>
    %cst_71 = arith.constant dense<0.000000e+00> : vector<118x64xf32>
    %75 = tpu.matmul %72, %74, %cst_71 {dimension_numbers = #tpu.dot_dimension_numbers<[1], [0], [0], [1], [0, 0, 1, 1], [], []>} : vector<118x32xbf16>, vector<32x64xbf16>, vector<118x64xf32> -> vector<118x64xf32>
    %76 = arith.addf %71, %75 : vector<118x64xf32>
    %c1_72 = arith.constant 1 : index
    %c0_73 = arith.constant 0 : index
    %77 = vector.load %arg12[%c1_72, %c0_73] : memref<144x32xbf16, #tpu.memory_space<vmem>>, vector<118x32xbf16>
    %c1_74 = arith.constant 1 : index
    %c0_75 = arith.constant 0 : index
    %c0_76 = arith.constant 0 : index
    %78 = vector.load %arg5[%c1_74, %c0_75, %c0_76] : memref<9x32x64xbf16, #tpu.memory_space<vmem>>, vector<1x32x64xbf16>
    %79 = vector.shape_cast %78 : vector<1x32x64xbf16> to vector<32x64xbf16>
    %cst_77 = arith.constant dense<0.000000e+00> : vector<118x64xf32>
    %80 = tpu.matmul %77, %79, %cst_77 {dimension_numbers = #tpu.dot_dimension_numbers<[1], [0], [0], [1], [0, 0, 1, 1], [], []>} : vector<118x32xbf16>, vector<32x64xbf16>, vector<118x64xf32> -> vector<118x64xf32>
    %81 = arith.addf %76, %80 : vector<118x64xf32>
    %c2_78 = arith.constant 2 : index
    %c0_79 = arith.constant 0 : index
    %82 = vector.load %arg12[%c2_78, %c0_79] : memref<144x32xbf16, #tpu.memory_space<vmem>>, vector<118x32xbf16>
    %c2_80 = arith.constant 2 : index
    %c0_81 = arith.constant 0 : index
    %c0_82 = arith.constant 0 : index
    %83 = vector.load %arg5[%c2_80, %c0_81, %c0_82] : memref<9x32x64xbf16, #tpu.memory_space<vmem>>, vector<1x32x64xbf16>
    %84 = vector.shape_cast %83 : vector<1x32x64xbf16> to vector<32x64xbf16>
    %cst_83 = arith.constant dense<0.000000e+00> : vector<118x64xf32>
    %85 = tpu.matmul %82, %84, %cst_83 {dimension_numbers = #tpu.dot_dimension_numbers<[1], [0], [0], [1], [0, 0, 1, 1], [], []>} : vector<118x32xbf16>, vector<32x64xbf16>, vector<118x64xf32> -> vector<118x64xf32>
    %86 = arith.addf %81, %85 : vector<118x64xf32>
    %c12 = arith.constant 12 : index
    %c0_84 = arith.constant 0 : index
    %87 = vector.load %arg12[%c12, %c0_84] : memref<144x32xbf16, #tpu.memory_space<vmem>>, vector<118x32xbf16>
    %c3_85 = arith.constant 3 : index
    %c0_86 = arith.constant 0 : index
    %c0_87 = arith.constant 0 : index
    %88 = vector.load %arg5[%c3_85, %c0_86, %c0_87] : memref<9x32x64xbf16, #tpu.memory_space<vmem>>, vector<1x32x64xbf16>
    %89 = vector.shape_cast %88 : vector<1x32x64xbf16> to vector<32x64xbf16>
    %cst_88 = arith.constant dense<0.000000e+00> : vector<118x64xf32>
    %90 = tpu.matmul %87, %89, %cst_88 {dimension_numbers = #tpu.dot_dimension_numbers<[1], [0], [0], [1], [0, 0, 1, 1], [], []>} : vector<118x32xbf16>, vector<32x64xbf16>, vector<118x64xf32> -> vector<118x64xf32>
    %91 = arith.addf %86, %90 : vector<118x64xf32>
    %c13 = arith.constant 13 : index
    %c0_89 = arith.constant 0 : index
    %92 = vector.load %arg12[%c13, %c0_89] : memref<144x32xbf16, #tpu.memory_space<vmem>>, vector<118x32xbf16>
    %c4_90 = arith.constant 4 : index
    %c0_91 = arith.constant 0 : index
    %c0_92 = arith.constant 0 : index
    %93 = vector.load %arg5[%c4_90, %c0_91, %c0_92] : memref<9x32x64xbf16, #tpu.memory_space<vmem>>, vector<1x32x64xbf16>
    %94 = vector.shape_cast %93 : vector<1x32x64xbf16> to vector<32x64xbf16>
    %cst_93 = arith.constant dense<0.000000e+00> : vector<118x64xf32>
    %95 = tpu.matmul %92, %94, %cst_93 {dimension_numbers = #tpu.dot_dimension_numbers<[1], [0], [0], [1], [0, 0, 1, 1], [], []>} : vector<118x32xbf16>, vector<32x64xbf16>, vector<118x64xf32> -> vector<118x64xf32>
    %96 = arith.addf %91, %95 : vector<118x64xf32>
    %c14 = arith.constant 14 : index
    %c0_94 = arith.constant 0 : index
    %97 = vector.load %arg12[%c14, %c0_94] : memref<144x32xbf16, #tpu.memory_space<vmem>>, vector<118x32xbf16>
    %c5_95 = arith.constant 5 : index
    %c0_96 = arith.constant 0 : index
    %c0_97 = arith.constant 0 : index
    %98 = vector.load %arg5[%c5_95, %c0_96, %c0_97] : memref<9x32x64xbf16, #tpu.memory_space<vmem>>, vector<1x32x64xbf16>
    %99 = vector.shape_cast %98 : vector<1x32x64xbf16> to vector<32x64xbf16>
    %cst_98 = arith.constant dense<0.000000e+00> : vector<118x64xf32>
    %100 = tpu.matmul %97, %99, %cst_98 {dimension_numbers = #tpu.dot_dimension_numbers<[1], [0], [0], [1], [0, 0, 1, 1], [], []>} : vector<118x32xbf16>, vector<32x64xbf16>, vector<118x64xf32> -> vector<118x64xf32>
    %101 = arith.addf %96, %100 : vector<118x64xf32>
    %c24 = arith.constant 24 : index
    %c0_99 = arith.constant 0 : index
    %102 = vector.load %arg12[%c24, %c0_99] : memref<144x32xbf16, #tpu.memory_space<vmem>>, vector<118x32xbf16>
    %c6_100 = arith.constant 6 : index
    %c0_101 = arith.constant 0 : index
    %c0_102 = arith.constant 0 : index
    %103 = vector.load %arg5[%c6_100, %c0_101, %c0_102] : memref<9x32x64xbf16, #tpu.memory_space<vmem>>, vector<1x32x64xbf16>
    %104 = vector.shape_cast %103 : vector<1x32x64xbf16> to vector<32x64xbf16>
    %cst_103 = arith.constant dense<0.000000e+00> : vector<118x64xf32>
    %105 = tpu.matmul %102, %104, %cst_103 {dimension_numbers = #tpu.dot_dimension_numbers<[1], [0], [0], [1], [0, 0, 1, 1], [], []>} : vector<118x32xbf16>, vector<32x64xbf16>, vector<118x64xf32> -> vector<118x64xf32>
    %106 = arith.addf %101, %105 : vector<118x64xf32>
    %c25 = arith.constant 25 : index
    %c0_104 = arith.constant 0 : index
    %107 = vector.load %arg12[%c25, %c0_104] : memref<144x32xbf16, #tpu.memory_space<vmem>>, vector<118x32xbf16>
    %c7_105 = arith.constant 7 : index
    %c0_106 = arith.constant 0 : index
    %c0_107 = arith.constant 0 : index
    %108 = vector.load %arg5[%c7_105, %c0_106, %c0_107] : memref<9x32x64xbf16, #tpu.memory_space<vmem>>, vector<1x32x64xbf16>
    %109 = vector.shape_cast %108 : vector<1x32x64xbf16> to vector<32x64xbf16>
    %cst_108 = arith.constant dense<0.000000e+00> : vector<118x64xf32>
    %110 = tpu.matmul %107, %109, %cst_108 {dimension_numbers = #tpu.dot_dimension_numbers<[1], [0], [0], [1], [0, 0, 1, 1], [], []>} : vector<118x32xbf16>, vector<32x64xbf16>, vector<118x64xf32> -> vector<118x64xf32>
    %111 = arith.addf %106, %110 : vector<118x64xf32>
    %c26_109 = arith.constant 26 : index
    %c0_110 = arith.constant 0 : index
    %112 = vector.load %arg12[%c26_109, %c0_110] : memref<144x32xbf16, #tpu.memory_space<vmem>>, vector<118x32xbf16>
    %c8_111 = arith.constant 8 : index
    %c0_112 = arith.constant 0 : index
    %c0_113 = arith.constant 0 : index
    %113 = vector.load %arg5[%c8_111, %c0_112, %c0_113] : memref<9x32x64xbf16, #tpu.memory_space<vmem>>, vector<1x32x64xbf16>
    %114 = vector.shape_cast %113 : vector<1x32x64xbf16> to vector<32x64xbf16>
    %cst_114 = arith.constant dense<0.000000e+00> : vector<118x64xf32>
    %115 = tpu.matmul %112, %114, %cst_114 {dimension_numbers = #tpu.dot_dimension_numbers<[1], [0], [0], [1], [0, 0, 1, 1], [], []>} : vector<118x32xbf16>, vector<32x64xbf16>, vector<118x64xf32> -> vector<118x64xf32>
    %116 = arith.addf %111, %115 : vector<118x64xf32>
    %c0_115 = arith.constant 0 : index
    %c0_116 = arith.constant 0 : index
    %117 = vector.load %arg6[%c0_115, %c0_116] : memref<1x64xf32, #tpu.memory_space<vmem>>, vector<1x64xf32>
    %118 = vector.broadcast %117 : vector<1x64xf32> to vector<118x64xf32>
    %119 = arith.addf %116, %118 : vector<118x64xf32>
    %cst_117 = arith.constant 0.000000e+00 : f32
    %120 = vector.broadcast %cst_117 : f32 to vector<118x64xf32>
    %121 = arith.maximumf %119, %120 : vector<118x64xf32>
    %122 = arith.truncf %121 : vector<118x64xf32> to vector<118x64xbf16>
    %c0_118 = arith.constant 0 : index
    %c0_119 = arith.constant 0 : index
    %123 = vector.load %arg13[%c0_118, %c0_119] : memref<118x64xbf16, #tpu.memory_space<vmem>>, vector<118x64xbf16>
    tpu.vector_store %arg13[%c0_118, %c0_119], %122 {strides = array<i32>} : memref<118x64xbf16, #tpu.memory_space<vmem>>, vector<118x64xbf16>,
    %cst_120 = arith.constant 0.000000e+00 : f32
    %124 = vector.broadcast %cst_120 : f32 to vector<92x64xf32>
    %c0_121 = arith.constant 0 : index
    %c0_122 = arith.constant 0 : index
    %125 = vector.load %arg13[%c0_121, %c0_122] : memref<118x64xbf16, #tpu.memory_space<vmem>>, vector<92x64xbf16>
    %c0_123 = arith.constant 0 : index
    %c0_124 = arith.constant 0 : index
    %c0_125 = arith.constant 0 : index
    %126 = vector.load %arg7[%c0_123, %c0_124, %c0_125] : memref<9x64x64xbf16, #tpu.memory_space<vmem>>, vector<1x64x64xbf16>
    %127 = vector.shape_cast %126 : vector<1x64x64xbf16> to vector<64x64xbf16>
    %cst_126 = arith.constant dense<0.000000e+00> : vector<92x64xf32>
    %128 = tpu.matmul %125, %127, %cst_126 {dimension_numbers = #tpu.dot_dimension_numbers<[1], [0], [0], [1], [0, 0, 1, 1], [], []>} : vector<92x64xbf16>, vector<64x64xbf16>, vector<92x64xf32> -> vector<92x64xf32>
    %129 = arith.addf %124, %128 : vector<92x64xf32>
    %c1_127 = arith.constant 1 : index
    %c0_128 = arith.constant 0 : index
    %130 = vector.load %arg13[%c1_127, %c0_128] : memref<118x64xbf16, #tpu.memory_space<vmem>>, vector<92x64xbf16>
    %c1_129 = arith.constant 1 : index
    %c0_130 = arith.constant 0 : index
    %c0_131 = arith.constant 0 : index
    %131 = vector.load %arg7[%c1_129, %c0_130, %c0_131] : memref<9x64x64xbf16, #tpu.memory_space<vmem>>, vector<1x64x64xbf16>
    %132 = vector.shape_cast %131 : vector<1x64x64xbf16> to vector<64x64xbf16>
    %cst_132 = arith.constant dense<0.000000e+00> : vector<92x64xf32>
    %133 = tpu.matmul %130, %132, %cst_132 {dimension_numbers = #tpu.dot_dimension_numbers<[1], [0], [0], [1], [0, 0, 1, 1], [], []>} : vector<92x64xbf16>, vector<64x64xbf16>, vector<92x64xf32> -> vector<92x64xf32>
    %134 = arith.addf %129, %133 : vector<92x64xf32>
    %c2_133 = arith.constant 2 : index
    %c0_134 = arith.constant 0 : index
    %135 = vector.load %arg13[%c2_133, %c0_134] : memref<118x64xbf16, #tpu.memory_space<vmem>>, vector<92x64xbf16>
    %c2_135 = arith.constant 2 : index
    %c0_136 = arith.constant 0 : index
    %c0_137 = arith.constant 0 : index
    %136 = vector.load %arg7[%c2_135, %c0_136, %c0_137] : memref<9x64x64xbf16, #tpu.memory_space<vmem>>, vector<1x64x64xbf16>
    %137 = vector.shape_cast %136 : vector<1x64x64xbf16> to vector<64x64xbf16>
    %cst_138 = arith.constant dense<0.000000e+00> : vector<92x64xf32>
    %138 = tpu.matmul %135, %137, %cst_138 {dimension_numbers = #tpu.dot_dimension_numbers<[1], [0], [0], [1], [0, 0, 1, 1], [], []>} : vector<92x64xbf16>, vector<64x64xbf16>, vector<92x64xf32> -> vector<92x64xf32>
    %139 = arith.addf %134, %138 : vector<92x64xf32>
    %c12_139 = arith.constant 12 : index
    %c0_140 = arith.constant 0 : index
    %140 = vector.load %arg13[%c12_139, %c0_140] : memref<118x64xbf16, #tpu.memory_space<vmem>>, vector<92x64xbf16>
    %c3_141 = arith.constant 3 : index
    %c0_142 = arith.constant 0 : index
    %c0_143 = arith.constant 0 : index
    %141 = vector.load %arg7[%c3_141, %c0_142, %c0_143] : memref<9x64x64xbf16, #tpu.memory_space<vmem>>, vector<1x64x64xbf16>
    %142 = vector.shape_cast %141 : vector<1x64x64xbf16> to vector<64x64xbf16>
    %cst_144 = arith.constant dense<0.000000e+00> : vector<92x64xf32>
    %143 = tpu.matmul %140, %142, %cst_144 {dimension_numbers = #tpu.dot_dimension_numbers<[1], [0], [0], [1], [0, 0, 1, 1], [], []>} : vector<92x64xbf16>, vector<64x64xbf16>, vector<92x64xf32> -> vector<92x64xf32>
    %144 = arith.addf %139, %143 : vector<92x64xf32>
    %c13_145 = arith.constant 13 : index
    %c0_146 = arith.constant 0 : index
    %145 = vector.load %arg13[%c13_145, %c0_146] : memref<118x64xbf16, #tpu.memory_space<vmem>>, vector<92x64xbf16>
    %c4_147 = arith.constant 4 : index
    %c0_148 = arith.constant 0 : index
    %c0_149 = arith.constant 0 : index
    %146 = vector.load %arg7[%c4_147, %c0_148, %c0_149] : memref<9x64x64xbf16, #tpu.memory_space<vmem>>, vector<1x64x64xbf16>
    %147 = vector.shape_cast %146 : vector<1x64x64xbf16> to vector<64x64xbf16>
    %cst_150 = arith.constant dense<0.000000e+00> : vector<92x64xf32>
    %148 = tpu.matmul %145, %147, %cst_150 {dimension_numbers = #tpu.dot_dimension_numbers<[1], [0], [0], [1], [0, 0, 1, 1], [], []>} : vector<92x64xbf16>, vector<64x64xbf16>, vector<92x64xf32> -> vector<92x64xf32>
    %149 = arith.addf %144, %148 : vector<92x64xf32>
    %c14_151 = arith.constant 14 : index
    %c0_152 = arith.constant 0 : index
    %150 = vector.load %arg13[%c14_151, %c0_152] : memref<118x64xbf16, #tpu.memory_space<vmem>>, vector<92x64xbf16>
    %c5_153 = arith.constant 5 : index
    %c0_154 = arith.constant 0 : index
    %c0_155 = arith.constant 0 : index
    %151 = vector.load %arg7[%c5_153, %c0_154, %c0_155] : memref<9x64x64xbf16, #tpu.memory_space<vmem>>, vector<1x64x64xbf16>
    %152 = vector.shape_cast %151 : vector<1x64x64xbf16> to vector<64x64xbf16>
    %cst_156 = arith.constant dense<0.000000e+00> : vector<92x64xf32>
    %153 = tpu.matmul %150, %152, %cst_156 {dimension_numbers = #tpu.dot_dimension_numbers<[1], [0], [0], [1], [0, 0, 1, 1], [], []>} : vector<92x64xbf16>, vector<64x64xbf16>, vector<92x64xf32> -> vector<92x64xf32>
    %154 = arith.addf %149, %153 : vector<92x64xf32>
    %c24_157 = arith.constant 24 : index
    %c0_158 = arith.constant 0 : index
    %155 = vector.load %arg13[%c24_157, %c0_158] : memref<118x64xbf16, #tpu.memory_space<vmem>>, vector<92x64xbf16>
    %c6_159 = arith.constant 6 : index
    %c0_160 = arith.constant 0 : index
    %c0_161 = arith.constant 0 : index
    %156 = vector.load %arg7[%c6_159, %c0_160, %c0_161] : memref<9x64x64xbf16, #tpu.memory_space<vmem>>, vector<1x64x64xbf16>
    %157 = vector.shape_cast %156 : vector<1x64x64xbf16> to vector<64x64xbf16>
    %cst_162 = arith.constant dense<0.000000e+00> : vector<92x64xf32>
    %158 = tpu.matmul %155, %157, %cst_162 {dimension_numbers = #tpu.dot_dimension_numbers<[1], [0], [0], [1], [0, 0, 1, 1], [], []>} : vector<92x64xbf16>, vector<64x64xbf16>, vector<92x64xf32> -> vector<92x64xf32>
    %159 = arith.addf %154, %158 : vector<92x64xf32>
    %c25_163 = arith.constant 25 : index
    %c0_164 = arith.constant 0 : index
    %160 = vector.load %arg13[%c25_163, %c0_164] : memref<118x64xbf16, #tpu.memory_space<vmem>>, vector<92x64xbf16>
    %c7_165 = arith.constant 7 : index
    %c0_166 = arith.constant 0 : index
    %c0_167 = arith.constant 0 : index
    %161 = vector.load %arg7[%c7_165, %c0_166, %c0_167] : memref<9x64x64xbf16, #tpu.memory_space<vmem>>, vector<1x64x64xbf16>
    %162 = vector.shape_cast %161 : vector<1x64x64xbf16> to vector<64x64xbf16>
    %cst_168 = arith.constant dense<0.000000e+00> : vector<92x64xf32>
    %163 = tpu.matmul %160, %162, %cst_168 {dimension_numbers = #tpu.dot_dimension_numbers<[1], [0], [0], [1], [0, 0, 1, 1], [], []>} : vector<92x64xbf16>, vector<64x64xbf16>, vector<92x64xf32> -> vector<92x64xf32>
    %164 = arith.addf %159, %163 : vector<92x64xf32>
    %c26_169 = arith.constant 26 : index
    %c0_170 = arith.constant 0 : index
    %165 = vector.load %arg13[%c26_169, %c0_170] : memref<118x64xbf16, #tpu.memory_space<vmem>>, vector<92x64xbf16>
    %c8_171 = arith.constant 8 : index
    %c0_172 = arith.constant 0 : index
    %c0_173 = arith.constant 0 : index
    %166 = vector.load %arg7[%c8_171, %c0_172, %c0_173] : memref<9x64x64xbf16, #tpu.memory_space<vmem>>, vector<1x64x64xbf16>
    %167 = vector.shape_cast %166 : vector<1x64x64xbf16> to vector<64x64xbf16>
    %cst_174 = arith.constant dense<0.000000e+00> : vector<92x64xf32>
    %168 = tpu.matmul %165, %167, %cst_174 {dimension_numbers = #tpu.dot_dimension_numbers<[1], [0], [0], [1], [0, 0, 1, 1], [], []>} : vector<92x64xbf16>, vector<64x64xbf16>, vector<92x64xf32> -> vector<92x64xf32>
    %169 = arith.addf %164, %168 : vector<92x64xf32>
    %c0_175 = arith.constant 0 : index
    %c0_176 = arith.constant 0 : index
    %170 = vector.load %arg8[%c0_175, %c0_176] : memref<1x64xf32, #tpu.memory_space<vmem>>, vector<1x64xf32>
    %171 = vector.broadcast %170 : vector<1x64xf32> to vector<92x64xf32>
    %172 = arith.addf %169, %171 : vector<92x64xf32>
    %cst_177 = arith.constant 0.000000e+00 : f32
    %173 = vector.broadcast %cst_177 : f32 to vector<92x64xf32>
    %174 = arith.maximumf %172, %173 : vector<92x64xf32>
    %c0_178 = arith.constant 0 : index
    %c0_179 = arith.constant 0 : index
    %175 = vector.load %arg14[%c0_178, %c0_179] : memref<92x64xf32, #tpu.memory_space<vmem>>, vector<92x64xf32>
    tpu.vector_store %arg14[%c0_178, %c0_179], %174 {strides = array<i32>} : memref<92x64xf32, #tpu.memory_space<vmem>>, vector<92x64xf32>,
    %c0_180 = arith.constant 0 : index
    %c0_181 = arith.constant 0 : index
    %176 = vector.load %arg14[%c0_180, %c0_181] : memref<92x64xf32, #tpu.memory_space<vmem>>, vector<79x64xf32>
    %c1_182 = arith.constant 1 : index
    %c0_183 = arith.constant 0 : index
    %177 = vector.load %arg14[%c1_182, %c0_183] : memref<92x64xf32, #tpu.memory_space<vmem>>, vector<79x64xf32>
    %178 = arith.maximumf %176, %177 : vector<79x64xf32>
    %c12_184 = arith.constant 12 : index
    %c0_185 = arith.constant 0 : index
    %179 = vector.load %arg14[%c12_184, %c0_185] : memref<92x64xf32, #tpu.memory_space<vmem>>, vector<79x64xf32>
    %c13_186 = arith.constant 13 : index
    %c0_187 = arith.constant 0 : index
    %180 = vector.load %arg14[%c13_186, %c0_187] : memref<92x64xf32, #tpu.memory_space<vmem>>, vector<79x64xf32>
    %181 = arith.maximumf %179, %180 : vector<79x64xf32>
    %182 = arith.maximumf %178, %181 : vector<79x64xf32>
    %c0_188 = arith.constant 0 : index
    %c0_189 = arith.constant 0 : index
    %183 = vector.load %arg9[%c0_188, %c0_189] : memref<16x79xbf16, #tpu.memory_space<vmem>>, vector<16x79xbf16>
    %184 = arith.truncf %182 : vector<79x64xf32> to vector<79x64xbf16>
    %cst_190 = arith.constant dense<0.000000e+00> : vector<16x64xf32>
    %185 = tpu.matmul %183, %184, %cst_190 {dimension_numbers = #tpu.dot_dimension_numbers<[1], [0], [0], [1], [0, 0, 1, 1], [], []>} : vector<16x79xbf16>, vector<79x64xbf16>, vector<16x64xf32> -> vector<16x64xf32>
    %186 = arith.truncf %185 : vector<16x64xf32> to vector<16x64xbf16>
    %c0_191 = arith.constant 0 : index
    %c0_192 = arith.constant 0 : index
    %c0_193 = arith.constant 0 : index
    %187 = vector.load %arg10[%c0_191, %c0_192, %c0_193] : memref<1x16x64xbf16, #tpu.memory_space<vmem>>, vector<1x16x64xbf16>
    %188 = vector.shape_cast %187 : vector<1x16x64xbf16> to vector<16x64xbf16>
    %189 = vector.shape_cast %186 : vector<16x64xbf16> to vector<1x16x64xbf16>
    tpu.vector_store %arg10[%c0_191, %c0_192, %c0_193], %189 {strides = array<i32>} : memref<1x16x64xbf16, #tpu.memory_space<vmem>>, vector<1x16x64xbf16>,
    return
  }
  func.func @transform_0(%arg0: i32) -> (i32, i32, i32) {
    %c0_i32 = arith.constant 0 : i32
    %c0_i32_0 = arith.constant 0 : i32
    %c0_i32_1 = arith.constant 0 : i32
    return %arg0, %c0_i32, %c0_i32_0 : i32, i32, i32
  }
  func.func @transform_1(%arg0: i32) -> (i32, i32, i32) {
    %c0_i32 = arith.constant 0 : i32
    %c0_i32_0 = arith.constant 0 : i32
    %c0_i32_1 = arith.constant 0 : i32
    %c0_i32_2 = arith.constant 0 : i32
    return %c0_i32, %c0_i32_0, %c0_i32_1 : i32, i32, i32
  }
  func.func @transform_2(%arg0: i32) -> (i32, i32) {
    %c0_i32 = arith.constant 0 : i32
    %c0_i32_0 = arith.constant 0 : i32
    %c0_i32_1 = arith.constant 0 : i32
    return %c0_i32, %c0_i32_0 : i32, i32
  }
  func.func @transform_3(%arg0: i32) -> (i32, i32) {
    %c0_i32 = arith.constant 0 : i32
    %c0_i32_0 = arith.constant 0 : i32
    %c0_i32_1 = arith.constant 0 : i32
    return %c0_i32, %c0_i32_0 : i32, i32
  }
  func.func @transform_4(%arg0: i32) -> (i32, i32, i32) {
    %c0_i32 = arith.constant 0 : i32
    %c0_i32_0 = arith.constant 0 : i32
    %c0_i32_1 = arith.constant 0 : i32
    %c0_i32_2 = arith.constant 0 : i32
    return %c0_i32, %c0_i32_0, %c0_i32_1 : i32, i32, i32
  }
  func.func @transform_5(%arg0: i32) -> (i32, i32) {
    %c0_i32 = arith.constant 0 : i32
    %c0_i32_0 = arith.constant 0 : i32
    %c0_i32_1 = arith.constant 0 : i32
    return %c0_i32, %c0_i32_0 : i32, i32
  }
  func.func @transform_6(%arg0: i32) -> (i32, i32, i32) {
    %c0_i32 = arith.constant 0 : i32
    %c0_i32_0 = arith.constant 0 : i32
    %c0_i32_1 = arith.constant 0 : i32
    %c0_i32_2 = arith.constant 0 : i32
    return %c0_i32, %c0_i32_0, %c0_i32_1 : i32, i32, i32
  }
  func.func @transform_7(%arg0: i32) -> (i32, i32) {
    %c0_i32 = arith.constant 0 : i32
    %c0_i32_0 = arith.constant 0 : i32
    %c0_i32_1 = arith.constant 0 : i32
    return %c0_i32, %c0_i32_0 : i32, i32
  }
  func.func @transform_8(%arg0: i32) -> (i32, i32) {
    %c0_i32 = arith.constant 0 : i32
    %c0_i32_0 = arith.constant 0 : i32
    %c0_i32_1 = arith.constant 0 : i32
    return %c0_i32, %c0_i32_0 : i32, i32
  }
  func.func @transform_9(%arg0: i32) -> (i32, i32, i32) {
    %c0_i32 = arith.constant 0 : i32
    %c0_i32_0 = arith.constant 0 : i32
    %c0_i32_1 = arith.constant 0 : i32
    return %arg0, %c0_i32, %c0_i32_0 : i32, i32, i32
  }
}

module attributes {stable_mosaic.version = 11 : i64} {
  func.func @_mlp_kernel(%arg0: i32, %arg1: memref<2x1024xbf16, #tpu.memory_space<vmem>>, %arg2: memref<1024x256xbf16, #tpu.memory_space<vmem>>, %arg3: memref<1x256xf32, #tpu.memory_space<vmem>>, %arg4: memref<256x256xbf16, #tpu.memory_space<vmem>>, %arg5: memref<1x256xf32, #tpu.memory_space<vmem>>, %arg6: memref<256x10xbf16, #tpu.memory_space<vmem>>, %arg7: memref<1x10xf32, #tpu.memory_space<vmem>>, %arg8: memref<2x10xf32, #tpu.memory_space<vmem>>) attributes {dimension_semantics = [#tpu.dimension_semantics<parallel>], iteration_bounds = array<i64: 1>, scalar_prefetch = 0 : i64, scratch_operands = 0 : i64, tpu.core_type = #tpu.core_type<tc>, window_params = [{transform_indices = @transform_0, window_bounds = array<i64: 2, 1024>}, {pipeline_mode = #tpu.pipeline_mode<synchronous>, transform_indices = @transform_1, window_bounds = array<i64: 1024, 256>}, {pipeline_mode = #tpu.pipeline_mode<synchronous>, transform_indices = @transform_2, window_bounds = array<i64: 1, 256>}, {pipeline_mode = #tpu.pipeline_mode<synchronous>, transform_indices = @transform_3, window_bounds = array<i64: 256, 256>}, {pipeline_mode = #tpu.pipeline_mode<synchronous>, transform_indices = @transform_4, window_bounds = array<i64: 1, 256>}, {pipeline_mode = #tpu.pipeline_mode<synchronous>, transform_indices = @transform_5, window_bounds = array<i64: 256, 10>}, {pipeline_mode = #tpu.pipeline_mode<synchronous>, transform_indices = @transform_6, window_bounds = array<i64: 1, 10>}, {transform_indices = @transform_7, window_bounds = array<i64: 2, 10>}]} {
    %c0 = arith.constant 0 : index
    %c0_0 = arith.constant 0 : index
    %0 = vector.load %arg1[%c0, %c0_0] : memref<2x1024xbf16, #tpu.memory_space<vmem>>, vector<2x1024xbf16>
    %c0_1 = arith.constant 0 : index
    %c0_2 = arith.constant 0 : index
    %1 = vector.load %arg2[%c0_1, %c0_2] : memref<1024x256xbf16, #tpu.memory_space<vmem>>, vector<1024x256xbf16>
    %cst = arith.constant dense<0.000000e+00> : vector<2x256xf32>
    %2 = tpu.matmul %0, %1, %cst {dimension_numbers = #tpu.dot_dimension_numbers<[1], [0], [0], [1], [0, 0, 1, 1], [], []>} : vector<2x1024xbf16>, vector<1024x256xbf16>, vector<2x256xf32> -> vector<2x256xf32>
    %c0_3 = arith.constant 0 : index
    %c0_4 = arith.constant 0 : index
    %3 = vector.load %arg3[%c0_3, %c0_4] : memref<1x256xf32, #tpu.memory_space<vmem>>, vector<1x256xf32>
    %4 = vector.broadcast %3 : vector<1x256xf32> to vector<2x256xf32>
    %5 = arith.addf %2, %4 : vector<2x256xf32>
    %cst_5 = arith.constant 0.000000e+00 : f32
    %6 = vector.broadcast %cst_5 : f32 to vector<2x256xf32>
    %7 = arith.maximumf %5, %6 : vector<2x256xf32>
    %8 = arith.truncf %7 : vector<2x256xf32> to vector<2x256xbf16>
    %c0_6 = arith.constant 0 : index
    %c0_7 = arith.constant 0 : index
    %9 = vector.load %arg4[%c0_6, %c0_7] : memref<256x256xbf16, #tpu.memory_space<vmem>>, vector<256x256xbf16>
    %cst_8 = arith.constant dense<0.000000e+00> : vector<2x256xf32>
    %10 = tpu.matmul %8, %9, %cst_8 {dimension_numbers = #tpu.dot_dimension_numbers<[1], [0], [0], [1], [0, 0, 1, 1], [], []>} : vector<2x256xbf16>, vector<256x256xbf16>, vector<2x256xf32> -> vector<2x256xf32>
    %c0_9 = arith.constant 0 : index
    %c0_10 = arith.constant 0 : index
    %11 = vector.load %arg5[%c0_9, %c0_10] : memref<1x256xf32, #tpu.memory_space<vmem>>, vector<1x256xf32>
    %12 = vector.broadcast %11 : vector<1x256xf32> to vector<2x256xf32>
    %13 = arith.addf %10, %12 : vector<2x256xf32>
    %cst_11 = arith.constant 0.000000e+00 : f32
    %14 = vector.broadcast %cst_11 : f32 to vector<2x256xf32>
    %15 = arith.maximumf %13, %14 : vector<2x256xf32>
    %16 = arith.truncf %15 : vector<2x256xf32> to vector<2x256xbf16>
    %c0_12 = arith.constant 0 : index
    %c0_13 = arith.constant 0 : index
    %17 = vector.load %arg6[%c0_12, %c0_13] : memref<256x10xbf16, #tpu.memory_space<vmem>>, vector<256x10xbf16>
    %cst_14 = arith.constant dense<0.000000e+00> : vector<2x10xf32>
    %18 = tpu.matmul %16, %17, %cst_14 {dimension_numbers = #tpu.dot_dimension_numbers<[1], [0], [0], [1], [0, 0, 1, 1], [], []>} : vector<2x256xbf16>, vector<256x10xbf16>, vector<2x10xf32> -> vector<2x10xf32>
    %c0_15 = arith.constant 0 : index
    %c0_16 = arith.constant 0 : index
    %19 = vector.load %arg7[%c0_15, %c0_16] : memref<1x10xf32, #tpu.memory_space<vmem>>, vector<1x10xf32>
    %20 = vector.broadcast %19 : vector<1x10xf32> to vector<2x10xf32>
    %21 = arith.addf %18, %20 : vector<2x10xf32>
    %c0_17 = arith.constant 0 : index
    %c0_18 = arith.constant 0 : index
    %22 = vector.load %arg8[%c0_17, %c0_18] : memref<2x10xf32, #tpu.memory_space<vmem>>, vector<2x10xf32>
    tpu.vector_store %arg8[%c0_17, %c0_18], %21 {strides = array<i32>} : memref<2x10xf32, #tpu.memory_space<vmem>>, vector<2x10xf32>,
    return
  }
  func.func @transform_0(%arg0: i32) -> (i32, i32) {
    %c0_i32 = arith.constant 0 : i32
    %c0_i32_0 = arith.constant 0 : i32
    return %arg0, %c0_i32 : i32, i32
  }
  func.func @transform_1(%arg0: i32) -> (i32, i32) {
    %c0_i32 = arith.constant 0 : i32
    %c0_i32_0 = arith.constant 0 : i32
    %c0_i32_1 = arith.constant 0 : i32
    return %c0_i32, %c0_i32_0 : i32, i32
  }
  func.func @transform_2(%arg0: i32) -> (i32, i32) {
    %c0_i32 = arith.constant 0 : i32
    %c0_i32_0 = arith.constant 0 : i32
    %c0_i32_1 = arith.constant 0 : i32
    return %c0_i32, %c0_i32_0 : i32, i32
  }
  func.func @transform_3(%arg0: i32) -> (i32, i32) {
    %c0_i32 = arith.constant 0 : i32
    %c0_i32_0 = arith.constant 0 : i32
    %c0_i32_1 = arith.constant 0 : i32
    return %c0_i32, %c0_i32_0 : i32, i32
  }
  func.func @transform_4(%arg0: i32) -> (i32, i32) {
    %c0_i32 = arith.constant 0 : i32
    %c0_i32_0 = arith.constant 0 : i32
    %c0_i32_1 = arith.constant 0 : i32
    return %c0_i32, %c0_i32_0 : i32, i32
  }
  func.func @transform_5(%arg0: i32) -> (i32, i32) {
    %c0_i32 = arith.constant 0 : i32
    %c0_i32_0 = arith.constant 0 : i32
    %c0_i32_1 = arith.constant 0 : i32
    return %c0_i32, %c0_i32_0 : i32, i32
  }
  func.func @transform_6(%arg0: i32) -> (i32, i32) {
    %c0_i32 = arith.constant 0 : i32
    %c0_i32_0 = arith.constant 0 : i32
    %c0_i32_1 = arith.constant 0 : i32
    return %c0_i32, %c0_i32_0 : i32, i32
  }
  func.func @transform_7(%arg0: i32) -> (i32, i32) {
    %c0_i32 = arith.constant 0 : i32
    %c0_i32_0 = arith.constant 0 : i32
    return %arg0, %c0_i32 : i32, i32
  }
}

</mosaic_0001>

<llo_original>
// kernel: net_forward.3
$region0: #{net_forward.3}
  #allocation0 [shape = 'u32[]', space=smem, size = 0x4, offset = 0x4, fixed_abs, tag = 'smem constant byte address 0x4 - core index']
  #allocation1 [shape = 'u32[72,128]{1,0:T(1,128)}', space=vmem, size = 0x9000, scoped, tag = 'internal scratch']
  %s0 = inlined_call_operand.vmem [shape: bf16[2,1024], index: 0, kind: input, shape index: {}]
  %s1 = inlined_call_operand.vmem [shape: bf16[1024,256], index: 1, kind: input, shape index: {}]
  %s2 = inlined_call_operand.vmem [shape: f32[1,256], index: 2, kind: input, shape index: {}]
  %s3 = inlined_call_operand.vmem [shape: bf16[256,256], index: 3, kind: input, shape index: {}]
  %s4 = inlined_call_operand.vmem [shape: f32[1,256], index: 4, kind: input, shape index: {}]
  %s5 = inlined_call_operand.vmem [shape: bf16[256,10], index: 5, kind: input, shape index: {}]
  %s6 = inlined_call_operand.vmem [shape: f32[1,10], index: 6, kind: input, shape index: {}]
  %s7 = inlined_call_operand.hbm [shape: f32[2,10], index: 7, kind: output, shape index: {}]
  %s8 = sld [smem:[#allocation0]]
  $region38: #{net_forward.3} parent=0
    _
  %s10 = ssub.s32 1, %s8
  %s11 = scalar_select 0, %s10, %s8
  $region1: #{net_forward.3} parent=0
    #allocation2 [shape = 'u8[1024]{0}', space=vmem, size = 0x400, scoped, tag = 'output window, operand 0, single buffered']
    #allocation3 [shape = 's32[1]{0}', space=sflag, size = 0x4, scoped, tag = 'scoped memory for net_forward.3']
    %12 = vsyncpa [#allocation3], 0
    // Predicated region
    $region2: #{net_forward.3} parent=1 // pred_check
      _
    $region3: #{net_forward.3} parent=1 // pred_check_branch
      %14 = sbr.rel (0) target = $region5
    $region4: #{net_forward.3} parent=1 // pred_region
      _
    $region5: #{net_forward.3} parent=1 // pred_fallthru
      _
    // Predicated region
    $region6: #{net_forward.3} parent=1 // pred_check
      _
    $region7: #{net_forward.3} parent=1 // pred_check_branch
      %16 = sbr.rel (0) target = $region9
    $region8: #{net_forward.3} parent=1 // pred_region
      _
    $region9: #{net_forward.3} parent=1 // pred_fallthru
      _
    // Predicated region
    $region10: #{net_forward.3} parent=1 // pred_check
      _
    $region11: #{net_forward.3} parent=1 // pred_check_branch
      %18 = sbr.rel (0) target = $region13
    $region12: #{net_forward.3} parent=1 // pred_region
      _
    $region13: #{net_forward.3} parent=1 // pred_fallthru
      _
    // Predicated region
    $region14: #{net_forward.3} parent=1 // pred_check
      _
    $region15: #{net_forward.3} parent=1 // pred_check_branch
      %20 = sbr.rel (0) target = $region17
    $region16: #{net_forward.3} parent=1 // pred_region
      _
    $region17: #{net_forward.3} parent=1 // pred_fallthru
      _
    // Predicated region
    $region18: #{net_forward.3} parent=1 // pred_check
      _
    $region19: #{net_forward.3} parent=1 // pred_check_branch
      %22 = sbr.rel (0) target = $region21
    $region20: #{net_forward.3} parent=1 // pred_region
      _
    $region21: #{net_forward.3} parent=1 // pred_fallthru
      _
    // Predicated region
    $region22: #{net_forward.3} parent=1 // pred_check
      _
    $region23: #{net_forward.3} parent=1 // pred_check_branch
      %24 = sbr.rel (0) target = $region25
    $region24: #{net_forward.3} parent=1 // pred_region
      _
    $region25: #{net_forward.3} parent=1 // pred_fallthru
      _
    // Predicated region
    $region26: #{net_forward.3} parent=1 // pred_check
      _
    $region27: #{net_forward.3} parent=1 // pred_check_branch
      %26 = sbr.rel (0) target = $region29
    $region28: #{net_forward.3} parent=1 // pred_region
      _
    $region29: #{net_forward.3} parent=1 // pred_fallthru
      _
    %v27 = vld [vmem:[%s0] sm:$0xff]
    %v28 = vld [vmem:[%s1] sm:$0xff]
    %v29 = vld [vmem:[%s1 + $0x8] sm:$0xff]
    %v30 = vld [vmem:[%s1 + $0x10] sm:$0xff]
    %v31 = vld [vmem:[%s1 + $0x18] sm:$0xff]
    %v32 = vld [vmem:[%s1 + $0x20] sm:$0xff]
    %v33 = vld [vmem:[%s1 + $0x28] sm:$0xff]
    %v34 = vld [vmem:[%s1 + $0x30] sm:$0xff]
    %v35 = vld [vmem:[%s1 + $0x38] sm:$0xff]
    %v36 = vld [vmem:[%s1 + $0x40] sm:$0xff]
    %v37 = vld [vmem:[%s1 + $0x48] sm:$0xff]
    %v38 = vld [vmem:[%s1 + $0x50] sm:$0xff]
    %v39 = vld [vmem:[%s1 + $0x58] sm:$0xff]
    %v40 = vld [vmem:[%s1 + $0x60] sm:$0xff]
    %v41 = vld [vmem:[%s1 + $0x68] sm:$0xff]
    %v42 = vld [vmem:[%s1 + $0x70] sm:$0xff]
    %v43 = vld [vmem:[%s1 + $0x78] sm:$0xff]
    %v44 = vld [vmem:[%s1 + $0x80] sm:$0xff]
    %v45 = vld [vmem:[%s1 + $0x88] sm:$0xff]
    %v46 = vld [vmem:[%s1 + $0x90] sm:$0xff]
    %v47 = vld [vmem:[%s1 + $0x98] sm:$0xff]
    %v48 = vld [vmem:[%s1 + $0xa0] sm:$0xff]
    %v49 = vld [vmem:[%s1 + $0xa8] sm:$0xff]
    %v50 = vld [vmem:[%s1 + $0xb0] sm:$0xff]
    %v51 = vld [vmem:[%s1 + $0xb8] sm:$0xff]
    %v52 = vld [vmem:[%s1 + $0xc0] sm:$0xff]
    %v53 = vld [vmem:[%s1 + $0xc8] sm:$0xff]
    %v54 = vld [vmem:[%s1 + $0xd0] sm:$0xff]
    %v55 = vld [vmem:[%s1 + $0xd8] sm:$0xff]
    %v56 = vld [vmem:[%s1 + $0xe0] sm:$0xff]
    %v57 = vld [vmem:[%s1 + $0xe8] sm:$0xff]
    %v58 = vld [vmem:[%s1 + $0xf0] sm:$0xff]
    %v59 = vld [vmem:[%s1 + $0xf8] sm:$0xff]
    %v60 = vld [vmem:[%s1 + $0x100] sm:$0xff]
    %v61 = vld [vmem:[%s1 + $0x108] sm:$0xff]
    %v62 = vld [vmem:[%s1 + $0x110] sm:$0xff]
    %v63 = vld [vmem:[%s1 + $0x118] sm:$0xff]
    %v64 = vld [vmem:[%s1 + $0x120] sm:$0xff]
    %v65 = vld [vmem:[%s1 + $0x128] sm:$0xff]
    %v66 = vld [vmem:[%s1 + $0x130] sm:$0xff]
    %v67 = vld [vmem:[%s1 + $0x138] sm:$0xff]
    %v68 = vld [vmem:[%s1 + $0x140] sm:$0xff]
    %v69 = vld [vmem:[%s1 + $0x148] sm:$0xff]
    %v70 = vld [vmem:[%s1 + $0x150] sm:$0xff]
    %v71 = vld [vmem:[%s1 + $0x158] sm:$0xff]
    %v72 = vld [vmem:[%s1 + $0x160] sm:$0xff]
    %v73 = vld [vmem:[%s1 + $0x168] sm:$0xff]
    %v74 = vld [vmem:[%s1 + $0x170] sm:$0xff]
    %v75 = vld [vmem:[%s1 + $0x178] sm:$0xff]
    %v76 = vld [vmem:[%s1 + $0x180] sm:$0xff]
    %v77 = vld [vmem:[%s1 + $0x188] sm:$0xff]
    %v78 = vld [vmem:[%s1 + $0x190] sm:$0xff]
    %v79 = vld [vmem:[%s1 + $0x198] sm:$0xff]
    %v80 = vld [vmem:[%s1 + $0x1a0] sm:$0xff]
    %v81 = vld [vmem:[%s1 + $0x1a8] sm:$0xff]
    %v82 = vld [vmem:[%s1 + $0x1b0] sm:$0xff]
    %v83 = vld [vmem:[%s1 + $0x1b8] sm:$0xff]
    %v84 = vld [vmem:[%s1 + $0x1c0] sm:$0xff]
    %v85 = vld [vmem:[%s1 + $0x1c8] sm:$0xff]
    %v86 = vld [vmem:[%s1 + $0x1d0] sm:$0xff]
    %v87 = vld [vmem:[%s1 + $0x1d8] sm:$0xff]
    %v88 = vld [vmem:[%s1 + $0x1e0] sm:$0xff]
    %v89 = vld [vmem:[%s1 + $0x1e8] sm:$0xff]
    %v90 = vld [vmem:[%s1 + $0x1f0] sm:$0xff]
    %v91 = vld [vmem:[%s1 + $0x1f8] sm:$0xff]
    %v92 = vld [vmem:[%s1 + $0x200] sm:$0xff]
    %v93 = vld [vmem:[%s1 + $0x208] sm:$0xff]
    %v94 = vld [vmem:[%s1 + $0x210] sm:$0xff]
    %v95 = vld [vmem:[%s1 + $0x218] sm:$0xff]
    %v96 = vld [vmem:[%s1 + $0x220] sm:$0xff]
    %v97 = vld [vmem:[%s1 + $0x228] sm:$0xff]
    %v98 = vld [vmem:[%s1 + $0x230] sm:$0xff]
    %v99 = vld [vmem:[%s1 + $0x238] sm:$0xff]
    %v100 = vld [vmem:[%s1 + $0x240] sm:$0xff]
    %v101 = vld [vmem:[%s1 + $0x248] sm:$0xff]
    %v102 = vld [vmem:[%s1 + $0x250] sm:$0xff]
    %v103 = vld [vmem:[%s1 + $0x258] sm:$0xff]
    %v104 = vld [vmem:[%s1 + $0x260] sm:$0xff]
    %v105 = vld [vmem:[%s1 + $0x268] sm:$0xff]
    %v106 = vld [vmem:[%s1 + $0x270] sm:$0xff]
    %v107 = vld [vmem:[%s1 + $0x278] sm:$0xff]
    %v108 = vld [vmem:[%s1 + $0x280] sm:$0xff]
    %v109 = vld [vmem:[%s1 + $0x288] sm:$0xff]
    %v110 = vld [vmem:[%s1 + $0x290] sm:$0xff]
    %v111 = vld [vmem:[%s1 + $0x298] sm:$0xff]
    %v112 = vld [vmem:[%s1 + $0x2a0] sm:$0xff]
    %v113 = vld [vmem:[%s1 + $0x2a8] sm:$0xff]
    %v114 = vld [vmem:[%s1 + $0x2b0] sm:$0xff]
    %v115 = vld [vmem:[%s1 + $0x2b8] sm:$0xff]
    %v116 = vld [vmem:[%s1 + $0x2c0] sm:$0xff]
    %v117 = vld [vmem:[%s1 + $0x2c8] sm:$0xff]
    %v118 = vld [vmem:[%s1 + $0x2d0] sm:$0xff]
    %v119 = vld [vmem:[%s1 + $0x2d8] sm:$0xff]
    %v120 = vld [vmem:[%s1 + $0x2e0] sm:$0xff]
    %v121 = vld [vmem:[%s1 + $0x2e8] sm:$0xff]
    %v122 = vld [vmem:[%s1 + $0x2f0] sm:$0xff]
    %v123 = vld [vmem:[%s1 + $0x2f8] sm:$0xff]
    %v124 = vld [vmem:[%s1 + $0x300] sm:$0xff]
    %v125 = vld [vmem:[%s1 + $0x308] sm:$0xff]
    %v126 = vld [vmem:[%s1 + $0x310] sm:$0xff]
    %v127 = vld [vmem:[%s1 + $0x318] sm:$0xff]
    %v128 = vld [vmem:[%s1 + $0x320] sm:$0xff]
    %v129 = vld [vmem:[%s1 + $0x328] sm:$0xff]
    %v130 = vld [vmem:[%s1 + $0x330] sm:$0xff]
    %v131 = vld [vmem:[%s1 + $0x338] sm:$0xff]
    %v132 = vld [vmem:[%s1 + $0x340] sm:$0xff]
    %v133 = vld [vmem:[%s1 + $0x348] sm:$0xff]
    %v134 = vld [vmem:[%s1 + $0x350] sm:$0xff]
    %v135 = vld [vmem:[%s1 + $0x358] sm:$0xff]
    %v136 = vld [vmem:[%s1 + $0x360] sm:$0xff]
    %v137 = vld [vmem:[%s1 + $0x368] sm:$0xff]
    %v138 = vld [vmem:[%s1 + $0x370] sm:$0xff]
    %v139 = vld [vmem:[%s1 + $0x378] sm:$0xff]
    %v140 = vld [vmem:[%s1 + $0x380] sm:$0xff]
    %v141 = vld [vmem:[%s1 + $0x388] sm:$0xff]
    %v142 = vld [vmem:[%s1 + $0x390] sm:$0xff]
    %v143 = vld [vmem:[%s1 + $0x398] sm:$0xff]
    %v144 = vld [vmem:[%s1 + $0x3a0] sm:$0xff]
    %v145 = vld [vmem:[%s1 + $0x3a8] sm:$0xff]
    %v146 = vld [vmem:[%s1 + $0x3b0] sm:$0xff]
    %v147 = vld [vmem:[%s1 + $0x3b8] sm:$0xff]
    %v148 = vld [vmem:[%s1 + $0x3c0] sm:$0xff]
    %v149 = vld [vmem:[%s1 + $0x3c8] sm:$0xff]
    %v150 = vld [vmem:[%s1 + $0x3d0] sm:$0xff]
    %v151 = vld [vmem:[%s1 + $0x3d8] sm:$0xff]
    %v152 = vld [vmem:[%s1 + $0x3e0] sm:$0xff]
    %v153 = vld [vmem:[%s1 + $0x3e8] sm:$0xff]
    %v154 = vld [vmem:[%s1 + $0x3f0] sm:$0xff]
    %v155 = vld [vmem:[%s1 + $0x3f8] sm:$0xff]
    %v156 = vld [vmem:[%s2] sm:$0x3]
    %v158 = vperm.slane %v156, 0
    %v159 = vperm.slane %v156, 1
    %163 = vst [vmem:[#allocation1] ss:$9 sm:$0xff] %v27
    %v164 = vld [vmem:[#allocation1] sm:$0xff]
    %v165 = vld [vmem:[#allocation1 + $0x9] sm:$0xff]
    %v166 = vld [vmem:[#allocation1 + $0x12] sm:$0xff]
    %v167 = vld [vmem:[#allocation1 + $0x1b] sm:$0xff]
    %v168 = vld [vmem:[#allocation1 + $0x24] sm:$0xff]
    %v169 = vld [vmem:[#allocation1 + $0x2d] sm:$0xff]
    %v170 = vld [vmem:[#allocation1 + $0x36] sm:$0xff]
    %v171 = vld [vmem:[#allocation1 + $0x3f] sm:$0xff]
    %v308 = vunpack.c.l.b16 %v28
    %v309 = vunpack.c.h.b16 %v28
    %v310 = vunpack.c.l.b16 %v29
    %v311 = vunpack.c.h.b16 %v29
    %v312 = vunpack.c.l.b16 %v30
    %v313 = vunpack.c.h.b16 %v30
    %v314 = vunpack.c.l.b16 %v31
    %v315 = vunpack.c.h.b16 %v31
    %v316 = vunpack.c.l.b16 %v32
    %v317 = vunpack.c.h.b16 %v32
    %v318 = vunpack.c.l.b16 %v33
    %v319 = vunpack.c.h.b16 %v33
    %v320 = vunpack.c.l.b16 %v34
    %v321 = vunpack.c.h.b16 %v34
    %v322 = vunpack.c.l.b16 %v35
    %v323 = vunpack.c.h.b16 %v35
    %v324 = vunpack.c.l.b16 %v36
    %v325 = vunpack.c.h.b16 %v36
    %v326 = vunpack.c.l.b16 %v37
    %v327 = vunpack.c.h.b16 %v37
    %v328 = vunpack.c.l.b16 %v38
    %v329 = vunpack.c.h.b16 %v38
    %v330 = vunpack.c.l.b16 %v39
    %v331 = vunpack.c.h.b16 %v39
    %v332 = vunpack.c.l.b16 %v40
    %v333 = vunpack.c.h.b16 %v40
    %v334 = vunpack.c.l.b16 %v41
    %v335 = vunpack.c.h.b16 %v41
    %v336 = vunpack.c.l.b16 %v42
    %v337 = vunpack.c.h.b16 %v42
    %v338 = vunpack.c.l.b16 %v43
    %v339 = vunpack.c.h.b16 %v43
    %v340 = vunpack.c.l.b16 %v44
    %v341 = vunpack.c.h.b16 %v44
    %v342 = vunpack.c.l.b16 %v45
    %v343 = vunpack.c.h.b16 %v45
    %v344 = vunpack.c.l.b16 %v46
    %v345 = vunpack.c.h.b16 %v46
    %v346 = vunpack.c.l.b16 %v47
    %v347 = vunpack.c.h.b16 %v47
    %v348 = vunpack.c.l.b16 %v48
    %v349 = vunpack.c.h.b16 %v48
    %v350 = vunpack.c.l.b16 %v49
    %v351 = vunpack.c.h.b16 %v49
    %v352 = vunpack.c.l.b16 %v50
    %v353 = vunpack.c.h.b16 %v50
    %v354 = vunpack.c.l.b16 %v51
    %v355 = vunpack.c.h.b16 %v51
    %v356 = vunpack.c.l.b16 %v52
    %v357 = vunpack.c.h.b16 %v52
    %v358 = vunpack.c.l.b16 %v53
    %v359 = vunpack.c.h.b16 %v53
    %v360 = vunpack.c.l.b16 %v54
    %v361 = vunpack.c.h.b16 %v54
    %v362 = vunpack.c.l.b16 %v55
    %v363 = vunpack.c.h.b16 %v55
    %v364 = vunpack.c.l.b16 %v56
    %v365 = vunpack.c.h.b16 %v56
    %v366 = vunpack.c.l.b16 %v57
    %v367 = vunpack.c.h.b16 %v57
    %v368 = vunpack.c.l.b16 %v58
    %v369 = vunpack.c.h.b16 %v58
    %v370 = vunpack.c.l.b16 %v59
    %v371 = vunpack.c.h.b16 %v59
    %v372 = vunpack.c.l.b16 %v60
    %v373 = vunpack.c.h.b16 %v60
    %v374 = vunpack.c.l.b16 %v61
    %v375 = vunpack.c.h.b16 %v61
    %v376 = vunpack.c.l.b16 %v62
    %v377 = vunpack.c.h.b16 %v62
    %v378 = vunpack.c.l.b16 %v63
    %v379 = vunpack.c.h.b16 %v63
    %v380 = vunpack.c.l.b16 %v64
    %v381 = vunpack.c.h.b16 %v64
    %v382 = vunpack.c.l.b16 %v65
    %v383 = vunpack.c.h.b16 %v65
    %v384 = vunpack.c.l.b16 %v66
    %v385 = vunpack.c.h.b16 %v66
    %v386 = vunpack.c.l.b16 %v67
    %v387 = vunpack.c.h.b16 %v67
    %v388 = vunpack.c.l.b16 %v68
    %v389 = vunpack.c.h.b16 %v68
    %v390 = vunpack.c.l.b16 %v69
    %v391 = vunpack.c.h.b16 %v69
    %v392 = vunpack.c.l.b16 %v70
    %v393 = vunpack.c.h.b16 %v70
    %v394 = vunpack.c.l.b16 %v71
    %v395 = vunpack.c.h.b16 %v71
    %v396 = vunpack.c.l.b16 %v72
    %v397 = vunpack.c.h.b16 %v72
    %v398 = vunpack.c.l.b16 %v73
    %v399 = vunpack.c.h.b16 %v73
    %v400 = vunpack.c.l.b16 %v74
    %v401 = vunpack.c.h.b16 %v74
    %v402 = vunpack.c.l.b16 %v75
    %v403 = vunpack.c.h.b16 %v75
    %v404 = vunpack.c.l.b16 %v76
    %v405 = vunpack.c.h.b16 %v76
    %v406 = vunpack.c.l.b16 %v77
    %v407 = vunpack.c.h.b16 %v77
    %v408 = vunpack.c.l.b16 %v78
    %v409 = vunpack.c.h.b16 %v78
    %v410 = vunpack.c.l.b16 %v79
    %v411 = vunpack.c.h.b16 %v79
    %v412 = vunpack.c.l.b16 %v80
    %v413 = vunpack.c.h.b16 %v80
    %v414 = vunpack.c.l.b16 %v81
    %v415 = vunpack.c.h.b16 %v81
    %v416 = vunpack.c.l.b16 %v82
    %v417 = vunpack.c.h.b16 %v82
    %v418 = vunpack.c.l.b16 %v83
    %v419 = vunpack.c.h.b16 %v83
    %v420 = vunpack.c.l.b16 %v84
    %v421 = vunpack.c.h.b16 %v84
    %v422 = vunpack.c.l.b16 %v85
    %v423 = vunpack.c.h.b16 %v85
    %v424 = vunpack.c.l.b16 %v86
    %v425 = vunpack.c.h.b16 %v86
    %v426 = vunpack.c.l.b16 %v87
    %v427 = vunpack.c.h.b16 %v87
    %v428 = vunpack.c.l.b16 %v88
    %v429 = vunpack.c.h.b16 %v88
    %v430 = vunpack.c.l.b16 %v89
    %v431 = vunpack.c.h.b16 %v89
    %v432 = vunpack.c.l.b16 %v90
    %v433 = vunpack.c.h.b16 %v90
    %v434 = vunpack.c.l.b16 %v91
    %v435 = vunpack.c.h.b16 %v91
    %v436 = vunpack.c.l.b16 %v92
    %v437 = vunpack.c.h.b16 %v92
    %v438 = vunpack.c.l.b16 %v93
    %v439 = vunpack.c.h.b16 %v93
    %v440 = vunpack.c.l.b16 %v94
    %v441 = vunpack.c.h.b16 %v94
    %v442 = vunpack.c.l.b16 %v95
    %v443 = vunpack.c.h.b16 %v95
    %v444 = vunpack.c.l.b16 %v96
    %v445 = vunpack.c.h.b16 %v96
    %v446 = vunpack.c.l.b16 %v97
    %v447 = vunpack.c.h.b16 %v97
    %v448 = vunpack.c.l.b16 %v98
    %v449 = vunpack.c.h.b16 %v98
    %v450 = vunpack.c.l.b16 %v99
    %v451 = vunpack.c.h.b16 %v99
    %v452 = vunpack.c.l.b16 %v100
    %v453 = vunpack.c.h.b16 %v100
    %v454 = vunpack.c.l.b16 %v101
    %v455 = vunpack.c.h.b16 %v101
    %v456 = vunpack.c.l.b16 %v102
    %v457 = vunpack.c.h.b16 %v102
    %v458 = vunpack.c.l.b16 %v103
    %v459 = vunpack.c.h.b16 %v103
    %v460 = vunpack.c.l.b16 %v104
    %v461 = vunpack.c.h.b16 %v104
    %v462 = vunpack.c.l.b16 %v105
    %v463 = vunpack.c.h.b16 %v105
    %v464 = vunpack.c.l.b16 %v106
    %v465 = vunpack.c.h.b16 %v106
    %v466 = vunpack.c.l.b16 %v107
    %v467 = vunpack.c.h.b16 %v107
    %v468 = vunpack.c.l.b16 %v108
    %v469 = vunpack.c.h.b16 %v108
    %v470 = vunpack.c.l.b16 %v109
    %v471 = vunpack.c.h.b16 %v109
    %v472 = vunpack.c.l.b16 %v110
    %v473 = vunpack.c.h.b16 %v110
    %v474 = vunpack.c.l.b16 %v111
    %v475 = vunpack.c.h.b16 %v111
    %v476 = vunpack.c.l.b16 %v112
    %v477 = vunpack.c.h.b16 %v112
    %v478 = vunpack.c.l.b16 %v113
    %v479 = vunpack.c.h.b16 %v113
    %v480 = vunpack.c.l.b16 %v114
    %v481 = vunpack.c.h.b16 %v114
    %v482 = vunpack.c.l.b16 %v115
    %v483 = vunpack.c.h.b16 %v115
    %v484 = vunpack.c.l.b16 %v116
    %v485 = vunpack.c.h.b16 %v116
    %v486 = vunpack.c.l.b16 %v117
    %v487 = vunpack.c.h.b16 %v117
    %v488 = vunpack.c.l.b16 %v118
    %v489 = vunpack.c.h.b16 %v118
    %v490 = vunpack.c.l.b16 %v119
    %v491 = vunpack.c.h.b16 %v119
    %v492 = vunpack.c.l.b16 %v120
    %v493 = vunpack.c.h.b16 %v120
    %v494 = vunpack.c.l.b16 %v121
    %v495 = vunpack.c.h.b16 %v121
    %v496 = vunpack.c.l.b16 %v122
    %v497 = vunpack.c.h.b16 %v122
    %v498 = vunpack.c.l.b16 %v123
    %v499 = vunpack.c.h.b16 %v123
    %v500 = vunpack.c.l.b16 %v124
    %v501 = vunpack.c.h.b16 %v124
    %v502 = vunpack.c.l.b16 %v125
    %v503 = vunpack.c.h.b16 %v125
    %v504 = vunpack.c.l.b16 %v126
    %v505 = vunpack.c.h.b16 %v126
    %v506 = vunpack.c.l.b16 %v127
    %v507 = vunpack.c.h.b16 %v127
    %v508 = vunpack.c.l.b16 %v128
    %v509 = vunpack.c.h.b16 %v128
    %v510 = vunpack.c.l.b16 %v129
    %v511 = vunpack.c.h.b16 %v129
    %v512 = vunpack.c.l.b16 %v130
    %v513 = vunpack.c.h.b16 %v130
    %v514 = vunpack.c.l.b16 %v131
    %v515 = vunpack.c.h.b16 %v131
    %v516 = vunpack.c.l.b16 %v132
    %v517 = vunpack.c.h.b16 %v132
    %v518 = vunpack.c.l.b16 %v133
    %v519 = vunpack.c.h.b16 %v133
    %v520 = vunpack.c.l.b16 %v134
    %v521 = vunpack.c.h.b16 %v134
    %v522 = vunpack.c.l.b16 %v135
    %v523 = vunpack.c.h.b16 %v135
    %v524 = vunpack.c.l.b16 %v136
    %v525 = vunpack.c.h.b16 %v136
    %v526 = vunpack.c.l.b16 %v137
    %v527 = vunpack.c.h.b16 %v137
    %v528 = vunpack.c.l.b16 %v138
    %v529 = vunpack.c.h.b16 %v138
    %v530 = vunpack.c.l.b16 %v139
    %v531 = vunpack.c.h.b16 %v139
    %v532 = vunpack.c.l.b16 %v140
    %v533 = vunpack.c.h.b16 %v140
    %v534 = vunpack.c.l.b16 %v141
    %v535 = vunpack.c.h.b16 %v141
    %v536 = vunpack.c.l.b16 %v142
    %v537 = vunpack.c.h.b16 %v142
    %v538 = vunpack.c.l.b16 %v143
    %v539 = vunpack.c.h.b16 %v143
    %v540 = vunpack.c.l.b16 %v144
    %v541 = vunpack.c.h.b16 %v144
    %v542 = vunpack.c.l.b16 %v145
    %v543 = vunpack.c.h.b16 %v145
    %v544 = vunpack.c.l.b16 %v146
    %v545 = vunpack.c.h.b16 %v146
    %v546 = vunpack.c.l.b16 %v147
    %v547 = vunpack.c.h.b16 %v147
    %v548 = vunpack.c.l.b16 %v148
    %v549 = vunpack.c.h.b16 %v148
    %v550 = vunpack.c.l.b16 %v149
    %v551 = vunpack.c.h.b16 %v149
    %v552 = vunpack.c.l.b16 %v150
    %v553 = vunpack.c.h.b16 %v150
    %v554 = vunpack.c.l.b16 %v151
    %v555 = vunpack.c.h.b16 %v151
    %v556 = vunpack.c.l.b16 %v152
    %v557 = vunpack.c.h.b16 %v152
    %v558 = vunpack.c.l.b16 %v153
    %v559 = vunpack.c.h.b16 %v153
    %v560 = vunpack.c.l.b16 %v154
    %v561 = vunpack.c.h.b16 %v154
    %v562 = vunpack.c.l.b16 %v155
    %v563 = vunpack.c.h.b16 %v155
    %v564 = vpack.c.b16 %v310, %v308
    %v565 = vpack.c.b16 %v311, %v309
    %v566 = vpack.c.b16 %v314, %v312
    %v567 = vpack.c.b16 %v315, %v313
    %v568 = vpack.c.b16 %v318, %v316
    %v569 = vpack.c.b16 %v319, %v317
    %v570 = vpack.c.b16 %v322, %v320
    %v571 = vpack.c.b16 %v323, %v321
    %v572 = vpack.c.b16 %v326, %v324
    %v573 = vpack.c.b16 %v327, %v325
    %v574 = vpack.c.b16 %v330, %v328
    %v575 = vpack.c.b16 %v331, %v329
    %v576 = vpack.c.b16 %v334, %v332
    %v577 = vpack.c.b16 %v335, %v333
    %v578 = vpack.c.b16 %v338, %v336
    %v579 = vpack.c.b16 %v339, %v337
    %v580 = vpack.c.b16 %v342, %v340
    %v581 = vpack.c.b16 %v343, %v341
    %v582 = vpack.c.b16 %v346, %v344
    %v583 = vpack.c.b16 %v347, %v345
    %v584 = vpack.c.b16 %v350, %v348
    %v585 = vpack.c.b16 %v351, %v349
    %v586 = vpack.c.b16 %v354, %v352
    %v587 = vpack.c.b16 %v355, %v353
    %v588 = vpack.c.b16 %v358, %v356
    %v589 = vpack.c.b16 %v359, %v357
    %v590 = vpack.c.b16 %v362, %v360
    %v591 = vpack.c.b16 %v363, %v361
    %v592 = vpack.c.b16 %v366, %v364
    %v593 = vpack.c.b16 %v367, %v365
    %v594 = vpack.c.b16 %v370, %v368
    %v595 = vpack.c.b16 %v371, %v369
    %v596 = vpack.c.b16 %v374, %v372
    %v597 = vpack.c.b16 %v375, %v373
    %v598 = vpack.c.b16 %v378, %v376
    %v599 = vpack.c.b16 %v379, %v377
    %v600 = vpack.c.b16 %v382, %v380
    %v601 = vpack.c.b16 %v383, %v381
    %v602 = vpack.c.b16 %v386, %v384
    %v603 = vpack.c.b16 %v387, %v385
    %v604 = vpack.c.b16 %v390, %v388
    %v605 = vpack.c.b16 %v391, %v389
    %v606 = vpack.c.b16 %v394, %v392
    %v607 = vpack.c.b16 %v395, %v393
    %v608 = vpack.c.b16 %v398, %v396
    %v609 = vpack.c.b16 %v399, %v397
    %v610 = vpack.c.b16 %v402, %v400
    %v611 = vpack.c.b16 %v403, %v401
    %v612 = vpack.c.b16 %v406, %v404
    %v613 = vpack.c.b16 %v407, %v405
    %v614 = vpack.c.b16 %v410, %v408
    %v615 = vpack.c.b16 %v411, %v409
    %v616 = vpack.c.b16 %v414, %v412
    %v617 = vpack.c.b16 %v415, %v413
    %v618 = vpack.c.b16 %v418, %v416
    %v619 = vpack.c.b16 %v419, %v417
    %v620 = vpack.c.b16 %v422, %v420
    %v621 = vpack.c.b16 %v423, %v421
    %v622 = vpack.c.b16 %v426, %v424
    %v623 = vpack.c.b16 %v427, %v425
    %v624 = vpack.c.b16 %v430, %v428
    %v625 = vpack.c.b16 %v431, %v429
    %v626 = vpack.c.b16 %v434, %v432
    %v627 = vpack.c.b16 %v435, %v433
    %v628 = vpack.c.b16 %v438, %v436
    %v629 = vpack.c.b16 %v439, %v437
    %v630 = vpack.c.b16 %v442, %v440
    %v631 = vpack.c.b16 %v443, %v441
    %v632 = vpack.c.b16 %v446, %v444
    %v633 = vpack.c.b16 %v447, %v445
    %v634 = vpack.c.b16 %v450, %v448
    %v635 = vpack.c.b16 %v451, %v449
    %v636 = vpack.c.b16 %v454, %v452
    %v637 = vpack.c.b16 %v455, %v453
    %v638 = vpack.c.b16 %v458, %v456
    %v639 = vpack.c.b16 %v459, %v457
    %v640 = vpack.c.b16 %v462, %v460
    %v641 = vpack.c.b16 %v463, %v461
    %v642 = vpack.c.b16 %v466, %v464
    %v643 = vpack.c.b16 %v467, %v465
    %v644 = vpack.c.b16 %v470, %v468
    %v645 = vpack.c.b16 %v471, %v469
    %v646 = vpack.c.b16 %v474, %v472
    %v647 = vpack.c.b16 %v475, %v473
    %v648 = vpack.c.b16 %v478, %v476
    %v649 = vpack.c.b16 %v479, %v477
    %v650 = vpack.c.b16 %v482, %v480
    %v651 = vpack.c.b16 %v483, %v481
    %v652 = vpack.c.b16 %v486, %v484
    %v653 = vpack.c.b16 %v487, %v485
    %v654 = vpack.c.b16 %v490, %v488
    %v655 = vpack.c.b16 %v491, %v489
    %v656 = vpack.c.b16 %v494, %v492
    %v657 = vpack.c.b16 %v495, %v493
    %v658 = vpack.c.b16 %v498, %v496
    %v659 = vpack.c.b16 %v499, %v497
    %v660 = vpack.c.b16 %v502, %v500
    %v661 = vpack.c.b16 %v503, %v501
    %v662 = vpack.c.b16 %v506, %v504
    %v663 = vpack.c.b16 %v507, %v505
    %v664 = vpack.c.b16 %v510, %v508
    %v665 = vpack.c.b16 %v511, %v509
    %v666 = vpack.c.b16 %v514, %v512
    %v667 = vpack.c.b16 %v515, %v513
    %v668 = vpack.c.b16 %v518, %v516
    %v669 = vpack.c.b16 %v519, %v517
    %v670 = vpack.c.b16 %v522, %v520
    %v671 = vpack.c.b16 %v523, %v521
    %v672 = vpack.c.b16 %v526, %v524
    %v673 = vpack.c.b16 %v527, %v525
    %v674 = vpack.c.b16 %v530, %v528
    %v675 = vpack.c.b16 %v531, %v529
    %v676 = vpack.c.b16 %v534, %v532
    %v677 = vpack.c.b16 %v535, %v533
    %v678 = vpack.c.b16 %v538, %v536
    %v679 = vpack.c.b16 %v539, %v537
    %v680 = vpack.c.b16 %v542, %v540
    %v681 = vpack.c.b16 %v543, %v541
    %v682 = vpack.c.b16 %v546, %v544
    %v683 = vpack.c.b16 %v547, %v545
    %v684 = vpack.c.b16 %v550, %v548
    %v685 = vpack.c.b16 %v551, %v549
    %v686 = vpack.c.b16 %v554, %v552
    %v687 = vpack.c.b16 %v555, %v553
    %v688 = vpack.c.b16 %v558, %v556
    %v689 = vpack.c.b16 %v559, %v557
    %v690 = vpack.c.b16 %v562, %v560
    %v691 = vpack.c.b16 %v563, %v561
    %820 = vmatpush.bf16.msra.mxu0 %v578
    %821 = vmatpush.bf16.msra.mxu0 %v576
    %822 = vmatpush.bf16.msra.mxu0 %v574
    %823 = vmatpush.bf16.msra.mxu0 %v572
    %824 = vmatpush.bf16.msra.mxu0 %v570
    %825 = vmatpush.bf16.msra.mxu0 %v568
    %826 = vmatpush.bf16.msra.mxu0 %v566
    %827 = vmatpush.bf16.msra.mxu0 %v564
    %828 = vmatmul.bf16.gmra.mxu0 %v164
    %v829 = vpop.f32.mrf.mxu0
    %v830 = vadd.f32 %v158, %v829
    %v831 = vpop.f32.mrf.mxu0
    %832 = vdwg.mxu0
    %833 = vmatpush.bf16.msra.mxu0 %v594
    %834 = vmatpush.bf16.msra.mxu0 %v592
    %835 = vmatpush.bf16.msra.mxu0 %v590
    %836 = vmatpush.bf16.msra.mxu0 %v588
    %837 = vmatpush.bf16.msra.mxu0 %v586
    %838 = vmatpush.bf16.msra.mxu0 %v584
    %839 = vmatpush.bf16.msra.mxu0 %v582
    %840 = vmatpush.bf16.msra.mxu0 %v580
    %841 = vmatmul.bf16.gmra.mxu0 %v165
    %v842 = vpop.f32.mrf.mxu0
    %v843 = vadd.f32 %v830, %v842
    %v844 = vpop.f32.mrf.mxu0
    %845 = vdwg.mxu0
    %846 = vmatpush.bf16.msra.mxu0 %v610
    %847 = vmatpush.bf16.msra.mxu0 %v608
    %848 = vmatpush.bf16.msra.mxu0 %v606
    %849 = vmatpush.bf16.msra.mxu0 %v604
    %850 = vmatpush.bf16.msra.mxu0 %v602
    %851 = vmatpush.bf16.msra.mxu0 %v600
    %852 = vmatpush.bf16.msra.mxu0 %v598
    %853 = vmatpush.bf16.msra.mxu0 %v596
    %854 = vmatmul.bf16.gmra.mxu0 %v166
    %v855 = vpop.f32.mrf.mxu0
    %v856 = vadd.f32 %v843, %v855
    %v857 = vpop.f32.mrf.mxu0
    %858 = vdwg.mxu0
    %859 = vmatpush.bf16.msra.mxu0 %v626
    %860 = vmatpush.bf16.msra.mxu0 %v624
    %861 = vmatpush.bf16.msra.mxu0 %v622
    %862 = vmatpush.bf16.msra.mxu0 %v620
    %863 = vmatpush.bf16.msra.mxu0 %v618
    %864 = vmatpush.bf16.msra.mxu0 %v616
    %865 = vmatpush.bf16.msra.mxu0 %v614
    %866 = vmatpush.bf16.msra.mxu0 %v612
    %867 = vmatmul.bf16.gmra.mxu0 %v167
    %v868 = vpop.f32.mrf.mxu0
    %v869 = vadd.f32 %v856, %v868
    %v870 = vpop.f32.mrf.mxu0
    %871 = vdwg.mxu0
    %872 = vmatpush.bf16.msra.mxu0 %v642
    %873 = vmatpush.bf16.msra.mxu0 %v640
    %874 = vmatpush.bf16.msra.mxu0 %v638
    %875 = vmatpush.bf16.msra.mxu0 %v636
    %876 = vmatpush.bf16.msra.mxu0 %v634
    %877 = vmatpush.bf16.msra.mxu0 %v632
    %878 = vmatpush.bf16.msra.mxu0 %v630
    %879 = vmatpush.bf16.msra.mxu0 %v628
    %880 = vmatmul.bf16.gmra.mxu0 %v168
    %v881 = vpop.f32.mrf.mxu0
    %v882 = vadd.f32 %v869, %v881
    %v883 = vpop.f32.mrf.mxu0
    %884 = vdwg.mxu0
    %885 = vmatpush.bf16.msra.mxu0 %v658
    %886 = vmatpush.bf16.msra.mxu0 %v656
    %887 = vmatpush.bf16.msra.mxu0 %v654
    %888 = vmatpush.bf16.msra.mxu0 %v652
    %889 = vmatpush.bf16.msra.mxu0 %v650
    %890 = vmatpush.bf16.msra.mxu0 %v648
    %891 = vmatpush.bf16.msra.mxu0 %v646
    %892 = vmatpush.bf16.msra.mxu0 %v644
    %893 = vmatmul.bf16.gmra.mxu0 %v169
    %v894 = vpop.f32.mrf.mxu0
    %v895 = vadd.f32 %v882, %v894
    %v896 = vpop.f32.mrf.mxu0
    %897 = vdwg.mxu0
    %898 = vmatpush.bf16.msra.mxu0 %v674
    %899 = vmatpush.bf16.msra.mxu0 %v672
    %900 = vmatpush.bf16.msra.mxu0 %v670
    %901 = vmatpush.bf16.msra.mxu0 %v668
    %902 = vmatpush.bf16.msra.mxu0 %v666
    %903 = vmatpush.bf16.msra.mxu0 %v664
    %904 = vmatpush.bf16.msra.mxu0 %v662
    %905 = vmatpush.bf16.msra.mxu0 %v660
    %906 = vmatmul.bf16.gmra.mxu0 %v170
    %v907 = vpop.f32.mrf.mxu0
    %v908 = vadd.f32 %v895, %v907
    %v909 = vpop.f32.mrf.mxu0
    %910 = vdwg.mxu0
    %911 = vmatpush.bf16.msra.mxu0 %v690
    %912 = vmatpush.bf16.msra.mxu0 %v688
    %913 = vmatpush.bf16.msra.mxu0 %v686
    %914 = vmatpush.bf16.msra.mxu0 %v684
    %915 = vmatpush.bf16.msra.mxu0 %v682
    %916 = vmatpush.bf16.msra.mxu0 %v680
    %917 = vmatpush.bf16.msra.mxu0 %v678
    %918 = vmatpush.bf16.msra.mxu0 %v676
    %919 = vmatmul.bf16.gmra.mxu0 %v171
    %v920 = vpop.f32.mrf.mxu0
    %v921 = vadd.f32 %v908, %v920
    %v922 = vpop.f32.mrf.mxu0
    %923 = vdwg.mxu0
    %924 = vmatpush.bf16.msra.mxu0 %v579
    %925 = vmatpush.bf16.msra.mxu0 %v577
    %926 = vmatpush.bf16.msra.mxu0 %v575
    %927 = vmatpush.bf16.msra.mxu0 %v573
    %928 = vmatpush.bf16.msra.mxu0 %v571
    %929 = vmatpush.bf16.msra.mxu0 %v569
    %930 = vmatpush.bf16.msra.mxu0 %v567
    %931 = vmatpush.bf16.msra.mxu0 %v565
    %932 = vmatmul.bf16.gmra.mxu0 %v164
    %v933 = vpop.f32.mrf.mxu0
    %v934 = vadd.f32 %v159, %v933
    %v935 = vpop.f32.mrf.mxu0
    %936 = vdwg.mxu0
    %937 = vmatpush.bf16.msra.mxu0 %v595
    %938 = vmatpush.bf16.msra.mxu0 %v593
    %939 = vmatpush.bf16.msra.mxu0 %v591
    %940 = vmatpush.bf16.msra.mxu0 %v589
    %941 = vmatpush.bf16.msra.mxu0 %v587
    %942 = vmatpush.bf16.msra.mxu0 %v585
    %943 = vmatpush.bf16.msra.mxu0 %v583
    %944 = vmatpush.bf16.msra.mxu0 %v581
    %945 = vmatmul.bf16.gmra.mxu0 %v165
    %v946 = vpop.f32.mrf.mxu0
    %v947 = vadd.f32 %v934, %v946
    %v948 = vpop.f32.mrf.mxu0
    %949 = vdwg.mxu0
    %950 = vmatpush.bf16.msra.mxu0 %v611
    %951 = vmatpush.bf16.msra.mxu0 %v609
    %952 = vmatpush.bf16.msra.mxu0 %v607
    %953 = vmatpush.bf16.msra.mxu0 %v605
    %954 = vmatpush.bf16.msra.mxu0 %v603
    %955 = vmatpush.bf16.msra.mxu0 %v601
    %956 = vmatpush.bf16.msra.mxu0 %v599
    %957 = vmatpush.bf16.msra.mxu0 %v597
    %958 = vmatmul.bf16.gmra.mxu0 %v166
    %v959 = vpop.f32.mrf.mxu0
    %v960 = vadd.f32 %v947, %v959
    %v961 = vpop.f32.mrf.mxu0
    %962 = vdwg.mxu0
    %963 = vmatpush.bf16.msra.mxu0 %v627
    %964 = vmatpush.bf16.msra.mxu0 %v625
    %965 = vmatpush.bf16.msra.mxu0 %v623
    %966 = vmatpush.bf16.msra.mxu0 %v621
    %967 = vmatpush.bf16.msra.mxu0 %v619
    %968 = vmatpush.bf16.msra.mxu0 %v617
    %969 = vmatpush.bf16.msra.mxu0 %v615
    %970 = vmatpush.bf16.msra.mxu0 %v613
    %971 = vmatmul.bf16.gmra.mxu0 %v167
    %v972 = vpop.f32.mrf.mxu0
    %v973 = vadd.f32 %v960, %v972
    %v974 = vpop.f32.mrf.mxu0
    %975 = vdwg.mxu0
    %976 = vmatpush.bf16.msra.mxu0 %v643
    %977 = vmatpush.bf16.msra.mxu0 %v641
    %978 = vmatpush.bf16.msra.mxu0 %v639
    %979 = vmatpush.bf16.msra.mxu0 %v637
    %980 = vmatpush.bf16.msra.mxu0 %v635
    %981 = vmatpush.bf16.msra.mxu0 %v633
    %982 = vmatpush.bf16.msra.mxu0 %v631
    %983 = vmatpush.bf16.msra.mxu0 %v629
    %984 = vmatmul.bf16.gmra.mxu0 %v168
    %v985 = vpop.f32.mrf.mxu0
    %v986 = vadd.f32 %v973, %v985
    %v987 = vpop.f32.mrf.mxu0
    %988 = vdwg.mxu0
    %989 = vmatpush.bf16.msra.mxu0 %v659
    %990 = vmatpush.bf16.msra.mxu0 %v657
    %991 = vmatpush.bf16.msra.mxu0 %v655
    %992 = vmatpush.bf16.msra.mxu0 %v653
    %993 = vmatpush.bf16.msra.mxu0 %v651
    %994 = vmatpush.bf16.msra.mxu0 %v649
    %995 = vmatpush.bf16.msra.mxu0 %v647
    %996 = vmatpush.bf16.msra.mxu0 %v645
    %997 = vmatmul.bf16.gmra.mxu0 %v169
    %v998 = vpop.f32.mrf.mxu0
    %v999 = vadd.f32 %v986, %v998
    %v1000 = vpop.f32.mrf.mxu0
    %1001 = vdwg.mxu0
    %1002 = vmatpush.bf16.msra.mxu0 %v675
    %1003 = vmatpush.bf16.msra.mxu0 %v673
    %1004 = vmatpush.bf16.msra.mxu0 %v671
    %1005 = vmatpush.bf16.msra.mxu0 %v669
    %1006 = vmatpush.bf16.msra.mxu0 %v667
    %1007 = vmatpush.bf16.msra.mxu0 %v665
    %1008 = vmatpush.bf16.msra.mxu0 %v663
    %1009 = vmatpush.bf16.msra.mxu0 %v661
    %1010 = vmatmul.bf16.gmra.mxu0 %v170
    %v1011 = vpop.f32.mrf.mxu0
    %v1012 = vadd.f32 %v999, %v1011
    %v1013 = vpop.f32.mrf.mxu0
    %1014 = vdwg.mxu0
    %1015 = vmatpush.bf16.msra.mxu0 %v691
    %1016 = vmatpush.bf16.msra.mxu0 %v689
    %1017 = vmatpush.bf16.msra.mxu0 %v687
    %1018 = vmatpush.bf16.msra.mxu0 %v685
    %1019 = vmatpush.bf16.msra.mxu0 %v683
    %1020 = vmatpush.bf16.msra.mxu0 %v681
    %1021 = vmatpush.bf16.msra.mxu0 %v679
    %1022 = vmatpush.bf16.msra.mxu0 %v677
    %1023 = vmatmul.bf16.gmra.mxu0 %v171
    %v1024 = vpop.f32.mrf.mxu0
    %v1025 = vadd.f32 %v1012, %v1024
    %v1026 = vpop.f32.mrf.mxu0
    %1027 = vdwg.mxu0
    %v1028 = vmax.f32 %v921, 0.0
    %v1029 = vmax.f32 %v1025, 0.0
    %v1030 = vpack.c.bf16 %v1028, %v1028
    %v1031 = vpack.c.bf16 %v1029, %v1029
    %v1032 = vld [vmem:[%s3] sm:$0xff]
    %v1033 = vld [vmem:[%s3 + $0x8] sm:$0xff]
    %v1034 = vld [vmem:[%s3 + $0x10] sm:$0xff]
    %v1035 = vld [vmem:[%s3 + $0x18] sm:$0xff]
    %v1036 = vld [vmem:[%s3 + $0x20] sm:$0xff]
    %v1037 = vld [vmem:[%s3 + $0x28] sm:$0xff]
    %v1038 = vld [vmem:[%s3 + $0x30] sm:$0xff]
    %v1039 = vld [vmem:[%s3 + $0x38] sm:$0xff]
    %v1040 = vld [vmem:[%s3 + $0x40] sm:$0xff]
    %v1041 = vld [vmem:[%s3 + $0x48] sm:$0xff]
    %v1042 = vld [vmem:[%s3 + $0x50] sm:$0xff]
    %v1043 = vld [vmem:[%s3 + $0x58] sm:$0xff]
    %v1044 = vld [vmem:[%s3 + $0x60] sm:$0xff]
    %v1045 = vld [vmem:[%s3 + $0x68] sm:$0xff]
    %v1046 = vld [vmem:[%s3 + $0x70] sm:$0xff]
    %v1047 = vld [vmem:[%s3 + $0x78] sm:$0xff]
    %v1048 = vld [vmem:[%s3 + $0x80] sm:$0xff]
    %v1049 = vld [vmem:[%s3 + $0x88] sm:$0xff]
    %v1050 = vld [vmem:[%s3 + $0x90] sm:$0xff]
    %v1051 = vld [vmem:[%s3 + $0x98] sm:$0xff]
    %v1052 = vld [vmem:[%s3 + $0xa0] sm:$0xff]
    %v1053 = vld [vmem:[%s3 + $0xa8] sm:$0xff]
    %v1054 = vld [vmem:[%s3 + $0xb0] sm:$0xff]
    %v1055 = vld [vmem:[%s3 + $0xb8] sm:$0xff]
    %v1056 = vld [vmem:[%s3 + $0xc0] sm:$0xff]
    %v1057 = vld [vmem:[%s3 + $0xc8] sm:$0xff]
    %v1058 = vld [vmem:[%s3 + $0xd0] sm:$0xff]
    %v1059 = vld [vmem:[%s3 + $0xd8] sm:$0xff]
    %v1060 = vld [vmem:[%s3 + $0xe0] sm:$0xff]
    %v1061 = vld [vmem:[%s3 + $0xe8] sm:$0xff]
    %v1062 = vld [vmem:[%s3 + $0xf0] sm:$0xff]
    %v1063 = vld [vmem:[%s3 + $0xf8] sm:$0xff]
    %v1064 = vld [vmem:[%s4] sm:$0x3]
    %v1066 = vperm.slane %v1064, 0
    %v1067 = vperm.slane %v1064, 1
    %v1102 = vunpack.c.l.b16 %v1032
    %v1103 = vunpack.c.h.b16 %v1032
    %v1104 = vunpack.c.l.b16 %v1033
    %v1105 = vunpack.c.h.b16 %v1033
    %v1106 = vunpack.c.l.b16 %v1034
    %v1107 = vunpack.c.h.b16 %v1034
    %v1108 = vunpack.c.l.b16 %v1035
    %v1109 = vunpack.c.h.b16 %v1035
    %v1110 = vunpack.c.l.b16 %v1036
    %v1111 = vunpack.c.h.b16 %v1036
    %v1112 = vunpack.c.l.b16 %v1037
    %v1113 = vunpack.c.h.b16 %v1037
    %v1114 = vunpack.c.l.b16 %v1038
    %v1115 = vunpack.c.h.b16 %v1038
    %v1116 = vunpack.c.l.b16 %v1039
    %v1117 = vunpack.c.h.b16 %v1039
    %v1118 = vunpack.c.l.b16 %v1040
    %v1119 = vunpack.c.h.b16 %v1040
    %v1120 = vunpack.c.l.b16 %v1041
    %v1121 = vunpack.c.h.b16 %v1041
    %v1122 = vunpack.c.l.b16 %v1042
    %v1123 = vunpack.c.h.b16 %v1042
    %v1124 = vunpack.c.l.b16 %v1043
    %v1125 = vunpack.c.h.b16 %v1043
    %v1126 = vunpack.c.l.b16 %v1044
    %v1127 = vunpack.c.h.b16 %v1044
    %v1128 = vunpack.c.l.b16 %v1045
    %v1129 = vunpack.c.h.b16 %v1045
    %v1130 = vunpack.c.l.b16 %v1046
    %v1131 = vunpack.c.h.b16 %v1046
    %v1132 = vunpack.c.l.b16 %v1047
    %v1133 = vunpack.c.h.b16 %v1047
    %v1134 = vunpack.c.l.b16 %v1048
    %v1135 = vunpack.c.h.b16 %v1048
    %v1136 = vunpack.c.l.b16 %v1049
    %v1137 = vunpack.c.h.b16 %v1049
    %v1138 = vunpack.c.l.b16 %v1050
    %v1139 = vunpack.c.h.b16 %v1050
    %v1140 = vunpack.c.l.b16 %v1051
    %v1141 = vunpack.c.h.b16 %v1051
    %v1142 = vunpack.c.l.b16 %v1052
    %v1143 = vunpack.c.h.b16 %v1052
    %v1144 = vunpack.c.l.b16 %v1053
    %v1145 = vunpack.c.h.b16 %v1053
    %v1146 = vunpack.c.l.b16 %v1054
    %v1147 = vunpack.c.h.b16 %v1054
    %v1148 = vunpack.c.l.b16 %v1055
    %v1149 = vunpack.c.h.b16 %v1055
    %v1150 = vunpack.c.l.b16 %v1056
    %v1151 = vunpack.c.h.b16 %v1056
    %v1152 = vunpack.c.l.b16 %v1057
    %v1153 = vunpack.c.h.b16 %v1057
    %v1154 = vunpack.c.l.b16 %v1058
    %v1155 = vunpack.c.h.b16 %v1058
    %v1156 = vunpack.c.l.b16 %v1059
    %v1157 = vunpack.c.h.b16 %v1059
    %v1158 = vunpack.c.l.b16 %v1060
    %v1159 = vunpack.c.h.b16 %v1060
    %v1160 = vunpack.c.l.b16 %v1061
    %v1161 = vunpack.c.h.b16 %v1061
    %v1162 = vunpack.c.l.b16 %v1062
    %v1163 = vunpack.c.h.b16 %v1062
    %v1164 = vunpack.c.l.b16 %v1063
    %v1165 = vunpack.c.h.b16 %v1063
    %v1166 = vpack.c.b16 %v1104, %v1102
    %v1167 = vpack.c.b16 %v1105, %v1103
    %v1168 = vpack.c.b16 %v1108, %v1106
    %v1169 = vpack.c.b16 %v1109, %v1107
    %v1170 = vpack.c.b16 %v1112, %v1110
    %v1171 = vpack.c.b16 %v1113, %v1111
    %v1172 = vpack.c.b16 %v1116, %v1114
    %v1173 = vpack.c.b16 %v1117, %v1115
    %v1174 = vpack.c.b16 %v1120, %v1118
    %v1175 = vpack.c.b16 %v1121, %v1119
    %v1176 = vpack.c.b16 %v1124, %v1122
    %v1177 = vpack.c.b16 %v1125, %v1123
    %v1178 = vpack.c.b16 %v1128, %v1126
    %v1179 = vpack.c.b16 %v1129, %v1127
    %v1180 = vpack.c.b16 %v1132, %v1130
    %v1181 = vpack.c.b16 %v1133, %v1131
    %v1182 = vpack.c.b16 %v1136, %v1134
    %v1183 = vpack.c.b16 %v1137, %v1135
    %v1184 = vpack.c.b16 %v1140, %v1138
    %v1185 = vpack.c.b16 %v1141, %v1139
    %v1186 = vpack.c.b16 %v1144, %v1142
    %v1187 = vpack.c.b16 %v1145, %v1143
    %v1188 = vpack.c.b16 %v1148, %v1146
    %v1189 = vpack.c.b16 %v1149, %v1147
    %v1190 = vpack.c.b16 %v1152, %v1150
    %v1191 = vpack.c.b16 %v1153, %v1151
    %v1192 = vpack.c.b16 %v1156, %v1154
    %v1193 = vpack.c.b16 %v1157, %v1155
    %v1194 = vpack.c.b16 %v1160, %v1158
    %v1195 = vpack.c.b16 %v1161, %v1159
    %v1196 = vpack.c.b16 %v1164, %v1162
    %v1197 = vpack.c.b16 %v1165, %v1163
    %1230 = vmatpush.bf16.msra.mxu0 %v1180
    %1231 = vmatpush.bf16.msra.mxu0 %v1178
    %1232 = vmatpush.bf16.msra.mxu0 %v1176
    %1233 = vmatpush.bf16.msra.mxu0 %v1174
    %1234 = vmatpush.bf16.msra.mxu0 %v1172
    %1235 = vmatpush.bf16.msra.mxu0 %v1170
    %1236 = vmatpush.bf16.msra.mxu0 %v1168
    %1237 = vmatpush.bf16.msra.mxu0 %v1166
    %1238 = vmatmul.bf16.gmra.mxu0 %v1030
    %v1239 = vpop.f32.mrf.mxu0
    %v1240 = vadd.f32 %v1066, %v1239
    %v1241 = vpop.f32.mrf.mxu0
    %1242 = vdwg.mxu0
    %1243 = vmatpush.bf16.msra.mxu0 %v1196
    %1244 = vmatpush.bf16.msra.mxu0 %v1194
    %1245 = vmatpush.bf16.msra.mxu0 %v1192
    %1246 = vmatpush.bf16.msra.mxu0 %v1190
    %1247 = vmatpush.bf16.msra.mxu0 %v1188
    %1248 = vmatpush.bf16.msra.mxu0 %v1186
    %1249 = vmatpush.bf16.msra.mxu0 %v1184
    %1250 = vmatpush.bf16.msra.mxu0 %v1182
    %1251 = vmatmul.bf16.gmra.mxu0 %v1031
    %v1252 = vpop.f32.mrf.mxu0
    %v1253 = vadd.f32 %v1240, %v1252
    %v1254 = vpop.f32.mrf.mxu0
    %1255 = vdwg.mxu0
    %1256 = vmatpush.bf16.msra.mxu0 %v1181
    %1257 = vmatpush.bf16.msra.mxu0 %v1179
    %1258 = vmatpush.bf16.msra.mxu0 %v1177
    %1259 = vmatpush.bf16.msra.mxu0 %v1175
    %1260 = vmatpush.bf16.msra.mxu0 %v1173
    %1261 = vmatpush.bf16.msra.mxu0 %v1171
    %1262 = vmatpush.bf16.msra.mxu0 %v1169
    %1263 = vmatpush.bf16.msra.mxu0 %v1167
    %1264 = vmatmul.bf16.gmra.mxu0 %v1030
    %v1265 = vpop.f32.mrf.mxu0
    %v1266 = vadd.f32 %v1067, %v1265
    %v1267 = vpop.f32.mrf.mxu0
    %1268 = vdwg.mxu0
    %1269 = vmatpush.bf16.msra.mxu0 %v1197
    %1270 = vmatpush.bf16.msra.mxu0 %v1195
    %1271 = vmatpush.bf16.msra.mxu0 %v1193
    %1272 = vmatpush.bf16.msra.mxu0 %v1191
    %1273 = vmatpush.bf16.msra.mxu0 %v1189
    %1274 = vmatpush.bf16.msra.mxu0 %v1187
    %1275 = vmatpush.bf16.msra.mxu0 %v1185
    %1276 = vmatpush.bf16.msra.mxu0 %v1183
    %1277 = vmatmul.bf16.gmra.mxu0 %v1031
    %v1278 = vpop.f32.mrf.mxu0
    %v1279 = vadd.f32 %v1266, %v1278
    %v1280 = vpop.f32.mrf.mxu0
    %1281 = vdwg.mxu0
    %v1282 = vmax.f32 %v1253, 0.0
    %v1283 = vmax.f32 %v1279, 0.0
    %v1284 = vpack.c.bf16 %v1282, %v1282
    %v1285 = vpack.c.bf16 %v1283, %v1283
    %v1286 = vld [vmem:[%s5] sm:$0xf]
    %v1287 = vld [vmem:[%s5 + $0x4] sm:$0xf]
    %v1288 = vld [vmem:[%s5 + $0x8] sm:$0xf]
    %v1289 = vld [vmem:[%s5 + $0xc] sm:$0xf]
    %v1290 = vld [vmem:[%s5 + $0x10] sm:$0xf]
    %v1291 = vld [vmem:[%s5 + $0x14] sm:$0xf]
    %v1292 = vld [vmem:[%s5 + $0x18] sm:$0xf]
    %v1293 = vld [vmem:[%s5 + $0x1c] sm:$0xf]
    %v1294 = vld [vmem:[%s5 + $0x20] sm:$0xf]
    %v1295 = vld [vmem:[%s5 + $0x24] sm:$0xf]
    %v1296 = vld [vmem:[%s5 + $0x28] sm:$0xf]
    %v1297 = vld [vmem:[%s5 + $0x2c] sm:$0xf]
    %v1298 = vld [vmem:[%s5 + $0x30] sm:$0xf]
    %v1299 = vld [vmem:[%s5 + $0x34] sm:$0xf]
    %v1300 = vld [vmem:[%s5 + $0x38] sm:$0xf]
    %v1301 = vld [vmem:[%s5 + $0x3c] sm:$0xf]
    %v1302 = vld [vmem:[%s5 + $0x40] sm:$0xf]
    %v1303 = vld [vmem:[%s5 + $0x44] sm:$0xf]
    %v1304 = vld [vmem:[%s5 + $0x48] sm:$0xf]
    %v1305 = vld [vmem:[%s5 + $0x4c] sm:$0xf]
    %v1306 = vld [vmem:[%s5 + $0x50] sm:$0xf]
    %v1307 = vld [vmem:[%s5 + $0x54] sm:$0xf]
    %v1308 = vld [vmem:[%s5 + $0x58] sm:$0xf]
    %v1309 = vld [vmem:[%s5 + $0x5c] sm:$0xf]
    %v1310 = vld [vmem:[%s5 + $0x60] sm:$0xf]
    %v1311 = vld [vmem:[%s5 + $0x64] sm:$0xf]
    %v1312 = vld [vmem:[%s5 + $0x68] sm:$0xf]
    %v1313 = vld [vmem:[%s5 + $0x6c] sm:$0xf]
    %v1314 = vld [vmem:[%s5 + $0x70] sm:$0xf]
    %v1315 = vld [vmem:[%s5 + $0x74] sm:$0xf]
    %v1316 = vld [vmem:[%s5 + $0x78] sm:$0xf]
    %v1317 = vld [vmem:[%s5 + $0x7c] sm:$0xf]
    %v1318 = vld [vmem:[%s6] sm:$0x1]
    %v1320 = vperm.slane %v1318, 0
    %v1354 = vunpack.c.l.b16 %v1286
    %v1355 = vunpack.c.l.b16 %v1287
    %v1356 = vunpack.c.l.b16 %v1288
    %v1357 = vunpack.c.l.b16 %v1289
    %v1358 = vunpack.c.l.b16 %v1290
    %v1359 = vunpack.c.l.b16 %v1291
    %v1360 = vunpack.c.l.b16 %v1292
    %v1361 = vunpack.c.l.b16 %v1293
    %v1362 = vunpack.c.l.b16 %v1294
    %v1363 = vunpack.c.l.b16 %v1295
    %v1364 = vunpack.c.l.b16 %v1296
    %v1365 = vunpack.c.l.b16 %v1297
    %v1366 = vunpack.c.l.b16 %v1298
    %v1367 = vunpack.c.l.b16 %v1299
    %v1368 = vunpack.c.l.b16 %v1300
    %v1369 = vunpack.c.l.b16 %v1301
    %v1370 = vunpack.c.l.b16 %v1302
    %v1371 = vunpack.c.l.b16 %v1303
    %v1372 = vunpack.c.l.b16 %v1304
    %v1373 = vunpack.c.l.b16 %v1305
    %v1374 = vunpack.c.l.b16 %v1306
    %v1375 = vunpack.c.l.b16 %v1307
    %v1376 = vunpack.c.l.b16 %v1308
    %v1377 = vunpack.c.l.b16 %v1309
    %v1378 = vunpack.c.l.b16 %v1310
    %v1379 = vunpack.c.l.b16 %v1311
    %v1380 = vunpack.c.l.b16 %v1312
    %v1381 = vunpack.c.l.b16 %v1313
    %v1382 = vunpack.c.l.b16 %v1314
    %v1383 = vunpack.c.l.b16 %v1315
    %v1384 = vunpack.c.l.b16 %v1316
    %v1385 = vunpack.c.l.b16 %v1317
    %v1386 = vpack.c.b16 %v1355, %v1354
    %v1387 = vpack.c.b16 %v1357, %v1356
    %v1388 = vpack.c.b16 %v1359, %v1358
    %v1389 = vpack.c.b16 %v1361, %v1360
    %v1390 = vpack.c.b16 %v1363, %v1362
    %v1391 = vpack.c.b16 %v1365, %v1364
    %v1392 = vpack.c.b16 %v1367, %v1366
    %v1393 = vpack.c.b16 %v1369, %v1368
    %v1394 = vpack.c.b16 %v1371, %v1370
    %v1395 = vpack.c.b16 %v1373, %v1372
    %v1396 = vpack.c.b16 %v1375, %v1374
    %v1397 = vpack.c.b16 %v1377, %v1376
    %v1398 = vpack.c.b16 %v1379, %v1378
    %v1399 = vpack.c.b16 %v1381, %v1380
    %v1400 = vpack.c.b16 %v1383, %v1382
    %v1401 = vpack.c.b16 %v1385, %v1384
    %1418 = vmatpush.bf16.msra.mxu0 %v1393
    %1419 = vmatpush.bf16.msra.mxu0 %v1392
    %1420 = vmatpush.bf16.msra.mxu0 %v1391
    %1421 = vmatpush.bf16.msra.mxu0 %v1390
    %1422 = vmatpush.bf16.msra.mxu0 %v1389
    %1423 = vmatpush.bf16.msra.mxu0 %v1388
    %1424 = vmatpush.bf16.msra.mxu0 %v1387
    %1425 = vmatpush.bf16.msra.mxu0 %v1386
    %1426 = vmatmul.bf16.gmra.mxu0 %v1284
    %v1427 = vpop.f32.mrf.mxu0
    %v1428 = vadd.f32 %v1320, %v1427
    %v1429 = vpop.f32.mrf.mxu0
    %1430 = vdwg.mxu0
    %1431 = vmatpush.bf16.msra.mxu0 %v1401
    %1432 = vmatpush.bf16.msra.mxu0 %v1400
    %1433 = vmatpush.bf16.msra.mxu0 %v1399
    %1434 = vmatpush.bf16.msra.mxu0 %v1398
    %1435 = vmatpush.bf16.msra.mxu0 %v1397
    %1436 = vmatpush.bf16.msra.mxu0 %v1396
    %1437 = vmatpush.bf16.msra.mxu0 %v1395
    %1438 = vmatpush.bf16.msra.mxu0 %v1394
    %1439 = vmatmul.bf16.gmra.mxu0 %v1285
    %v1440 = vpop.f32.mrf.mxu0
    %v1441 = vadd.f32 %v1428, %v1440
    %v1442 = vpop.f32.mrf.mxu0
    %1443 = vdwg.mxu0
    %vm1444 = vcmask 74752
    %1445 = vst.msk [vmem:[#allocation2] sm:$0x3] %vm1444, %v1441
    // Predicated region
    $region30: #{net_forward.3} parent=1 // pred_check
      _
    $region31: #{net_forward.3} parent=1 // pred_check_branch
      %1447 = sbr.rel (0) target = $region33
    $region32: #{net_forward.3} parent=1 // pred_region
      %1449 = vsyncadd [#allocation3], 0
      %s1451 = sshll.u32 [#allocation2], 4
      %s1452 = int_to_ptr.vmem [resolvable:$true] %s1451
      %s1453 = sshll.u32 %s7, 4
      %s1454 = int_to_ptr.hbm [resolvable:$true] %s1453
      %1456 = dma.vmem_to_hbm [thread:$0]  %s1452, 32, %s1454, [#allocation3]
    $region33: #{net_forward.3} parent=1 // pred_fallthru
      _
    // Predicated region
    $region34: #{net_forward.3} parent=1 // pred_check
      _
    $region35: #{net_forward.3} parent=1 // pred_check_branch
      %1458 = sbr.rel (0) target = $region37
    $region36: #{net_forward.3} parent=1 // pred_region
      %1460 = dma.done [#allocation3], 32
    $region37: #{net_forward.3} parent=1 // pred_fallthru
      _
    %1461 = vsyncpa [#allocation3], 1

// kernel: net_forward.2
$region0: #{net_forward.2}
  #allocation0 [shape = 'u32[]', space=smem, size = 0x4, offset = 0x4, fixed_abs, tag = 'smem constant byte address 0x4 - core index']
  #allocation1 [shape = 'u32[72,128]{1,0:T(1,128)}', space=vmem, size = 0x9000, scoped, tag = 'internal scratch']
  #allocation2 [shape = 'f32[622,32]{1,0:T(8,128)}', space=vmem, size = 0x4e000, scoped, tag = 'scratch operand']
  #allocation3 [shape = 'bf16[144,32]{1,0:T(8,128)(2,1)}', space=vmem, size = 0x9000, scoped, tag = 'scratch operand']
  #allocation4 [shape = 'bf16[118,64]{1,0:T(8,128)(2,1)}', space=vmem, size = 0x7800, scoped, tag = 'scratch operand']
  #allocation5 [shape = 'f32[92,64]{1,0:T(8,128)}', space=vmem, size = 0xc000, scoped, tag = 'scratch operand']
  %s0 = inlined_call_operand.vmem [shape: bf16[2,676,32], index: 0, kind: input, shape index: {}]
  %s1 = inlined_call_operand.vmem [shape: bf16[9,32,32], index: 1, kind: input, shape index: {}]
  %s2 = inlined_call_operand.vmem [shape: f32[1,32], index: 2, kind: input, shape index: {}]
  %s3 = inlined_call_operand.vmem [shape: bf16[144,595], index: 3, kind: input, shape index: {}]
  %s4 = inlined_call_operand.vmem [shape: bf16[9,32,64], index: 4, kind: input, shape index: {}]
  %s5 = inlined_call_operand.vmem [shape: f32[1,64], index: 5, kind: input, shape index: {}]
  %s6 = inlined_call_operand.vmem [shape: bf16[9,64,64], index: 6, kind: input, shape index: {}]
  %s7 = inlined_call_operand.vmem [shape: f32[1,64], index: 7, kind: input, shape index: {}]
  %s8 = inlined_call_operand.vmem [shape: bf16[16,79], index: 8, kind: input, shape index: {}]
  %s9 = inlined_call_operand.vmem [shape: bf16[2,16,64], index: 9, kind: output, shape index: {}]
  %s10 = sld [smem:[#allocation0]]
  $region69: #{net_forward.2} parent=0
    _
  %s12 = ssub.s32 1, %s10
  %s13 = scalar_select 0, %s12, %s10
  loop: start=0, step=1, limit=4
  $region2: #{net_forward.2} parent=0 // loop_pre_header
    _
  $region3: #{net_forward.2} parent=0 // loop_header
    %s15 = sphi 0, %s19
    %p16 = scmp.ge.s32.totalorder %s15, 4
    %s25 = sphi 0, %s27
    %s28 = sphi 0, %s25
    %s29 = sphi 0, %s28
    %s45 = sphi 0, %s29
    %s49 = sphi 0, %s49
    %s51 = sphi 0, %s49
    %s52 = sphi 0, %s51
    %s66 = sphi 0, %s52
    %s70 = sphi 0, %s70
    %s72 = sphi 0, %s70
    %s73 = sphi 0, %s72
    %s87 = sphi 0, %s73
    %s91 = sphi 0, %s91
    %s93 = sphi 0, %s91
    %s94 = sphi 0, %s93
    %s108 = sphi 0, %s94
    %s112 = sphi 0, %s112
    %s114 = sphi 0, %s112
    %s115 = sphi 0, %s114
    %s129 = sphi 0, %s115
    %s133 = sphi 0, %s133
    %s135 = sphi 0, %s133
    %s136 = sphi 0, %s135
    %s150 = sphi 0, %s136
    %s154 = sphi 0, %s154
    %s156 = sphi 0, %s154
    %s157 = sphi 0, %s156
    %s171 = sphi 0, %s157
    %s175 = sphi 0, %s175
    %s177 = sphi 0, %s175
    %s178 = sphi 0, %s177
    %s192 = sphi 0, %s178
    %s196 = sphi 0, %s196
    %s198 = sphi 0, %s196
    %s199 = sphi 0, %s198
    %s213 = sphi 0, %s199
    %s219 = sphi 0, %s221
    %s222 = sphi 0, %s219
    %s223 = sphi 0, %s222
    %s239 = sphi 0, %s223
  $region4: #{net_forward.2} parent=0 // loop_header_branch
    %18 = sbr.rel (%p16) target = $region8
  $region5: #{net_forward.2} parent=0 // loop_body
    %s20 = ssub.s32 %s15, 1
    %s21 = ssub.s32 %s15, 2
    %s22 = sadd.s32 %s15, 1
    %s23 = ssub.s32 %s15, %s22
    %p24 = scmp.eq.s32.totalorder %s23, 0
    %s26 = sadd.s32 %s25, 1
    %s27 = scalar_select %p24, %s25, %s26
    %p30 = pneg %p24
    %p31 = scmp.eq.s32.totalorder %s15, 1
    %p32 = por %p30, %p31
    %p33 = scmp.ne.s32.totalorder %s25, %s28
    %p34 = scmp.eq.s32.totalorder %s15, 0
    %p35 = por %p33, %p34
    %p36 = scmp.ne.s32.totalorder %s25, %s28
    %p37 = scmp.eq.s32.totalorder %s20, 1
    %p38 = por %p36, %p37
    %p39 = scmp.ne.s32.totalorder %s28, %s29
    %p40 = scmp.eq.s32.totalorder %s20, 0
    %p41 = por %p39, %p40
    %p42 = scmp.ne.s32.totalorder %s28, %s29
    %p43 = scmp.eq.s32.totalorder %s21, 1
    %p44 = por %p42, %p43
    %p46 = scmp.ne.s32.totalorder %s29, %s45
    %p47 = scmp.eq.s32.totalorder %s21, 0
    %p48 = por %p46, %p47
    %s50 = sadd.s32 %s49, 1
    %p53 = scmp.eq.s32.totalorder %s15, 1
    %p54 = scmp.ne.s32.totalorder %s49, %s51
    %p55 = scmp.eq.s32.totalorder %s15, 0
    %p56 = por %p54, %p55
    %p57 = scmp.ne.s32.totalorder %s49, %s51
    %p58 = scmp.eq.s32.totalorder %s20, 1
    %p59 = por %p57, %p58
    %p60 = scmp.ne.s32.totalorder %s51, %s52
    %p61 = scmp.eq.s32.totalorder %s20, 0
    %p62 = por %p60, %p61
    %p63 = scmp.ne.s32.totalorder %s51, %s52
    %p64 = scmp.eq.s32.totalorder %s21, 1
    %p65 = por %p63, %p64
    %p67 = scmp.ne.s32.totalorder %s52, %s66
    %p68 = scmp.eq.s32.totalorder %s21, 0
    %p69 = por %p67, %p68
    %s71 = sadd.s32 %s70, 1
    %p74 = scmp.eq.s32.totalorder %s15, 1
    %p75 = scmp.ne.s32.totalorder %s70, %s72
    %p76 = scmp.eq.s32.totalorder %s15, 0
    %p77 = por %p75, %p76
    %p78 = scmp.ne.s32.totalorder %s70, %s72
    %p79 = scmp.eq.s32.totalorder %s20, 1
    %p80 = por %p78, %p79
    %p81 = scmp.ne.s32.totalorder %s72, %s73
    %p82 = scmp.eq.s32.totalorder %s20, 0
    %p83 = por %p81, %p82
    %p84 = scmp.ne.s32.totalorder %s72, %s73
    %p85 = scmp.eq.s32.totalorder %s21, 1
    %p86 = por %p84, %p85
    %p88 = scmp.ne.s32.totalorder %s73, %s87
    %p89 = scmp.eq.s32.totalorder %s21, 0
    %p90 = por %p88, %p89
    %s92 = sadd.s32 %s91, 1
    %p95 = scmp.eq.s32.totalorder %s15, 1
    %p96 = scmp.ne.s32.totalorder %s91, %s93
    %p97 = scmp.eq.s32.totalorder %s15, 0
    %p98 = por %p96, %p97
    %p99 = scmp.ne.s32.totalorder %s91, %s93
    %p100 = scmp.eq.s32.totalorder %s20, 1
    %p101 = por %p99, %p100
    %p102 = scmp.ne.s32.totalorder %s93, %s94
    %p103 = scmp.eq.s32.totalorder %s20, 0
    %p104 = por %p102, %p103
    %p105 = scmp.ne.s32.totalorder %s93, %s94
    %p106 = scmp.eq.s32.totalorder %s21, 1
    %p107 = por %p105, %p106
    %p109 = scmp.ne.s32.totalorder %s94, %s108
    %p110 = scmp.eq.s32.totalorder %s21, 0
    %p111 = por %p109, %p110
    %s113 = sadd.s32 %s112, 1
    %p116 = scmp.eq.s32.totalorder %s15, 1
    %p117 = scmp.ne.s32.totalorder %s112, %s114
    %p118 = scmp.eq.s32.totalorder %s15, 0
    %p119 = por %p117, %p118
    %p120 = scmp.ne.s32.totalorder %s112, %s114
    %p121 = scmp.eq.s32.totalorder %s20, 1
    %p122 = por %p120, %p121
    %p123 = scmp.ne.s32.totalorder %s114, %s115
    %p124 = scmp.eq.s32.totalorder %s20, 0
    %p125 = por %p123, %p124
    %p126 = scmp.ne.s32.totalorder %s114, %s115
    %p127 = scmp.eq.s32.totalorder %s21, 1
    %p128 = por %p126, %p127
    %p130 = scmp.ne.s32.totalorder %s115, %s129
    %p131 = scmp.eq.s32.totalorder %s21, 0
    %p132 = por %p130, %p131
    %s134 = sadd.s32 %s133, 1
    %p137 = scmp.eq.s32.totalorder %s15, 1
    %p138 = scmp.ne.s32.totalorder %s133, %s135
    %p139 = scmp.eq.s32.totalorder %s15, 0
    %p140 = por %p138, %p139
    %p141 = scmp.ne.s32.totalorder %s133, %s135
    %p142 = scmp.eq.s32.totalorder %s20, 1
    %p143 = por %p141, %p142
    %p144 = scmp.ne.s32.totalorder %s135, %s136
    %p145 = scmp.eq.s32.totalorder %s20, 0
    %p146 = por %p144, %p145
    %p147 = scmp.ne.s32.totalorder %s135, %s136
    %p148 = scmp.eq.s32.totalorder %s21, 1
    %p149 = por %p147, %p148
    %p151 = scmp.ne.s32.totalorder %s136, %s150
    %p152 = scmp.eq.s32.totalorder %s21, 0
    %p153 = por %p151, %p152
    %s155 = sadd.s32 %s154, 1
    %p158 = scmp.eq.s32.totalorder %s15, 1
    %p159 = scmp.ne.s32.totalorder %s154, %s156
    %p160 = scmp.eq.s32.totalorder %s15, 0
    %p161 = por %p159, %p160
    %p162 = scmp.ne.s32.totalorder %s154, %s156
    %p163 = scmp.eq.s32.totalorder %s20, 1
    %p164 = por %p162, %p163
    %p165 = scmp.ne.s32.totalorder %s156, %s157
    %p166 = scmp.eq.s32.totalorder %s20, 0
    %p167 = por %p165, %p166
    %p168 = scmp.ne.s32.totalorder %s156, %s157
    %p169 = scmp.eq.s32.totalorder %s21, 1
    %p170 = por %p168, %p169
    %p172 = scmp.ne.s32.totalorder %s157, %s171
    %p173 = scmp.eq.s32.totalorder %s21, 0
    %p174 = por %p172, %p173
    %s176 = sadd.s32 %s175, 1
    %p179 = scmp.eq.s32.totalorder %s15, 1
    %p180 = scmp.ne.s32.totalorder %s175, %s177
    %p181 = scmp.eq.s32.totalorder %s15, 0
    %p182 = por %p180, %p181
    %p183 = scmp.ne.s32.totalorder %s175, %s177
    %p184 = scmp.eq.s32.totalorder %s20, 1
    %p185 = por %p183, %p184
    %p186 = scmp.ne.s32.totalorder %s177, %s178
    %p187 = scmp.eq.s32.totalorder %s20, 0
    %p188 = por %p186, %p187
    %p189 = scmp.ne.s32.totalorder %s177, %s178
    %p190 = scmp.eq.s32.totalorder %s21, 1
    %p191 = por %p189, %p190
    %p193 = scmp.ne.s32.totalorder %s178, %s192
    %p194 = scmp.eq.s32.totalorder %s21, 0
    %p195 = por %p193, %p194
    %s197 = sadd.s32 %s196, 1
    %p200 = scmp.eq.s32.totalorder %s15, 1
    %p201 = scmp.ne.s32.totalorder %s196, %s198
    %p202 = scmp.eq.s32.totalorder %s15, 0
    %p203 = por %p201, %p202
    %p204 = scmp.ne.s32.totalorder %s196, %s198
    %p205 = scmp.eq.s32.totalorder %s20, 1
    %p206 = por %p204, %p205
    %p207 = scmp.ne.s32.totalorder %s198, %s199
    %p208 = scmp.eq.s32.totalorder %s20, 0
    %p209 = por %p207, %p208
    %p210 = scmp.ne.s32.totalorder %s198, %s199
    %p211 = scmp.eq.s32.totalorder %s21, 1
    %p212 = por %p210, %p211
    %p214 = scmp.ne.s32.totalorder %s199, %s213
    %p215 = scmp.eq.s32.totalorder %s21, 0
    %p216 = por %p214, %p215
    %s217 = ssub.s32 %s15, %s22
    %p218 = scmp.eq.s32.totalorder %s217, 0
    %s220 = sadd.s32 %s219, 1
    %s221 = scalar_select %p218, %s219, %s220
    %p224 = pneg %p218
    %p225 = scmp.eq.s32.totalorder %s15, 1
    %p226 = por %p224, %p225
    %p227 = scmp.ne.s32.totalorder %s219, %s222
    %p228 = scmp.eq.s32.totalorder %s15, 0
    %p229 = por %p227, %p228
    %p230 = scmp.ne.s32.totalorder %s219, %s222
    %p231 = scmp.eq.s32.totalorder %s20, 1
    %p232 = por %p230, %p231
    %p233 = scmp.ne.s32.totalorder %s222, %s223
    %p234 = scmp.eq.s32.totalorder %s20, 0
    %p235 = por %p233, %p234
    %p236 = scmp.ne.s32.totalorder %s222, %s223
    %p237 = scmp.eq.s32.totalorder %s21, 1
    %p238 = por %p236, %p237
    %p240 = scmp.ne.s32.totalorder %s223, %s239
    %p241 = scmp.eq.s32.totalorder %s21, 0
    %p242 = por %p240, %p241
    %p243 = scmp.le.s32.totalorder 1, %s15
    %p244 = scmp.lt.s32.totalorder %s15, 3
    %p245 = pnand %p243, %p244
    %p246 = pneg %p245
    // Predicated region
    $region9: #{net_forward.2} parent=5 // pred_check
      _
    $region10: #{net_forward.2} parent=5 // pred_check_branch
      %248 = sbr.rel (%p245) target = $region12
    $region11: #{net_forward.2} parent=5 // pred_region
      %s249 = ssub.s32 %s15, 1
      // Predicated region
      $region13: #{net_forward.2} parent=11 // pred_check
        %p250 = pneg %p62
      $region14: #{net_forward.2} parent=11 // pred_check_branch
        %252 = sbr.rel (%p250) target = $region16
      $region15: #{net_forward.2} parent=11 // pred_region
        _
      $region16: #{net_forward.2} parent=11 // pred_fallthru
        _
      // Predicated region
      $region17: #{net_forward.2} parent=11 // pred_check
        %p253 = pneg %p83
      $region18: #{net_forward.2} parent=11 // pred_check_branch
        %255 = sbr.rel (%p253) target = $region20
      $region19: #{net_forward.2} parent=11 // pred_region
        _
      $region20: #{net_forward.2} parent=11 // pred_fallthru
        _
      // Predicated region
      $region21: #{net_forward.2} parent=11 // pred_check
        %p256 = pneg %p104
      $region22: #{net_forward.2} parent=11 // pred_check_branch
        %258 = sbr.rel (%p256) target = $region24
      $region23: #{net_forward.2} parent=11 // pred_region
        _
      $region24: #{net_forward.2} parent=11 // pred_fallthru
        _
      // Predicated region
      $region25: #{net_forward.2} parent=11 // pred_check
        %p259 = pneg %p125
      $region26: #{net_forward.2} parent=11 // pred_check_branch
        %261 = sbr.rel (%p259) target = $region28
      $region27: #{net_forward.2} parent=11 // pred_region
        _
      $region28: #{net_forward.2} parent=11 // pred_fallthru
        _
      // Predicated region
      $region29: #{net_forward.2} parent=11 // pred_check
        %p262 = pneg %p146
      $region30: #{net_forward.2} parent=11 // pred_check_branch
        %264 = sbr.rel (%p262) target = $region32
      $region31: #{net_forward.2} parent=11 // pred_region
        _
      $region32: #{net_forward.2} parent=11 // pred_fallthru
        _
      // Predicated region
      $region33: #{net_forward.2} parent=11 // pred_check
        %p265 = pneg %p167
      $region34: #{net_forward.2} parent=11 // pred_check_branch
        %267 = sbr.rel (%p265) target = $region36
      $region35: #{net_forward.2} parent=11 // pred_region
        _
      $region36: #{net_forward.2} parent=11 // pred_fallthru
        _
      // Predicated region
      $region37: #{net_forward.2} parent=11 // pred_check
        %p268 = pneg %p188
      $region38: #{net_forward.2} parent=11 // pred_check_branch
        %270 = sbr.rel (%p268) target = $region40
      $region39: #{net_forward.2} parent=11 // pred_region
        _
      $region40: #{net_forward.2} parent=11 // pred_fallthru
        _
      // Predicated region
      $region41: #{net_forward.2} parent=11 // pred_check
        %p271 = pneg %p209
      $region42: #{net_forward.2} parent=11 // pred_check_branch
        %273 = sbr.rel (%p271) target = $region44
      $region43: #{net_forward.2} parent=11 // pred_region
        _
      $region44: #{net_forward.2} parent=11 // pred_fallthru
        _
    $region12: #{net_forward.2} parent=5 // pred_fallthru
      _
    %p274 = scmp.lt.s32.totalorder %s15, 2
    // Predicated region
    $region45: #{net_forward.2} parent=5 // pred_check
      %p275 = pneg %p274
    $region46: #{net_forward.2} parent=5 // pred_check_branch
      %277 = sbr.rel (%p275) target = $region48
    $region47: #{net_forward.2} parent=5 // pred_region
      // Predicated region
      $region49: #{net_forward.2} parent=47 // pred_check
        %p278 = pneg %p35
      $region50: #{net_forward.2} parent=47 // pred_check_branch
        %280 = sbr.rel (%p278) target = $region52
      $region51: #{net_forward.2} parent=47 // pred_region
        %p281 = scmp.lt.s32.totalorder %s15, 1
        %s282 = scalar_select %p281, %s15, 1
        %s283 = smul.addr %s282, 85
        %s284 = smul.addr %s283, 4
        %s285 = scalar_lea.vmem %s0, %s284
      $region52: #{net_forward.2} parent=47 // pred_fallthru
        _
    $region48: #{net_forward.2} parent=5 // pred_fallthru
      _
    %p286 = scmp.le.s32.totalorder 1, %s15
    %p287 = scmp.lt.s32.totalorder %s15, 3
    %p288 = pnand %p286, %p287
    %p289 = pneg %p288
    // Predicated region
    $region53: #{net_forward.2} parent=5 // pred_check
      _
    $region54: #{net_forward.2} parent=5 // pred_check_branch
      %291 = sbr.rel (%p288) target = $region56
    $region55: #{net_forward.2} parent=5 // pred_region
      %s292 = ssub.s32 %s15, 1
      %p293 = scmp.lt.s32.totalorder %s20, 1
      %s294 = scalar_select %p293, %s20, 1
      %s295 = smul.addr %s294, 85
      %s296 = smul.addr %s295, 4
      %s297 = scalar_lea.vmem %s0, %s296
      %p298 = pneg %p41
      %p299 = pneg %p38
      %p300 = pneg %p62
      %p301 = pneg %p59
      %p302 = pneg %p83
      %p303 = pneg %p80
      %p304 = pneg %p104
      %p305 = pneg %p101
      %p306 = pneg %p125
      %p307 = pneg %p122
      %p308 = pneg %p146
      %p309 = pneg %p143
      %p310 = pneg %p167
      %p311 = pneg %p164
      %p312 = pneg %p188
      %p313 = pneg %p185
      %p314 = pneg %p209
      %p315 = pneg %p206
      %p316 = pneg %p235
      %p317 = pneg %p232
      %p318 = scmp.lt.s32.totalorder %s20, 1
      %s319 = scalar_select %p318, %s20, 1
      %s320 = smul.addr %s319, 2
      %s321 = smul.addr %s320, 4
      %s322 = scalar_lea.vmem %s9, %s321
      %p323 = scmp.lt.s32.totalorder %s20, 1
      %s324 = scalar_select %p323, %s20, 1
      %s325 = smul.addr %s324, 85
      %s326 = smul.addr %s325, 4
      %s327 = scalar_lea.vmem %s0, %s326
      %p328 = scmp.lt.s32.totalorder %s20, 1
      %s329 = scalar_select %p328, %s20, 1
      %s330 = smul.addr %s329, 2
      %s331 = smul.addr %s330, 4
      %s332 = scalar_lea.vmem %s9, %s331
      %v334 = vld [vmem:[%s327] sm:$0xf]
      %v335 = vld [vmem:[%s327 + $0x4] sm:$0xf]
      %v336 = vld [vmem:[%s327 + $0x8] sm:$0xf]
      %v337 = vld [vmem:[%s327 + $0xc] sm:$0xf]
      %v338 = vld [vmem:[%s327 + $0x10] sm:$0xf]
      %v339 = vld [vmem:[%s327 + $0x14] sm:$0xf]
      %v340 = vld [vmem:[%s327 + $0x18] sm:$0xf]
      %v341 = vld [vmem:[%s327 + $0x1c] sm:$0xf]
      %v342 = vld [vmem:[%s327 + $0x20] sm:$0xf]
      %v343 = vld [vmem:[%s327 + $0x24] sm:$0xf]
      %v344 = vld [vmem:[%s327 + $0x28] sm:$0xf]
      %v345 = vld [vmem:[%s327 + $0x2c] sm:$0xf]
      %v346 = vld [vmem:[%s327 + $0x30] sm:$0xf]
      %v347 = vld [vmem:[%s327 + $0x34] sm:$0xf]
      %v348 = vld [vmem:[%s327 + $0x38] sm:$0xf]
      %v349 = vld [vmem:[%s327 + $0x3c] sm:$0xf]
      %v350 = vld [vmem:[%s327 + $0x40] sm:$0xf]
      %v351 = vld [vmem:[%s327 + $0x44] sm:$0xf]
      %v352 = vld [vmem:[%s327 + $0x48] sm:$0xf]
      %v353 = vld [vmem:[%s327 + $0x4c] sm:$0xf]
      %v354 = vld [vmem:[%s327 + $0x50] sm:$0xf]
      %v355 = vld [vmem:[%s327 + $0x54] sm:$0xf]
      %v356 = vld [vmem:[%s327 + $0x58] sm:$0xf]
      %v357 = vld [vmem:[%s327 + $0x5c] sm:$0xf]
      %v358 = vld [vmem:[%s327 + $0x60] sm:$0xf]
      %v359 = vld [vmem:[%s327 + $0x64] sm:$0xf]
      %v360 = vld [vmem:[%s327 + $0x68] sm:$0xf]
      %v361 = vld [vmem:[%s327 + $0x6c] sm:$0xf]
      %v362 = vld [vmem:[%s327 + $0x70] sm:$0xf]
      %v363 = vld [vmem:[%s327 + $0x74] sm:$0xf]
      %v364 = vld [vmem:[%s327 + $0x78] sm:$0xf]
      %v365 = vld [vmem:[%s327 + $0x7c] sm:$0xf]
      %v366 = vld [vmem:[%s327 + $0x80] sm:$0xf]
      %v367 = vld [vmem:[%s327 + $0x84] sm:$0xf]
      %v368 = vld [vmem:[%s327 + $0x88] sm:$0xf]
      %v369 = vld [vmem:[%s327 + $0x8c] sm:$0xf]
      %v370 = vld [vmem:[%s327 + $0x90] sm:$0xf]
      %v371 = vld [vmem:[%s327 + $0x94] sm:$0xf]
      %v372 = vld [vmem:[%s327 + $0x98] sm:$0xf]
      %v373 = vld [vmem:[%s327 + $0x9c] sm:$0xf]
      %v374 = vld [vmem:[%s327 + $0xa0] sm:$0xf]
      %v375 = vld [vmem:[%s327 + $0xa4] sm:$0xf]
      %v376 = vld [vmem:[%s327 + $0xa8] sm:$0xf]
      %v377 = vld [vmem:[%s327 + $0xac] sm:$0xf]
      %v378 = vld [vmem:[%s327 + $0xb0] sm:$0xf]
      %v379 = vld [vmem:[%s327 + $0xb4] sm:$0xf]
      %v380 = vld [vmem:[%s327 + $0xb8] sm:$0xf]
      %v381 = vld [vmem:[%s327 + $0xbc] sm:$0xf]
      %v382 = vld [vmem:[%s327 + $0xc0] sm:$0xf]
      %v383 = vld [vmem:[%s327 + $0xc4] sm:$0xf]
      %v384 = vld [vmem:[%s327 + $0xc8] sm:$0xf]
      %v385 = vld [vmem:[%s327 + $0xcc] sm:$0xf]
      %v386 = vld [vmem:[%s327 + $0xd0] sm:$0xf]
      %v387 = vld [vmem:[%s327 + $0xd4] sm:$0xf]
      %v388 = vld [vmem:[%s327 + $0xd8] sm:$0xf]
      %v389 = vld [vmem:[%s327 + $0xdc] sm:$0xf]
      %v390 = vld [vmem:[%s327 + $0xe0] sm:$0xf]
      %v391 = vld [vmem:[%s327 + $0xe4] sm:$0xf]
      %v392 = vld [vmem:[%s327 + $0xe8] sm:$0xf]
      %v393 = vld [vmem:[%s327 + $0xec] sm:$0xf]
      %v394 = vld [vmem:[%s327 + $0xf0] sm:$0xf]
      %v395 = vld [vmem:[%s327 + $0xf4] sm:$0xf]
      %v396 = vld [vmem:[%s327 + $0xf8] sm:$0xf]
      %v397 = vld [vmem:[%s327 + $0xfc] sm:$0xf]
      %v398 = vld [vmem:[%s327 + $0x100] sm:$0xf]
      %v399 = vld [vmem:[%s327 + $0x104] sm:$0xf]
      %v400 = vld [vmem:[%s327 + $0x108] sm:$0xf]
      %v401 = vld [vmem:[%s327 + $0x10c] sm:$0xf]
      %v402 = vld [vmem:[%s327 + $0x110] sm:$0xf]
      %v403 = vld [vmem:[%s327 + $0x114] sm:$0xf]
      %v404 = vld [vmem:[%s327 + $0x118] sm:$0xf]
      %v405 = vld [vmem:[%s327 + $0x11c] sm:$0xf]
      %v406 = vld [vmem:[%s327 + $0x120] sm:$0xf]
      %v407 = vld [vmem:[%s327 + $0x124] sm:$0xf]
      %v408 = vld [vmem:[%s327 + $0x128] sm:$0xf]
      %v409 = vld [vmem:[%s327 + $0x12c] sm:$0xf]
      %v410 = vld [vmem:[%s327 + $0x130] sm:$0xf]
      %v411 = vld [vmem:[%s327 + $0x134] sm:$0x7]
      %v412 = vld [vmem:[%s1] sm:$0xf]
      %v413 = vld [vmem:[%s1 + $0x4] sm:$0xf]
      %v414 = vld [vmem:[%s1 + $0x8] sm:$0xf]
      %v415 = vld [vmem:[%s1 + $0xc] sm:$0xf]
      %v416 = vld [vmem:[%s327 + $0x134] sm:$0xf]
      %s417 = scalar_lea.vmem %s1, 16
      %v418 = vld [vmem:[%s417] sm:$0xf]
      %v419 = vld [vmem:[%s417 + $0x4] sm:$0xf]
      %v420 = vld [vmem:[%s417 + $0x8] sm:$0xf]
      %v421 = vld [vmem:[%s417 + $0xc] sm:$0xf]
      %v500 = vunpack.c.l.b16 %v334
      %v501 = vunpack.c.l.b16 %v335
      %v502 = vunpack.c.l.b16 %v336
      %v503 = vunpack.c.l.b16 %v337
      %v504 = vunpack.c.l.b16 %v338
      %v505 = vunpack.c.l.b16 %v339
      %v506 = vunpack.c.l.b16 %v340
      %v507 = vunpack.c.l.b16 %v341
      %v508 = vunpack.c.l.b16 %v342
      %v509 = vunpack.c.l.b16 %v343
      %v510 = vunpack.c.l.b16 %v344
      %v511 = vunpack.c.l.b16 %v345
      %v512 = vunpack.c.l.b16 %v346
      %v513 = vunpack.c.l.b16 %v347
      %v514 = vunpack.c.l.b16 %v348
      %v515 = vunpack.c.l.b16 %v349
      %v516 = vunpack.c.l.b16 %v350
      %v517 = vunpack.c.l.b16 %v351
      %v518 = vunpack.c.l.b16 %v352
      %v519 = vunpack.c.l.b16 %v353
      %v520 = vunpack.c.l.b16 %v354
      %v521 = vunpack.c.l.b16 %v355
      %v522 = vunpack.c.l.b16 %v356
      %v523 = vunpack.c.l.b16 %v357
      %v524 = vunpack.c.l.b16 %v358
      %v525 = vunpack.c.l.b16 %v359
      %v526 = vunpack.c.l.b16 %v360
      %v527 = vunpack.c.l.b16 %v361
      %v528 = vunpack.c.l.b16 %v362
      %v529 = vunpack.c.l.b16 %v363
      %v530 = vunpack.c.l.b16 %v364
      %v531 = vunpack.c.l.b16 %v365
      %v532 = vunpack.c.l.b16 %v366
      %v533 = vunpack.c.l.b16 %v367
      %v534 = vunpack.c.l.b16 %v368
      %v535 = vunpack.c.l.b16 %v369
      %v536 = vunpack.c.l.b16 %v370
      %v537 = vunpack.c.l.b16 %v371
      %v538 = vunpack.c.l.b16 %v372
      %v539 = vunpack.c.l.b16 %v373
      %v540 = vunpack.c.l.b16 %v374
      %v541 = vunpack.c.l.b16 %v375
      %v542 = vunpack.c.l.b16 %v376
      %v543 = vunpack.c.l.b16 %v377
      %v544 = vunpack.c.l.b16 %v378
      %v545 = vunpack.c.l.b16 %v379
      %v546 = vunpack.c.l.b16 %v380
      %v547 = vunpack.c.l.b16 %v381
      %v548 = vunpack.c.l.b16 %v382
      %v549 = vunpack.c.l.b16 %v383
      %v550 = vunpack.c.l.b16 %v384
      %v551 = vunpack.c.l.b16 %v385
      %v552 = vunpack.c.l.b16 %v386
      %v553 = vunpack.c.l.b16 %v387
      %v554 = vunpack.c.l.b16 %v388
      %v555 = vunpack.c.l.b16 %v389
      %v556 = vunpack.c.l.b16 %v390
      %v557 = vunpack.c.l.b16 %v391
      %v558 = vunpack.c.l.b16 %v392
      %v559 = vunpack.c.l.b16 %v393
      %v560 = vunpack.c.l.b16 %v394
      %v561 = vunpack.c.l.b16 %v395
      %v562 = vunpack.c.l.b16 %v396
      %v563 = vunpack.c.l.b16 %v397
      %v564 = vunpack.c.l.b16 %v398
      %v565 = vunpack.c.l.b16 %v399
      %v566 = vunpack.c.l.b16 %v400
      %v567 = vunpack.c.l.b16 %v401
      %v568 = vunpack.c.l.b16 %v402
      %v569 = vunpack.c.l.b16 %v403
      %v570 = vunpack.c.l.b16 %v404
      %v571 = vunpack.c.l.b16 %v405
      %v572 = vunpack.c.l.b16 %v406
      %v573 = vunpack.c.l.b16 %v407
      %v574 = vunpack.c.l.b16 %v408
      %v575 = vunpack.c.l.b16 %v409
      %v576 = vunpack.c.l.b16 %v410
      %v577 = vunpack.c.l.b16 %v416
      %v578 = vpack.c.b16 %v501, %v500
      %v579 = vpack.c.b16 %v503, %v502
      %v580 = vpack.c.b16 %v505, %v504
      %v581 = vpack.c.b16 %v507, %v506
      %v582 = vpack.c.b16 %v509, %v508
      %v583 = vpack.c.b16 %v511, %v510
      %v584 = vpack.c.b16 %v513, %v512
      %v585 = vpack.c.b16 %v515, %v514
      %v586 = vpack.c.b16 %v517, %v516
      %v587 = vpack.c.b16 %v519, %v518
      %v588 = vpack.c.b16 %v521, %v520
      %v589 = vpack.c.b16 %v523, %v522
      %v590 = vpack.c.b16 %v525, %v524
      %v591 = vpack.c.b16 %v527, %v526
      %v592 = vpack.c.b16 %v529, %v528
      %v593 = vpack.c.b16 %v531, %v530
      %v594 = vpack.c.b16 %v533, %v532
      %v595 = vpack.c.b16 %v535, %v534
      %v596 = vpack.c.b16 %v537, %v536
      %v597 = vpack.c.b16 %v539, %v538
      %v598 = vpack.c.b16 %v541, %v540
      %v599 = vpack.c.b16 %v543, %v542
      %v600 = vpack.c.b16 %v545, %v544
      %v601 = vpack.c.b16 %v547, %v546
      %v602 = vpack.c.b16 %v549, %v548
      %v603 = vpack.c.b16 %v551, %v550
      %v604 = vpack.c.b16 %v553, %v552
      %v605 = vpack.c.b16 %v555, %v554
      %v606 = vpack.c.b16 %v557, %v556
      %v607 = vpack.c.b16 %v559, %v558
      %v608 = vpack.c.b16 %v561, %v560
      %v609 = vpack.c.b16 %v563, %v562
      %v610 = vpack.c.b16 %v565, %v564
      %v611 = vpack.c.b16 %v567, %v566
      %v612 = vpack.c.b16 %v569, %v568
      %v613 = vpack.c.b16 %v571, %v570
      %v614 = vpack.c.b16 %v573, %v572
      %v615 = vpack.c.b16 %v575, %v574
      %v616 = vpack.c.b16 %v577, %v576
      %vm617 = vsmask.f32 7424
      %v619 = vshrl.u32 %v578, 16
      %v621 = vshll.u32 %v578, 16
      %v623 = vrot.slane %v621, 1
      %v624 = vor.u32 %v619, %v623
      %v626 = vshll.u32 %v579, 16
      %v628 = vrot.slane %v626, 1
      %v629 = vsel %vm617, %v624, %v628
      %v630 = vshrl.u32 %v579, 16
      %v632 = vor.u32 %v630, %v628
      %v634 = vshll.u32 %v580, 16
      %v636 = vrot.slane %v634, 1
      %v637 = vsel %vm617, %v632, %v636
      %v638 = vshrl.u32 %v580, 16
      %v640 = vor.u32 %v638, %v636
      %v642 = vshll.u32 %v581, 16
      %v644 = vrot.slane %v642, 1
      %v645 = vsel %vm617, %v640, %v644
      %v646 = vshrl.u32 %v581, 16
      %v648 = vor.u32 %v646, %v644
      %v650 = vshll.u32 %v582, 16
      %v652 = vrot.slane %v650, 1
      %v653 = vsel %vm617, %v648, %v652
      %v654 = vshrl.u32 %v582, 16
      %v656 = vor.u32 %v654, %v652
      %v658 = vshll.u32 %v583, 16
      %v660 = vrot.slane %v658, 1
      %v661 = vsel %vm617, %v656, %v660
      %v662 = vshrl.u32 %v583, 16
      %v664 = vor.u32 %v662, %v660
      %v666 = vshll.u32 %v584, 16
      %v668 = vrot.slane %v666, 1
      %v669 = vsel %vm617, %v664, %v668
      %v670 = vshrl.u32 %v584, 16
      %v672 = vor.u32 %v670, %v668
      %v674 = vshll.u32 %v585, 16
      %v676 = vrot.slane %v674, 1
      %v677 = vsel %vm617, %v672, %v676
      %v678 = vshrl.u32 %v585, 16
      %v680 = vor.u32 %v678, %v676
      %v682 = vshll.u32 %v586, 16
      %v684 = vrot.slane %v682, 1
      %v685 = vsel %vm617, %v680, %v684
      %v686 = vshrl.u32 %v586, 16
      %v688 = vor.u32 %v686, %v684
      %v690 = vshll.u32 %v587, 16
      %v692 = vrot.slane %v690, 1
      %v693 = vsel %vm617, %v688, %v692
      %v694 = vshrl.u32 %v587, 16
      %v696 = vor.u32 %v694, %v692
      %v698 = vshll.u32 %v588, 16
      %v700 = vrot.slane %v698, 1
      %v701 = vsel %vm617, %v696, %v700
      %v702 = vshrl.u32 %v588, 16
      %v704 = vor.u32 %v702, %v700
      %v706 = vshll.u32 %v589, 16
      %v708 = vrot.slane %v706, 1
      %v709 = vsel %vm617, %v704, %v708
      %v710 = vshrl.u32 %v589, 16
      %v712 = vor.u32 %v710, %v708
      %v714 = vshll.u32 %v590, 16
      %v716 = vrot.slane %v714, 1
      %v717 = vsel %vm617, %v712, %v716
      %v718 = vshrl.u32 %v590, 16
      %v720 = vor.u32 %v718, %v716
      %v722 = vshll.u32 %v591, 16
      %v724 = vrot.slane %v722, 1
      %v725 = vsel %vm617, %v720, %v724
      %v726 = vshrl.u32 %v591, 16
      %v728 = vor.u32 %v726, %v724
      %v730 = vshll.u32 %v592, 16
      %v732 = vrot.slane %v730, 1
      %v733 = vsel %vm617, %v728, %v732
      %v734 = vshrl.u32 %v592, 16
      %v736 = vor.u32 %v734, %v732
      %v738 = vshll.u32 %v593, 16
      %v740 = vrot.slane %v738, 1
      %v741 = vsel %vm617, %v736, %v740
      %v742 = vshrl.u32 %v593, 16
      %v744 = vor.u32 %v742, %v740
      %v746 = vshll.u32 %v594, 16
      %v748 = vrot.slane %v746, 1
      %v749 = vsel %vm617, %v744, %v748
      %v750 = vshrl.u32 %v594, 16
      %v752 = vor.u32 %v750, %v748
      %v754 = vshll.u32 %v595, 16
      %v756 = vrot.slane %v754, 1
      %v757 = vsel %vm617, %v752, %v756
      %v758 = vshrl.u32 %v595, 16
      %v760 = vor.u32 %v758, %v756
      %v762 = vshll.u32 %v596, 16
      %v764 = vrot.slane %v762, 1
      %v765 = vsel %vm617, %v760, %v764
      %v766 = vshrl.u32 %v596, 16
      %v768 = vor.u32 %v766, %v764
      %v770 = vshll.u32 %v597, 16
      %v772 = vrot.slane %v770, 1
      %v773 = vsel %vm617, %v768, %v772
      %v774 = vshrl.u32 %v597, 16
      %v776 = vor.u32 %v774, %v772
      %v778 = vshll.u32 %v598, 16
      %v780 = vrot.slane %v778, 1
      %v781 = vsel %vm617, %v776, %v780
      %v782 = vshrl.u32 %v598, 16
      %v784 = vor.u32 %v782, %v780
      %v786 = vshll.u32 %v599, 16
      %v788 = vrot.slane %v786, 1
      %v789 = vsel %vm617, %v784, %v788
      %v790 = vshrl.u32 %v599, 16
      %v792 = vor.u32 %v790, %v788
      %v794 = vshll.u32 %v600, 16
      %v796 = vrot.slane %v794, 1
      %v797 = vsel %vm617, %v792, %v796
      %v798 = vshrl.u32 %v600, 16
      %v800 = vor.u32 %v798, %v796
      %v802 = vshll.u32 %v601, 16
      %v804 = vrot.slane %v802, 1
      %v805 = vsel %vm617, %v800, %v804
      %v806 = vshrl.u32 %v601, 16
      %v808 = vor.u32 %v806, %v804
      %v810 = vshll.u32 %v602, 16
      %v812 = vrot.slane %v810, 1
      %v813 = vsel %vm617, %v808, %v812
      %v814 = vshrl.u32 %v602, 16
      %v816 = vor.u32 %v814, %v812
      %v818 = vshll.u32 %v603, 16
      %v820 = vrot.slane %v818, 1
      %v821 = vsel %vm617, %v816, %v820
      %v822 = vshrl.u32 %v603, 16
      %v824 = vor.u32 %v822, %v820
      %v826 = vshll.u32 %v604, 16
      %v828 = vrot.slane %v826, 1
      %v829 = vsel %vm617, %v824, %v828
      %v830 = vshrl.u32 %v604, 16
      %v832 = vor.u32 %v830, %v828
      %v834 = vshll.u32 %v605, 16
      %v836 = vrot.slane %v834, 1
      %v837 = vsel %vm617, %v832, %v836
      %v838 = vshrl.u32 %v605, 16
      %v840 = vor.u32 %v838, %v836
      %v842 = vshll.u32 %v606, 16
      %v844 = vrot.slane %v842, 1
      %v845 = vsel %vm617, %v840, %v844
      %v846 = vshrl.u32 %v606, 16
      %v848 = vor.u32 %v846, %v844
      %v850 = vshll.u32 %v607, 16
      %v852 = vrot.slane %v850, 1
      %v853 = vsel %vm617, %v848, %v852
      %v854 = vshrl.u32 %v607, 16
      %v856 = vor.u32 %v854, %v852
      %v858 = vshll.u32 %v608, 16
      %v860 = vrot.slane %v858, 1
      %v861 = vsel %vm617, %v856, %v860
      %v862 = vshrl.u32 %v608, 16
      %v864 = vor.u32 %v862, %v860
      %v866 = vshll.u32 %v609, 16
      %v868 = vrot.slane %v866, 1
      %v869 = vsel %vm617, %v864, %v868
      %v870 = vshrl.u32 %v609, 16
      %v872 = vor.u32 %v870, %v868
      %v874 = vshll.u32 %v610, 16
      %v876 = vrot.slane %v874, 1
      %v877 = vsel %vm617, %v872, %v876
      %v878 = vshrl.u32 %v610, 16
      %v880 = vor.u32 %v878, %v876
      %v882 = vshll.u32 %v611, 16
      %v884 = vrot.slane %v882, 1
      %v885 = vsel %vm617, %v880, %v884
      %v886 = vshrl.u32 %v611, 16
      %v888 = vor.u32 %v886, %v884
      %v890 = vshll.u32 %v612, 16
      %v892 = vrot.slane %v890, 1
      %v893 = vsel %vm617, %v888, %v892
      %v894 = vshrl.u32 %v612, 16
      %v896 = vor.u32 %v894, %v892
      %v898 = vshll.u32 %v613, 16
      %v900 = vrot.slane %v898, 1
      %v901 = vsel %vm617, %v896, %v900
      %v902 = vshrl.u32 %v613, 16
      %v904 = vor.u32 %v902, %v900
      %v906 = vshll.u32 %v614, 16
      %v908 = vrot.slane %v906, 1
      %v909 = vsel %vm617, %v904, %v908
      %v910 = vshrl.u32 %v614, 16
      %v912 = vor.u32 %v910, %v908
      %v914 = vshll.u32 %v615, 16
      %v916 = vrot.slane %v914, 1
      %v917 = vsel %vm617, %v912, %v916
      %v918 = vshrl.u32 %v615, 16
      %v920 = vor.u32 %v918, %v916
      %v922 = vshll.u32 %v616, 16
      %v924 = vrot.slane %v922, 1
      %v925 = vsel %vm617, %v920, %v924
      %v926 = vshrl.u32 %v616, 16
      %v928 = vor.u32 %v926, %v924
      %v933 = vunpack.c.l.b16 %v418
      %v934 = vunpack.c.l.b16 %v419
      %v935 = vunpack.c.l.b16 %v420
      %v936 = vunpack.c.l.b16 %v421
      %v937 = vpack.c.b16 %v934, %v933
      %v938 = vpack.c.b16 %v936, %v935
      %vm941 = vcmask 261120
      %v943 = vsel %vm941, %v629, 0
      %v946 = vsel %vm941, %v637, 0
      %v949 = vsel %vm941, %v645, 0
      %v952 = vsel %vm941, %v653, 0
      %v955 = vsel %vm941, %v661, 0
      %v958 = vsel %vm941, %v669, 0
      %v961 = vsel %vm941, %v677, 0
      %v964 = vsel %vm941, %v685, 0
      %v967 = vsel %vm941, %v693, 0
      %v970 = vsel %vm941, %v701, 0
      %v973 = vsel %vm941, %v709, 0
      %v976 = vsel %vm941, %v717, 0
      %v979 = vsel %vm941, %v725, 0
      %v982 = vsel %vm941, %v733, 0
      %v985 = vsel %vm941, %v741, 0
      %v988 = vsel %vm941, %v749, 0
      %v991 = vsel %vm941, %v757, 0
      %v994 = vsel %vm941, %v765, 0
      %v997 = vsel %vm941, %v773, 0
      %v1000 = vsel %vm941, %v781, 0
      %v1003 = vsel %vm941, %v789, 0
      %v1006 = vsel %vm941, %v797, 0
      %v1009 = vsel %vm941, %v805, 0
      %v1012 = vsel %vm941, %v813, 0
      %v1015 = vsel %vm941, %v821, 0
      %v1018 = vsel %vm941, %v829, 0
      %v1021 = vsel %vm941, %v837, 0
      %v1024 = vsel %vm941, %v845, 0
      %v1027 = vsel %vm941, %v853, 0
      %v1030 = vsel %vm941, %v861, 0
      %v1033 = vsel %vm941, %v869, 0
      %v1036 = vsel %vm941, %v877, 0
      %v1039 = vsel %vm941, %v885, 0
      %v1042 = vsel %vm941, %v893, 0
      %v1045 = vsel %vm941, %v901, 0
      %v1048 = vsel %vm941, %v909, 0
      %v1051 = vsel %vm941, %v917, 0
      %v1054 = vsel %vm941, %v925, 0
      %v1057 = vsel %vm941, %v928, 0
      %1059 = vmatpush.bf16.msra.mxu0 0
      %1060 = vmatpush.bf16.msra.mxu0 0
      %1061 = vmatpush.bf16.msra.mxu0 0
      %1062 = vmatpush.bf16.msra.mxu0 0
      %1063 = vmatpush.bf16.msra.mxu0 0
      %1064 = vmatpush.bf16.msra.mxu0 0
      %1065 = vmatpush.bf16.msra.mxu0 %v938
      %1066 = vmatpush.bf16.msra.mxu0 %v937
      %1067 = vmatmul.bf16.gmra.mxu0 %v943
      %v1068 = vpop.f32.mrf.mxu0
      %v1069 = vadd.f32 0.0, %v1068
      %v1070 = vpop.f32.mrf.mxu0
      %v1071 = vadd.f32 0.0, %v1070
      %1072 = vmatmul.bf16.gmra.mxu0 %v946
      %v1073 = vpop.f32.mrf.mxu0
      %v1074 = vadd.f32 0.0, %v1073
      %v1075 = vpop.f32.mrf.mxu0
      %v1076 = vadd.f32 0.0, %v1075
      %1077 = vmatmul.bf16.gmra.mxu0 %v949
      %v1078 = vpop.f32.mrf.mxu0
      %v1079 = vadd.f32 0.0, %v1078
      %v1080 = vpop.f32.mrf.mxu0
      %v1081 = vadd.f32 0.0, %v1080
      %1082 = vmatmul.bf16.gmra.mxu0 %v952
      %v1083 = vpop.f32.mrf.mxu0
      %v1084 = vadd.f32 0.0, %v1083
      %v1085 = vpop.f32.mrf.mxu0
      %v1086 = vadd.f32 0.0, %v1085
      %1087 = vmatmul.bf16.gmra.mxu0 %v955
      %v1088 = vpop.f32.mrf.mxu0
      %v1089 = vadd.f32 0.0, %v1088
      %v1090 = vpop.f32.mrf.mxu0
      %v1091 = vadd.f32 0.0, %v1090
      %1092 = vmatmul.bf16.gmra.mxu0 %v958
      %v1093 = vpop.f32.mrf.mxu0
      %v1094 = vadd.f32 0.0, %v1093
      %v1095 = vpop.f32.mrf.mxu0
      %v1096 = vadd.f32 0.0, %v1095
      %1097 = vmatmul.bf16.gmra.mxu0 %v961
      %v1098 = vpop.f32.mrf.mxu0
      %v1099 = vadd.f32 0.0, %v1098
      %v1100 = vpop.f32.mrf.mxu0
      %v1101 = vadd.f32 0.0, %v1100
      %1102 = vmatmul.bf16.gmra.mxu0 %v964
      %v1103 = vpop.f32.mrf.mxu0
      %v1104 = vadd.f32 0.0, %v1103
      %v1105 = vpop.f32.mrf.mxu0
      %v1106 = vadd.f32 0.0, %v1105
      %1107 = vmatmul.bf16.gmra.mxu0 %v967
      %v1108 = vpop.f32.mrf.mxu0
      %v1109 = vadd.f32 0.0, %v1108
      %v1110 = vpop.f32.mrf.mxu0
      %v1111 = vadd.f32 0.0, %v1110
      %1112 = vmatmul.bf16.gmra.mxu0 %v970
      %v1113 = vpop.f32.mrf.mxu0
      %v1114 = vadd.f32 0.0, %v1113
      %v1115 = vpop.f32.mrf.mxu0
      %v1116 = vadd.f32 0.0, %v1115
      %1117 = vmatmul.bf16.gmra.mxu0 %v973
      %v1118 = vpop.f32.mrf.mxu0
      %v1119 = vadd.f32 0.0, %v1118
      %v1120 = vpop.f32.mrf.mxu0
      %v1121 = vadd.f32 0.0, %v1120
      %1122 = vmatmul.bf16.gmra.mxu0 %v976
      %v1123 = vpop.f32.mrf.mxu0
      %v1124 = vadd.f32 0.0, %v1123
      %v1125 = vpop.f32.mrf.mxu0
      %v1126 = vadd.f32 0.0, %v1125
      %1127 = vmatmul.bf16.gmra.mxu0 %v979
      %v1128 = vpop.f32.mrf.mxu0
      %v1129 = vadd.f32 0.0, %v1128
      %v1130 = vpop.f32.mrf.mxu0
      %v1131 = vadd.f32 0.0, %v1130
      %1132 = vmatmul.bf16.gmra.mxu0 %v982
      %v1133 = vpop.f32.mrf.mxu0
      %v1134 = vadd.f32 0.0, %v1133
      %v1135 = vpop.f32.mrf.mxu0
      %v1136 = vadd.f32 0.0, %v1135
      %1137 = vmatmul.bf16.gmra.mxu0 %v985
      %v1138 = vpop.f32.mrf.mxu0
      %v1139 = vadd.f32 0.0, %v1138
      %v1140 = vpop.f32.mrf.mxu0
      %v1141 = vadd.f32 0.0, %v1140
      %1142 = vmatmul.bf16.gmra.mxu0 %v988
      %v1143 = vpop.f32.mrf.mxu0
      %v1144 = vadd.f32 0.0, %v1143
      %v1145 = vpop.f32.mrf.mxu0
      %v1146 = vadd.f32 0.0, %v1145
      %1147 = vmatmul.bf16.gmra.mxu0 %v991
      %v1148 = vpop.f32.mrf.mxu0
      %v1149 = vadd.f32 0.0, %v1148
      %v1150 = vpop.f32.mrf.mxu0
      %v1151 = vadd.f32 0.0, %v1150
      %1152 = vmatmul.bf16.gmra.mxu0 %v994
      %v1153 = vpop.f32.mrf.mxu0
      %v1154 = vadd.f32 0.0, %v1153
      %v1155 = vpop.f32.mrf.mxu0
      %v1156 = vadd.f32 0.0, %v1155
      %1157 = vmatmul.bf16.gmra.mxu0 %v997
      %v1158 = vpop.f32.mrf.mxu0
      %v1159 = vadd.f32 0.0, %v1158
      %v1160 = vpop.f32.mrf.mxu0
      %v1161 = vadd.f32 0.0, %v1160
      %1162 = vmatmul.bf16.gmra.mxu0 %v1000
      %v1163 = vpop.f32.mrf.mxu0
      %v1164 = vadd.f32 0.0, %v1163
      %v1165 = vpop.f32.mrf.mxu0
      %v1166 = vadd.f32 0.0, %v1165
      %1167 = vmatmul.bf16.gmra.mxu0 %v1003
      %v1168 = vpop.f32.mrf.mxu0
      %v1169 = vadd.f32 0.0, %v1168
      %v1170 = vpop.f32.mrf.mxu0
      %v1171 = vadd.f32 0.0, %v1170
      %1172 = vmatmul.bf16.gmra.mxu0 %v1006
      %v1173 = vpop.f32.mrf.mxu0
      %v1174 = vadd.f32 0.0, %v1173
      %v1175 = vpop.f32.mrf.mxu0
      %v1176 = vadd.f32 0.0, %v1175
      %1177 = vmatmul.bf16.gmra.mxu0 %v1009
      %v1178 = vpop.f32.mrf.mxu0
      %v1179 = vadd.f32 0.0, %v1178
      %v1180 = vpop.f32.mrf.mxu0
      %v1181 = vadd.f32 0.0, %v1180
      %1182 = vmatmul.bf16.gmra.mxu0 %v1012
      %v1183 = vpop.f32.mrf.mxu0
      %v1184 = vadd.f32 0.0, %v1183
      %v1185 = vpop.f32.mrf.mxu0
      %v1186 = vadd.f32 0.0, %v1185
      %1187 = vmatmul.bf16.gmra.mxu0 %v1015
      %v1188 = vpop.f32.mrf.mxu0
      %v1189 = vadd.f32 0.0, %v1188
      %v1190 = vpop.f32.mrf.mxu0
      %v1191 = vadd.f32 0.0, %v1190
      %1192 = vmatmul.bf16.gmra.mxu0 %v1018
      %v1193 = vpop.f32.mrf.mxu0
      %v1194 = vadd.f32 0.0, %v1193
      %v1195 = vpop.f32.mrf.mxu0
      %v1196 = vadd.f32 0.0, %v1195
      %1197 = vmatmul.bf16.gmra.mxu0 %v1021
      %v1198 = vpop.f32.mrf.mxu0
      %v1199 = vadd.f32 0.0, %v1198
      %v1200 = vpop.f32.mrf.mxu0
      %v1201 = vadd.f32 0.0, %v1200
      %1202 = vmatmul.bf16.gmra.mxu0 %v1024
      %v1203 = vpop.f32.mrf.mxu0
      %v1204 = vadd.f32 0.0, %v1203
      %v1205 = vpop.f32.mrf.mxu0
      %v1206 = vadd.f32 0.0, %v1205
      %1207 = vmatmul.bf16.gmra.mxu0 %v1027
      %v1208 = vpop.f32.mrf.mxu0
      %v1209 = vadd.f32 0.0, %v1208
      %v1210 = vpop.f32.mrf.mxu0
      %v1211 = vadd.f32 0.0, %v1210
      %1212 = vmatmul.bf16.gmra.mxu0 %v1030
      %v1213 = vpop.f32.mrf.mxu0
      %v1214 = vadd.f32 0.0, %v1213
      %v1215 = vpop.f32.mrf.mxu0
      %v1216 = vadd.f32 0.0, %v1215
      %1217 = vmatmul.bf16.gmra.mxu0 %v1033
      %v1218 = vpop.f32.mrf.mxu0
      %v1219 = vadd.f32 0.0, %v1218
      %v1220 = vpop.f32.mrf.mxu0
      %v1221 = vadd.f32 0.0, %v1220
      %1222 = vmatmul.bf16.gmra.mxu0 %v1036
      %v1223 = vpop.f32.mrf.mxu0
      %v1224 = vadd.f32 0.0, %v1223
      %v1225 = vpop.f32.mrf.mxu0
      %v1226 = vadd.f32 0.0, %v1225
      %1227 = vmatmul.bf16.gmra.mxu0 %v1039
      %v1228 = vpop.f32.mrf.mxu0
      %v1229 = vadd.f32 0.0, %v1228
      %v1230 = vpop.f32.mrf.mxu0
      %v1231 = vadd.f32 0.0, %v1230
      %1232 = vmatmul.bf16.gmra.mxu0 %v1042
      %v1233 = vpop.f32.mrf.mxu0
      %v1234 = vadd.f32 0.0, %v1233
      %v1235 = vpop.f32.mrf.mxu0
      %v1236 = vadd.f32 0.0, %v1235
      %1237 = vmatmul.bf16.gmra.mxu0 %v1045
      %v1238 = vpop.f32.mrf.mxu0
      %v1239 = vadd.f32 0.0, %v1238
      %v1240 = vpop.f32.mrf.mxu0
      %v1241 = vadd.f32 0.0, %v1240
      %1242 = vmatmul.bf16.gmra.mxu0 %v1048
      %v1243 = vpop.f32.mrf.mxu0
      %v1244 = vadd.f32 0.0, %v1243
      %v1245 = vpop.f32.mrf.mxu0
      %v1246 = vadd.f32 0.0, %v1245
      %1247 = vmatmul.bf16.gmra.mxu0 %v1051
      %v1248 = vpop.f32.mrf.mxu0
      %v1249 = vadd.f32 0.0, %v1248
      %v1250 = vpop.f32.mrf.mxu0
      %v1251 = vadd.f32 0.0, %v1250
      %1252 = vmatmul.bf16.gmra.mxu0 %v1054
      %v1253 = vpop.f32.mrf.mxu0
      %v1254 = vadd.f32 0.0, %v1253
      %v1255 = vpop.f32.mrf.mxu0
      %v1256 = vadd.f32 0.0, %v1255
      %1257 = vmatmul.bf16.gmra.mxu0 %v1057
      %v1258 = vpop.f32.mrf.mxu0
      %v1259 = vadd.f32 0.0, %v1258
      %v1260 = vpop.f32.mrf.mxu0
      %v1261 = vadd.f32 0.0, %v1260
      %1262 = vdwg.mxu0
      %v1264 = vunpack.c.l.b16 %v411
      %v1265 = vpack.c.b16 %v1264, %v576
      %v1270 = vunpack.c.l.b16 %v412
      %v1271 = vunpack.c.l.b16 %v413
      %v1272 = vunpack.c.l.b16 %v414
      %v1273 = vunpack.c.l.b16 %v415
      %v1274 = vpack.c.b16 %v1271, %v1270
      %v1275 = vpack.c.b16 %v1273, %v1272
      %v1278 = vsel %vm941, %v578, 0
      %v1280 = vsel %vm941, %v579, 0
      %v1282 = vsel %vm941, %v580, 0
      %v1284 = vsel %vm941, %v581, 0
      %v1286 = vsel %vm941, %v582, 0
      %v1288 = vsel %vm941, %v583, 0
      %v1290 = vsel %vm941, %v584, 0
      %v1292 = vsel %vm941, %v585, 0
      %v1294 = vsel %vm941, %v586, 0
      %v1296 = vsel %vm941, %v587, 0
      %v1298 = vsel %vm941, %v588, 0
      %v1300 = vsel %vm941, %v589, 0
      %v1302 = vsel %vm941, %v590, 0
      %v1304 = vsel %vm941, %v591, 0
      %v1306 = vsel %vm941, %v592, 0
      %v1308 = vsel %vm941, %v593, 0
      %v1310 = vsel %vm941, %v594, 0
      %v1312 = vsel %vm941, %v595, 0
      %v1314 = vsel %vm941, %v596, 0
      %v1316 = vsel %vm941, %v597, 0
      %v1318 = vsel %vm941, %v598, 0
      %v1320 = vsel %vm941, %v599, 0
      %v1322 = vsel %vm941, %v600, 0
      %v1324 = vsel %vm941, %v601, 0
      %v1326 = vsel %vm941, %v602, 0
      %v1328 = vsel %vm941, %v603, 0
      %v1330 = vsel %vm941, %v604, 0
      %v1332 = vsel %vm941, %v605, 0
      %v1334 = vsel %vm941, %v606, 0
      %v1336 = vsel %vm941, %v607, 0
      %v1338 = vsel %vm941, %v608, 0
      %v1340 = vsel %vm941, %v609, 0
      %v1342 = vsel %vm941, %v610, 0
      %v1344 = vsel %vm941, %v611, 0
      %v1346 = vsel %vm941, %v612, 0
      %v1348 = vsel %vm941, %v613, 0
      %v1350 = vsel %vm941, %v614, 0
      %v1352 = vsel %vm941, %v615, 0
      %v1355 = vsel %vm941, %v1265, 0
      %1357 = vmatpush.bf16.msra.mxu0 0
      %1358 = vmatpush.bf16.msra.mxu0 0
      %1359 = vmatpush.bf16.msra.mxu0 0
      %1360 = vmatpush.bf16.msra.mxu0 0
      %1361 = vmatpush.bf16.msra.mxu0 0
      %1362 = vmatpush.bf16.msra.mxu0 0
      %1363 = vmatpush.bf16.msra.mxu0 %v1275
      %1364 = vmatpush.bf16.msra.mxu0 %v1274
      %1365 = vmatmul.bf16.gmra.mxu0 %v1278
      %v1366 = vpop.f32.mrf.mxu0
      %v1367 = vadd.f32 %v1069, %v1366
      %v1368 = vpop.f32.mrf.mxu0
      %v1369 = vadd.f32 %v1071, %v1368
      %1370 = vmatmul.bf16.gmra.mxu0 %v1280
      %v1371 = vpop.f32.mrf.mxu0
      %v1372 = vadd.f32 %v1074, %v1371
      %v1373 = vpop.f32.mrf.mxu0
      %v1374 = vadd.f32 %v1076, %v1373
      %1375 = vmatmul.bf16.gmra.mxu0 %v1282
      %v1376 = vpop.f32.mrf.mxu0
      %v1377 = vadd.f32 %v1079, %v1376
      %v1378 = vpop.f32.mrf.mxu0
      %v1379 = vadd.f32 %v1081, %v1378
      %1380 = vmatmul.bf16.gmra.mxu0 %v1284
      %v1381 = vpop.f32.mrf.mxu0
      %v1382 = vadd.f32 %v1084, %v1381
      %v1383 = vpop.f32.mrf.mxu0
      %v1384 = vadd.f32 %v1086, %v1383
      %1385 = vmatmul.bf16.gmra.mxu0 %v1286
      %v1386 = vpop.f32.mrf.mxu0
      %v1387 = vadd.f32 %v1089, %v1386
      %v1388 = vpop.f32.mrf.mxu0
      %v1389 = vadd.f32 %v1091, %v1388
      %1390 = vmatmul.bf16.gmra.mxu0 %v1288
      %v1391 = vpop.f32.mrf.mxu0
      %v1392 = vadd.f32 %v1094, %v1391
      %v1393 = vpop.f32.mrf.mxu0
      %v1394 = vadd.f32 %v1096, %v1393
      %1395 = vmatmul.bf16.gmra.mxu0 %v1290
      %v1396 = vpop.f32.mrf.mxu0
      %v1397 = vadd.f32 %v1099, %v1396
      %v1398 = vpop.f32.mrf.mxu0
      %v1399 = vadd.f32 %v1101, %v1398
      %1400 = vmatmul.bf16.gmra.mxu0 %v1292
      %v1401 = vpop.f32.mrf.mxu0
      %v1402 = vadd.f32 %v1104, %v1401
      %v1403 = vpop.f32.mrf.mxu0
      %v1404 = vadd.f32 %v1106, %v1403
      %1405 = vmatmul.bf16.gmra.mxu0 %v1294
      %v1406 = vpop.f32.mrf.mxu0
      %v1407 = vadd.f32 %v1109, %v1406
      %v1408 = vpop.f32.mrf.mxu0
      %v1409 = vadd.f32 %v1111, %v1408
      %1410 = vmatmul.bf16.gmra.mxu0 %v1296
      %v1411 = vpop.f32.mrf.mxu0
      %v1412 = vadd.f32 %v1114, %v1411
      %v1413 = vpop.f32.mrf.mxu0
      %v1414 = vadd.f32 %v1116, %v1413
      %1415 = vmatmul.bf16.gmra.mxu0 %v1298
      %v1416 = vpop.f32.mrf.mxu0
      %v1417 = vadd.f32 %v1119, %v1416
      %v1418 = vpop.f32.mrf.mxu0
      %v1419 = vadd.f32 %v1121, %v1418
      %1420 = vmatmul.bf16.gmra.mxu0 %v1300
      %v1421 = vpop.f32.mrf.mxu0
      %v1422 = vadd.f32 %v1124, %v1421
      %v1423 = vpop.f32.mrf.mxu0
      %v1424 = vadd.f32 %v1126, %v1423
      %1425 = vmatmul.bf16.gmra.mxu0 %v1302
      %v1426 = vpop.f32.mrf.mxu0
      %v1427 = vadd.f32 %v1129, %v1426
      %v1428 = vpop.f32.mrf.mxu0
      %v1429 = vadd.f32 %v1131, %v1428
      %1430 = vmatmul.bf16.gmra.mxu0 %v1304
      %v1431 = vpop.f32.mrf.mxu0
      %v1432 = vadd.f32 %v1134, %v1431
      %v1433 = vpop.f32.mrf.mxu0
      %v1434 = vadd.f32 %v1136, %v1433
      %1435 = vmatmul.bf16.gmra.mxu0 %v1306
      %v1436 = vpop.f32.mrf.mxu0
      %v1437 = vadd.f32 %v1139, %v1436
      %v1438 = vpop.f32.mrf.mxu0
      %v1439 = vadd.f32 %v1141, %v1438
      %1440 = vmatmul.bf16.gmra.mxu0 %v1308
      %v1441 = vpop.f32.mrf.mxu0
      %v1442 = vadd.f32 %v1144, %v1441
      %v1443 = vpop.f32.mrf.mxu0
      %v1444 = vadd.f32 %v1146, %v1443
      %1445 = vmatmul.bf16.gmra.mxu0 %v1310
      %v1446 = vpop.f32.mrf.mxu0
      %v1447 = vadd.f32 %v1149, %v1446
      %v1448 = vpop.f32.mrf.mxu0
      %v1449 = vadd.f32 %v1151, %v1448
      %1450 = vmatmul.bf16.gmra.mxu0 %v1312
      %v1451 = vpop.f32.mrf.mxu0
      %v1452 = vadd.f32 %v1154, %v1451
      %v1453 = vpop.f32.mrf.mxu0
      %v1454 = vadd.f32 %v1156, %v1453
      %1455 = vmatmul.bf16.gmra.mxu0 %v1314
      %v1456 = vpop.f32.mrf.mxu0
      %v1457 = vadd.f32 %v1159, %v1456
      %v1458 = vpop.f32.mrf.mxu0
      %v1459 = vadd.f32 %v1161, %v1458
      %1460 = vmatmul.bf16.gmra.mxu0 %v1316
      %v1461 = vpop.f32.mrf.mxu0
      %v1462 = vadd.f32 %v1164, %v1461
      %v1463 = vpop.f32.mrf.mxu0
      %v1464 = vadd.f32 %v1166, %v1463
      %1465 = vmatmul.bf16.gmra.mxu0 %v1318
      %v1466 = vpop.f32.mrf.mxu0
      %v1467 = vadd.f32 %v1169, %v1466
      %v1468 = vpop.f32.mrf.mxu0
      %v1469 = vadd.f32 %v1171, %v1468
      %1470 = vmatmul.bf16.gmra.mxu0 %v1320
      %v1471 = vpop.f32.mrf.mxu0
      %v1472 = vadd.f32 %v1174, %v1471
      %v1473 = vpop.f32.mrf.mxu0
      %v1474 = vadd.f32 %v1176, %v1473
      %1475 = vmatmul.bf16.gmra.mxu0 %v1322
      %v1476 = vpop.f32.mrf.mxu0
      %v1477 = vadd.f32 %v1179, %v1476
      %v1478 = vpop.f32.mrf.mxu0
      %v1479 = vadd.f32 %v1181, %v1478
      %1480 = vmatmul.bf16.gmra.mxu0 %v1324
      %v1481 = vpop.f32.mrf.mxu0
      %v1482 = vadd.f32 %v1184, %v1481
      %v1483 = vpop.f32.mrf.mxu0
      %v1484 = vadd.f32 %v1186, %v1483
      %1485 = vmatmul.bf16.gmra.mxu0 %v1326
      %v1486 = vpop.f32.mrf.mxu0
      %v1487 = vadd.f32 %v1189, %v1486
      %v1488 = vpop.f32.mrf.mxu0
      %v1489 = vadd.f32 %v1191, %v1488
      %1490 = vmatmul.bf16.gmra.mxu0 %v1328
      %v1491 = vpop.f32.mrf.mxu0
      %v1492 = vadd.f32 %v1194, %v1491
      %v1493 = vpop.f32.mrf.mxu0
      %v1494 = vadd.f32 %v1196, %v1493
      %1495 = vmatmul.bf16.gmra.mxu0 %v1330
      %v1496 = vpop.f32.mrf.mxu0
      %v1497 = vadd.f32 %v1199, %v1496
      %v1498 = vpop.f32.mrf.mxu0
      %v1499 = vadd.f32 %v1201, %v1498
      %1500 = vmatmul.bf16.gmra.mxu0 %v1332
      %v1501 = vpop.f32.mrf.mxu0
      %v1502 = vadd.f32 %v1204, %v1501
      %v1503 = vpop.f32.mrf.mxu0
      %v1504 = vadd.f32 %v1206, %v1503
      %1505 = vmatmul.bf16.gmra.mxu0 %v1334
      %v1506 = vpop.f32.mrf.mxu0
      %v1507 = vadd.f32 %v1209, %v1506
      %v1508 = vpop.f32.mrf.mxu0
      %v1509 = vadd.f32 %v1211, %v1508
      %1510 = vmatmul.bf16.gmra.mxu0 %v1336
      %v1511 = vpop.f32.mrf.mxu0
      %v1512 = vadd.f32 %v1214, %v1511
      %v1513 = vpop.f32.mrf.mxu0
      %v1514 = vadd.f32 %v1216, %v1513
      %1515 = vmatmul.bf16.gmra.mxu0 %v1338
      %v1516 = vpop.f32.mrf.mxu0
      %v1517 = vadd.f32 %v1219, %v1516
      %v1518 = vpop.f32.mrf.mxu0
      %v1519 = vadd.f32 %v1221, %v1518
      %1520 = vmatmul.bf16.gmra.mxu0 %v1340
      %v1521 = vpop.f32.mrf.mxu0
      %v1522 = vadd.f32 %v1224, %v1521
      %v1523 = vpop.f32.mrf.mxu0
      %v1524 = vadd.f32 %v1226, %v1523
      %1525 = vmatmul.bf16.gmra.mxu0 %v1342
      %v1526 = vpop.f32.mrf.mxu0
      %v1527 = vadd.f32 %v1229, %v1526
      %v1528 = vpop.f32.mrf.mxu0
      %v1529 = vadd.f32 %v1231, %v1528
      %1530 = vmatmul.bf16.gmra.mxu0 %v1344
      %v1531 = vpop.f32.mrf.mxu0
      %v1532 = vadd.f32 %v1234, %v1531
      %v1533 = vpop.f32.mrf.mxu0
      %v1534 = vadd.f32 %v1236, %v1533
      %1535 = vmatmul.bf16.gmra.mxu0 %v1346
      %v1536 = vpop.f32.mrf.mxu0
      %v1537 = vadd.f32 %v1239, %v1536
      %v1538 = vpop.f32.mrf.mxu0
      %v1539 = vadd.f32 %v1241, %v1538
      %1540 = vmatmul.bf16.gmra.mxu0 %v1348
      %v1541 = vpop.f32.mrf.mxu0
      %v1542 = vadd.f32 %v1244, %v1541
      %v1543 = vpop.f32.mrf.mxu0
      %v1544 = vadd.f32 %v1246, %v1543
      %1545 = vmatmul.bf16.gmra.mxu0 %v1350
      %v1546 = vpop.f32.mrf.mxu0
      %v1547 = vadd.f32 %v1249, %v1546
      %v1548 = vpop.f32.mrf.mxu0
      %v1549 = vadd.f32 %v1251, %v1548
      %1550 = vmatmul.bf16.gmra.mxu0 %v1352
      %v1551 = vpop.f32.mrf.mxu0
      %v1552 = vadd.f32 %v1254, %v1551
      %v1553 = vpop.f32.mrf.mxu0
      %v1554 = vadd.f32 %v1256, %v1553
      %1555 = vmatmul.bf16.gmra.mxu0 %v1355
      %v1556 = vpop.f32.mrf.mxu0
      %v1557 = vadd.f32 %v1259, %v1556
      %v1558 = vpop.f32.mrf.mxu0
      %v1559 = vadd.f32 %v1261, %v1558
      %1560 = vdwg.mxu0
      %v1561 = vld [vmem:[%s327] sm:$0xe]
      %s1562 = scalar_lea.vmem %s1, 32
      %v1563 = vld [vmem:[%s1562] sm:$0xf]
      %v1564 = vld [vmem:[%s1562 + $0x4] sm:$0xf]
      %v1565 = vld [vmem:[%s1562 + $0x8] sm:$0xf]
      %v1566 = vld [vmem:[%s1562 + $0xc] sm:$0xf]
      %v1568 = vunpack.c.l.b16 %v1561
      %v1569 = vpack.c.b16 %v501, %v1568
      %vm1570 = vcmask 1046528
      %v1571 = vrot.slane %v1569, 1
      %v1572 = vrot.slane %v579, 1
      %v1573 = vsel %vm1570, %v1571, %v1572
      %v1574 = vrot.slane %v580, 1
      %v1575 = vsel %vm1570, %v1572, %v1574
      %v1576 = vrot.slane %v581, 1
      %v1577 = vsel %vm1570, %v1574, %v1576
      %v1578 = vrot.slane %v582, 1
      %v1579 = vsel %vm1570, %v1576, %v1578
      %v1580 = vrot.slane %v583, 1
      %v1581 = vsel %vm1570, %v1578, %v1580
      %v1582 = vrot.slane %v584, 1
      %v1583 = vsel %vm1570, %v1580, %v1582
      %v1584 = vrot.slane %v585, 1
      %v1585 = vsel %vm1570, %v1582, %v1584
      %v1586 = vrot.slane %v586, 1
      %v1587 = vsel %vm1570, %v1584, %v1586
      %v1588 = vrot.slane %v587, 1
      %v1589 = vsel %vm1570, %v1586, %v1588
      %v1590 = vrot.slane %v588, 1
      %v1591 = vsel %vm1570, %v1588, %v1590
      %v1592 = vrot.slane %v589, 1
      %v1593 = vsel %vm1570, %v1590, %v1592
      %v1594 = vrot.slane %v590, 1
      %v1595 = vsel %vm1570, %v1592, %v1594
      %v1596 = vrot.slane %v591, 1
      %v1597 = vsel %vm1570, %v1594, %v1596
      %v1598 = vrot.slane %v592, 1
      %v1599 = vsel %vm1570, %v1596, %v1598
      %v1600 = vrot.slane %v593, 1
      %v1601 = vsel %vm1570, %v1598, %v1600
      %v1602 = vrot.slane %v594, 1
      %v1603 = vsel %vm1570, %v1600, %v1602
      %v1604 = vrot.slane %v595, 1
      %v1605 = vsel %vm1570, %v1602, %v1604
      %v1606 = vrot.slane %v596, 1
      %v1607 = vsel %vm1570, %v1604, %v1606
      %v1608 = vrot.slane %v597, 1
      %v1609 = vsel %vm1570, %v1606, %v1608
      %v1610 = vrot.slane %v598, 1
      %v1611 = vsel %vm1570, %v1608, %v1610
      %v1612 = vrot.slane %v599, 1
      %v1613 = vsel %vm1570, %v1610, %v1612
      %v1614 = vrot.slane %v600, 1
      %v1615 = vsel %vm1570, %v1612, %v1614
      %v1616 = vrot.slane %v601, 1
      %v1617 = vsel %vm1570, %v1614, %v1616
      %v1618 = vrot.slane %v602, 1
      %v1619 = vsel %vm1570, %v1616, %v1618
      %v1620 = vrot.slane %v603, 1
      %v1621 = vsel %vm1570, %v1618, %v1620
      %v1622 = vrot.slane %v604, 1
      %v1623 = vsel %vm1570, %v1620, %v1622
      %v1624 = vrot.slane %v605, 1
      %v1625 = vsel %vm1570, %v1622, %v1624
      %v1626 = vrot.slane %v606, 1
      %v1627 = vsel %vm1570, %v1624, %v1626
      %v1628 = vrot.slane %v607, 1
      %v1629 = vsel %vm1570, %v1626, %v1628
      %v1630 = vrot.slane %v608, 1
      %v1631 = vsel %vm1570, %v1628, %v1630
      %v1632 = vrot.slane %v609, 1
      %v1633 = vsel %vm1570, %v1630, %v1632
      %v1634 = vrot.slane %v610, 1
      %v1635 = vsel %vm1570, %v1632, %v1634
      %v1636 = vrot.slane %v611, 1
      %v1637 = vsel %vm1570, %v1634, %v1636
      %v1638 = vrot.slane %v612, 1
      %v1639 = vsel %vm1570, %v1636, %v1638
      %v1640 = vrot.slane %v613, 1
      %v1641 = vsel %vm1570, %v1638, %v1640
      %v1642 = vrot.slane %v614, 1
      %v1643 = vsel %vm1570, %v1640, %v1642
      %v1644 = vrot.slane %v615, 1
      %v1645 = vsel %vm1570, %v1642, %v1644
      %v1646 = vrot.slane %v616, 1
      %v1647 = vsel %vm1570, %v1644, %v1646
      %v1652 = vunpack.c.l.b16 %v1563
      %v1653 = vunpack.c.l.b16 %v1564
      %v1654 = vunpack.c.l.b16 %v1565
      %v1655 = vunpack.c.l.b16 %v1566
      %v1656 = vpack.c.b16 %v1653, %v1652
      %v1657 = vpack.c.b16 %v1655, %v1654
      %v1661 = vsel %vm941, %v1573, 0
      %v1664 = vsel %vm941, %v1575, 0
      %v1667 = vsel %vm941, %v1577, 0
      %v1670 = vsel %vm941, %v1579, 0
      %v1673 = vsel %vm941, %v1581, 0
      %v1676 = vsel %vm941, %v1583, 0
      %v1679 = vsel %vm941, %v1585, 0
      %v1682 = vsel %vm941, %v1587, 0
      %v1685 = vsel %vm941, %v1589, 0
      %v1688 = vsel %vm941, %v1591, 0
      %v1691 = vsel %vm941, %v1593, 0
      %v1694 = vsel %vm941, %v1595, 0
      %v1697 = vsel %vm941, %v1597, 0
      %v1700 = vsel %vm941, %v1599, 0
      %v1703 = vsel %vm941, %v1601, 0
      %v1706 = vsel %vm941, %v1603, 0
      %v1709 = vsel %vm941, %v1605, 0
      %v1712 = vsel %vm941, %v1607, 0
      %v1715 = vsel %vm941, %v1609, 0
      %v1718 = vsel %vm941, %v1611, 0
      %v1721 = vsel %vm941, %v1613, 0
      %v1724 = vsel %vm941, %v1615, 0
      %v1727 = vsel %vm941, %v1617, 0
      %v1730 = vsel %vm941, %v1619, 0
      %v1733 = vsel %vm941, %v1621, 0
      %v1736 = vsel %vm941, %v1623, 0
      %v1739 = vsel %vm941, %v1625, 0
      %v1742 = vsel %vm941, %v1627, 0
      %v1745 = vsel %vm941, %v1629, 0
      %v1748 = vsel %vm941, %v1631, 0
      %v1751 = vsel %vm941, %v1633, 0
      %v1754 = vsel %vm941, %v1635, 0
      %v1757 = vsel %vm941, %v1637, 0
      %v1760 = vsel %vm941, %v1639, 0
      %v1763 = vsel %vm941, %v1641, 0
      %v1766 = vsel %vm941, %v1643, 0
      %v1769 = vsel %vm941, %v1645, 0
      %v1772 = vsel %vm941, %v1647, 0
      %v1775 = vsel %vm941, %v1646, 0
      %1777 = vmatpush.bf16.msra.mxu0 0
      %1778 = vmatpush.bf16.msra.mxu0 0
      %1779 = vmatpush.bf16.msra.mxu0 0
      %1780 = vmatpush.bf16.msra.mxu0 0
      %1781 = vmatpush.bf16.msra.mxu0 0
      %1782 = vmatpush.bf16.msra.mxu0 0
      %1783 = vmatpush.bf16.msra.mxu0 %v1657
      %1784 = vmatpush.bf16.msra.mxu0 %v1656
      %1785 = vmatmul.bf16.gmra.mxu0 %v1661
      %v1786 = vpop.f32.mrf.mxu0
      %v1787 = vadd.f32 0.0, %v1786
      %v1788 = vpop.f32.mrf.mxu0
      %v1789 = vadd.f32 0.0, %v1788
      %1790 = vmatmul.bf16.gmra.mxu0 %v1664
      %v1791 = vpop.f32.mrf.mxu0
      %v1792 = vadd.f32 0.0, %v1791
      %v1793 = vpop.f32.mrf.mxu0
      %v1794 = vadd.f32 0.0, %v1793
      %1795 = vmatmul.bf16.gmra.mxu0 %v1667
      %v1796 = vpop.f32.mrf.mxu0
      %v1797 = vadd.f32 0.0, %v1796
      %v1798 = vpop.f32.mrf.mxu0
      %v1799 = vadd.f32 0.0, %v1798
      %1800 = vmatmul.bf16.gmra.mxu0 %v1670
      %v1801 = vpop.f32.mrf.mxu0
      %v1802 = vadd.f32 0.0, %v1801
      %v1803 = vpop.f32.mrf.mxu0
      %v1804 = vadd.f32 0.0, %v1803
      %1805 = vmatmul.bf16.gmra.mxu0 %v1673
      %v1806 = vpop.f32.mrf.mxu0
      %v1807 = vadd.f32 0.0, %v1806
      %v1808 = vpop.f32.mrf.mxu0
      %v1809 = vadd.f32 0.0, %v1808
      %1810 = vmatmul.bf16.gmra.mxu0 %v1676
      %v1811 = vpop.f32.mrf.mxu0
      %v1812 = vadd.f32 0.0, %v1811
      %v1813 = vpop.f32.mrf.mxu0
      %v1814 = vadd.f32 0.0, %v1813
      %1815 = vmatmul.bf16.gmra.mxu0 %v1679
      %v1816 = vpop.f32.mrf.mxu0
      %v1817 = vadd.f32 0.0, %v1816
      %v1818 = vpop.f32.mrf.mxu0
      %v1819 = vadd.f32 0.0, %v1818
      %1820 = vmatmul.bf16.gmra.mxu0 %v1682
      %v1821 = vpop.f32.mrf.mxu0
      %v1822 = vadd.f32 0.0, %v1821
      %v1823 = vpop.f32.mrf.mxu0
      %v1824 = vadd.f32 0.0, %v1823
      %1825 = vmatmul.bf16.gmra.mxu0 %v1685
      %v1826 = vpop.f32.mrf.mxu0
      %v1827 = vadd.f32 0.0, %v1826
      %v1828 = vpop.f32.mrf.mxu0
      %v1829 = vadd.f32 0.0, %v1828
      %1830 = vmatmul.bf16.gmra.mxu0 %v1688
      %v1831 = vpop.f32.mrf.mxu0
      %v1832 = vadd.f32 0.0, %v1831
      %v1833 = vpop.f32.mrf.mxu0
      %v1834 = vadd.f32 0.0, %v1833
      %1835 = vmatmul.bf16.gmra.mxu0 %v1691
      %v1836 = vpop.f32.mrf.mxu0
      %v1837 = vadd.f32 0.0, %v1836
      %v1838 = vpop.f32.mrf.mxu0
      %v1839 = vadd.f32 0.0, %v1838
      %1840 = vmatmul.bf16.gmra.mxu0 %v1694
      %v1841 = vpop.f32.mrf.mxu0
      %v1842 = vadd.f32 0.0, %v1841
      %v1843 = vpop.f32.mrf.mxu0
      %v1844 = vadd.f32 0.0, %v1843
      %1845 = vmatmul.bf16.gmra.mxu0 %v1697
      %v1846 = vpop.f32.mrf.mxu0
      %v1847 = vadd.f32 0.0, %v1846
      %v1848 = vpop.f32.mrf.mxu0
      %v1849 = vadd.f32 0.0, %v1848
      %1850 = vmatmul.bf16.gmra.mxu0 %v1700
      %v1851 = vpop.f32.mrf.mxu0
      %v1852 = vadd.f32 0.0, %v1851
      %v1853 = vpop.f32.mrf.mxu0
      %v1854 = vadd.f32 0.0, %v1853
      %1855 = vmatmul.bf16.gmra.mxu0 %v1703
      %v1856 = vpop.f32.mrf.mxu0
      %v1857 = vadd.f32 0.0, %v1856
      %v1858 = vpop.f32.mrf.mxu0
      %v1859 = vadd.f32 0.0, %v1858
      %1860 = vmatmul.bf16.gmra.mxu0 %v1706
      %v1861 = vpop.f32.mrf.mxu0
      %v1862 = vadd.f32 0.0, %v1861
      %v1863 = vpop.f32.mrf.mxu0
      %v1864 = vadd.f32 0.0, %v1863
      %1865 = vmatmul.bf16.gmra.mxu0 %v1709
      %v1866 = vpop.f32.mrf.mxu0
      %v1867 = vadd.f32 0.0, %v1866
      %v1868 = vpop.f32.mrf.mxu0
      %v1869 = vadd.f32 0.0, %v1868
      %1870 = vmatmul.bf16.gmra.mxu0 %v1712
      %v1871 = vpop.f32.mrf.mxu0
      %v1872 = vadd.f32 0.0, %v1871
      %v1873 = vpop.f32.mrf.mxu0
      %v1874 = vadd.f32 0.0, %v1873
      %1875 = vmatmul.bf16.gmra.mxu0 %v1715
      %v1876 = vpop.f32.mrf.mxu0
      %v1877 = vadd.f32 0.0, %v1876
      %v1878 = vpop.f32.mrf.mxu0
      %v1879 = vadd.f32 0.0, %v1878
      %1880 = vmatmul.bf16.gmra.mxu0 %v1718
      %v1881 = vpop.f32.mrf.mxu0
      %v1882 = vadd.f32 0.0, %v1881
      %v1883 = vpop.f32.mrf.mxu0
      %v1884 = vadd.f32 0.0, %v1883
      %1885 = vmatmul.bf16.gmra.mxu0 %v1721
      %v1886 = vpop.f32.mrf.mxu0
      %v1887 = vadd.f32 0.0, %v1886
      %v1888 = vpop.f32.mrf.mxu0
      %v1889 = vadd.f32 0.0, %v1888
      %1890 = vmatmul.bf16.gmra.mxu0 %v1724
      %v1891 = vpop.f32.mrf.mxu0
      %v1892 = vadd.f32 0.0, %v1891
      %v1893 = vpop.f32.mrf.mxu0
      %v1894 = vadd.f32 0.0, %v1893
      %1895 = vmatmul.bf16.gmra.mxu0 %v1727
      %v1896 = vpop.f32.mrf.mxu0
      %v1897 = vadd.f32 0.0, %v1896
      %v1898 = vpop.f32.mrf.mxu0
      %v1899 = vadd.f32 0.0, %v1898
      %1900 = vmatmul.bf16.gmra.mxu0 %v1730
      %v1901 = vpop.f32.mrf.mxu0
      %v1902 = vadd.f32 0.0, %v1901
      %v1903 = vpop.f32.mrf.mxu0
      %v1904 = vadd.f32 0.0, %v1903
      %1905 = vmatmul.bf16.gmra.mxu0 %v1733
      %v1906 = vpop.f32.mrf.mxu0
      %v1907 = vadd.f32 0.0, %v1906
      %v1908 = vpop.f32.mrf.mxu0
      %v1909 = vadd.f32 0.0, %v1908
      %1910 = vmatmul.bf16.gmra.mxu0 %v1736
      %v1911 = vpop.f32.mrf.mxu0
      %v1912 = vadd.f32 0.0, %v1911
      %v1913 = vpop.f32.mrf.mxu0
      %v1914 = vadd.f32 0.0, %v1913
      %1915 = vmatmul.bf16.gmra.mxu0 %v1739
      %v1916 = vpop.f32.mrf.mxu0
      %v1917 = vadd.f32 0.0, %v1916
      %v1918 = vpop.f32.mrf.mxu0
      %v1919 = vadd.f32 0.0, %v1918
      %1920 = vmatmul.bf16.gmra.mxu0 %v1742
      %v1921 = vpop.f32.mrf.mxu0
      %v1922 = vadd.f32 0.0, %v1921
      %v1923 = vpop.f32.mrf.mxu0
      %v1924 = vadd.f32 0.0, %v1923
      %1925 = vmatmul.bf16.gmra.mxu0 %v1745
      %v1926 = vpop.f32.mrf.mxu0
      %v1927 = vadd.f32 0.0, %v1926
      %v1928 = vpop.f32.mrf.mxu0
      %v1929 = vadd.f32 0.0, %v1928
      %1930 = vmatmul.bf16.gmra.mxu0 %v1748
      %v1931 = vpop.f32.mrf.mxu0
      %v1932 = vadd.f32 0.0, %v1931
      %v1933 = vpop.f32.mrf.mxu0
      %v1934 = vadd.f32 0.0, %v1933
      %1935 = vmatmul.bf16.gmra.mxu0 %v1751
      %v1936 = vpop.f32.mrf.mxu0
      %v1937 = vadd.f32 0.0, %v1936
      %v1938 = vpop.f32.mrf.mxu0
      %v1939 = vadd.f32 0.0, %v1938
      %1940 = vmatmul.bf16.gmra.mxu0 %v1754
      %v1941 = vpop.f32.mrf.mxu0
      %v1942 = vadd.f32 0.0, %v1941
      %v1943 = vpop.f32.mrf.mxu0
      %v1944 = vadd.f32 0.0, %v1943
      %1945 = vmatmul.bf16.gmra.mxu0 %v1757
      %v1946 = vpop.f32.mrf.mxu0
      %v1947 = vadd.f32 0.0, %v1946
      %v1948 = vpop.f32.mrf.mxu0
      %v1949 = vadd.f32 0.0, %v1948
      %1950 = vmatmul.bf16.gmra.mxu0 %v1760
      %v1951 = vpop.f32.mrf.mxu0
      %v1952 = vadd.f32 0.0, %v1951
      %v1953 = vpop.f32.mrf.mxu0
      %v1954 = vadd.f32 0.0, %v1953
      %1955 = vmatmul.bf16.gmra.mxu0 %v1763
      %v1956 = vpop.f32.mrf.mxu0
      %v1957 = vadd.f32 0.0, %v1956
      %v1958 = vpop.f32.mrf.mxu0
      %v1959 = vadd.f32 0.0, %v1958
      %1960 = vmatmul.bf16.gmra.mxu0 %v1766
      %v1961 = vpop.f32.mrf.mxu0
      %v1962 = vadd.f32 0.0, %v1961
      %v1963 = vpop.f32.mrf.mxu0
      %v1964 = vadd.f32 0.0, %v1963
      %1965 = vmatmul.bf16.gmra.mxu0 %v1769
      %v1966 = vpop.f32.mrf.mxu0
      %v1967 = vadd.f32 0.0, %v1966
      %v1968 = vpop.f32.mrf.mxu0
      %v1969 = vadd.f32 0.0, %v1968
      %1970 = vmatmul.bf16.gmra.mxu0 %v1772
      %v1971 = vpop.f32.mrf.mxu0
      %v1972 = vadd.f32 0.0, %v1971
      %v1973 = vpop.f32.mrf.mxu0
      %v1974 = vadd.f32 0.0, %v1973
      %1975 = vmatmul.bf16.gmra.mxu0 %v1775
      %v1976 = vpop.f32.mrf.mxu0
      %v1977 = vadd.f32 0.0, %v1976
      %v1978 = vpop.f32.mrf.mxu0
      %v1979 = vadd.f32 0.0, %v1978
      %1980 = vdwg.mxu0
      %v1981 = vadd.f32 %v1367, %v1787
      %v1982 = vadd.f32 %v1369, %v1789
      %v1983 = vadd.f32 %v1372, %v1792
      %v1984 = vadd.f32 %v1374, %v1794
      %v1985 = vadd.f32 %v1377, %v1797
      %v1986 = vadd.f32 %v1379, %v1799
      %v1987 = vadd.f32 %v1382, %v1802
      %v1988 = vadd.f32 %v1384, %v1804
      %v1989 = vadd.f32 %v1387, %v1807
      %v1990 = vadd.f32 %v1389, %v1809
      %v1991 = vadd.f32 %v1392, %v1812
      %v1992 = vadd.f32 %v1394, %v1814
      %v1993 = vadd.f32 %v1397, %v1817
      %v1994 = vadd.f32 %v1399, %v1819
      %v1995 = vadd.f32 %v1402, %v1822
      %v1996 = vadd.f32 %v1404, %v1824
      %v1997 = vadd.f32 %v1407, %v1827
      %v1998 = vadd.f32 %v1409, %v1829
      %v1999 = vadd.f32 %v1412, %v1832
      %v2000 = vadd.f32 %v1414, %v1834
      %v2001 = vadd.f32 %v1417, %v1837
      %v2002 = vadd.f32 %v1419, %v1839
      %v2003 = vadd.f32 %v1422, %v1842
      %v2004 = vadd.f32 %v1424, %v1844
      %v2005 = vadd.f32 %v1427, %v1847
      %v2006 = vadd.f32 %v1429, %v1849
      %v2007 = vadd.f32 %v1432, %v1852
      %v2008 = vadd.f32 %v1434, %v1854
      %v2009 = vadd.f32 %v1437, %v1857
      %v2010 = vadd.f32 %v1439, %v1859
      %v2011 = vadd.f32 %v1442, %v1862
      %v2012 = vadd.f32 %v1444, %v1864
      %v2013 = vadd.f32 %v1447, %v1867
      %v2014 = vadd.f32 %v1449, %v1869
      %v2015 = vadd.f32 %v1452, %v1872
      %v2016 = vadd.f32 %v1454, %v1874
      %v2017 = vadd.f32 %v1457, %v1877
      %v2018 = vadd.f32 %v1459, %v1879
      %v2019 = vadd.f32 %v1462, %v1882
      %v2020 = vadd.f32 %v1464, %v1884
      %v2021 = vadd.f32 %v1467, %v1887
      %v2022 = vadd.f32 %v1469, %v1889
      %v2023 = vadd.f32 %v1472, %v1892
      %v2024 = vadd.f32 %v1474, %v1894
      %v2025 = vadd.f32 %v1477, %v1897
      %v2026 = vadd.f32 %v1479, %v1899
      %v2027 = vadd.f32 %v1482, %v1902
      %v2028 = vadd.f32 %v1484, %v1904
      %v2029 = vadd.f32 %v1487, %v1907
      %v2030 = vadd.f32 %v1489, %v1909
      %v2031 = vadd.f32 %v1492, %v1912
      %v2032 = vadd.f32 %v1494, %v1914
      %v2033 = vadd.f32 %v1497, %v1917
      %v2034 = vadd.f32 %v1499, %v1919
      %v2035 = vadd.f32 %v1502, %v1922
      %v2036 = vadd.f32 %v1504, %v1924
      %v2037 = vadd.f32 %v1507, %v1927
      %v2038 = vadd.f32 %v1509, %v1929
      %v2039 = vadd.f32 %v1512, %v1932
      %v2040 = vadd.f32 %v1514, %v1934
      %v2041 = vadd.f32 %v1517, %v1937
      %v2042 = vadd.f32 %v1519, %v1939
      %v2043 = vadd.f32 %v1522, %v1942
      %v2044 = vadd.f32 %v1524, %v1944
      %v2045 = vadd.f32 %v1527, %v1947
      %v2046 = vadd.f32 %v1529, %v1949
      %v2047 = vadd.f32 %v1532, %v1952
      %v2048 = vadd.f32 %v1534, %v1954
      %v2049 = vadd.f32 %v1537, %v1957
      %v2050 = vadd.f32 %v1539, %v1959
      %v2051 = vadd.f32 %v1542, %v1962
      %v2052 = vadd.f32 %v1544, %v1964
      %v2053 = vadd.f32 %v1547, %v1967
      %v2054 = vadd.f32 %v1549, %v1969
      %v2055 = vadd.f32 %v1552, %v1972
      %v2056 = vadd.f32 %v1554, %v1974
      %v2057 = vadd.f32 %v1557, %v1977
      %v2058 = vadd.f32 %v1559, %v1979
      %v2059 = vld [vmem:[%s327 + $0xc] sm:$0xe]
      %v2060 = vld [vmem:[%s327 + $0x10] sm:$0xf]
      %v2061 = vld [vmem:[%s327 + $0x14] sm:$0xf]
      %v2062 = vld [vmem:[%s327 + $0x18] sm:$0xf]
      %v2063 = vld [vmem:[%s327 + $0x1c] sm:$0xf]
      %v2064 = vld [vmem:[%s327 + $0x20] sm:$0xf]
      %v2065 = vld [vmem:[%s327 + $0x24] sm:$0xf]
      %v2066 = vld [vmem:[%s327 + $0x28] sm:$0xf]
      %v2067 = vld [vmem:[%s327 + $0x2c] sm:$0xf]
      %v2068 = vld [vmem:[%s327 + $0x30] sm:$0xf]
      %v2069 = vld [vmem:[%s327 + $0x34] sm:$0xf]
      %v2070 = vld [vmem:[%s327 + $0x38] sm:$0xf]
      %v2071 = vld [vmem:[%s327 + $0x3c] sm:$0xf]
      %v2072 = vld [vmem:[%s327 + $0x40] sm:$0xf]
      %v2073 = vld [vmem:[%s327 + $0x44] sm:$0xf]
      %v2074 = vld [vmem:[%s327 + $0x48] sm:$0xf]
      %v2075 = vld [vmem:[%s327 + $0x4c] sm:$0xf]
      %v2076 = vld [vmem:[%s327 + $0x50] sm:$0xf]
      %v2077 = vld [vmem:[%s327 + $0x54] sm:$0xf]
      %v2078 = vld [vmem:[%s327 + $0x58] sm:$0xf]
      %v2079 = vld [vmem:[%s327 + $0x5c] sm:$0xf]
      %v2080 = vld [vmem:[%s327 + $0x60] sm:$0xf]
      %v2081 = vld [vmem:[%s327 + $0x64] sm:$0xf]
      %v2082 = vld [vmem:[%s327 + $0x68] sm:$0xf]
      %v2083 = vld [vmem:[%s327 + $0x6c] sm:$0xf]
      %v2084 = vld [vmem:[%s327 + $0x70] sm:$0xf]
      %v2085 = vld [vmem:[%s327 + $0x74] sm:$0xf]
      %v2086 = vld [vmem:[%s327 + $0x78] sm:$0xf]
      %v2087 = vld [vmem:[%s327 + $0x7c] sm:$0xf]
      %v2088 = vld [vmem:[%s327 + $0x80] sm:$0xf]
      %v2089 = vld [vmem:[%s327 + $0x84] sm:$0xf]
      %v2090 = vld [vmem:[%s327 + $0x88] sm:$0xf]
      %v2091 = vld [vmem:[%s327 + $0x8c] sm:$0xf]
      %v2092 = vld [vmem:[%s327 + $0x90] sm:$0xf]
      %v2093 = vld [vmem:[%s327 + $0x94] sm:$0xf]
      %v2094 = vld [vmem:[%s327 + $0x98] sm:$0xf]
      %v2095 = vld [vmem:[%s327 + $0x9c] sm:$0xf]
      %v2096 = vld [vmem:[%s327 + $0xa0] sm:$0xf]
      %v2097 = vld [vmem:[%s327 + $0xa4] sm:$0xf]
      %v2098 = vld [vmem:[%s327 + $0xa8] sm:$0xf]
      %v2099 = vld [vmem:[%s327 + $0xac] sm:$0xf]
      %v2100 = vld [vmem:[%s327 + $0xb0] sm:$0xf]
      %v2101 = vld [vmem:[%s327 + $0xb4] sm:$0xf]
      %v2102 = vld [vmem:[%s327 + $0xb8] sm:$0xf]
      %v2103 = vld [vmem:[%s327 + $0xbc] sm:$0xf]
      %v2104 = vld [vmem:[%s327 + $0xc0] sm:$0xf]
      %v2105 = vld [vmem:[%s327 + $0xc4] sm:$0xf]
      %v2106 = vld [vmem:[%s327 + $0xc8] sm:$0xf]
      %v2107 = vld [vmem:[%s327 + $0xcc] sm:$0xf]
      %v2108 = vld [vmem:[%s327 + $0xd0] sm:$0xf]
      %v2109 = vld [vmem:[%s327 + $0xd4] sm:$0xf]
      %v2110 = vld [vmem:[%s327 + $0xd8] sm:$0xf]
      %v2111 = vld [vmem:[%s327 + $0xdc] sm:$0xf]
      %v2112 = vld [vmem:[%s327 + $0xe0] sm:$0xf]
      %v2113 = vld [vmem:[%s327 + $0xe4] sm:$0xf]
      %v2114 = vld [vmem:[%s327 + $0xe8] sm:$0xf]
      %v2115 = vld [vmem:[%s327 + $0xec] sm:$0xf]
      %v2116 = vld [vmem:[%s327 + $0xf0] sm:$0xf]
      %v2117 = vld [vmem:[%s327 + $0xf4] sm:$0xf]
      %v2118 = vld [vmem:[%s327 + $0xf8] sm:$0xf]
      %v2119 = vld [vmem:[%s327 + $0xfc] sm:$0xf]
      %v2120 = vld [vmem:[%s327 + $0x100] sm:$0xf]
      %v2121 = vld [vmem:[%s327 + $0x104] sm:$0xf]
      %v2122 = vld [vmem:[%s327 + $0x108] sm:$0xf]
      %v2123 = vld [vmem:[%s327 + $0x10c] sm:$0xf]
      %v2124 = vld [vmem:[%s327 + $0x110] sm:$0xf]
      %v2125 = vld [vmem:[%s327 + $0x114] sm:$0xf]
      %v2126 = vld [vmem:[%s327 + $0x118] sm:$0xf]
      %v2127 = vld [vmem:[%s327 + $0x11c] sm:$0xf]
      %v2128 = vld [vmem:[%s327 + $0x120] sm:$0xf]
      %v2129 = vld [vmem:[%s327 + $0x124] sm:$0xf]
      %v2130 = vld [vmem:[%s327 + $0x128] sm:$0xf]
      %v2131 = vld [vmem:[%s327 + $0x12c] sm:$0xf]
      %v2132 = vld [vmem:[%s327 + $0x130] sm:$0xf]
      %v2133 = vld [vmem:[%s327 + $0x134] sm:$0xf]
      %v2134 = vld [vmem:[%s327 + $0x138] sm:$0xf]
      %v2135 = vld [vmem:[%s327 + $0x13c] sm:$0xf]
      %v2136 = vld [vmem:[%s327 + $0x140] sm:$0xf]
      %s2137 = scalar_lea.vmem %s1, 48
      %v2138 = vld [vmem:[%s2137] sm:$0xf]
      %v2139 = vld [vmem:[%s2137 + $0x4] sm:$0xf]
      %v2140 = vld [vmem:[%s2137 + $0x8] sm:$0xf]
      %v2141 = vld [vmem:[%s2137 + $0xc] sm:$0xf]
      %v2220 = vunpack.c.l.b16 %v2059
      %v2221 = vunpack.c.l.b16 %v2060
      %v2222 = vunpack.c.l.b16 %v2061
      %v2223 = vunpack.c.l.b16 %v2062
      %v2224 = vunpack.c.l.b16 %v2063
      %v2225 = vunpack.c.l.b16 %v2064
      %v2226 = vunpack.c.l.b16 %v2065
      %v2227 = vunpack.c.l.b16 %v2066
      %v2228 = vunpack.c.l.b16 %v2067
      %v2229 = vunpack.c.l.b16 %v2068
      %v2230 = vunpack.c.l.b16 %v2069
      %v2231 = vunpack.c.l.b16 %v2070
      %v2232 = vunpack.c.l.b16 %v2071
      %v2233 = vunpack.c.l.b16 %v2072
      %v2234 = vunpack.c.l.b16 %v2073
      %v2235 = vunpack.c.l.b16 %v2074
      %v2236 = vunpack.c.l.b16 %v2075
      %v2237 = vunpack.c.l.b16 %v2076
      %v2238 = vunpack.c.l.b16 %v2077
      %v2239 = vunpack.c.l.b16 %v2078
      %v2240 = vunpack.c.l.b16 %v2079
      %v2241 = vunpack.c.l.b16 %v2080
      %v2242 = vunpack.c.l.b16 %v2081
      %v2243 = vunpack.c.l.b16 %v2082
      %v2244 = vunpack.c.l.b16 %v2083
      %v2245 = vunpack.c.l.b16 %v2084
      %v2246 = vunpack.c.l.b16 %v2085
      %v2247 = vunpack.c.l.b16 %v2086
      %v2248 = vunpack.c.l.b16 %v2087
      %v2249 = vunpack.c.l.b16 %v2088
      %v2250 = vunpack.c.l.b16 %v2089
      %v2251 = vunpack.c.l.b16 %v2090
      %v2252 = vunpack.c.l.b16 %v2091
      %v2253 = vunpack.c.l.b16 %v2092
      %v2254 = vunpack.c.l.b16 %v2093
      %v2255 = vunpack.c.l.b16 %v2094
      %v2256 = vunpack.c.l.b16 %v2095
      %v2257 = vunpack.c.l.b16 %v2096
      %v2258 = vunpack.c.l.b16 %v2097
      %v2259 = vunpack.c.l.b16 %v2098
      %v2260 = vunpack.c.l.b16 %v2099
      %v2261 = vunpack.c.l.b16 %v2100
      %v2262 = vunpack.c.l.b16 %v2101
      %v2263 = vunpack.c.l.b16 %v2102
      %v2264 = vunpack.c.l.b16 %v2103
      %v2265 = vunpack.c.l.b16 %v2104
      %v2266 = vunpack.c.l.b16 %v2105
      %v2267 = vunpack.c.l.b16 %v2106
      %v2268 = vunpack.c.l.b16 %v2107
      %v2269 = vunpack.c.l.b16 %v2108
      %v2270 = vunpack.c.l.b16 %v2109
      %v2271 = vunpack.c.l.b16 %v2110
      %v2272 = vunpack.c.l.b16 %v2111
      %v2273 = vunpack.c.l.b16 %v2112
      %v2274 = vunpack.c.l.b16 %v2113
      %v2275 = vunpack.c.l.b16 %v2114
      %v2276 = vunpack.c.l.b16 %v2115
      %v2277 = vunpack.c.l.b16 %v2116
      %v2278 = vunpack.c.l.b16 %v2117
      %v2279 = vunpack.c.l.b16 %v2118
      %v2280 = vunpack.c.l.b16 %v2119
      %v2281 = vunpack.c.l.b16 %v2120
      %v2282 = vunpack.c.l.b16 %v2121
      %v2283 = vunpack.c.l.b16 %v2122
      %v2284 = vunpack.c.l.b16 %v2123
      %v2285 = vunpack.c.l.b16 %v2124
      %v2286 = vunpack.c.l.b16 %v2125
      %v2287 = vunpack.c.l.b16 %v2126
      %v2288 = vunpack.c.l.b16 %v2127
      %v2289 = vunpack.c.l.b16 %v2128
      %v2290 = vunpack.c.l.b16 %v2129
      %v2291 = vunpack.c.l.b16 %v2130
      %v2292 = vunpack.c.l.b16 %v2131
      %v2293 = vunpack.c.l.b16 %v2132
      %v2294 = vunpack.c.l.b16 %v2133
      %v2295 = vunpack.c.l.b16 %v2134
      %v2296 = vunpack.c.l.b16 %v2135
      %v2297 = vunpack.c.l.b16 %v2136
      %v2298 = vpack.c.b16 %v2221, %v2220
      %v2299 = vpack.c.b16 %v2223, %v2222
      %v2300 = vpack.c.b16 %v2225, %v2224
      %v2301 = vpack.c.b16 %v2227, %v2226
      %v2302 = vpack.c.b16 %v2229, %v2228
      %v2303 = vpack.c.b16 %v2231, %v2230
      %v2304 = vpack.c.b16 %v2233, %v2232
      %v2305 = vpack.c.b16 %v2235, %v2234
      %v2306 = vpack.c.b16 %v2237, %v2236
      %v2307 = vpack.c.b16 %v2239, %v2238
      %v2308 = vpack.c.b16 %v2241, %v2240
      %v2309 = vpack.c.b16 %v2243, %v2242
      %v2310 = vpack.c.b16 %v2245, %v2244
      %v2311 = vpack.c.b16 %v2247, %v2246
      %v2312 = vpack.c.b16 %v2249, %v2248
      %v2313 = vpack.c.b16 %v2251, %v2250
      %v2314 = vpack.c.b16 %v2253, %v2252
      %v2315 = vpack.c.b16 %v2255, %v2254
      %v2316 = vpack.c.b16 %v2257, %v2256
      %v2317 = vpack.c.b16 %v2259, %v2258
      %v2318 = vpack.c.b16 %v2261, %v2260
      %v2319 = vpack.c.b16 %v2263, %v2262
      %v2320 = vpack.c.b16 %v2265, %v2264
      %v2321 = vpack.c.b16 %v2267, %v2266
      %v2322 = vpack.c.b16 %v2269, %v2268
      %v2323 = vpack.c.b16 %v2271, %v2270
      %v2324 = vpack.c.b16 %v2273, %v2272
      %v2325 = vpack.c.b16 %v2275, %v2274
      %v2326 = vpack.c.b16 %v2277, %v2276
      %v2327 = vpack.c.b16 %v2279, %v2278
      %v2328 = vpack.c.b16 %v2281, %v2280
      %v2329 = vpack.c.b16 %v2283, %v2282
      %v2330 = vpack.c.b16 %v2285, %v2284
      %v2331 = vpack.c.b16 %v2287, %v2286
      %v2332 = vpack.c.b16 %v2289, %v2288
      %v2333 = vpack.c.b16 %v2291, %v2290
      %v2334 = vpack.c.b16 %v2293, %v2292
      %v2335 = vpack.c.b16 %v2295, %v2294
      %v2336 = vpack.c.b16 %v2297, %v2296
      %v2337 = vrot.slane %v2298, 1
      %v2338 = vrot.slane %v2299, 1
      %v2339 = vsel %vm1570, %v2337, %v2338
      %v2340 = vrot.slane %v2300, 1
      %v2341 = vsel %vm1570, %v2338, %v2340
      %v2342 = vrot.slane %v2301, 1
      %v2343 = vsel %vm1570, %v2340, %v2342
      %v2344 = vrot.slane %v2302, 1
      %v2345 = vsel %vm1570, %v2342, %v2344
      %v2346 = vrot.slane %v2303, 1
      %v2347 = vsel %vm1570, %v2344, %v2346
      %v2348 = vrot.slane %v2304, 1
      %v2349 = vsel %vm1570, %v2346, %v2348
      %v2350 = vrot.slane %v2305, 1
      %v2351 = vsel %vm1570, %v2348, %v2350
      %v2352 = vrot.slane %v2306, 1
      %v2353 = vsel %vm1570, %v2350, %v2352
      %v2354 = vrot.slane %v2307, 1
      %v2355 = vsel %vm1570, %v2352, %v2354
      %v2356 = vrot.slane %v2308, 1
      %v2357 = vsel %vm1570, %v2354, %v2356
      %v2358 = vrot.slane %v2309, 1
      %v2359 = vsel %vm1570, %v2356, %v2358
      %v2360 = vrot.slane %v2310, 1
      %v2361 = vsel %vm1570, %v2358, %v2360
      %v2362 = vrot.slane %v2311, 1
      %v2363 = vsel %vm1570, %v2360, %v2362
      %v2364 = vrot.slane %v2312, 1
      %v2365 = vsel %vm1570, %v2362, %v2364
      %v2366 = vrot.slane %v2313, 1
      %v2367 = vsel %vm1570, %v2364, %v2366
      %v2368 = vrot.slane %v2314, 1
      %v2369 = vsel %vm1570, %v2366, %v2368
      %v2370 = vrot.slane %v2315, 1
      %v2371 = vsel %vm1570, %v2368, %v2370
      %v2372 = vrot.slane %v2316, 1
      %v2373 = vsel %vm1570, %v2370, %v2372
      %v2374 = vrot.slane %v2317, 1
      %v2375 = vsel %vm1570, %v2372, %v2374
      %v2376 = vrot.slane %v2318, 1
      %v2377 = vsel %vm1570, %v2374, %v2376
      %v2378 = vrot.slane %v2319, 1
      %v2379 = vsel %vm1570, %v2376, %v2378
      %v2380 = vrot.slane %v2320, 1
      %v2381 = vsel %vm1570, %v2378, %v2380
      %v2382 = vrot.slane %v2321, 1
      %v2383 = vsel %vm1570, %v2380, %v2382
      %v2384 = vrot.slane %v2322, 1
      %v2385 = vsel %vm1570, %v2382, %v2384
      %v2386 = vrot.slane %v2323, 1
      %v2387 = vsel %vm1570, %v2384, %v2386
      %v2388 = vrot.slane %v2324, 1
      %v2389 = vsel %vm1570, %v2386, %v2388
      %v2390 = vrot.slane %v2325, 1
      %v2391 = vsel %vm1570, %v2388, %v2390
      %v2392 = vrot.slane %v2326, 1
      %v2393 = vsel %vm1570, %v2390, %v2392
      %v2394 = vrot.slane %v2327, 1
      %v2395 = vsel %vm1570, %v2392, %v2394
      %v2396 = vrot.slane %v2328, 1
      %v2397 = vsel %vm1570, %v2394, %v2396
      %v2398 = vrot.slane %v2329, 1
      %v2399 = vsel %vm1570, %v2396, %v2398
      %v2400 = vrot.slane %v2330, 1
      %v2401 = vsel %vm1570, %v2398, %v2400
      %v2402 = vrot.slane %v2331, 1
      %v2403 = vsel %vm1570, %v2400, %v2402
      %v2404 = vrot.slane %v2332, 1
      %v2405 = vsel %vm1570, %v2402, %v2404
      %v2406 = vrot.slane %v2333, 1
      %v2407 = vsel %vm1570, %v2404, %v2406
      %v2408 = vrot.slane %v2334, 1
      %v2409 = vsel %vm1570, %v2406, %v2408
      %v2410 = vrot.slane %v2335, 1
      %v2411 = vsel %vm1570, %v2408, %v2410
      %v2412 = vrot.slane %v2336, 1
      %v2413 = vsel %vm1570, %v2410, %v2412
      %v2418 = vunpack.c.l.b16 %v2138
      %v2419 = vunpack.c.l.b16 %v2139
      %v2420 = vunpack.c.l.b16 %v2140
      %v2421 = vunpack.c.l.b16 %v2141
      %v2422 = vpack.c.b16 %v2419, %v2418
      %v2423 = vpack.c.b16 %v2421, %v2420
      %v2427 = vsel %vm941, %v2339, 0
      %v2430 = vsel %vm941, %v2341, 0
      %v2433 = vsel %vm941, %v2343, 0
      %v2436 = vsel %vm941, %v2345, 0
      %v2439 = vsel %vm941, %v2347, 0
      %v2442 = vsel %vm941, %v2349, 0
      %v2445 = vsel %vm941, %v2351, 0
      %v2448 = vsel %vm941, %v2353, 0
      %v2451 = vsel %vm941, %v2355, 0
      %v2454 = vsel %vm941, %v2357, 0
      %v2457 = vsel %vm941, %v2359, 0
      %v2460 = vsel %vm941, %v2361, 0
      %v2463 = vsel %vm941, %v2363, 0
      %v2466 = vsel %vm941, %v2365, 0
      %v2469 = vsel %vm941, %v2367, 0
      %v2472 = vsel %vm941, %v2369, 0
      %v2475 = vsel %vm941, %v2371, 0
      %v2478 = vsel %vm941, %v2373, 0
      %v2481 = vsel %vm941, %v2375, 0
      %v2484 = vsel %vm941, %v2377, 0
      %v2487 = vsel %vm941, %v2379, 0
      %v2490 = vsel %vm941, %v2381, 0
      %v2493 = vsel %vm941, %v2383, 0
      %v2496 = vsel %vm941, %v2385, 0
      %v2499 = vsel %vm941, %v2387, 0
      %v2502 = vsel %vm941, %v2389, 0
      %v2505 = vsel %vm941, %v2391, 0
      %v2508 = vsel %vm941, %v2393, 0
      %v2511 = vsel %vm941, %v2395, 0
      %v2514 = vsel %vm941, %v2397, 0
      %v2517 = vsel %vm941, %v2399, 0
      %v2520 = vsel %vm941, %v2401, 0
      %v2523 = vsel %vm941, %v2403, 0
      %v2526 = vsel %vm941, %v2405, 0
      %v2529 = vsel %vm941, %v2407, 0
      %v2532 = vsel %vm941, %v2409, 0
      %v2535 = vsel %vm941, %v2411, 0
      %v2538 = vsel %vm941, %v2413, 0
      %v2541 = vsel %vm941, %v2412, 0
      %2543 = vmatpush.bf16.msra.mxu0 0
      %2544 = vmatpush.bf16.msra.mxu0 0
      %2545 = vmatpush.bf16.msra.mxu0 0
      %2546 = vmatpush.bf16.msra.mxu0 0
      %2547 = vmatpush.bf16.msra.mxu0 0
      %2548 = vmatpush.bf16.msra.mxu0 0
      %2549 = vmatpush.bf16.msra.mxu0 %v2423
      %2550 = vmatpush.bf16.msra.mxu0 %v2422
      %2551 = vmatmul.bf16.gmra.mxu0 %v2427
      %v2552 = vpop.f32.mrf.mxu0
      %v2553 = vadd.f32 0.0, %v2552
      %v2554 = vpop.f32.mrf.mxu0
      %v2555 = vadd.f32 0.0, %v2554
      %2556 = vmatmul.bf16.gmra.mxu0 %v2430
      %v2557 = vpop.f32.mrf.mxu0
      %v2558 = vadd.f32 0.0, %v2557
      %v2559 = vpop.f32.mrf.mxu0
      %v2560 = vadd.f32 0.0, %v2559
      %2561 = vmatmul.bf16.gmra.mxu0 %v2433
      %v2562 = vpop.f32.mrf.mxu0
      %v2563 = vadd.f32 0.0, %v2562
      %v2564 = vpop.f32.mrf.mxu0
      %v2565 = vadd.f32 0.0, %v2564
      %2566 = vmatmul.bf16.gmra.mxu0 %v2436
      %v2567 = vpop.f32.mrf.mxu0
      %v2568 = vadd.f32 0.0, %v2567
      %v2569 = vpop.f32.mrf.mxu0
      %v2570 = vadd.f32 0.0, %v2569
      %2571 = vmatmul.bf16.gmra.mxu0 %v2439
      %v2572 = vpop.f32.mrf.mxu0
      %v2573 = vadd.f32 0.0, %v2572
      %v2574 = vpop.f32.mrf.mxu0
      %v2575 = vadd.f32 0.0, %v2574
      %2576 = vmatmul.bf16.gmra.mxu0 %v2442
      %v2577 = vpop.f32.mrf.mxu0
      %v2578 = vadd.f32 0.0, %v2577
      %v2579 = vpop.f32.mrf.mxu0
      %v2580 = vadd.f32 0.0, %v2579
      %2581 = vmatmul.bf16.gmra.mxu0 %v2445
      %v2582 = vpop.f32.mrf.mxu0
      %v2583 = vadd.f32 0.0, %v2582
      %v2584 = vpop.f32.mrf.mxu0
      %v2585 = vadd.f32 0.0, %v2584
      %2586 = vmatmul.bf16.gmra.mxu0 %v2448
      %v2587 = vpop.f32.mrf.mxu0
      %v2588 = vadd.f32 0.0, %v2587
      %v2589 = vpop.f32.mrf.mxu0
      %v2590 = vadd.f32 0.0, %v2589
      %2591 = vmatmul.bf16.gmra.mxu0 %v2451
      %v2592 = vpop.f32.mrf.mxu0
      %v2593 = vadd.f32 0.0, %v2592
      %v2594 = vpop.f32.mrf.mxu0
      %v2595 = vadd.f32 0.0, %v2594
      %2596 = vmatmul.bf16.gmra.mxu0 %v2454
      %v2597 = vpop.f32.mrf.mxu0
      %v2598 = vadd.f32 0.0, %v2597
      %v2599 = vpop.f32.mrf.mxu0
      %v2600 = vadd.f32 0.0, %v2599
      %2601 = vmatmul.bf16.gmra.mxu0 %v2457
      %v2602 = vpop.f32.mrf.mxu0
      %v2603 = vadd.f32 0.0, %v2602
      %v2604 = vpop.f32.mrf.mxu0
      %v2605 = vadd.f32 0.0, %v2604
      %2606 = vmatmul.bf16.gmra.mxu0 %v2460
      %v2607 = vpop.f32.mrf.mxu0
      %v2608 = vadd.f32 0.0, %v2607
      %v2609 = vpop.f32.mrf.mxu0
      %v2610 = vadd.f32 0.0, %v2609
      %2611 = vmatmul.bf16.gmra.mxu0 %v2463
      %v2612 = vpop.f32.mrf.mxu0
      %v2613 = vadd.f32 0.0, %v2612
      %v2614 = vpop.f32.mrf.mxu0
      %v2615 = vadd.f32 0.0, %v2614
      %2616 = vmatmul.bf16.gmra.mxu0 %v2466
      %v2617 = vpop.f32.mrf.mxu0
      %v2618 = vadd.f32 0.0, %v2617
      %v2619 = vpop.f32.mrf.mxu0
      %v2620 = vadd.f32 0.0, %v2619
      %2621 = vmatmul.bf16.gmra.mxu0 %v2469
      %v2622 = vpop.f32.mrf.mxu0
      %v2623 = vadd.f32 0.0, %v2622
      %v2624 = vpop.f32.mrf.mxu0
      %v2625 = vadd.f32 0.0, %v2624
      %2626 = vmatmul.bf16.gmra.mxu0 %v2472
      %v2627 = vpop.f32.mrf.mxu0
      %v2628 = vadd.f32 0.0, %v2627
      %v2629 = vpop.f32.mrf.mxu0
      %v2630 = vadd.f32 0.0, %v2629
      %2631 = vmatmul.bf16.gmra.mxu0 %v2475
      %v2632 = vpop.f32.mrf.mxu0
      %v2633 = vadd.f32 0.0, %v2632
      %v2634 = vpop.f32.mrf.mxu0
      %v2635 = vadd.f32 0.0, %v2634
      %2636 = vmatmul.bf16.gmra.mxu0 %v2478
      %v2637 = vpop.f32.mrf.mxu0
      %v2638 = vadd.f32 0.0, %v2637
      %v2639 = vpop.f32.mrf.mxu0
      %v2640 = vadd.f32 0.0, %v2639
      %2641 = vmatmul.bf16.gmra.mxu0 %v2481
      %v2642 = vpop.f32.mrf.mxu0
      %v2643 = vadd.f32 0.0, %v2642
      %v2644 = vpop.f32.mrf.mxu0
      %v2645 = vadd.f32 0.0, %v2644
      %2646 = vmatmul.bf16.gmra.mxu0 %v2484
      %v2647 = vpop.f32.mrf.mxu0
      %v2648 = vadd.f32 0.0, %v2647
      %v2649 = vpop.f32.mrf.mxu0
      %v2650 = vadd.f32 0.0, %v2649
      %2651 = vmatmul.bf16.gmra.mxu0 %v2487
      %v2652 = vpop.f32.mrf.mxu0
      %v2653 = vadd.f32 0.0, %v2652
      %v2654 = vpop.f32.mrf.mxu0
      %v2655 = vadd.f32 0.0, %v2654
      %2656 = vmatmul.bf16.gmra.mxu0 %v2490
      %v2657 = vpop.f32.mrf.mxu0
      %v2658 = vadd.f32 0.0, %v2657
      %v2659 = vpop.f32.mrf.mxu0
      %v2660 = vadd.f32 0.0, %v2659
      %2661 = vmatmul.bf16.gmra.mxu0 %v2493
      %v2662 = vpop.f32.mrf.mxu0
      %v2663 = vadd.f32 0.0, %v2662
      %v2664 = vpop.f32.mrf.mxu0
      %v2665 = vadd.f32 0.0, %v2664
      %2666 = vmatmul.bf16.gmra.mxu0 %v2496
      %v2667 = vpop.f32.mrf.mxu0
      %v2668 = vadd.f32 0.0, %v2667
      %v2669 = vpop.f32.mrf.mxu0
      %v2670 = vadd.f32 0.0, %v2669
      %2671 = vmatmul.bf16.gmra.mxu0 %v2499
      %v2672 = vpop.f32.mrf.mxu0
      %v2673 = vadd.f32 0.0, %v2672
      %v2674 = vpop.f32.mrf.mxu0
      %v2675 = vadd.f32 0.0, %v2674
      %2676 = vmatmul.bf16.gmra.mxu0 %v2502
      %v2677 = vpop.f32.mrf.mxu0
      %v2678 = vadd.f32 0.0, %v2677
      %v2679 = vpop.f32.mrf.mxu0
      %v2680 = vadd.f32 0.0, %v2679
      %2681 = vmatmul.bf16.gmra.mxu0 %v2505
      %v2682 = vpop.f32.mrf.mxu0
      %v2683 = vadd.f32 0.0, %v2682
      %v2684 = vpop.f32.mrf.mxu0
      %v2685 = vadd.f32 0.0, %v2684
      %2686 = vmatmul.bf16.gmra.mxu0 %v2508
      %v2687 = vpop.f32.mrf.mxu0
      %v2688 = vadd.f32 0.0, %v2687
      %v2689 = vpop.f32.mrf.mxu0
      %v2690 = vadd.f32 0.0, %v2689
      %2691 = vmatmul.bf16.gmra.mxu0 %v2511
      %v2692 = vpop.f32.mrf.mxu0
      %v2693 = vadd.f32 0.0, %v2692
      %v2694 = vpop.f32.mrf.mxu0
      %v2695 = vadd.f32 0.0, %v2694
      %2696 = vmatmul.bf16.gmra.mxu0 %v2514
      %v2697 = vpop.f32.mrf.mxu0
      %v2698 = vadd.f32 0.0, %v2697
      %v2699 = vpop.f32.mrf.mxu0
      %v2700 = vadd.f32 0.0, %v2699
      %2701 = vmatmul.bf16.gmra.mxu0 %v2517
      %v2702 = vpop.f32.mrf.mxu0
      %v2703 = vadd.f32 0.0, %v2702
      %v2704 = vpop.f32.mrf.mxu0
      %v2705 = vadd.f32 0.0, %v2704
      %2706 = vmatmul.bf16.gmra.mxu0 %v2520
      %v2707 = vpop.f32.mrf.mxu0
      %v2708 = vadd.f32 0.0, %v2707
      %v2709 = vpop.f32.mrf.mxu0
      %v2710 = vadd.f32 0.0, %v2709
      %2711 = vmatmul.bf16.gmra.mxu0 %v2523
      %v2712 = vpop.f32.mrf.mxu0
      %v2713 = vadd.f32 0.0, %v2712
      %v2714 = vpop.f32.mrf.mxu0
      %v2715 = vadd.f32 0.0, %v2714
      %2716 = vmatmul.bf16.gmra.mxu0 %v2526
      %v2717 = vpop.f32.mrf.mxu0
      %v2718 = vadd.f32 0.0, %v2717
      %v2719 = vpop.f32.mrf.mxu0
      %v2720 = vadd.f32 0.0, %v2719
      %2721 = vmatmul.bf16.gmra.mxu0 %v2529
      %v2722 = vpop.f32.mrf.mxu0
      %v2723 = vadd.f32 0.0, %v2722
      %v2724 = vpop.f32.mrf.mxu0
      %v2725 = vadd.f32 0.0, %v2724
      %2726 = vmatmul.bf16.gmra.mxu0 %v2532
      %v2727 = vpop.f32.mrf.mxu0
      %v2728 = vadd.f32 0.0, %v2727
      %v2729 = vpop.f32.mrf.mxu0
      %v2730 = vadd.f32 0.0, %v2729
      %2731 = vmatmul.bf16.gmra.mxu0 %v2535
      %v2732 = vpop.f32.mrf.mxu0
      %v2733 = vadd.f32 0.0, %v2732
      %v2734 = vpop.f32.mrf.mxu0
      %v2735 = vadd.f32 0.0, %v2734
      %2736 = vmatmul.bf16.gmra.mxu0 %v2538
      %v2737 = vpop.f32.mrf.mxu0
      %v2738 = vadd.f32 0.0, %v2737
      %v2739 = vpop.f32.mrf.mxu0
      %v2740 = vadd.f32 0.0, %v2739
      %2741 = vmatmul.bf16.gmra.mxu0 %v2541
      %v2742 = vpop.f32.mrf.mxu0
      %v2743 = vadd.f32 0.0, %v2742
      %v2744 = vpop.f32.mrf.mxu0
      %v2745 = vadd.f32 0.0, %v2744
      %2746 = vdwg.mxu0
      %v2747 = vadd.f32 %v1981, %v2553
      %v2748 = vadd.f32 %v1982, %v2555
      %v2749 = vadd.f32 %v1983, %v2558
      %v2750 = vadd.f32 %v1984, %v2560
      %v2751 = vadd.f32 %v1985, %v2563
      %v2752 = vadd.f32 %v1986, %v2565
      %v2753 = vadd.f32 %v1987, %v2568
      %v2754 = vadd.f32 %v1988, %v2570
      %v2755 = vadd.f32 %v1989, %v2573
      %v2756 = vadd.f32 %v1990, %v2575
      %v2757 = vadd.f32 %v1991, %v2578
      %v2758 = vadd.f32 %v1992, %v2580
      %v2759 = vadd.f32 %v1993, %v2583
      %v2760 = vadd.f32 %v1994, %v2585
      %v2761 = vadd.f32 %v1995, %v2588
      %v2762 = vadd.f32 %v1996, %v2590
      %v2763 = vadd.f32 %v1997, %v2593
      %v2764 = vadd.f32 %v1998, %v2595
      %v2765 = vadd.f32 %v1999, %v2598
      %v2766 = vadd.f32 %v2000, %v2600
      %v2767 = vadd.f32 %v2001, %v2603
      %v2768 = vadd.f32 %v2002, %v2605
      %v2769 = vadd.f32 %v2003, %v2608
      %v2770 = vadd.f32 %v2004, %v2610
      %v2771 = vadd.f32 %v2005, %v2613
      %v2772 = vadd.f32 %v2006, %v2615
      %v2773 = vadd.f32 %v2007, %v2618
      %v2774 = vadd.f32 %v2008, %v2620
      %v2775 = vadd.f32 %v2009, %v2623
      %v2776 = vadd.f32 %v2010, %v2625
      %v2777 = vadd.f32 %v2011, %v2628
      %v2778 = vadd.f32 %v2012, %v2630
      %v2779 = vadd.f32 %v2013, %v2633
      %v2780 = vadd.f32 %v2014, %v2635
      %v2781 = vadd.f32 %v2015, %v2638
      %v2782 = vadd.f32 %v2016, %v2640
      %v2783 = vadd.f32 %v2017, %v2643
      %v2784 = vadd.f32 %v2018, %v2645
      %v2785 = vadd.f32 %v2019, %v2648
      %v2786 = vadd.f32 %v2020, %v2650
      %v2787 = vadd.f32 %v2021, %v2653
      %v2788 = vadd.f32 %v2022, %v2655
      %v2789 = vadd.f32 %v2023, %v2658
      %v2790 = vadd.f32 %v2024, %v2660
      %v2791 = vadd.f32 %v2025, %v2663
      %v2792 = vadd.f32 %v2026, %v2665
      %v2793 = vadd.f32 %v2027, %v2668
      %v2794 = vadd.f32 %v2028, %v2670
      %v2795 = vadd.f32 %v2029, %v2673
      %v2796 = vadd.f32 %v2030, %v2675
      %v2797 = vadd.f32 %v2031, %v2678
      %v2798 = vadd.f32 %v2032, %v2680
      %v2799 = vadd.f32 %v2033, %v2683
      %v2800 = vadd.f32 %v2034, %v2685
      %v2801 = vadd.f32 %v2035, %v2688
      %v2802 = vadd.f32 %v2036, %v2690
      %v2803 = vadd.f32 %v2037, %v2693
      %v2804 = vadd.f32 %v2038, %v2695
      %v2805 = vadd.f32 %v2039, %v2698
      %v2806 = vadd.f32 %v2040, %v2700
      %v2807 = vadd.f32 %v2041, %v2703
      %v2808 = vadd.f32 %v2042, %v2705
      %v2809 = vadd.f32 %v2043, %v2708
      %v2810 = vadd.f32 %v2044, %v2710
      %v2811 = vadd.f32 %v2045, %v2713
      %v2812 = vadd.f32 %v2046, %v2715
      %v2813 = vadd.f32 %v2047, %v2718
      %v2814 = vadd.f32 %v2048, %v2720
      %v2815 = vadd.f32 %v2049, %v2723
      %v2816 = vadd.f32 %v2050, %v2725
      %v2817 = vadd.f32 %v2051, %v2728
      %v2818 = vadd.f32 %v2052, %v2730
      %v2819 = vadd.f32 %v2053, %v2733
      %v2820 = vadd.f32 %v2054, %v2735
      %v2821 = vadd.f32 %v2055, %v2738
      %v2822 = vadd.f32 %v2056, %v2740
      %v2823 = vadd.f32 %v2057, %v2743
      %v2824 = vadd.f32 %v2058, %v2745
      %v2825 = vld [vmem:[%s327 + $0xc] sm:$0xe]
      %v2826 = vld [vmem:[%s327 + $0x10] sm:$0xf]
      %v2827 = vld [vmem:[%s327 + $0x14] sm:$0xf]
      %v2828 = vld [vmem:[%s327 + $0x18] sm:$0xf]
      %v2829 = vld [vmem:[%s327 + $0x1c] sm:$0xf]
      %v2830 = vld [vmem:[%s327 + $0x20] sm:$0xf]
      %v2831 = vld [vmem:[%s327 + $0x24] sm:$0xf]
      %v2832 = vld [vmem:[%s327 + $0x28] sm:$0xf]
      %v2833 = vld [vmem:[%s327 + $0x2c] sm:$0xf]
      %v2834 = vld [vmem:[%s327 + $0x30] sm:$0xf]
      %v2835 = vld [vmem:[%s327 + $0x34] sm:$0xf]
      %v2836 = vld [vmem:[%s327 + $0x38] sm:$0xf]
      %v2837 = vld [vmem:[%s327 + $0x3c] sm:$0xf]
      %v2838 = vld [vmem:[%s327 + $0x40] sm:$0xf]
      %v2839 = vld [vmem:[%s327 + $0x44] sm:$0xf]
      %v2840 = vld [vmem:[%s327 + $0x48] sm:$0xf]
      %v2841 = vld [vmem:[%s327 + $0x4c] sm:$0xf]
      %v2842 = vld [vmem:[%s327 + $0x50] sm:$0xf]
      %v2843 = vld [vmem:[%s327 + $0x54] sm:$0xf]
      %v2844 = vld [vmem:[%s327 + $0x58] sm:$0xf]
      %v2845 = vld [vmem:[%s327 + $0x5c] sm:$0xf]
      %v2846 = vld [vmem:[%s327 + $0x60] sm:$0xf]
      %v2847 = vld [vmem:[%s327 + $0x64] sm:$0xf]
      %v2848 = vld [vmem:[%s327 + $0x68] sm:$0xf]
      %v2849 = vld [vmem:[%s327 + $0x6c] sm:$0xf]
      %v2850 = vld [vmem:[%s327 + $0x70] sm:$0xf]
      %v2851 = vld [vmem:[%s327 + $0x74] sm:$0xf]
      %v2852 = vld [vmem:[%s327 + $0x78] sm:$0xf]
      %v2853 = vld [vmem:[%s327 + $0x7c] sm:$0xf]
      %v2854 = vld [vmem:[%s327 + $0x80] sm:$0xf]
      %v2855 = vld [vmem:[%s327 + $0x84] sm:$0xf]
      %v2856 = vld [vmem:[%s327 + $0x88] sm:$0xf]
      %v2857 = vld [vmem:[%s327 + $0x8c] sm:$0xf]
      %v2858 = vld [vmem:[%s327 + $0x90] sm:$0xf]
      %v2859 = vld [vmem:[%s327 + $0x94] sm:$0xf]
      %v2860 = vld [vmem:[%s327 + $0x98] sm:$0xf]
      %v2861 = vld [vmem:[%s327 + $0x9c] sm:$0xf]
      %v2862 = vld [vmem:[%s327 + $0xa0] sm:$0xf]
      %v2863 = vld [vmem:[%s327 + $0xa4] sm:$0xf]
      %v2864 = vld [vmem:[%s327 + $0xa8] sm:$0xf]
      %v2865 = vld [vmem:[%s327 + $0xac] sm:$0xf]
      %v2866 = vld [vmem:[%s327 + $0xb0] sm:$0xf]
      %v2867 = vld [vmem:[%s327 + $0xb4] sm:$0xf]
      %v2868 = vld [vmem:[%s327 + $0xb8] sm:$0xf]
      %v2869 = vld [vmem:[%s327 + $0xbc] sm:$0xf]
      %v2870 = vld [vmem:[%s327 + $0xc0] sm:$0xf]
      %v2871 = vld [vmem:[%s327 + $0xc4] sm:$0xf]
      %v2872 = vld [vmem:[%s327 + $0xc8] sm:$0xf]
      %v2873 = vld [vmem:[%s327 + $0xcc] sm:$0xf]
      %v2874 = vld [vmem:[%s327 + $0xd0] sm:$0xf]
      %v2875 = vld [vmem:[%s327 + $0xd4] sm:$0xf]
      %v2876 = vld [vmem:[%s327 + $0xd8] sm:$0xf]
      %v2877 = vld [vmem:[%s327 + $0xdc] sm:$0xf]
      %v2878 = vld [vmem:[%s327 + $0xe0] sm:$0xf]
      %v2879 = vld [vmem:[%s327 + $0xe4] sm:$0xf]
      %v2880 = vld [vmem:[%s327 + $0xe8] sm:$0xf]
      %v2881 = vld [vmem:[%s327 + $0xec] sm:$0xf]
      %v2882 = vld [vmem:[%s327 + $0xf0] sm:$0xf]
      %v2883 = vld [vmem:[%s327 + $0xf4] sm:$0xf]
      %v2884 = vld [vmem:[%s327 + $0xf8] sm:$0xf]
      %v2885 = vld [vmem:[%s327 + $0xfc] sm:$0xf]
      %v2886 = vld [vmem:[%s327 + $0x100] sm:$0xf]
      %v2887 = vld [vmem:[%s327 + $0x104] sm:$0xf]
      %v2888 = vld [vmem:[%s327 + $0x108] sm:$0xf]
      %v2889 = vld [vmem:[%s327 + $0x10c] sm:$0xf]
      %v2890 = vld [vmem:[%s327 + $0x110] sm:$0xf]
      %v2891 = vld [vmem:[%s327 + $0x114] sm:$0xf]
      %v2892 = vld [vmem:[%s327 + $0x118] sm:$0xf]
      %v2893 = vld [vmem:[%s327 + $0x11c] sm:$0xf]
      %v2894 = vld [vmem:[%s327 + $0x120] sm:$0xf]
      %v2895 = vld [vmem:[%s327 + $0x124] sm:$0xf]
      %v2896 = vld [vmem:[%s327 + $0x128] sm:$0xf]
      %v2897 = vld [vmem:[%s327 + $0x12c] sm:$0xf]
      %v2898 = vld [vmem:[%s327 + $0x130] sm:$0xf]
      %v2899 = vld [vmem:[%s327 + $0x134] sm:$0xf]
      %v2900 = vld [vmem:[%s327 + $0x138] sm:$0xf]
      %v2901 = vld [vmem:[%s327 + $0x13c] sm:$0xf]
      %v2902 = vld [vmem:[%s327 + $0x140] sm:$0xf]
      %v2903 = vld [vmem:[%s327 + $0x144] sm:$0x1]
      %s2904 = scalar_lea.vmem %s1, 64
      %v2905 = vld [vmem:[%s2904] sm:$0xf]
      %v2906 = vld [vmem:[%s2904 + $0x4] sm:$0xf]
      %v2907 = vld [vmem:[%s2904 + $0x8] sm:$0xf]
      %v2908 = vld [vmem:[%s2904 + $0xc] sm:$0xf]
      %v2988 = vunpack.c.l.b16 %v2825
      %v2989 = vunpack.c.l.b16 %v2826
      %v2990 = vunpack.c.l.b16 %v2827
      %v2991 = vunpack.c.l.b16 %v2828
      %v2992 = vunpack.c.l.b16 %v2829
      %v2993 = vunpack.c.l.b16 %v2830
      %v2994 = vunpack.c.l.b16 %v2831
      %v2995 = vunpack.c.l.b16 %v2832
      %v2996 = vunpack.c.l.b16 %v2833
      %v2997 = vunpack.c.l.b16 %v2834
      %v2998 = vunpack.c.l.b16 %v2835
      %v2999 = vunpack.c.l.b16 %v2836
      %v3000 = vunpack.c.l.b16 %v2837
      %v3001 = vunpack.c.l.b16 %v2838
      %v3002 = vunpack.c.l.b16 %v2839
      %v3003 = vunpack.c.l.b16 %v2840
      %v3004 = vunpack.c.l.b16 %v2841
      %v3005 = vunpack.c.l.b16 %v2842
      %v3006 = vunpack.c.l.b16 %v2843
      %v3007 = vunpack.c.l.b16 %v2844
      %v3008 = vunpack.c.l.b16 %v2845
      %v3009 = vunpack.c.l.b16 %v2846
      %v3010 = vunpack.c.l.b16 %v2847
      %v3011 = vunpack.c.l.b16 %v2848
      %v3012 = vunpack.c.l.b16 %v2849
      %v3013 = vunpack.c.l.b16 %v2850
      %v3014 = vunpack.c.l.b16 %v2851
      %v3015 = vunpack.c.l.b16 %v2852
      %v3016 = vunpack.c.l.b16 %v2853
      %v3017 = vunpack.c.l.b16 %v2854
      %v3018 = vunpack.c.l.b16 %v2855
      %v3019 = vunpack.c.l.b16 %v2856
      %v3020 = vunpack.c.l.b16 %v2857
      %v3021 = vunpack.c.l.b16 %v2858
      %v3022 = vunpack.c.l.b16 %v2859
      %v3023 = vunpack.c.l.b16 %v2860
      %v3024 = vunpack.c.l.b16 %v2861
      %v3025 = vunpack.c.l.b16 %v2862
      %v3026 = vunpack.c.l.b16 %v2863
      %v3027 = vunpack.c.l.b16 %v2864
      %v3028 = vunpack.c.l.b16 %v2865
      %v3029 = vunpack.c.l.b16 %v2866
      %v3030 = vunpack.c.l.b16 %v2867
      %v3031 = vunpack.c.l.b16 %v2868
      %v3032 = vunpack.c.l.b16 %v2869
      %v3033 = vunpack.c.l.b16 %v2870
      %v3034 = vunpack.c.l.b16 %v2871
      %v3035 = vunpack.c.l.b16 %v2872
      %v3036 = vunpack.c.l.b16 %v2873
      %v3037 = vunpack.c.l.b16 %v2874
      %v3038 = vunpack.c.l.b16 %v2875
      %v3039 = vunpack.c.l.b16 %v2876
      %v3040 = vunpack.c.l.b16 %v2877
      %v3041 = vunpack.c.l.b16 %v2878
      %v3042 = vunpack.c.l.b16 %v2879
      %v3043 = vunpack.c.l.b16 %v2880
      %v3044 = vunpack.c.l.b16 %v2881
      %v3045 = vunpack.c.l.b16 %v2882
      %v3046 = vunpack.c.l.b16 %v2883
      %v3047 = vunpack.c.l.b16 %v2884
      %v3048 = vunpack.c.l.b16 %v2885
      %v3049 = vunpack.c.l.b16 %v2886
      %v3050 = vunpack.c.l.b16 %v2887
      %v3051 = vunpack.c.l.b16 %v2888
      %v3052 = vunpack.c.l.b16 %v2889
      %v3053 = vunpack.c.l.b16 %v2890
      %v3054 = vunpack.c.l.b16 %v2891
      %v3055 = vunpack.c.l.b16 %v2892
      %v3056 = vunpack.c.l.b16 %v2893
      %v3057 = vunpack.c.l.b16 %v2894
      %v3058 = vunpack.c.l.b16 %v2895
      %v3059 = vunpack.c.l.b16 %v2896
      %v3060 = vunpack.c.l.b16 %v2897
      %v3061 = vunpack.c.l.b16 %v2898
      %v3062 = vunpack.c.l.b16 %v2899
      %v3063 = vunpack.c.l.b16 %v2900
      %v3064 = vunpack.c.l.b16 %v2901
      %v3065 = vunpack.c.l.b16 %v2902
      %v3066 = vunpack.c.l.b16 %v2903
      %v3067 = vpack.c.b16 %v2989, %v2988
      %v3068 = vpack.c.b16 %v2991, %v2990
      %v3069 = vpack.c.b16 %v2993, %v2992
      %v3070 = vpack.c.b16 %v2995, %v2994
      %v3071 = vpack.c.b16 %v2997, %v2996
      %v3072 = vpack.c.b16 %v2999, %v2998
      %v3073 = vpack.c.b16 %v3001, %v3000
      %v3074 = vpack.c.b16 %v3003, %v3002
      %v3075 = vpack.c.b16 %v3005, %v3004
      %v3076 = vpack.c.b16 %v3007, %v3006
      %v3077 = vpack.c.b16 %v3009, %v3008
      %v3078 = vpack.c.b16 %v3011, %v3010
      %v3079 = vpack.c.b16 %v3013, %v3012
      %v3080 = vpack.c.b16 %v3015, %v3014
      %v3081 = vpack.c.b16 %v3017, %v3016
      %v3082 = vpack.c.b16 %v3019, %v3018
      %v3083 = vpack.c.b16 %v3021, %v3020
      %v3084 = vpack.c.b16 %v3023, %v3022
      %v3085 = vpack.c.b16 %v3025, %v3024
      %v3086 = vpack.c.b16 %v3027, %v3026
      %v3087 = vpack.c.b16 %v3029, %v3028
      %v3088 = vpack.c.b16 %v3031, %v3030
      %v3089 = vpack.c.b16 %v3033, %v3032
      %v3090 = vpack.c.b16 %v3035, %v3034
      %v3091 = vpack.c.b16 %v3037, %v3036
      %v3092 = vpack.c.b16 %v3039, %v3038
      %v3093 = vpack.c.b16 %v3041, %v3040
      %v3094 = vpack.c.b16 %v3043, %v3042
      %v3095 = vpack.c.b16 %v3045, %v3044
      %v3096 = vpack.c.b16 %v3047, %v3046
      %v3097 = vpack.c.b16 %v3049, %v3048
      %v3098 = vpack.c.b16 %v3051, %v3050
      %v3099 = vpack.c.b16 %v3053, %v3052
      %v3100 = vpack.c.b16 %v3055, %v3054
      %v3101 = vpack.c.b16 %v3057, %v3056
      %v3102 = vpack.c.b16 %v3059, %v3058
      %v3103 = vpack.c.b16 %v3061, %v3060
      %v3104 = vpack.c.b16 %v3063, %v3062
      %v3105 = vpack.c.b16 %v3065, %v3064
      %v3106 = vpack.c.b16 %v3066, %v3066
      %vm3107 = vsmask.f32 6400
      %v3109 = vshrl.u32 %v3067, 16
      %v3111 = vrot.slane %v3109, 1
      %v3112 = vshll.u32 %v3067, 16
      %v3114 = vrot.slane %v3112, 2
      %v3115 = vor.u32 %v3111, %v3114
      %v3117 = vshrl.u32 %v3068, 16
      %v3119 = vrot.slane %v3117, 1
      %v3120 = vshll.u32 %v3068, 16
      %v3122 = vrot.slane %v3120, 2
      %v3123 = vor.u32 %v3119, %v3122
      %v3124 = vsel %vm3107, %v3115, %v3123
      %v3126 = vshrl.u32 %v3069, 16
      %v3128 = vrot.slane %v3126, 1
      %v3129 = vshll.u32 %v3069, 16
      %v3131 = vrot.slane %v3129, 2
      %v3132 = vor.u32 %v3128, %v3131
      %v3133 = vsel %vm3107, %v3123, %v3132
      %v3135 = vshrl.u32 %v3070, 16
      %v3137 = vrot.slane %v3135, 1
      %v3138 = vshll.u32 %v3070, 16
      %v3140 = vrot.slane %v3138, 2
      %v3141 = vor.u32 %v3137, %v3140
      %v3142 = vsel %vm3107, %v3132, %v3141
      %v3144 = vshrl.u32 %v3071, 16
      %v3146 = vrot.slane %v3144, 1
      %v3147 = vshll.u32 %v3071, 16
      %v3149 = vrot.slane %v3147, 2
      %v3150 = vor.u32 %v3146, %v3149
      %v3151 = vsel %vm3107, %v3141, %v3150
      %v3153 = vshrl.u32 %v3072, 16
      %v3155 = vrot.slane %v3153, 1
      %v3156 = vshll.u32 %v3072, 16
      %v3158 = vrot.slane %v3156, 2
      %v3159 = vor.u32 %v3155, %v3158
      %v3160 = vsel %vm3107, %v3150, %v3159
      %v3162 = vshrl.u32 %v3073, 16
      %v3164 = vrot.slane %v3162, 1
      %v3165 = vshll.u32 %v3073, 16
      %v3167 = vrot.slane %v3165, 2
      %v3168 = vor.u32 %v3164, %v3167
      %v3169 = vsel %vm3107, %v3159, %v3168
      %v3171 = vshrl.u32 %v3074, 16
      %v3173 = vrot.slane %v3171, 1
      %v3174 = vshll.u32 %v3074, 16
      %v3176 = vrot.slane %v3174, 2
      %v3177 = vor.u32 %v3173, %v3176
      %v3178 = vsel %vm3107, %v3168, %v3177
      %v3180 = vshrl.u32 %v3075, 16
      %v3182 = vrot.slane %v3180, 1
      %v3183 = vshll.u32 %v3075, 16
      %v3185 = vrot.slane %v3183, 2
      %v3186 = vor.u32 %v3182, %v3185
      %v3187 = vsel %vm3107, %v3177, %v3186
      %v3189 = vshrl.u32 %v3076, 16
      %v3191 = vrot.slane %v3189, 1
      %v3192 = vshll.u32 %v3076, 16
      %v3194 = vrot.slane %v3192, 2
      %v3195 = vor.u32 %v3191, %v3194
      %v3196 = vsel %vm3107, %v3186, %v3195
      %v3198 = vshrl.u32 %v3077, 16
      %v3200 = vrot.slane %v3198, 1
      %v3201 = vshll.u32 %v3077, 16
      %v3203 = vrot.slane %v3201, 2
      %v3204 = vor.u32 %v3200, %v3203
      %v3205 = vsel %vm3107, %v3195, %v3204
      %v3207 = vshrl.u32 %v3078, 16
      %v3209 = vrot.slane %v3207, 1
      %v3210 = vshll.u32 %v3078, 16
      %v3212 = vrot.slane %v3210, 2
      %v3213 = vor.u32 %v3209, %v3212
      %v3214 = vsel %vm3107, %v3204, %v3213
      %v3216 = vshrl.u32 %v3079, 16
      %v3218 = vrot.slane %v3216, 1
      %v3219 = vshll.u32 %v3079, 16
      %v3221 = vrot.slane %v3219, 2
      %v3222 = vor.u32 %v3218, %v3221
      %v3223 = vsel %vm3107, %v3213, %v3222
      %v3225 = vshrl.u32 %v3080, 16
      %v3227 = vrot.slane %v3225, 1
      %v3228 = vshll.u32 %v3080, 16
      %v3230 = vrot.slane %v3228, 2
      %v3231 = vor.u32 %v3227, %v3230
      %v3232 = vsel %vm3107, %v3222, %v3231
      %v3234 = vshrl.u32 %v3081, 16
      %v3236 = vrot.slane %v3234, 1
      %v3237 = vshll.u32 %v3081, 16
      %v3239 = vrot.slane %v3237, 2
      %v3240 = vor.u32 %v3236, %v3239
      %v3241 = vsel %vm3107, %v3231, %v3240
      %v3243 = vshrl.u32 %v3082, 16
      %v3245 = vrot.slane %v3243, 1
      %v3246 = vshll.u32 %v3082, 16
      %v3248 = vrot.slane %v3246, 2
      %v3249 = vor.u32 %v3245, %v3248
      %v3250 = vsel %vm3107, %v3240, %v3249
      %v3252 = vshrl.u32 %v3083, 16
      %v3254 = vrot.slane %v3252, 1
      %v3255 = vshll.u32 %v3083, 16
      %v3257 = vrot.slane %v3255, 2
      %v3258 = vor.u32 %v3254, %v3257
      %v3259 = vsel %vm3107, %v3249, %v3258
      %v3261 = vshrl.u32 %v3084, 16
      %v3263 = vrot.slane %v3261, 1
      %v3264 = vshll.u32 %v3084, 16
      %v3266 = vrot.slane %v3264, 2
      %v3267 = vor.u32 %v3263, %v3266
      %v3268 = vsel %vm3107, %v3258, %v3267
      %v3270 = vshrl.u32 %v3085, 16
      %v3272 = vrot.slane %v3270, 1
      %v3273 = vshll.u32 %v3085, 16
      %v3275 = vrot.slane %v3273, 2
      %v3276 = vor.u32 %v3272, %v3275
      %v3277 = vsel %vm3107, %v3267, %v3276
      %v3279 = vshrl.u32 %v3086, 16
      %v3281 = vrot.slane %v3279, 1
      %v3282 = vshll.u32 %v3086, 16
      %v3284 = vrot.slane %v3282, 2
      %v3285 = vor.u32 %v3281, %v3284
      %v3286 = vsel %vm3107, %v3276, %v3285
      %v3288 = vshrl.u32 %v3087, 16
      %v3290 = vrot.slane %v3288, 1
      %v3291 = vshll.u32 %v3087, 16
      %v3293 = vrot.slane %v3291, 2
      %v3294 = vor.u32 %v3290, %v3293
      %v3295 = vsel %vm3107, %v3285, %v3294
      %v3297 = vshrl.u32 %v3088, 16
      %v3299 = vrot.slane %v3297, 1
      %v3300 = vshll.u32 %v3088, 16
      %v3302 = vrot.slane %v3300, 2
      %v3303 = vor.u32 %v3299, %v3302
      %v3304 = vsel %vm3107, %v3294, %v3303
      %v3306 = vshrl.u32 %v3089, 16
      %v3308 = vrot.slane %v3306, 1
      %v3309 = vshll.u32 %v3089, 16
      %v3311 = vrot.slane %v3309, 2
      %v3312 = vor.u32 %v3308, %v3311
      %v3313 = vsel %vm3107, %v3303, %v3312
      %v3315 = vshrl.u32 %v3090, 16
      %v3317 = vrot.slane %v3315, 1
      %v3318 = vshll.u32 %v3090, 16
      %v3320 = vrot.slane %v3318, 2
      %v3321 = vor.u32 %v3317, %v3320
      %v3322 = vsel %vm3107, %v3312, %v3321
      %v3324 = vshrl.u32 %v3091, 16
      %v3326 = vrot.slane %v3324, 1
      %v3327 = vshll.u32 %v3091, 16
      %v3329 = vrot.slane %v3327, 2
      %v3330 = vor.u32 %v3326, %v3329
      %v3331 = vsel %vm3107, %v3321, %v3330
      %v3333 = vshrl.u32 %v3092, 16
      %v3335 = vrot.slane %v3333, 1
      %v3336 = vshll.u32 %v3092, 16
      %v3338 = vrot.slane %v3336, 2
      %v3339 = vor.u32 %v3335, %v3338
      %v3340 = vsel %vm3107, %v3330, %v3339
      %v3342 = vshrl.u32 %v3093, 16
      %v3344 = vrot.slane %v3342, 1
      %v3345 = vshll.u32 %v3093, 16
      %v3347 = vrot.slane %v3345, 2
      %v3348 = vor.u32 %v3344, %v3347
      %v3349 = vsel %vm3107, %v3339, %v3348
      %v3351 = vshrl.u32 %v3094, 16
      %v3353 = vrot.slane %v3351, 1
      %v3354 = vshll.u32 %v3094, 16
      %v3356 = vrot.slane %v3354, 2
      %v3357 = vor.u32 %v3353, %v3356
      %v3358 = vsel %vm3107, %v3348, %v3357
      %v3360 = vshrl.u32 %v3095, 16
      %v3362 = vrot.slane %v3360, 1
      %v3363 = vshll.u32 %v3095, 16
      %v3365 = vrot.slane %v3363, 2
      %v3366 = vor.u32 %v3362, %v3365
      %v3367 = vsel %vm3107, %v3357, %v3366
      %v3369 = vshrl.u32 %v3096, 16
      %v3371 = vrot.slane %v3369, 1
      %v3372 = vshll.u32 %v3096, 16
      %v3374 = vrot.slane %v3372, 2
      %v3375 = vor.u32 %v3371, %v3374
      %v3376 = vsel %vm3107, %v3366, %v3375
      %v3378 = vshrl.u32 %v3097, 16
      %v3380 = vrot.slane %v3378, 1
      %v3381 = vshll.u32 %v3097, 16
      %v3383 = vrot.slane %v3381, 2
      %v3384 = vor.u32 %v3380, %v3383
      %v3385 = vsel %vm3107, %v3375, %v3384
      %v3387 = vshrl.u32 %v3098, 16
      %v3389 = vrot.slane %v3387, 1
      %v3390 = vshll.u32 %v3098, 16
      %v3392 = vrot.slane %v3390, 2
      %v3393 = vor.u32 %v3389, %v3392
      %v3394 = vsel %vm3107, %v3384, %v3393
      %v3396 = vshrl.u32 %v3099, 16
      %v3398 = vrot.slane %v3396, 1
      %v3399 = vshll.u32 %v3099, 16
      %v3401 = vrot.slane %v3399, 2
      %v3402 = vor.u32 %v3398, %v3401
      %v3403 = vsel %vm3107, %v3393, %v3402
      %v3405 = vshrl.u32 %v3100, 16
      %v3407 = vrot.slane %v3405, 1
      %v3408 = vshll.u32 %v3100, 16
      %v3410 = vrot.slane %v3408, 2
      %v3411 = vor.u32 %v3407, %v3410
      %v3412 = vsel %vm3107, %v3402, %v3411
      %v3414 = vshrl.u32 %v3101, 16
      %v3416 = vrot.slane %v3414, 1
      %v3417 = vshll.u32 %v3101, 16
      %v3419 = vrot.slane %v3417, 2
      %v3420 = vor.u32 %v3416, %v3419
      %v3421 = vsel %vm3107, %v3411, %v3420
      %v3423 = vshrl.u32 %v3102, 16
      %v3425 = vrot.slane %v3423, 1
      %v3426 = vshll.u32 %v3102, 16
      %v3428 = vrot.slane %v3426, 2
      %v3429 = vor.u32 %v3425, %v3428
      %v3430 = vsel %vm3107, %v3420, %v3429
      %v3432 = vshrl.u32 %v3103, 16
      %v3434 = vrot.slane %v3432, 1
      %v3435 = vshll.u32 %v3103, 16
      %v3437 = vrot.slane %v3435, 2
      %v3438 = vor.u32 %v3434, %v3437
      %v3439 = vsel %vm3107, %v3429, %v3438
      %v3441 = vshrl.u32 %v3104, 16
      %v3443 = vrot.slane %v3441, 1
      %v3444 = vshll.u32 %v3104, 16
      %v3446 = vrot.slane %v3444, 2
      %v3447 = vor.u32 %v3443, %v3446
      %v3448 = vsel %vm3107, %v3438, %v3447
      %v3450 = vshrl.u32 %v3105, 16
      %v3452 = vrot.slane %v3450, 1
      %v3453 = vshll.u32 %v3105, 16
      %v3455 = vrot.slane %v3453, 2
      %v3456 = vor.u32 %v3452, %v3455
      %v3457 = vsel %vm3107, %v3447, %v3456
      %v3459 = vshll.u32 %v3106, 16
      %v3461 = vrot.slane %v3459, 2
      %v3462 = vsel %vm3107, %v3456, %v3461
      %v3467 = vunpack.c.l.b16 %v2905
      %v3468 = vunpack.c.l.b16 %v2906
      %v3469 = vunpack.c.l.b16 %v2907
      %v3470 = vunpack.c.l.b16 %v2908
      %v3471 = vpack.c.b16 %v3468, %v3467
      %v3472 = vpack.c.b16 %v3470, %v3469
      %v3476 = vsel %vm941, %v3124, 0
      %v3479 = vsel %vm941, %v3133, 0
      %v3482 = vsel %vm941, %v3142, 0
      %v3485 = vsel %vm941, %v3151, 0
      %v3488 = vsel %vm941, %v3160, 0
      %v3491 = vsel %vm941, %v3169, 0
      %v3494 = vsel %vm941, %v3178, 0
      %v3497 = vsel %vm941, %v3187, 0
      %v3500 = vsel %vm941, %v3196, 0
      %v3503 = vsel %vm941, %v3205, 0
      %v3506 = vsel %vm941, %v3214, 0
      %v3509 = vsel %vm941, %v3223, 0
      %v3512 = vsel %vm941, %v3232, 0
      %v3515 = vsel %vm941, %v3241, 0
      %v3518 = vsel %vm941, %v3250, 0
      %v3521 = vsel %vm941, %v3259, 0
      %v3524 = vsel %vm941, %v3268, 0
      %v3527 = vsel %vm941, %v3277, 0
      %v3530 = vsel %vm941, %v3286, 0
      %v3533 = vsel %vm941, %v3295, 0
      %v3536 = vsel %vm941, %v3304, 0
      %v3539 = vsel %vm941, %v3313, 0
      %v3542 = vsel %vm941, %v3322, 0
      %v3545 = vsel %vm941, %v3331, 0
      %v3548 = vsel %vm941, %v3340, 0
      %v3551 = vsel %vm941, %v3349, 0
      %v3554 = vsel %vm941, %v3358, 0
      %v3557 = vsel %vm941, %v3367, 0
      %v3560 = vsel %vm941, %v3376, 0
      %v3563 = vsel %vm941, %v3385, 0
      %v3566 = vsel %vm941, %v3394, 0
      %v3569 = vsel %vm941, %v3403, 0
      %v3572 = vsel %vm941, %v3412, 0
      %v3575 = vsel %vm941, %v3421, 0
      %v3578 = vsel %vm941, %v3430, 0
      %v3581 = vsel %vm941, %v3439, 0
      %v3584 = vsel %vm941, %v3448, 0
      %v3587 = vsel %vm941, %v3457, 0
      %v3590 = vsel %vm941, %v3462, 0
      %3592 = vmatpush.bf16.msra.mxu0 0
      %3593 = vmatpush.bf16.msra.mxu0 0
      %3594 = vmatpush.bf16.msra.mxu0 0
      %3595 = vmatpush.bf16.msra.mxu0 0
      %3596 = vmatpush.bf16.msra.mxu0 0
      %3597 = vmatpush.bf16.msra.mxu0 0
      %3598 = vmatpush.bf16.msra.mxu0 %v3472
      %3599 = vmatpush.bf16.msra.mxu0 %v3471
      %3600 = vmatmul.bf16.gmra.mxu0 %v3476
      %v3601 = vpop.f32.mrf.mxu0
      %v3602 = vadd.f32 0.0, %v3601
      %v3603 = vpop.f32.mrf.mxu0
      %v3604 = vadd.f32 0.0, %v3603
      %3605 = vmatmul.bf16.gmra.mxu0 %v3479
      %v3606 = vpop.f32.mrf.mxu0
      %v3607 = vadd.f32 0.0, %v3606
      %v3608 = vpop.f32.mrf.mxu0
      %v3609 = vadd.f32 0.0, %v3608
      %3610 = vmatmul.bf16.gmra.mxu0 %v3482
      %v3611 = vpop.f32.mrf.mxu0
      %v3612 = vadd.f32 0.0, %v3611
      %v3613 = vpop.f32.mrf.mxu0
      %v3614 = vadd.f32 0.0, %v3613
      %3615 = vmatmul.bf16.gmra.mxu0 %v3485
      %v3616 = vpop.f32.mrf.mxu0
      %v3617 = vadd.f32 0.0, %v3616
      %v3618 = vpop.f32.mrf.mxu0
      %v3619 = vadd.f32 0.0, %v3618
      %3620 = vmatmul.bf16.gmra.mxu0 %v3488
      %v3621 = vpop.f32.mrf.mxu0
      %v3622 = vadd.f32 0.0, %v3621
      %v3623 = vpop.f32.mrf.mxu0
      %v3624 = vadd.f32 0.0, %v3623
      %3625 = vmatmul.bf16.gmra.mxu0 %v3491
      %v3626 = vpop.f32.mrf.mxu0
      %v3627 = vadd.f32 0.0, %v3626
      %v3628 = vpop.f32.mrf.mxu0
      %v3629 = vadd.f32 0.0, %v3628
      %3630 = vmatmul.bf16.gmra.mxu0 %v3494
      %v3631 = vpop.f32.mrf.mxu0
      %v3632 = vadd.f32 0.0, %v3631
      %v3633 = vpop.f32.mrf.mxu0
      %v3634 = vadd.f32 0.0, %v3633
      %3635 = vmatmul.bf16.gmra.mxu0 %v3497
      %v3636 = vpop.f32.mrf.mxu0
      %v3637 = vadd.f32 0.0, %v3636
      %v3638 = vpop.f32.mrf.mxu0
      %v3639 = vadd.f32 0.0, %v3638
      %3640 = vmatmul.bf16.gmra.mxu0 %v3500
      %v3641 = vpop.f32.mrf.mxu0
      %v3642 = vadd.f32 0.0, %v3641
      %v3643 = vpop.f32.mrf.mxu0
      %v3644 = vadd.f32 0.0, %v3643
      %3645 = vmatmul.bf16.gmra.mxu0 %v3503
      %v3646 = vpop.f32.mrf.mxu0
      %v3647 = vadd.f32 0.0, %v3646
      %v3648 = vpop.f32.mrf.mxu0
      %v3649 = vadd.f32 0.0, %v3648
      %3650 = vmatmul.bf16.gmra.mxu0 %v3506
      %v3651 = vpop.f32.mrf.mxu0
      %v3652 = vadd.f32 0.0, %v3651
      %v3653 = vpop.f32.mrf.mxu0
      %v3654 = vadd.f32 0.0, %v3653
      %3655 = vmatmul.bf16.gmra.mxu0 %v3509
      %v3656 = vpop.f32.mrf.mxu0
      %v3657 = vadd.f32 0.0, %v3656
      %v3658 = vpop.f32.mrf.mxu0
      %v3659 = vadd.f32 0.0, %v3658
      %3660 = vmatmul.bf16.gmra.mxu0 %v3512
      %v3661 = vpop.f32.mrf.mxu0
      %v3662 = vadd.f32 0.0, %v3661
      %v3663 = vpop.f32.mrf.mxu0
      %v3664 = vadd.f32 0.0, %v3663
      %3665 = vmatmul.bf16.gmra.mxu0 %v3515
      %v3666 = vpop.f32.mrf.mxu0
      %v3667 = vadd.f32 0.0, %v3666
      %v3668 = vpop.f32.mrf.mxu0
      %v3669 = vadd.f32 0.0, %v3668
      %3670 = vmatmul.bf16.gmra.mxu0 %v3518
      %v3671 = vpop.f32.mrf.mxu0
      %v3672 = vadd.f32 0.0, %v3671
      %v3673 = vpop.f32.mrf.mxu0
      %v3674 = vadd.f32 0.0, %v3673
      %3675 = vmatmul.bf16.gmra.mxu0 %v3521
      %v3676 = vpop.f32.mrf.mxu0
      %v3677 = vadd.f32 0.0, %v3676
      %v3678 = vpop.f32.mrf.mxu0
      %v3679 = vadd.f32 0.0, %v3678
      %3680 = vmatmul.bf16.gmra.mxu0 %v3524
      %v3681 = vpop.f32.mrf.mxu0
      %v3682 = vadd.f32 0.0, %v3681
      %v3683 = vpop.f32.mrf.mxu0
      %v3684 = vadd.f32 0.0, %v3683
      %3685 = vmatmul.bf16.gmra.mxu0 %v3527
      %v3686 = vpop.f32.mrf.mxu0
      %v3687 = vadd.f32 0.0, %v3686
      %v3688 = vpop.f32.mrf.mxu0
      %v3689 = vadd.f32 0.0, %v3688
      %3690 = vmatmul.bf16.gmra.mxu0 %v3530
      %v3691 = vpop.f32.mrf.mxu0
      %v3692 = vadd.f32 0.0, %v3691
      %v3693 = vpop.f32.mrf.mxu0
      %v3694 = vadd.f32 0.0, %v3693
      %3695 = vmatmul.bf16.gmra.mxu0 %v3533
      %v3696 = vpop.f32.mrf.mxu0
      %v3697 = vadd.f32 0.0, %v3696
      %v3698 = vpop.f32.mrf.mxu0
      %v3699 = vadd.f32 0.0, %v3698
      %3700 = vmatmul.bf16.gmra.mxu0 %v3536
      %v3701 = vpop.f32.mrf.mxu0
      %v3702 = vadd.f32 0.0, %v3701
      %v3703 = vpop.f32.mrf.mxu0
      %v3704 = vadd.f32 0.0, %v3703
      %3705 = vmatmul.bf16.gmra.mxu0 %v3539
      %v3706 = vpop.f32.mrf.mxu0
      %v3707 = vadd.f32 0.0, %v3706
      %v3708 = vpop.f32.mrf.mxu0
      %v3709 = vadd.f32 0.0, %v3708
      %3710 = vmatmul.bf16.gmra.mxu0 %v3542
      %v3711 = vpop.f32.mrf.mxu0
      %v3712 = vadd.f32 0.0, %v3711
      %v3713 = vpop.f32.mrf.mxu0
      %v3714 = vadd.f32 0.0, %v3713
      %3715 = vmatmul.bf16.gmra.mxu0 %v3545
      %v3716 = vpop.f32.mrf.mxu0
      %v3717 = vadd.f32 0.0, %v3716
      %v3718 = vpop.f32.mrf.mxu0
      %v3719 = vadd.f32 0.0, %v3718
      %3720 = vmatmul.bf16.gmra.mxu0 %v3548
      %v3721 = vpop.f32.mrf.mxu0
      %v3722 = vadd.f32 0.0, %v3721
      %v3723 = vpop.f32.mrf.mxu0
      %v3724 = vadd.f32 0.0, %v3723
      %3725 = vmatmul.bf16.gmra.mxu0 %v3551
      %v3726 = vpop.f32.mrf.mxu0
      %v3727 = vadd.f32 0.0, %v3726
      %v3728 = vpop.f32.mrf.mxu0
      %v3729 = vadd.f32 0.0, %v3728
      %3730 = vmatmul.bf16.gmra.mxu0 %v3554
      %v3731 = vpop.f32.mrf.mxu0
      %v3732 = vadd.f32 0.0, %v3731
      %v3733 = vpop.f32.mrf.mxu0
      %v3734 = vadd.f32 0.0, %v3733
      %3735 = vmatmul.bf16.gmra.mxu0 %v3557
      %v3736 = vpop.f32.mrf.mxu0
      %v3737 = vadd.f32 0.0, %v3736
      %v3738 = vpop.f32.mrf.mxu0
      %v3739 = vadd.f32 0.0, %v3738
      %3740 = vmatmul.bf16.gmra.mxu0 %v3560
      %v3741 = vpop.f32.mrf.mxu0
      %v3742 = vadd.f32 0.0, %v3741
      %v3743 = vpop.f32.mrf.mxu0
      %v3744 = vadd.f32 0.0, %v3743
      %3745 = vmatmul.bf16.gmra.mxu0 %v3563
      %v3746 = vpop.f32.mrf.mxu0
      %v3747 = vadd.f32 0.0, %v3746
      %v3748 = vpop.f32.mrf.mxu0
      %v3749 = vadd.f32 0.0, %v3748
      %3750 = vmatmul.bf16.gmra.mxu0 %v3566
      %v3751 = vpop.f32.mrf.mxu0
      %v3752 = vadd.f32 0.0, %v3751
      %v3753 = vpop.f32.mrf.mxu0
      %v3754 = vadd.f32 0.0, %v3753
      %3755 = vmatmul.bf16.gmra.mxu0 %v3569
      %v3756 = vpop.f32.mrf.mxu0
      %v3757 = vadd.f32 0.0, %v3756
      %v3758 = vpop.f32.mrf.mxu0
      %v3759 = vadd.f32 0.0, %v3758
      %3760 = vmatmul.bf16.gmra.mxu0 %v3572
      %v3761 = vpop.f32.mrf.mxu0
      %v3762 = vadd.f32 0.0, %v3761
      %v3763 = vpop.f32.mrf.mxu0
      %v3764 = vadd.f32 0.0, %v3763
      %3765 = vmatmul.bf16.gmra.mxu0 %v3575
      %v3766 = vpop.f32.mrf.mxu0
      %v3767 = vadd.f32 0.0, %v3766
      %v3768 = vpop.f32.mrf.mxu0
      %v3769 = vadd.f32 0.0, %v3768
      %3770 = vmatmul.bf16.gmra.mxu0 %v3578
      %v3771 = vpop.f32.mrf.mxu0
      %v3772 = vadd.f32 0.0, %v3771
      %v3773 = vpop.f32.mrf.mxu0
      %v3774 = vadd.f32 0.0, %v3773
      %3775 = vmatmul.bf16.gmra.mxu0 %v3581
      %v3776 = vpop.f32.mrf.mxu0
      %v3777 = vadd.f32 0.0, %v3776
      %v3778 = vpop.f32.mrf.mxu0
      %v3779 = vadd.f32 0.0, %v3778
      %3780 = vmatmul.bf16.gmra.mxu0 %v3584
      %v3781 = vpop.f32.mrf.mxu0
      %v3782 = vadd.f32 0.0, %v3781
      %v3783 = vpop.f32.mrf.mxu0
      %v3784 = vadd.f32 0.0, %v3783
      %3785 = vmatmul.bf16.gmra.mxu0 %v3587
      %v3786 = vpop.f32.mrf.mxu0
      %v3787 = vadd.f32 0.0, %v3786
      %v3788 = vpop.f32.mrf.mxu0
      %v3789 = vadd.f32 0.0, %v3788
      %3790 = vmatmul.bf16.gmra.mxu0 %v3590
      %v3791 = vpop.f32.mrf.mxu0
      %v3792 = vadd.f32 0.0, %v3791
      %v3793 = vpop.f32.mrf.mxu0
      %v3794 = vadd.f32 0.0, %v3793
      %3795 = vdwg.mxu0
      %v3796 = vadd.f32 %v2747, %v3602
      %v3797 = vadd.f32 %v2748, %v3604
      %v3798 = vadd.f32 %v2749, %v3607
      %v3799 = vadd.f32 %v2750, %v3609
      %v3800 = vadd.f32 %v2751, %v3612
      %v3801 = vadd.f32 %v2752, %v3614
      %v3802 = vadd.f32 %v2753, %v3617
      %v3803 = vadd.f32 %v2754, %v3619
      %v3804 = vadd.f32 %v2755, %v3622
      %v3805 = vadd.f32 %v2756, %v3624
      %v3806 = vadd.f32 %v2757, %v3627
      %v3807 = vadd.f32 %v2758, %v3629
      %v3808 = vadd.f32 %v2759, %v3632
      %v3809 = vadd.f32 %v2760, %v3634
      %v3810 = vadd.f32 %v2761, %v3637
      %v3811 = vadd.f32 %v2762, %v3639
      %v3812 = vadd.f32 %v2763, %v3642
      %v3813 = vadd.f32 %v2764, %v3644
      %v3814 = vadd.f32 %v2765, %v3647
      %v3815 = vadd.f32 %v2766, %v3649
      %v3816 = vadd.f32 %v2767, %v3652
      %v3817 = vadd.f32 %v2768, %v3654
      %v3818 = vadd.f32 %v2769, %v3657
      %v3819 = vadd.f32 %v2770, %v3659
      %v3820 = vadd.f32 %v2771, %v3662
      %v3821 = vadd.f32 %v2772, %v3664
      %v3822 = vadd.f32 %v2773, %v3667
      %v3823 = vadd.f32 %v2774, %v3669
      %v3824 = vadd.f32 %v2775, %v3672
      %v3825 = vadd.f32 %v2776, %v3674
      %v3826 = vadd.f32 %v2777, %v3677
      %v3827 = vadd.f32 %v2778, %v3679
      %v3828 = vadd.f32 %v2779, %v3682
      %v3829 = vadd.f32 %v2780, %v3684
      %v3830 = vadd.f32 %v2781, %v3687
      %v3831 = vadd.f32 %v2782, %v3689
      %v3832 = vadd.f32 %v2783, %v3692
      %v3833 = vadd.f32 %v2784, %v3694
      %v3834 = vadd.f32 %v2785, %v3697
      %v3835 = vadd.f32 %v2786, %v3699
      %v3836 = vadd.f32 %v2787, %v3702
      %v3837 = vadd.f32 %v2788, %v3704
      %v3838 = vadd.f32 %v2789, %v3707
      %v3839 = vadd.f32 %v2790, %v3709
      %v3840 = vadd.f32 %v2791, %v3712
      %v3841 = vadd.f32 %v2792, %v3714
      %v3842 = vadd.f32 %v2793, %v3717
      %v3843 = vadd.f32 %v2794, %v3719
      %v3844 = vadd.f32 %v2795, %v3722
      %v3845 = vadd.f32 %v2796, %v3724
      %v3846 = vadd.f32 %v2797, %v3727
      %v3847 = vadd.f32 %v2798, %v3729
      %v3848 = vadd.f32 %v2799, %v3732
      %v3849 = vadd.f32 %v2800, %v3734
      %v3850 = vadd.f32 %v2801, %v3737
      %v3851 = vadd.f32 %v2802, %v3739
      %v3852 = vadd.f32 %v2803, %v3742
      %v3853 = vadd.f32 %v2804, %v3744
      %v3854 = vadd.f32 %v2805, %v3747
      %v3855 = vadd.f32 %v2806, %v3749
      %v3856 = vadd.f32 %v2807, %v3752
      %v3857 = vadd.f32 %v2808, %v3754
      %v3858 = vadd.f32 %v2809, %v3757
      %v3859 = vadd.f32 %v2810, %v3759
      %v3860 = vadd.f32 %v2811, %v3762
      %v3861 = vadd.f32 %v2812, %v3764
      %v3862 = vadd.f32 %v2813, %v3767
      %v3863 = vadd.f32 %v2814, %v3769
      %v3864 = vadd.f32 %v2815, %v3772
      %v3865 = vadd.f32 %v2816, %v3774
      %v3866 = vadd.f32 %v2817, %v3777
      %v3867 = vadd.f32 %v2818, %v3779
      %v3868 = vadd.f32 %v2819, %v3782
      %v3869 = vadd.f32 %v2820, %v3784
      %v3870 = vadd.f32 %v2821, %v3787
      %v3871 = vadd.f32 %v2822, %v3789
      %v3872 = vadd.f32 %v2823, %v3792
      %v3873 = vadd.f32 %v2824, %v3794
      %v3874 = vld [vmem:[%s327 + $0xc] sm:$0xc]
      %s3875 = scalar_lea.vmem %s1, 80
      %v3876 = vld [vmem:[%s3875] sm:$0xf]
      %v3877 = vld [vmem:[%s3875 + $0x4] sm:$0xf]
      %v3878 = vld [vmem:[%s3875 + $0x8] sm:$0xf]
      %v3879 = vld [vmem:[%s3875 + $0xc] sm:$0xf]
      %v3881 = vunpack.c.l.b16 %v3874
      %v3882 = vpack.c.b16 %v2989, %v3881
      %vm3883 = vcmask 1045504
      %v3884 = vrot.slane %v3882, 2
      %v3885 = vrot.slane %v3068, 2
      %v3886 = vsel %vm3883, %v3884, %v3885
      %v3887 = vrot.slane %v3069, 2
      %v3888 = vsel %vm3883, %v3885, %v3887
      %v3889 = vrot.slane %v3070, 2
      %v3890 = vsel %vm3883, %v3887, %v3889
      %v3891 = vrot.slane %v3071, 2
      %v3892 = vsel %vm3883, %v3889, %v3891
      %v3893 = vrot.slane %v3072, 2
      %v3894 = vsel %vm3883, %v3891, %v3893
      %v3895 = vrot.slane %v3073, 2
      %v3896 = vsel %vm3883, %v3893, %v3895
      %v3897 = vrot.slane %v3074, 2
      %v3898 = vsel %vm3883, %v3895, %v3897
      %v3899 = vrot.slane %v3075, 2
      %v3900 = vsel %vm3883, %v3897, %v3899
      %v3901 = vrot.slane %v3076, 2
      %v3902 = vsel %vm3883, %v3899, %v3901
      %v3903 = vrot.slane %v3077, 2
      %v3904 = vsel %vm3883, %v3901, %v3903
      %v3905 = vrot.slane %v3078, 2
      %v3906 = vsel %vm3883, %v3903, %v3905
      %v3907 = vrot.slane %v3079, 2
      %v3908 = vsel %vm3883, %v3905, %v3907
      %v3909 = vrot.slane %v3080, 2
      %v3910 = vsel %vm3883, %v3907, %v3909
      %v3911 = vrot.slane %v3081, 2
      %v3912 = vsel %vm3883, %v3909, %v3911
      %v3913 = vrot.slane %v3082, 2
      %v3914 = vsel %vm3883, %v3911, %v3913
      %v3915 = vrot.slane %v3083, 2
      %v3916 = vsel %vm3883, %v3913, %v3915
      %v3917 = vrot.slane %v3084, 2
      %v3918 = vsel %vm3883, %v3915, %v3917
      %v3919 = vrot.slane %v3085, 2
      %v3920 = vsel %vm3883, %v3917, %v3919
      %v3921 = vrot.slane %v3086, 2
      %v3922 = vsel %vm3883, %v3919, %v3921
      %v3923 = vrot.slane %v3087, 2
      %v3924 = vsel %vm3883, %v3921, %v3923
      %v3925 = vrot.slane %v3088, 2
      %v3926 = vsel %vm3883, %v3923, %v3925
      %v3927 = vrot.slane %v3089, 2
      %v3928 = vsel %vm3883, %v3925, %v3927
      %v3929 = vrot.slane %v3090, 2
      %v3930 = vsel %vm3883, %v3927, %v3929
      %v3931 = vrot.slane %v3091, 2
      %v3932 = vsel %vm3883, %v3929, %v3931
      %v3933 = vrot.slane %v3092, 2
      %v3934 = vsel %vm3883, %v3931, %v3933
      %v3935 = vrot.slane %v3093, 2
      %v3936 = vsel %vm3883, %v3933, %v3935
      %v3937 = vrot.slane %v3094, 2
      %v3938 = vsel %vm3883, %v3935, %v3937
      %v3939 = vrot.slane %v3095, 2
      %v3940 = vsel %vm3883, %v3937, %v3939
      %v3941 = vrot.slane %v3096, 2
      %v3942 = vsel %vm3883, %v3939, %v3941
      %v3943 = vrot.slane %v3097, 2
      %v3944 = vsel %vm3883, %v3941, %v3943
      %v3945 = vrot.slane %v3098, 2
      %v3946 = vsel %vm3883, %v3943, %v3945
      %v3947 = vrot.slane %v3099, 2
      %v3948 = vsel %vm3883, %v3945, %v3947
      %v3949 = vrot.slane %v3100, 2
      %v3950 = vsel %vm3883, %v3947, %v3949
      %v3951 = vrot.slane %v3101, 2
      %v3952 = vsel %vm3883, %v3949, %v3951
      %v3953 = vrot.slane %v3102, 2
      %v3954 = vsel %vm3883, %v3951, %v3953
      %v3955 = vrot.slane %v3103, 2
      %v3956 = vsel %vm3883, %v3953, %v3955
      %v3957 = vrot.slane %v3104, 2
      %v3958 = vsel %vm3883, %v3955, %v3957
      %v3959 = vrot.slane %v3105, 2
      %v3960 = vsel %vm3883, %v3957, %v3959
      %v3961 = vrot.slane %v3106, 2
      %v3962 = vsel %vm3883, %v3959, %v3961
      %v3967 = vunpack.c.l.b16 %v3876
      %v3968 = vunpack.c.l.b16 %v3877
      %v3969 = vunpack.c.l.b16 %v3878
      %v3970 = vunpack.c.l.b16 %v3879
      %v3971 = vpack.c.b16 %v3968, %v3967
      %v3972 = vpack.c.b16 %v3970, %v3969
      %v3976 = vsel %vm941, %v3886, 0
      %v3979 = vsel %vm941, %v3888, 0
      %v3982 = vsel %vm941, %v3890, 0
      %v3985 = vsel %vm941, %v3892, 0
      %v3988 = vsel %vm941, %v3894, 0
      %v3991 = vsel %vm941, %v3896, 0
      %v3994 = vsel %vm941, %v3898, 0
      %v3997 = vsel %vm941, %v3900, 0
      %v4000 = vsel %vm941, %v3902, 0
      %v4003 = vsel %vm941, %v3904, 0
      %v4006 = vsel %vm941, %v3906, 0
      %v4009 = vsel %vm941, %v3908, 0
      %v4012 = vsel %vm941, %v3910, 0
      %v4015 = vsel %vm941, %v3912, 0
      %v4018 = vsel %vm941, %v3914, 0
      %v4021 = vsel %vm941, %v3916, 0
      %v4024 = vsel %vm941, %v3918, 0
      %v4027 = vsel %vm941, %v3920, 0
      %v4030 = vsel %vm941, %v3922, 0
      %v4033 = vsel %vm941, %v3924, 0
      %v4036 = vsel %vm941, %v3926, 0
      %v4039 = vsel %vm941, %v3928, 0
      %v4042 = vsel %vm941, %v3930, 0
      %v4045 = vsel %vm941, %v3932, 0
      %v4048 = vsel %vm941, %v3934, 0
      %v4051 = vsel %vm941, %v3936, 0
      %v4054 = vsel %vm941, %v3938, 0
      %v4057 = vsel %vm941, %v3940, 0
      %v4060 = vsel %vm941, %v3942, 0
      %v4063 = vsel %vm941, %v3944, 0
      %v4066 = vsel %vm941, %v3946, 0
      %v4069 = vsel %vm941, %v3948, 0
      %v4072 = vsel %vm941, %v3950, 0
      %v4075 = vsel %vm941, %v3952, 0
      %v4078 = vsel %vm941, %v3954, 0
      %v4081 = vsel %vm941, %v3956, 0
      %v4084 = vsel %vm941, %v3958, 0
      %v4087 = vsel %vm941, %v3960, 0
      %v4090 = vsel %vm941, %v3962, 0
      %4092 = vmatpush.bf16.msra.mxu0 0
      %4093 = vmatpush.bf16.msra.mxu0 0
      %4094 = vmatpush.bf16.msra.mxu0 0
      %4095 = vmatpush.bf16.msra.mxu0 0
      %4096 = vmatpush.bf16.msra.mxu0 0
      %4097 = vmatpush.bf16.msra.mxu0 0
      %4098 = vmatpush.bf16.msra.mxu0 %v3972
      %4099 = vmatpush.bf16.msra.mxu0 %v3971
      %4100 = vmatmul.bf16.gmra.mxu0 %v3976
      %v4101 = vpop.f32.mrf.mxu0
      %v4102 = vadd.f32 0.0, %v4101
      %v4103 = vpop.f32.mrf.mxu0
      %v4104 = vadd.f32 0.0, %v4103
      %4105 = vmatmul.bf16.gmra.mxu0 %v3979
      %v4106 = vpop.f32.mrf.mxu0
      %v4107 = vadd.f32 0.0, %v4106
      %v4108 = vpop.f32.mrf.mxu0
      %v4109 = vadd.f32 0.0, %v4108
      %4110 = vmatmul.bf16.gmra.mxu0 %v3982
      %v4111 = vpop.f32.mrf.mxu0
      %v4112 = vadd.f32 0.0, %v4111
      %v4113 = vpop.f32.mrf.mxu0
      %v4114 = vadd.f32 0.0, %v4113
      %4115 = vmatmul.bf16.gmra.mxu0 %v3985
      %v4116 = vpop.f32.mrf.mxu0
      %v4117 = vadd.f32 0.0, %v4116
      %v4118 = vpop.f32.mrf.mxu0
      %v4119 = vadd.f32 0.0, %v4118
      %4120 = vmatmul.bf16.gmra.mxu0 %v3988
      %v4121 = vpop.f32.mrf.mxu0
      %v4122 = vadd.f32 0.0, %v4121
      %v4123 = vpop.f32.mrf.mxu0
      %v4124 = vadd.f32 0.0, %v4123
      %4125 = vmatmul.bf16.gmra.mxu0 %v3991
      %v4126 = vpop.f32.mrf.mxu0
      %v4127 = vadd.f32 0.0, %v4126
      %v4128 = vpop.f32.mrf.mxu0
      %v4129 = vadd.f32 0.0, %v4128
      %4130 = vmatmul.bf16.gmra.mxu0 %v3994
      %v4131 = vpop.f32.mrf.mxu0
      %v4132 = vadd.f32 0.0, %v4131
      %v4133 = vpop.f32.mrf.mxu0
      %v4134 = vadd.f32 0.0, %v4133
      %4135 = vmatmul.bf16.gmra.mxu0 %v3997
      %v4136 = vpop.f32.mrf.mxu0
      %v4137 = vadd.f32 0.0, %v4136
      %v4138 = vpop.f32.mrf.mxu0
      %v4139 = vadd.f32 0.0, %v4138
      %4140 = vmatmul.bf16.gmra.mxu0 %v4000
      %v4141 = vpop.f32.mrf.mxu0
      %v4142 = vadd.f32 0.0, %v4141
      %v4143 = vpop.f32.mrf.mxu0
      %v4144 = vadd.f32 0.0, %v4143
      %4145 = vmatmul.bf16.gmra.mxu0 %v4003
      %v4146 = vpop.f32.mrf.mxu0
      %v4147 = vadd.f32 0.0, %v4146
      %v4148 = vpop.f32.mrf.mxu0
      %v4149 = vadd.f32 0.0, %v4148
      %4150 = vmatmul.bf16.gmra.mxu0 %v4006
      %v4151 = vpop.f32.mrf.mxu0
      %v4152 = vadd.f32 0.0, %v4151
      %v4153 = vpop.f32.mrf.mxu0
      %v4154 = vadd.f32 0.0, %v4153
      %4155 = vmatmul.bf16.gmra.mxu0 %v4009
      %v4156 = vpop.f32.mrf.mxu0
      %v4157 = vadd.f32 0.0, %v4156
      %v4158 = vpop.f32.mrf.mxu0
      %v4159 = vadd.f32 0.0, %v4158
      %4160 = vmatmul.bf16.gmra.mxu0 %v4012
      %v4161 = vpop.f32.mrf.mxu0
      %v4162 = vadd.f32 0.0, %v4161
      %v4163 = vpop.f32.mrf.mxu0
      %v4164 = vadd.f32 0.0, %v4163
      %4165 = vmatmul.bf16.gmra.mxu0 %v4015
      %v4166 = vpop.f32.mrf.mxu0
      %v4167 = vadd.f32 0.0, %v4166
      %v4168 = vpop.f32.mrf.mxu0
      %v4169 = vadd.f32 0.0, %v4168
      %4170 = vmatmul.bf16.gmra.mxu0 %v4018
      %v4171 = vpop.f32.mrf.mxu0
      %v4172 = vadd.f32 0.0, %v4171
      %v4173 = vpop.f32.mrf.mxu0
      %v4174 = vadd.f32 0.0, %v4173
      %4175 = vmatmul.bf16.gmra.mxu0 %v4021
      %v4176 = vpop.f32.mrf.mxu0
      %v4177 = vadd.f32 0.0, %v4176
      %v4178 = vpop.f32.mrf.mxu0
      %v4179 = vadd.f32 0.0, %v4178
      %4180 = vmatmul.bf16.gmra.mxu0 %v4024
      %v4181 = vpop.f32.mrf.mxu0
      %v4182 = vadd.f32 0.0, %v4181
      %v4183 = vpop.f32.mrf.mxu0
      %v4184 = vadd.f32 0.0, %v4183
      %4185 = vmatmul.bf16.gmra.mxu0 %v4027
      %v4186 = vpop.f32.mrf.mxu0
      %v4187 = vadd.f32 0.0, %v4186
      %v4188 = vpop.f32.mrf.mxu0
      %v4189 = vadd.f32 0.0, %v4188
      %4190 = vmatmul.bf16.gmra.mxu0 %v4030
      %v4191 = vpop.f32.mrf.mxu0
      %v4192 = vadd.f32 0.0, %v4191
      %v4193 = vpop.f32.mrf.mxu0
      %v4194 = vadd.f32 0.0, %v4193
      %4195 = vmatmul.bf16.gmra.mxu0 %v4033
      %v4196 = vpop.f32.mrf.mxu0
      %v4197 = vadd.f32 0.0, %v4196
      %v4198 = vpop.f32.mrf.mxu0
      %v4199 = vadd.f32 0.0, %v4198
      %4200 = vmatmul.bf16.gmra.mxu0 %v4036
      %v4201 = vpop.f32.mrf.mxu0
      %v4202 = vadd.f32 0.0, %v4201
      %v4203 = vpop.f32.mrf.mxu0
      %v4204 = vadd.f32 0.0, %v4203
      %4205 = vmatmul.bf16.gmra.mxu0 %v4039
      %v4206 = vpop.f32.mrf.mxu0
      %v4207 = vadd.f32 0.0, %v4206
      %v4208 = vpop.f32.mrf.mxu0
      %v4209 = vadd.f32 0.0, %v4208
      %4210 = vmatmul.bf16.gmra.mxu0 %v4042
      %v4211 = vpop.f32.mrf.mxu0
      %v4212 = vadd.f32 0.0, %v4211
      %v4213 = vpop.f32.mrf.mxu0
      %v4214 = vadd.f32 0.0, %v4213
      %4215 = vmatmul.bf16.gmra.mxu0 %v4045
      %v4216 = vpop.f32.mrf.mxu0
      %v4217 = vadd.f32 0.0, %v4216
      %v4218 = vpop.f32.mrf.mxu0
      %v4219 = vadd.f32 0.0, %v4218
      %4220 = vmatmul.bf16.gmra.mxu0 %v4048
      %v4221 = vpop.f32.mrf.mxu0
      %v4222 = vadd.f32 0.0, %v4221
      %v4223 = vpop.f32.mrf.mxu0
      %v4224 = vadd.f32 0.0, %v4223
      %4225 = vmatmul.bf16.gmra.mxu0 %v4051
      %v4226 = vpop.f32.mrf.mxu0
      %v4227 = vadd.f32 0.0, %v4226
      %v4228 = vpop.f32.mrf.mxu0
      %v4229 = vadd.f32 0.0, %v4228
      %4230 = vmatmul.bf16.gmra.mxu0 %v4054
      %v4231 = vpop.f32.mrf.mxu0
      %v4232 = vadd.f32 0.0, %v4231
      %v4233 = vpop.f32.mrf.mxu0
      %v4234 = vadd.f32 0.0, %v4233
      %4235 = vmatmul.bf16.gmra.mxu0 %v4057
      %v4236 = vpop.f32.mrf.mxu0
      %v4237 = vadd.f32 0.0, %v4236
      %v4238 = vpop.f32.mrf.mxu0
      %v4239 = vadd.f32 0.0, %v4238
      %4240 = vmatmul.bf16.gmra.mxu0 %v4060
      %v4241 = vpop.f32.mrf.mxu0
      %v4242 = vadd.f32 0.0, %v4241
      %v4243 = vpop.f32.mrf.mxu0
      %v4244 = vadd.f32 0.0, %v4243
      %4245 = vmatmul.bf16.gmra.mxu0 %v4063
      %v4246 = vpop.f32.mrf.mxu0
      %v4247 = vadd.f32 0.0, %v4246
      %v4248 = vpop.f32.mrf.mxu0
      %v4249 = vadd.f32 0.0, %v4248
      %4250 = vmatmul.bf16.gmra.mxu0 %v4066
      %v4251 = vpop.f32.mrf.mxu0
      %v4252 = vadd.f32 0.0, %v4251
      %v4253 = vpop.f32.mrf.mxu0
      %v4254 = vadd.f32 0.0, %v4253
      %4255 = vmatmul.bf16.gmra.mxu0 %v4069
      %v4256 = vpop.f32.mrf.mxu0
      %v4257 = vadd.f32 0.0, %v4256
      %v4258 = vpop.f32.mrf.mxu0
      %v4259 = vadd.f32 0.0, %v4258
      %4260 = vmatmul.bf16.gmra.mxu0 %v4072
      %v4261 = vpop.f32.mrf.mxu0
      %v4262 = vadd.f32 0.0, %v4261
      %v4263 = vpop.f32.mrf.mxu0
      %v4264 = vadd.f32 0.0, %v4263
      %4265 = vmatmul.bf16.gmra.mxu0 %v4075
      %v4266 = vpop.f32.mrf.mxu0
      %v4267 = vadd.f32 0.0, %v4266
      %v4268 = vpop.f32.mrf.mxu0
      %v4269 = vadd.f32 0.0, %v4268
      %4270 = vmatmul.bf16.gmra.mxu0 %v4078
      %v4271 = vpop.f32.mrf.mxu0
      %v4272 = vadd.f32 0.0, %v4271
      %v4273 = vpop.f32.mrf.mxu0
      %v4274 = vadd.f32 0.0, %v4273
      %4275 = vmatmul.bf16.gmra.mxu0 %v4081
      %v4276 = vpop.f32.mrf.mxu0
      %v4277 = vadd.f32 0.0, %v4276
      %v4278 = vpop.f32.mrf.mxu0
      %v4279 = vadd.f32 0.0, %v4278
      %4280 = vmatmul.bf16.gmra.mxu0 %v4084
      %v4281 = vpop.f32.mrf.mxu0
      %v4282 = vadd.f32 0.0, %v4281
      %v4283 = vpop.f32.mrf.mxu0
      %v4284 = vadd.f32 0.0, %v4283
      %4285 = vmatmul.bf16.gmra.mxu0 %v4087
      %v4286 = vpop.f32.mrf.mxu0
      %v4287 = vadd.f32 0.0, %v4286
      %v4288 = vpop.f32.mrf.mxu0
      %v4289 = vadd.f32 0.0, %v4288
      %4290 = vmatmul.bf16.gmra.mxu0 %v4090
      %v4291 = vpop.f32.mrf.mxu0
      %v4292 = vadd.f32 0.0, %v4291
      %v4293 = vpop.f32.mrf.mxu0
      %v4294 = vadd.f32 0.0, %v4293
      %4295 = vdwg.mxu0
      %v4296 = vadd.f32 %v3796, %v4102
      %v4297 = vadd.f32 %v3797, %v4104
      %v4298 = vadd.f32 %v3798, %v4107
      %v4299 = vadd.f32 %v3799, %v4109
      %v4300 = vadd.f32 %v3800, %v4112
      %v4301 = vadd.f32 %v3801, %v4114
      %v4302 = vadd.f32 %v3802, %v4117
      %v4303 = vadd.f32 %v3803, %v4119
      %v4304 = vadd.f32 %v3804, %v4122
      %v4305 = vadd.f32 %v3805, %v4124
      %v4306 = vadd.f32 %v3806, %v4127
      %v4307 = vadd.f32 %v3807, %v4129
      %v4308 = vadd.f32 %v3808, %v4132
      %v4309 = vadd.f32 %v3809, %v4134
      %v4310 = vadd.f32 %v3810, %v4137
      %v4311 = vadd.f32 %v3811, %v4139
      %v4312 = vadd.f32 %v3812, %v4142
      %v4313 = vadd.f32 %v3813, %v4144
      %v4314 = vadd.f32 %v3814, %v4147
      %v4315 = vadd.f32 %v3815, %v4149
      %v4316 = vadd.f32 %v3816, %v4152
      %v4317 = vadd.f32 %v3817, %v4154
      %v4318 = vadd.f32 %v3818, %v4157
      %v4319 = vadd.f32 %v3819, %v4159
      %v4320 = vadd.f32 %v3820, %v4162
      %v4321 = vadd.f32 %v3821, %v4164
      %v4322 = vadd.f32 %v3822, %v4167
      %v4323 = vadd.f32 %v3823, %v4169
      %v4324 = vadd.f32 %v3824, %v4172
      %v4325 = vadd.f32 %v3825, %v4174
      %v4326 = vadd.f32 %v3826, %v4177
      %v4327 = vadd.f32 %v3827, %v4179
      %v4328 = vadd.f32 %v3828, %v4182
      %v4329 = vadd.f32 %v3829, %v4184
      %v4330 = vadd.f32 %v3830, %v4187
      %v4331 = vadd.f32 %v3831, %v4189
      %v4332 = vadd.f32 %v3832, %v4192
      %v4333 = vadd.f32 %v3833, %v4194
      %v4334 = vadd.f32 %v3834, %v4197
      %v4335 = vadd.f32 %v3835, %v4199
      %v4336 = vadd.f32 %v3836, %v4202
      %v4337 = vadd.f32 %v3837, %v4204
      %v4338 = vadd.f32 %v3838, %v4207
      %v4339 = vadd.f32 %v3839, %v4209
      %v4340 = vadd.f32 %v3840, %v4212
      %v4341 = vadd.f32 %v3841, %v4214
      %v4342 = vadd.f32 %v3842, %v4217
      %v4343 = vadd.f32 %v3843, %v4219
      %v4344 = vadd.f32 %v3844, %v4222
      %v4345 = vadd.f32 %v3845, %v4224
      %v4346 = vadd.f32 %v3846, %v4227
      %v4347 = vadd.f32 %v3847, %v4229
      %v4348 = vadd.f32 %v3848, %v4232
      %v4349 = vadd.f32 %v3849, %v4234
      %v4350 = vadd.f32 %v3850, %v4237
      %v4351 = vadd.f32 %v3851, %v4239
      %v4352 = vadd.f32 %v3852, %v4242
      %v4353 = vadd.f32 %v3853, %v4244
      %v4354 = vadd.f32 %v3854, %v4247
      %v4355 = vadd.f32 %v3855, %v4249
      %v4356 = vadd.f32 %v3856, %v4252
      %v4357 = vadd.f32 %v3857, %v4254
      %v4358 = vadd.f32 %v3858, %v4257
      %v4359 = vadd.f32 %v3859, %v4259
      %v4360 = vadd.f32 %v3860, %v4262
      %v4361 = vadd.f32 %v3861, %v4264
      %v4362 = vadd.f32 %v3862, %v4267
      %v4363 = vadd.f32 %v3863, %v4269
      %v4364 = vadd.f32 %v3864, %v4272
      %v4365 = vadd.f32 %v3865, %v4274
      %v4366 = vadd.f32 %v3866, %v4277
      %v4367 = vadd.f32 %v3867, %v4279
      %v4368 = vadd.f32 %v3868, %v4282
      %v4369 = vadd.f32 %v3869, %v4284
      %v4370 = vadd.f32 %v3870, %v4287
      %v4371 = vadd.f32 %v3871, %v4289
      %v4372 = vadd.f32 %v3872, %v4292
      %v4373 = vadd.f32 %v3873, %v4294
      %v4374 = vld [vmem:[%s327 + $0x18] sm:$0xc]
      %v4375 = vld [vmem:[%s327 + $0x1c] sm:$0xf]
      %v4376 = vld [vmem:[%s327 + $0x20] sm:$0xf]
      %v4377 = vld [vmem:[%s327 + $0x24] sm:$0xf]
      %v4378 = vld [vmem:[%s327 + $0x28] sm:$0xf]
      %v4379 = vld [vmem:[%s327 + $0x2c] sm:$0xf]
      %v4380 = vld [vmem:[%s327 + $0x30] sm:$0xf]
      %v4381 = vld [vmem:[%s327 + $0x34] sm:$0xf]
      %v4382 = vld [vmem:[%s327 + $0x38] sm:$0xf]
      %v4383 = vld [vmem:[%s327 + $0x3c] sm:$0xf]
      %v4384 = vld [vmem:[%s327 + $0x40] sm:$0xf]
      %v4385 = vld [vmem:[%s327 + $0x44] sm:$0xf]
      %v4386 = vld [vmem:[%s327 + $0x48] sm:$0xf]
      %v4387 = vld [vmem:[%s327 + $0x4c] sm:$0xf]
      %v4388 = vld [vmem:[%s327 + $0x50] sm:$0xf]
      %v4389 = vld [vmem:[%s327 + $0x54] sm:$0xf]
      %v4390 = vld [vmem:[%s327 + $0x58] sm:$0xf]
      %v4391 = vld [vmem:[%s327 + $0x5c] sm:$0xf]
      %v4392 = vld [vmem:[%s327 + $0x60] sm:$0xf]
      %v4393 = vld [vmem:[%s327 + $0x64] sm:$0xf]
      %v4394 = vld [vmem:[%s327 + $0x68] sm:$0xf]
      %v4395 = vld [vmem:[%s327 + $0x6c] sm:$0xf]
      %v4396 = vld [vmem:[%s327 + $0x70] sm:$0xf]
      %v4397 = vld [vmem:[%s327 + $0x74] sm:$0xf]
      %v4398 = vld [vmem:[%s327 + $0x78] sm:$0xf]
      %v4399 = vld [vmem:[%s327 + $0x7c] sm:$0xf]
      %v4400 = vld [vmem:[%s327 + $0x80] sm:$0xf]
      %v4401 = vld [vmem:[%s327 + $0x84] sm:$0xf]
      %v4402 = vld [vmem:[%s327 + $0x88] sm:$0xf]
      %v4403 = vld [vmem:[%s327 + $0x8c] sm:$0xf]
      %v4404 = vld [vmem:[%s327 + $0x90] sm:$0xf]
      %v4405 = vld [vmem:[%s327 + $0x94] sm:$0xf]
      %v4406 = vld [vmem:[%s327 + $0x98] sm:$0xf]
      %v4407 = vld [vmem:[%s327 + $0x9c] sm:$0xf]
      %v4408 = vld [vmem:[%s327 + $0xa0] sm:$0xf]
      %v4409 = vld [vmem:[%s327 + $0xa4] sm:$0xf]
      %v4410 = vld [vmem:[%s327 + $0xa8] sm:$0xf]
      %v4411 = vld [vmem:[%s327 + $0xac] sm:$0xf]
      %v4412 = vld [vmem:[%s327 + $0xb0] sm:$0xf]
      %v4413 = vld [vmem:[%s327 + $0xb4] sm:$0xf]
      %v4414 = vld [vmem:[%s327 + $0xb8] sm:$0xf]
      %v4415 = vld [vmem:[%s327 + $0xbc] sm:$0xf]
      %v4416 = vld [vmem:[%s327 + $0xc0] sm:$0xf]
      %v4417 = vld [vmem:[%s327 + $0xc4] sm:$0xf]
      %v4418 = vld [vmem:[%s327 + $0xc8] sm:$0xf]
      %v4419 = vld [vmem:[%s327 + $0xcc] sm:$0xf]
      %v4420 = vld [vmem:[%s327 + $0xd0] sm:$0xf]
      %v4421 = vld [vmem:[%s327 + $0xd4] sm:$0xf]
      %v4422 = vld [vmem:[%s327 + $0xd8] sm:$0xf]
      %v4423 = vld [vmem:[%s327 + $0xdc] sm:$0xf]
      %v4424 = vld [vmem:[%s327 + $0xe0] sm:$0xf]
      %v4425 = vld [vmem:[%s327 + $0xe4] sm:$0xf]
      %v4426 = vld [vmem:[%s327 + $0xe8] sm:$0xf]
      %v4427 = vld [vmem:[%s327 + $0xec] sm:$0xf]
      %v4428 = vld [vmem:[%s327 + $0xf0] sm:$0xf]
      %v4429 = vld [vmem:[%s327 + $0xf4] sm:$0xf]
      %v4430 = vld [vmem:[%s327 + $0xf8] sm:$0xf]
      %v4431 = vld [vmem:[%s327 + $0xfc] sm:$0xf]
      %v4432 = vld [vmem:[%s327 + $0x100] sm:$0xf]
      %v4433 = vld [vmem:[%s327 + $0x104] sm:$0xf]
      %v4434 = vld [vmem:[%s327 + $0x108] sm:$0xf]
      %v4435 = vld [vmem:[%s327 + $0x10c] sm:$0xf]
      %v4436 = vld [vmem:[%s327 + $0x110] sm:$0xf]
      %v4437 = vld [vmem:[%s327 + $0x114] sm:$0xf]
      %v4438 = vld [vmem:[%s327 + $0x118] sm:$0xf]
      %v4439 = vld [vmem:[%s327 + $0x11c] sm:$0xf]
      %v4440 = vld [vmem:[%s327 + $0x120] sm:$0xf]
      %v4441 = vld [vmem:[%s327 + $0x124] sm:$0xf]
      %v4442 = vld [vmem:[%s327 + $0x128] sm:$0xf]
      %v4443 = vld [vmem:[%s327 + $0x12c] sm:$0xf]
      %v4444 = vld [vmem:[%s327 + $0x130] sm:$0xf]
      %v4445 = vld [vmem:[%s327 + $0x134] sm:$0xf]
      %v4446 = vld [vmem:[%s327 + $0x138] sm:$0xf]
      %v4447 = vld [vmem:[%s327 + $0x13c] sm:$0xf]
      %v4448 = vld [vmem:[%s327 + $0x140] sm:$0xf]
      %v4449 = vld [vmem:[%s327 + $0x144] sm:$0xf]
      %v4450 = vld [vmem:[%s327 + $0x148] sm:$0xf]
      %v4451 = vld [vmem:[%s327 + $0x14c] sm:$0xf]
      %v4452 = vld [vmem:[%s327 + $0x150] sm:$0x1]
      %s4453 = scalar_lea.vmem %s1, 96
      %v4454 = vld [vmem:[%s4453] sm:$0xf]
      %v4455 = vld [vmem:[%s4453 + $0x4] sm:$0xf]
      %v4456 = vld [vmem:[%s4453 + $0x8] sm:$0xf]
      %v4457 = vld [vmem:[%s4453 + $0xc] sm:$0xf]
      %v4537 = vunpack.c.l.b16 %v4374
      %v4538 = vunpack.c.l.b16 %v4375
      %v4539 = vunpack.c.l.b16 %v4376
      %v4540 = vunpack.c.l.b16 %v4377
      %v4541 = vunpack.c.l.b16 %v4378
      %v4542 = vunpack.c.l.b16 %v4379
      %v4543 = vunpack.c.l.b16 %v4380
      %v4544 = vunpack.c.l.b16 %v4381
      %v4545 = vunpack.c.l.b16 %v4382
      %v4546 = vunpack.c.l.b16 %v4383
      %v4547 = vunpack.c.l.b16 %v4384
      %v4548 = vunpack.c.l.b16 %v4385
      %v4549 = vunpack.c.l.b16 %v4386
      %v4550 = vunpack.c.l.b16 %v4387
      %v4551 = vunpack.c.l.b16 %v4388
      %v4552 = vunpack.c.l.b16 %v4389
      %v4553 = vunpack.c.l.b16 %v4390
      %v4554 = vunpack.c.l.b16 %v4391
      %v4555 = vunpack.c.l.b16 %v4392
      %v4556 = vunpack.c.l.b16 %v4393
      %v4557 = vunpack.c.l.b16 %v4394
      %v4558 = vunpack.c.l.b16 %v4395
      %v4559 = vunpack.c.l.b16 %v4396
      %v4560 = vunpack.c.l.b16 %v4397
      %v4561 = vunpack.c.l.b16 %v4398
      %v4562 = vunpack.c.l.b16 %v4399
      %v4563 = vunpack.c.l.b16 %v4400
      %v4564 = vunpack.c.l.b16 %v4401
      %v4565 = vunpack.c.l.b16 %v4402
      %v4566 = vunpack.c.l.b16 %v4403
      %v4567 = vunpack.c.l.b16 %v4404
      %v4568 = vunpack.c.l.b16 %v4405
      %v4569 = vunpack.c.l.b16 %v4406
      %v4570 = vunpack.c.l.b16 %v4407
      %v4571 = vunpack.c.l.b16 %v4408
      %v4572 = vunpack.c.l.b16 %v4409
      %v4573 = vunpack.c.l.b16 %v4410
      %v4574 = vunpack.c.l.b16 %v4411
      %v4575 = vunpack.c.l.b16 %v4412
      %v4576 = vunpack.c.l.b16 %v4413
      %v4577 = vunpack.c.l.b16 %v4414
      %v4578 = vunpack.c.l.b16 %v4415
      %v4579 = vunpack.c.l.b16 %v4416
      %v4580 = vunpack.c.l.b16 %v4417
      %v4581 = vunpack.c.l.b16 %v4418
      %v4582 = vunpack.c.l.b16 %v4419
      %v4583 = vunpack.c.l.b16 %v4420
      %v4584 = vunpack.c.l.b16 %v4421
      %v4585 = vunpack.c.l.b16 %v4422
      %v4586 = vunpack.c.l.b16 %v4423
      %v4587 = vunpack.c.l.b16 %v4424
      %v4588 = vunpack.c.l.b16 %v4425
      %v4589 = vunpack.c.l.b16 %v4426
      %v4590 = vunpack.c.l.b16 %v4427
      %v4591 = vunpack.c.l.b16 %v4428
      %v4592 = vunpack.c.l.b16 %v4429
      %v4593 = vunpack.c.l.b16 %v4430
      %v4594 = vunpack.c.l.b16 %v4431
      %v4595 = vunpack.c.l.b16 %v4432
      %v4596 = vunpack.c.l.b16 %v4433
      %v4597 = vunpack.c.l.b16 %v4434
      %v4598 = vunpack.c.l.b16 %v4435
      %v4599 = vunpack.c.l.b16 %v4436
      %v4600 = vunpack.c.l.b16 %v4437
      %v4601 = vunpack.c.l.b16 %v4438
      %v4602 = vunpack.c.l.b16 %v4439
      %v4603 = vunpack.c.l.b16 %v4440
      %v4604 = vunpack.c.l.b16 %v4441
      %v4605 = vunpack.c.l.b16 %v4442
      %v4606 = vunpack.c.l.b16 %v4443
      %v4607 = vunpack.c.l.b16 %v4444
      %v4608 = vunpack.c.l.b16 %v4445
      %v4609 = vunpack.c.l.b16 %v4446
      %v4610 = vunpack.c.l.b16 %v4447
      %v4611 = vunpack.c.l.b16 %v4448
      %v4612 = vunpack.c.l.b16 %v4449
      %v4613 = vunpack.c.l.b16 %v4450
      %v4614 = vunpack.c.l.b16 %v4451
      %v4615 = vunpack.c.l.b16 %v4452
      %v4616 = vpack.c.b16 %v4538, %v4537
      %v4617 = vpack.c.b16 %v4540, %v4539
      %v4618 = vpack.c.b16 %v4542, %v4541
      %v4619 = vpack.c.b16 %v4544, %v4543
      %v4620 = vpack.c.b16 %v4546, %v4545
      %v4621 = vpack.c.b16 %v4548, %v4547
      %v4622 = vpack.c.b16 %v4550, %v4549
      %v4623 = vpack.c.b16 %v4552, %v4551
      %v4624 = vpack.c.b16 %v4554, %v4553
      %v4625 = vpack.c.b16 %v4556, %v4555
      %v4626 = vpack.c.b16 %v4558, %v4557
      %v4627 = vpack.c.b16 %v4560, %v4559
      %v4628 = vpack.c.b16 %v4562, %v4561
      %v4629 = vpack.c.b16 %v4564, %v4563
      %v4630 = vpack.c.b16 %v4566, %v4565
      %v4631 = vpack.c.b16 %v4568, %v4567
      %v4632 = vpack.c.b16 %v4570, %v4569
      %v4633 = vpack.c.b16 %v4572, %v4571
      %v4634 = vpack.c.b16 %v4574, %v4573
      %v4635 = vpack.c.b16 %v4576, %v4575
      %v4636 = vpack.c.b16 %v4578, %v4577
      %v4637 = vpack.c.b16 %v4580, %v4579
      %v4638 = vpack.c.b16 %v4582, %v4581
      %v4639 = vpack.c.b16 %v4584, %v4583
      %v4640 = vpack.c.b16 %v4586, %v4585
      %v4641 = vpack.c.b16 %v4588, %v4587
      %v4642 = vpack.c.b16 %v4590, %v4589
      %v4643 = vpack.c.b16 %v4592, %v4591
      %v4644 = vpack.c.b16 %v4594, %v4593
      %v4645 = vpack.c.b16 %v4596, %v4595
      %v4646 = vpack.c.b16 %v4598, %v4597
      %v4647 = vpack.c.b16 %v4600, %v4599
      %v4648 = vpack.c.b16 %v4602, %v4601
      %v4649 = vpack.c.b16 %v4604, %v4603
      %v4650 = vpack.c.b16 %v4606, %v4605
      %v4651 = vpack.c.b16 %v4608, %v4607
      %v4652 = vpack.c.b16 %v4610, %v4609
      %v4653 = vpack.c.b16 %v4612, %v4611
      %v4654 = vpack.c.b16 %v4614, %v4613
      %v4655 = vpack.c.b16 %v4615, %v4615
      %v4656 = vrot.slane %v4616, 2
      %v4657 = vrot.slane %v4617, 2
      %v4658 = vsel %vm3883, %v4656, %v4657
      %v4659 = vrot.slane %v4618, 2
      %v4660 = vsel %vm3883, %v4657, %v4659
      %v4661 = vrot.slane %v4619, 2
      %v4662 = vsel %vm3883, %v4659, %v4661
      %v4663 = vrot.slane %v4620, 2
      %v4664 = vsel %vm3883, %v4661, %v4663
      %v4665 = vrot.slane %v4621, 2
      %v4666 = vsel %vm3883, %v4663, %v4665
      %v4667 = vrot.slane %v4622, 2
      %v4668 = vsel %vm3883, %v4665, %v4667
      %v4669 = vrot.slane %v4623, 2
      %v4670 = vsel %vm3883, %v4667, %v4669
      %v4671 = vrot.slane %v4624, 2
      %v4672 = vsel %vm3883, %v4669, %v4671
      %v4673 = vrot.slane %v4625, 2
      %v4674 = vsel %vm3883, %v4671, %v4673
      %v4675 = vrot.slane %v4626, 2
      %v4676 = vsel %vm3883, %v4673, %v4675
      %v4677 = vrot.slane %v4627, 2
      %v4678 = vsel %vm3883, %v4675, %v4677
      %v4679 = vrot.slane %v4628, 2
      %v4680 = vsel %vm3883, %v4677, %v4679
      %v4681 = vrot.slane %v4629, 2
      %v4682 = vsel %vm3883, %v4679, %v4681
      %v4683 = vrot.slane %v4630, 2
      %v4684 = vsel %vm3883, %v4681, %v4683
      %v4685 = vrot.slane %v4631, 2
      %v4686 = vsel %vm3883, %v4683, %v4685
      %v4687 = vrot.slane %v4632, 2
      %v4688 = vsel %vm3883, %v4685, %v4687
      %v4689 = vrot.slane %v4633, 2
      %v4690 = vsel %vm3883, %v4687, %v4689
      %v4691 = vrot.slane %v4634, 2
      %v4692 = vsel %vm3883, %v4689, %v4691
      %v4693 = vrot.slane %v4635, 2
      %v4694 = vsel %vm3883, %v4691, %v4693
      %v4695 = vrot.slane %v4636, 2
      %v4696 = vsel %vm3883, %v4693, %v4695
      %v4697 = vrot.slane %v4637, 2
      %v4698 = vsel %vm3883, %v4695, %v4697
      %v4699 = vrot.slane %v4638, 2
      %v4700 = vsel %vm3883, %v4697, %v4699
      %v4701 = vrot.slane %v4639, 2
      %v4702 = vsel %vm3883, %v4699, %v4701
      %v4703 = vrot.slane %v4640, 2
      %v4704 = vsel %vm3883, %v4701, %v4703
      %v4705 = vrot.slane %v4641, 2
      %v4706 = vsel %vm3883, %v4703, %v4705
      %v4707 = vrot.slane %v4642, 2
      %v4708 = vsel %vm3883, %v4705, %v4707
      %v4709 = vrot.slane %v4643, 2
      %v4710 = vsel %vm3883, %v4707, %v4709
      %v4711 = vrot.slane %v4644, 2
      %v4712 = vsel %vm3883, %v4709, %v4711
      %v4713 = vrot.slane %v4645, 2
      %v4714 = vsel %vm3883, %v4711, %v4713
      %v4715 = vrot.slane %v4646, 2
      %v4716 = vsel %vm3883, %v4713, %v4715
      %v4717 = vrot.slane %v4647, 2
      %v4718 = vsel %vm3883, %v4715, %v4717
      %v4719 = vrot.slane %v4648, 2
      %v4720 = vsel %vm3883, %v4717, %v4719
      %v4721 = vrot.slane %v4649, 2
      %v4722 = vsel %vm3883, %v4719, %v4721
      %v4723 = vrot.slane %v4650, 2
      %v4724 = vsel %vm3883, %v4721, %v4723
      %v4725 = vrot.slane %v4651, 2
      %v4726 = vsel %vm3883, %v4723, %v4725
      %v4727 = vrot.slane %v4652, 2
      %v4728 = vsel %vm3883, %v4725, %v4727
      %v4729 = vrot.slane %v4653, 2
      %v4730 = vsel %vm3883, %v4727, %v4729
      %v4731 = vrot.slane %v4654, 2
      %v4732 = vsel %vm3883, %v4729, %v4731
      %v4733 = vrot.slane %v4655, 2
      %v4734 = vsel %vm3883, %v4731, %v4733
      %v4739 = vunpack.c.l.b16 %v4454
      %v4740 = vunpack.c.l.b16 %v4455
      %v4741 = vunpack.c.l.b16 %v4456
      %v4742 = vunpack.c.l.b16 %v4457
      %v4743 = vpack.c.b16 %v4740, %v4739
      %v4744 = vpack.c.b16 %v4742, %v4741
      %v4748 = vsel %vm941, %v4658, 0
      %v4751 = vsel %vm941, %v4660, 0
      %v4754 = vsel %vm941, %v4662, 0
      %v4757 = vsel %vm941, %v4664, 0
      %v4760 = vsel %vm941, %v4666, 0
      %v4763 = vsel %vm941, %v4668, 0
      %v4766 = vsel %vm941, %v4670, 0
      %v4769 = vsel %vm941, %v4672, 0
      %v4772 = vsel %vm941, %v4674, 0
      %v4775 = vsel %vm941, %v4676, 0
      %v4778 = vsel %vm941, %v4678, 0
      %v4781 = vsel %vm941, %v4680, 0
      %v4784 = vsel %vm941, %v4682, 0
      %v4787 = vsel %vm941, %v4684, 0
      %v4790 = vsel %vm941, %v4686, 0
      %v4793 = vsel %vm941, %v4688, 0
      %v4796 = vsel %vm941, %v4690, 0
      %v4799 = vsel %vm941, %v4692, 0
      %v4802 = vsel %vm941, %v4694, 0
      %v4805 = vsel %vm941, %v4696, 0
      %v4808 = vsel %vm941, %v4698, 0
      %v4811 = vsel %vm941, %v4700, 0
      %v4814 = vsel %vm941, %v4702, 0
      %v4817 = vsel %vm941, %v4704, 0
      %v4820 = vsel %vm941, %v4706, 0
      %v4823 = vsel %vm941, %v4708, 0
      %v4826 = vsel %vm941, %v4710, 0
      %v4829 = vsel %vm941, %v4712, 0
      %v4832 = vsel %vm941, %v4714, 0
      %v4835 = vsel %vm941, %v4716, 0
      %v4838 = vsel %vm941, %v4718, 0
      %v4841 = vsel %vm941, %v4720, 0
      %v4844 = vsel %vm941, %v4722, 0
      %v4847 = vsel %vm941, %v4724, 0
      %v4850 = vsel %vm941, %v4726, 0
      %v4853 = vsel %vm941, %v4728, 0
      %v4856 = vsel %vm941, %v4730, 0
      %v4859 = vsel %vm941, %v4732, 0
      %v4862 = vsel %vm941, %v4734, 0
      %4864 = vmatpush.bf16.msra.mxu0 0
      %4865 = vmatpush.bf16.msra.mxu0 0
      %4866 = vmatpush.bf16.msra.mxu0 0
      %4867 = vmatpush.bf16.msra.mxu0 0
      %4868 = vmatpush.bf16.msra.mxu0 0
      %4869 = vmatpush.bf16.msra.mxu0 0
      %4870 = vmatpush.bf16.msra.mxu0 %v4744
      %4871 = vmatpush.bf16.msra.mxu0 %v4743
      %4872 = vmatmul.bf16.gmra.mxu0 %v4748
      %v4873 = vpop.f32.mrf.mxu0
      %v4874 = vadd.f32 0.0, %v4873
      %v4875 = vpop.f32.mrf.mxu0
      %v4876 = vadd.f32 0.0, %v4875
      %4877 = vmatmul.bf16.gmra.mxu0 %v4751
      %v4878 = vpop.f32.mrf.mxu0
      %v4879 = vadd.f32 0.0, %v4878
      %v4880 = vpop.f32.mrf.mxu0
      %v4881 = vadd.f32 0.0, %v4880
      %4882 = vmatmul.bf16.gmra.mxu0 %v4754
      %v4883 = vpop.f32.mrf.mxu0
      %v4884 = vadd.f32 0.0, %v4883
      %v4885 = vpop.f32.mrf.mxu0
      %v4886 = vadd.f32 0.0, %v4885
      %4887 = vmatmul.bf16.gmra.mxu0 %v4757
      %v4888 = vpop.f32.mrf.mxu0
      %v4889 = vadd.f32 0.0, %v4888
      %v4890 = vpop.f32.mrf.mxu0
      %v4891 = vadd.f32 0.0, %v4890
      %4892 = vmatmul.bf16.gmra.mxu0 %v4760
      %v4893 = vpop.f32.mrf.mxu0
      %v4894 = vadd.f32 0.0, %v4893
      %v4895 = vpop.f32.mrf.mxu0
      %v4896 = vadd.f32 0.0, %v4895
      %4897 = vmatmul.bf16.gmra.mxu0 %v4763
      %v4898 = vpop.f32.mrf.mxu0
      %v4899 = vadd.f32 0.0, %v4898
      %v4900 = vpop.f32.mrf.mxu0
      %v4901 = vadd.f32 0.0, %v4900
      %4902 = vmatmul.bf16.gmra.mxu0 %v4766
      %v4903 = vpop.f32.mrf.mxu0
      %v4904 = vadd.f32 0.0, %v4903
      %v4905 = vpop.f32.mrf.mxu0
      %v4906 = vadd.f32 0.0, %v4905
      %4907 = vmatmul.bf16.gmra.mxu0 %v4769
      %v4908 = vpop.f32.mrf.mxu0
      %v4909 = vadd.f32 0.0, %v4908
      %v4910 = vpop.f32.mrf.mxu0
      %v4911 = vadd.f32 0.0, %v4910
      %4912 = vmatmul.bf16.gmra.mxu0 %v4772
      %v4913 = vpop.f32.mrf.mxu0
      %v4914 = vadd.f32 0.0, %v4913
      %v4915 = vpop.f32.mrf.mxu0
      %v4916 = vadd.f32 0.0, %v4915
      %4917 = vmatmul.bf16.gmra.mxu0 %v4775
      %v4918 = vpop.f32.mrf.mxu0
      %v4919 = vadd.f32 0.0, %v4918
      %v4920 = vpop.f32.mrf.mxu0
      %v4921 = vadd.f32 0.0, %v4920
      %4922 = vmatmul.bf16.gmra.mxu0 %v4778
      %v4923 = vpop.f32.mrf.mxu0
      %v4924 = vadd.f32 0.0, %v4923
      %v4925 = vpop.f32.mrf.mxu0
      %v4926 = vadd.f32 0.0, %v4925
      %4927 = vmatmul.bf16.gmra.mxu0 %v4781
      %v4928 = vpop.f32.mrf.mxu0
      %v4929 = vadd.f32 0.0, %v4928
      %v4930 = vpop.f32.mrf.mxu0
      %v4931 = vadd.f32 0.0, %v4930
      %4932 = vmatmul.bf16.gmra.mxu0 %v4784
      %v4933 = vpop.f32.mrf.mxu0
      %v4934 = vadd.f32 0.0, %v4933
      %v4935 = vpop.f32.mrf.mxu0
      %v4936 = vadd.f32 0.0, %v4935
      %4937 = vmatmul.bf16.gmra.mxu0 %v4787
      %v4938 = vpop.f32.mrf.mxu0
      %v4939 = vadd.f32 0.0, %v4938
      %v4940 = vpop.f32.mrf.mxu0
      %v4941 = vadd.f32 0.0, %v4940
      %4942 = vmatmul.bf16.gmra.mxu0 %v4790
      %v4943 = vpop.f32.mrf.mxu0
      %v4944 = vadd.f32 0.0, %v4943
      %v4945 = vpop.f32.mrf.mxu0
      %v4946 = vadd.f32 0.0, %v4945
      %4947 = vmatmul.bf16.gmra.mxu0 %v4793
      %v4948 = vpop.f32.mrf.mxu0
      %v4949 = vadd.f32 0.0, %v4948
      %v4950 = vpop.f32.mrf.mxu0
      %v4951 = vadd.f32 0.0, %v4950
      %4952 = vmatmul.bf16.gmra.mxu0 %v4796
      %v4953 = vpop.f32.mrf.mxu0
      %v4954 = vadd.f32 0.0, %v4953
      %v4955 = vpop.f32.mrf.mxu0
      %v4956 = vadd.f32 0.0, %v4955
      %4957 = vmatmul.bf16.gmra.mxu0 %v4799
      %v4958 = vpop.f32.mrf.mxu0
      %v4959 = vadd.f32 0.0, %v4958
      %v4960 = vpop.f32.mrf.mxu0
      %v4961 = vadd.f32 0.0, %v4960
      %4962 = vmatmul.bf16.gmra.mxu0 %v4802
      %v4963 = vpop.f32.mrf.mxu0
      %v4964 = vadd.f32 0.0, %v4963
      %v4965 = vpop.f32.mrf.mxu0
      %v4966 = vadd.f32 0.0, %v4965
      %4967 = vmatmul.bf16.gmra.mxu0 %v4805
      %v4968 = vpop.f32.mrf.mxu0
      %v4969 = vadd.f32 0.0, %v4968
      %v4970 = vpop.f32.mrf.mxu0
      %v4971 = vadd.f32 0.0, %v4970
      %4972 = vmatmul.bf16.gmra.mxu0 %v4808
      %v4973 = vpop.f32.mrf.mxu0
      %v4974 = vadd.f32 0.0, %v4973
      %v4975 = vpop.f32.mrf.mxu0
      %v4976 = vadd.f32 0.0, %v4975
      %4977 = vmatmul.bf16.gmra.mxu0 %v4811
      %v4978 = vpop.f32.mrf.mxu0
      %v4979 = vadd.f32 0.0, %v4978
      %v4980 = vpop.f32.mrf.mxu0
      %v4981 = vadd.f32 0.0, %v4980
      %4982 = vmatmul.bf16.gmra.mxu0 %v4814
      %v4983 = vpop.f32.mrf.mxu0
      %v4984 = vadd.f32 0.0, %v4983
      %v4985 = vpop.f32.mrf.mxu0
      %v4986 = vadd.f32 0.0, %v4985
      %4987 = vmatmul.bf16.gmra.mxu0 %v4817
      %v4988 = vpop.f32.mrf.mxu0
      %v4989 = vadd.f32 0.0, %v4988
      %v4990 = vpop.f32.mrf.mxu0
      %v4991 = vadd.f32 0.0, %v4990
      %4992 = vmatmul.bf16.gmra.mxu0 %v4820
      %v4993 = vpop.f32.mrf.mxu0
      %v4994 = vadd.f32 0.0, %v4993
      %v4995 = vpop.f32.mrf.mxu0
      %v4996 = vadd.f32 0.0, %v4995
      %4997 = vmatmul.bf16.gmra.mxu0 %v4823
      %v4998 = vpop.f32.mrf.mxu0
      %v4999 = vadd.f32 0.0, %v4998
      %v5000 = vpop.f32.mrf.mxu0
      %v5001 = vadd.f32 0.0, %v5000
      %5002 = vmatmul.bf16.gmra.mxu0 %v4826
      %v5003 = vpop.f32.mrf.mxu0
      %v5004 = vadd.f32 0.0, %v5003
      %v5005 = vpop.f32.mrf.mxu0
      %v5006 = vadd.f32 0.0, %v5005
      %5007 = vmatmul.bf16.gmra.mxu0 %v4829
      %v5008 = vpop.f32.mrf.mxu0
      %v5009 = vadd.f32 0.0, %v5008
      %v5010 = vpop.f32.mrf.mxu0
      %v5011 = vadd.f32 0.0, %v5010
      %5012 = vmatmul.bf16.gmra.mxu0 %v4832
      %v5013 = vpop.f32.mrf.mxu0
      %v5014 = vadd.f32 0.0, %v5013
      %v5015 = vpop.f32.mrf.mxu0
      %v5016 = vadd.f32 0.0, %v5015
      %5017 = vmatmul.bf16.gmra.mxu0 %v4835
      %v5018 = vpop.f32.mrf.mxu0
      %v5019 = vadd.f32 0.0, %v5018
      %v5020 = vpop.f32.mrf.mxu0
      %v5021 = vadd.f32 0.0, %v5020
      %5022 = vmatmul.bf16.gmra.mxu0 %v4838
      %v5023 = vpop.f32.mrf.mxu0
      %v5024 = vadd.f32 0.0, %v5023
      %v5025 = vpop.f32.mrf.mxu0
      %v5026 = vadd.f32 0.0, %v5025
      %5027 = vmatmul.bf16.gmra.mxu0 %v4841
      %v5028 = vpop.f32.mrf.mxu0
      %v5029 = vadd.f32 0.0, %v5028
      %v5030 = vpop.f32.mrf.mxu0
      %v5031 = vadd.f32 0.0, %v5030
      %5032 = vmatmul.bf16.gmra.mxu0 %v4844
      %v5033 = vpop.f32.mrf.mxu0
      %v5034 = vadd.f32 0.0, %v5033
      %v5035 = vpop.f32.mrf.mxu0
      %v5036 = vadd.f32 0.0, %v5035
      %5037 = vmatmul.bf16.gmra.mxu0 %v4847
      %v5038 = vpop.f32.mrf.mxu0
      %v5039 = vadd.f32 0.0, %v5038
      %v5040 = vpop.f32.mrf.mxu0
      %v5041 = vadd.f32 0.0, %v5040
      %5042 = vmatmul.bf16.gmra.mxu0 %v4850
      %v5043 = vpop.f32.mrf.mxu0
      %v5044 = vadd.f32 0.0, %v5043
      %v5045 = vpop.f32.mrf.mxu0
      %v5046 = vadd.f32 0.0, %v5045
      %5047 = vmatmul.bf16.gmra.mxu0 %v4853
      %v5048 = vpop.f32.mrf.mxu0
      %v5049 = vadd.f32 0.0, %v5048
      %v5050 = vpop.f32.mrf.mxu0
      %v5051 = vadd.f32 0.0, %v5050
      %5052 = vmatmul.bf16.gmra.mxu0 %v4856
      %v5053 = vpop.f32.mrf.mxu0
      %v5054 = vadd.f32 0.0, %v5053
      %v5055 = vpop.f32.mrf.mxu0
      %v5056 = vadd.f32 0.0, %v5055
      %5057 = vmatmul.bf16.gmra.mxu0 %v4859
      %v5058 = vpop.f32.mrf.mxu0
      %v5059 = vadd.f32 0.0, %v5058
      %v5060 = vpop.f32.mrf.mxu0
      %v5061 = vadd.f32 0.0, %v5060
      %5062 = vmatmul.bf16.gmra.mxu0 %v4862
      %v5063 = vpop.f32.mrf.mxu0
      %v5064 = vadd.f32 0.0, %v5063
      %v5065 = vpop.f32.mrf.mxu0
      %v5066 = vadd.f32 0.0, %v5065
      %5067 = vdwg.mxu0
      %v5068 = vadd.f32 %v4296, %v4874
      %v5069 = vadd.f32 %v4297, %v4876
      %v5070 = vadd.f32 %v4298, %v4879
      %v5071 = vadd.f32 %v4299, %v4881
      %v5072 = vadd.f32 %v4300, %v4884
      %v5073 = vadd.f32 %v4301, %v4886
      %v5074 = vadd.f32 %v4302, %v4889
      %v5075 = vadd.f32 %v4303, %v4891
      %v5076 = vadd.f32 %v4304, %v4894
      %v5077 = vadd.f32 %v4305, %v4896
      %v5078 = vadd.f32 %v4306, %v4899
      %v5079 = vadd.f32 %v4307, %v4901
      %v5080 = vadd.f32 %v4308, %v4904
      %v5081 = vadd.f32 %v4309, %v4906
      %v5082 = vadd.f32 %v4310, %v4909
      %v5083 = vadd.f32 %v4311, %v4911
      %v5084 = vadd.f32 %v4312, %v4914
      %v5085 = vadd.f32 %v4313, %v4916
      %v5086 = vadd.f32 %v4314, %v4919
      %v5087 = vadd.f32 %v4315, %v4921
      %v5088 = vadd.f32 %v4316, %v4924
      %v5089 = vadd.f32 %v4317, %v4926
      %v5090 = vadd.f32 %v4318, %v4929
      %v5091 = vadd.f32 %v4319, %v4931
      %v5092 = vadd.f32 %v4320, %v4934
      %v5093 = vadd.f32 %v4321, %v4936
      %v5094 = vadd.f32 %v4322, %v4939
      %v5095 = vadd.f32 %v4323, %v4941
      %v5096 = vadd.f32 %v4324, %v4944
      %v5097 = vadd.f32 %v4325, %v4946
      %v5098 = vadd.f32 %v4326, %v4949
      %v5099 = vadd.f32 %v4327, %v4951
      %v5100 = vadd.f32 %v4328, %v4954
      %v5101 = vadd.f32 %v4329, %v4956
      %v5102 = vadd.f32 %v4330, %v4959
      %v5103 = vadd.f32 %v4331, %v4961
      %v5104 = vadd.f32 %v4332, %v4964
      %v5105 = vadd.f32 %v4333, %v4966
      %v5106 = vadd.f32 %v4334, %v4969
      %v5107 = vadd.f32 %v4335, %v4971
      %v5108 = vadd.f32 %v4336, %v4974
      %v5109 = vadd.f32 %v4337, %v4976
      %v5110 = vadd.f32 %v4338, %v4979
      %v5111 = vadd.f32 %v4339, %v4981
      %v5112 = vadd.f32 %v4340, %v4984
      %v5113 = vadd.f32 %v4341, %v4986
      %v5114 = vadd.f32 %v4342, %v4989
      %v5115 = vadd.f32 %v4343, %v4991
      %v5116 = vadd.f32 %v4344, %v4994
      %v5117 = vadd.f32 %v4345, %v4996
      %v5118 = vadd.f32 %v4346, %v4999
      %v5119 = vadd.f32 %v4347, %v5001
      %v5120 = vadd.f32 %v4348, %v5004
      %v5121 = vadd.f32 %v4349, %v5006
      %v5122 = vadd.f32 %v4350, %v5009
      %v5123 = vadd.f32 %v4351, %v5011
      %v5124 = vadd.f32 %v4352, %v5014
      %v5125 = vadd.f32 %v4353, %v5016
      %v5126 = vadd.f32 %v4354, %v5019
      %v5127 = vadd.f32 %v4355, %v5021
      %v5128 = vadd.f32 %v4356, %v5024
      %v5129 = vadd.f32 %v4357, %v5026
      %v5130 = vadd.f32 %v4358, %v5029
      %v5131 = vadd.f32 %v4359, %v5031
      %v5132 = vadd.f32 %v4360, %v5034
      %v5133 = vadd.f32 %v4361, %v5036
      %v5134 = vadd.f32 %v4362, %v5039
      %v5135 = vadd.f32 %v4363, %v5041
      %v5136 = vadd.f32 %v4364, %v5044
      %v5137 = vadd.f32 %v4365, %v5046
      %v5138 = vadd.f32 %v4366, %v5049
      %v5139 = vadd.f32 %v4367, %v5051
      %v5140 = vadd.f32 %v4368, %v5054
      %v5141 = vadd.f32 %v4369, %v5056
      %v5142 = vadd.f32 %v4370, %v5059
      %v5143 = vadd.f32 %v4371, %v5061
      %v5144 = vadd.f32 %v4372, %v5064
      %v5145 = vadd.f32 %v4373, %v5066
      %v5146 = vld [vmem:[%s327 + $0x150] sm:$0x3]
      %s5147 = scalar_lea.vmem %s1, 112
      %v5148 = vld [vmem:[%s5147] sm:$0xf]
      %v5149 = vld [vmem:[%s5147 + $0x4] sm:$0xf]
      %v5150 = vld [vmem:[%s5147 + $0x8] sm:$0xf]
      %v5151 = vld [vmem:[%s5147 + $0xc] sm:$0xf]
      %v5153 = vunpack.c.l.b16 %v5146
      %v5154 = vpack.c.b16 %v5153, %v5153
      %vm5155 = vsmask.f32 5376
      %v5157 = vshrl.u32 %v4616, 16
      %v5159 = vrot.slane %v5157, 2
      %v5160 = vshll.u32 %v4616, 16
      %v5162 = vrot.slane %v5160, 3
      %v5163 = vor.u32 %v5159, %v5162
      %v5165 = vshrl.u32 %v4617, 16
      %v5167 = vrot.slane %v5165, 2
      %v5168 = vshll.u32 %v4617, 16
      %v5170 = vrot.slane %v5168, 3
      %v5171 = vor.u32 %v5167, %v5170
      %v5172 = vsel %vm5155, %v5163, %v5171
      %v5174 = vshrl.u32 %v4618, 16
      %v5176 = vrot.slane %v5174, 2
      %v5177 = vshll.u32 %v4618, 16
      %v5179 = vrot.slane %v5177, 3
      %v5180 = vor.u32 %v5176, %v5179
      %v5181 = vsel %vm5155, %v5171, %v5180
      %v5183 = vshrl.u32 %v4619, 16
      %v5185 = vrot.slane %v5183, 2
      %v5186 = vshll.u32 %v4619, 16
      %v5188 = vrot.slane %v5186, 3
      %v5189 = vor.u32 %v5185, %v5188
      %v5190 = vsel %vm5155, %v5180, %v5189
      %v5192 = vshrl.u32 %v4620, 16
      %v5194 = vrot.slane %v5192, 2
      %v5195 = vshll.u32 %v4620, 16
      %v5197 = vrot.slane %v5195, 3
      %v5198 = vor.u32 %v5194, %v5197
      %v5199 = vsel %vm5155, %v5189, %v5198
      %v5201 = vshrl.u32 %v4621, 16
      %v5203 = vrot.slane %v5201, 2
      %v5204 = vshll.u32 %v4621, 16
      %v5206 = vrot.slane %v5204, 3
      %v5207 = vor.u32 %v5203, %v5206
      %v5208 = vsel %vm5155, %v5198, %v5207
      %v5210 = vshrl.u32 %v4622, 16
      %v5212 = vrot.slane %v5210, 2
      %v5213 = vshll.u32 %v4622, 16
      %v5215 = vrot.slane %v5213, 3
      %v5216 = vor.u32 %v5212, %v5215
      %v5217 = vsel %vm5155, %v5207, %v5216
      %v5219 = vshrl.u32 %v4623, 16
      %v5221 = vrot.slane %v5219, 2
      %v5222 = vshll.u32 %v4623, 16
      %v5224 = vrot.slane %v5222, 3
      %v5225 = vor.u32 %v5221, %v5224
      %v5226 = vsel %vm5155, %v5216, %v5225
      %v5228 = vshrl.u32 %v4624, 16
      %v5230 = vrot.slane %v5228, 2
      %v5231 = vshll.u32 %v4624, 16
      %v5233 = vrot.slane %v5231, 3
      %v5234 = vor.u32 %v5230, %v5233
      %v5235 = vsel %vm5155, %v5225, %v5234
      %v5237 = vshrl.u32 %v4625, 16
      %v5239 = vrot.slane %v5237, 2
      %v5240 = vshll.u32 %v4625, 16
      %v5242 = vrot.slane %v5240, 3
      %v5243 = vor.u32 %v5239, %v5242
      %v5244 = vsel %vm5155, %v5234, %v5243
      %v5246 = vshrl.u32 %v4626, 16
      %v5248 = vrot.slane %v5246, 2
      %v5249 = vshll.u32 %v4626, 16
      %v5251 = vrot.slane %v5249, 3
      %v5252 = vor.u32 %v5248, %v5251
      %v5253 = vsel %vm5155, %v5243, %v5252
      %v5255 = vshrl.u32 %v4627, 16
      %v5257 = vrot.slane %v5255, 2
      %v5258 = vshll.u32 %v4627, 16
      %v5260 = vrot.slane %v5258, 3
      %v5261 = vor.u32 %v5257, %v5260
      %v5262 = vsel %vm5155, %v5252, %v5261
      %v5264 = vshrl.u32 %v4628, 16
      %v5266 = vrot.slane %v5264, 2
      %v5267 = vshll.u32 %v4628, 16
      %v5269 = vrot.slane %v5267, 3
      %v5270 = vor.u32 %v5266, %v5269
      %v5271 = vsel %vm5155, %v5261, %v5270
      %v5273 = vshrl.u32 %v4629, 16
      %v5275 = vrot.slane %v5273, 2
      %v5276 = vshll.u32 %v4629, 16
      %v5278 = vrot.slane %v5276, 3
      %v5279 = vor.u32 %v5275, %v5278
      %v5280 = vsel %vm5155, %v5270, %v5279
      %v5282 = vshrl.u32 %v4630, 16
      %v5284 = vrot.slane %v5282, 2
      %v5285 = vshll.u32 %v4630, 16
      %v5287 = vrot.slane %v5285, 3
      %v5288 = vor.u32 %v5284, %v5287
      %v5289 = vsel %vm5155, %v5279, %v5288
      %v5291 = vshrl.u32 %v4631, 16
      %v5293 = vrot.slane %v5291, 2
      %v5294 = vshll.u32 %v4631, 16
      %v5296 = vrot.slane %v5294, 3
      %v5297 = vor.u32 %v5293, %v5296
      %v5298 = vsel %vm5155, %v5288, %v5297
      %v5300 = vshrl.u32 %v4632, 16
      %v5302 = vrot.slane %v5300, 2
      %v5303 = vshll.u32 %v4632, 16
      %v5305 = vrot.slane %v5303, 3
      %v5306 = vor.u32 %v5302, %v5305
      %v5307 = vsel %vm5155, %v5297, %v5306
      %v5309 = vshrl.u32 %v4633, 16
      %v5311 = vrot.slane %v5309, 2
      %v5312 = vshll.u32 %v4633, 16
      %v5314 = vrot.slane %v5312, 3
      %v5315 = vor.u32 %v5311, %v5314
      %v5316 = vsel %vm5155, %v5306, %v5315
      %v5318 = vshrl.u32 %v4634, 16
      %v5320 = vrot.slane %v5318, 2
      %v5321 = vshll.u32 %v4634, 16
      %v5323 = vrot.slane %v5321, 3
      %v5324 = vor.u32 %v5320, %v5323
      %v5325 = vsel %vm5155, %v5315, %v5324
      %v5327 = vshrl.u32 %v4635, 16
      %v5329 = vrot.slane %v5327, 2
      %v5330 = vshll.u32 %v4635, 16
      %v5332 = vrot.slane %v5330, 3
      %v5333 = vor.u32 %v5329, %v5332
      %v5334 = vsel %vm5155, %v5324, %v5333
      %v5336 = vshrl.u32 %v4636, 16
      %v5338 = vrot.slane %v5336, 2
      %v5339 = vshll.u32 %v4636, 16
      %v5341 = vrot.slane %v5339, 3
      %v5342 = vor.u32 %v5338, %v5341
      %v5343 = vsel %vm5155, %v5333, %v5342
      %v5345 = vshrl.u32 %v4637, 16
      %v5347 = vrot.slane %v5345, 2
      %v5348 = vshll.u32 %v4637, 16
      %v5350 = vrot.slane %v5348, 3
      %v5351 = vor.u32 %v5347, %v5350
      %v5352 = vsel %vm5155, %v5342, %v5351
      %v5354 = vshrl.u32 %v4638, 16
      %v5356 = vrot.slane %v5354, 2
      %v5357 = vshll.u32 %v4638, 16
      %v5359 = vrot.slane %v5357, 3
      %v5360 = vor.u32 %v5356, %v5359
      %v5361 = vsel %vm5155, %v5351, %v5360
      %v5363 = vshrl.u32 %v4639, 16
      %v5365 = vrot.slane %v5363, 2
      %v5366 = vshll.u32 %v4639, 16
      %v5368 = vrot.slane %v5366, 3
      %v5369 = vor.u32 %v5365, %v5368
      %v5370 = vsel %vm5155, %v5360, %v5369
      %v5372 = vshrl.u32 %v4640, 16
      %v5374 = vrot.slane %v5372, 2
      %v5375 = vshll.u32 %v4640, 16
      %v5377 = vrot.slane %v5375, 3
      %v5378 = vor.u32 %v5374, %v5377
      %v5379 = vsel %vm5155, %v5369, %v5378
      %v5381 = vshrl.u32 %v4641, 16
      %v5383 = vrot.slane %v5381, 2
      %v5384 = vshll.u32 %v4641, 16
      %v5386 = vrot.slane %v5384, 3
      %v5387 = vor.u32 %v5383, %v5386
      %v5388 = vsel %vm5155, %v5378, %v5387
      %v5390 = vshrl.u32 %v4642, 16
      %v5392 = vrot.slane %v5390, 2
      %v5393 = vshll.u32 %v4642, 16
      %v5395 = vrot.slane %v5393, 3
      %v5396 = vor.u32 %v5392, %v5395
      %v5397 = vsel %vm5155, %v5387, %v5396
      %v5399 = vshrl.u32 %v4643, 16
      %v5401 = vrot.slane %v5399, 2
      %v5402 = vshll.u32 %v4643, 16
      %v5404 = vrot.slane %v5402, 3
      %v5405 = vor.u32 %v5401, %v5404
      %v5406 = vsel %vm5155, %v5396, %v5405
      %v5408 = vshrl.u32 %v4644, 16
      %v5410 = vrot.slane %v5408, 2
      %v5411 = vshll.u32 %v4644, 16
      %v5413 = vrot.slane %v5411, 3
      %v5414 = vor.u32 %v5410, %v5413
      %v5415 = vsel %vm5155, %v5405, %v5414
      %v5417 = vshrl.u32 %v4645, 16
      %v5419 = vrot.slane %v5417, 2
      %v5420 = vshll.u32 %v4645, 16
      %v5422 = vrot.slane %v5420, 3
      %v5423 = vor.u32 %v5419, %v5422
      %v5424 = vsel %vm5155, %v5414, %v5423
      %v5426 = vshrl.u32 %v4646, 16
      %v5428 = vrot.slane %v5426, 2
      %v5429 = vshll.u32 %v4646, 16
      %v5431 = vrot.slane %v5429, 3
      %v5432 = vor.u32 %v5428, %v5431
      %v5433 = vsel %vm5155, %v5423, %v5432
      %v5435 = vshrl.u32 %v4647, 16
      %v5437 = vrot.slane %v5435, 2
      %v5438 = vshll.u32 %v4647, 16
      %v5440 = vrot.slane %v5438, 3
      %v5441 = vor.u32 %v5437, %v5440
      %v5442 = vsel %vm5155, %v5432, %v5441
      %v5444 = vshrl.u32 %v4648, 16
      %v5446 = vrot.slane %v5444, 2
      %v5447 = vshll.u32 %v4648, 16
      %v5449 = vrot.slane %v5447, 3
      %v5450 = vor.u32 %v5446, %v5449
      %v5451 = vsel %vm5155, %v5441, %v5450
      %v5453 = vshrl.u32 %v4649, 16
      %v5455 = vrot.slane %v5453, 2
      %v5456 = vshll.u32 %v4649, 16
      %v5458 = vrot.slane %v5456, 3
      %v5459 = vor.u32 %v5455, %v5458
      %v5460 = vsel %vm5155, %v5450, %v5459
      %v5462 = vshrl.u32 %v4650, 16
      %v5464 = vrot.slane %v5462, 2
      %v5465 = vshll.u32 %v4650, 16
      %v5467 = vrot.slane %v5465, 3
      %v5468 = vor.u32 %v5464, %v5467
      %v5469 = vsel %vm5155, %v5459, %v5468
      %v5471 = vshrl.u32 %v4651, 16
      %v5473 = vrot.slane %v5471, 2
      %v5474 = vshll.u32 %v4651, 16
      %v5476 = vrot.slane %v5474, 3
      %v5477 = vor.u32 %v5473, %v5476
      %v5478 = vsel %vm5155, %v5468, %v5477
      %v5480 = vshrl.u32 %v4652, 16
      %v5482 = vrot.slane %v5480, 2
      %v5483 = vshll.u32 %v4652, 16
      %v5485 = vrot.slane %v5483, 3
      %v5486 = vor.u32 %v5482, %v5485
      %v5487 = vsel %vm5155, %v5477, %v5486
      %v5489 = vshrl.u32 %v4653, 16
      %v5491 = vrot.slane %v5489, 2
      %v5492 = vshll.u32 %v4653, 16
      %v5494 = vrot.slane %v5492, 3
      %v5495 = vor.u32 %v5491, %v5494
      %v5496 = vsel %vm5155, %v5486, %v5495
      %v5498 = vshrl.u32 %v4654, 16
      %v5500 = vrot.slane %v5498, 2
      %v5501 = vshll.u32 %v4654, 16
      %v5503 = vrot.slane %v5501, 3
      %v5504 = vor.u32 %v5500, %v5503
      %v5505 = vsel %vm5155, %v5495, %v5504
      %v5507 = vshrl.u32 %v5154, 16
      %v5509 = vrot.slane %v5507, 2
      %v5510 = vshll.u32 %v5154, 16
      %v5512 = vrot.slane %v5510, 3
      %v5513 = vor.u32 %v5509, %v5512
      %v5514 = vsel %vm5155, %v5504, %v5513
      %v5519 = vunpack.c.l.b16 %v5148
      %v5520 = vunpack.c.l.b16 %v5149
      %v5521 = vunpack.c.l.b16 %v5150
      %v5522 = vunpack.c.l.b16 %v5151
      %v5523 = vpack.c.b16 %v5520, %v5519
      %v5524 = vpack.c.b16 %v5522, %v5521
      %v5528 = vsel %vm941, %v5172, 0
      %v5531 = vsel %vm941, %v5181, 0
      %v5534 = vsel %vm941, %v5190, 0
      %v5537 = vsel %vm941, %v5199, 0
      %v5540 = vsel %vm941, %v5208, 0
      %v5543 = vsel %vm941, %v5217, 0
      %v5546 = vsel %vm941, %v5226, 0
      %v5549 = vsel %vm941, %v5235, 0
      %v5552 = vsel %vm941, %v5244, 0
      %v5555 = vsel %vm941, %v5253, 0
      %v5558 = vsel %vm941, %v5262, 0
      %v5561 = vsel %vm941, %v5271, 0
      %v5564 = vsel %vm941, %v5280, 0
      %v5567 = vsel %vm941, %v5289, 0
      %v5570 = vsel %vm941, %v5298, 0
      %v5573 = vsel %vm941, %v5307, 0
      %v5576 = vsel %vm941, %v5316, 0
      %v5579 = vsel %vm941, %v5325, 0
      %v5582 = vsel %vm941, %v5334, 0
      %v5585 = vsel %vm941, %v5343, 0
      %v5588 = vsel %vm941, %v5352, 0
      %v5591 = vsel %vm941, %v5361, 0
      %v5594 = vsel %vm941, %v5370, 0
      %v5597 = vsel %vm941, %v5379, 0
      %v5600 = vsel %vm941, %v5388, 0
      %v5603 = vsel %vm941, %v5397, 0
      %v5606 = vsel %vm941, %v5406, 0
      %v5609 = vsel %vm941, %v5415, 0
      %v5612 = vsel %vm941, %v5424, 0
      %v5615 = vsel %vm941, %v5433, 0
      %v5618 = vsel %vm941, %v5442, 0
      %v5621 = vsel %vm941, %v5451, 0
      %v5624 = vsel %vm941, %v5460, 0
      %v5627 = vsel %vm941, %v5469, 0
      %v5630 = vsel %vm941, %v5478, 0
      %v5633 = vsel %vm941, %v5487, 0
      %v5636 = vsel %vm941, %v5496, 0
      %v5639 = vsel %vm941, %v5505, 0
      %v5642 = vsel %vm941, %v5514, 0
      %5644 = vmatpush.bf16.msra.mxu0 0
      %5645 = vmatpush.bf16.msra.mxu0 0
      %5646 = vmatpush.bf16.msra.mxu0 0
      %5647 = vmatpush.bf16.msra.mxu0 0
      %5648 = vmatpush.bf16.msra.mxu0 0
      %5649 = vmatpush.bf16.msra.mxu0 0
      %5650 = vmatpush.bf16.msra.mxu0 %v5524
      %5651 = vmatpush.bf16.msra.mxu0 %v5523
      %5652 = vmatmul.bf16.gmra.mxu0 %v5528
      %v5653 = vpop.f32.mrf.mxu0
      %v5654 = vadd.f32 0.0, %v5653
      %v5655 = vpop.f32.mrf.mxu0
      %v5656 = vadd.f32 0.0, %v5655
      %5657 = vmatmul.bf16.gmra.mxu0 %v5531
      %v5658 = vpop.f32.mrf.mxu0
      %v5659 = vadd.f32 0.0, %v5658
      %v5660 = vpop.f32.mrf.mxu0
      %v5661 = vadd.f32 0.0, %v5660
      %5662 = vmatmul.bf16.gmra.mxu0 %v5534
      %v5663 = vpop.f32.mrf.mxu0
      %v5664 = vadd.f32 0.0, %v5663
      %v5665 = vpop.f32.mrf.mxu0
      %v5666 = vadd.f32 0.0, %v5665
      %5667 = vmatmul.bf16.gmra.mxu0 %v5537
      %v5668 = vpop.f32.mrf.mxu0
      %v5669 = vadd.f32 0.0, %v5668
      %v5670 = vpop.f32.mrf.mxu0
      %v5671 = vadd.f32 0.0, %v5670
      %5672 = vmatmul.bf16.gmra.mxu0 %v5540
      %v5673 = vpop.f32.mrf.mxu0
      %v5674 = vadd.f32 0.0, %v5673
      %v5675 = vpop.f32.mrf.mxu0
      %v5676 = vadd.f32 0.0, %v5675
      %5677 = vmatmul.bf16.gmra.mxu0 %v5543
      %v5678 = vpop.f32.mrf.mxu0
      %v5679 = vadd.f32 0.0, %v5678
      %v5680 = vpop.f32.mrf.mxu0
      %v5681 = vadd.f32 0.0, %v5680
      %5682 = vmatmul.bf16.gmra.mxu0 %v5546
      %v5683 = vpop.f32.mrf.mxu0
      %v5684 = vadd.f32 0.0, %v5683
      %v5685 = vpop.f32.mrf.mxu0
      %v5686 = vadd.f32 0.0, %v5685
      %5687 = vmatmul.bf16.gmra.mxu0 %v5549
      %v5688 = vpop.f32.mrf.mxu0
      %v5689 = vadd.f32 0.0, %v5688
      %v5690 = vpop.f32.mrf.mxu0
      %v5691 = vadd.f32 0.0, %v5690
      %5692 = vmatmul.bf16.gmra.mxu0 %v5552
      %v5693 = vpop.f32.mrf.mxu0
      %v5694 = vadd.f32 0.0, %v5693
      %v5695 = vpop.f32.mrf.mxu0
      %v5696 = vadd.f32 0.0, %v5695
      %5697 = vmatmul.bf16.gmra.mxu0 %v5555
      %v5698 = vpop.f32.mrf.mxu0
      %v5699 = vadd.f32 0.0, %v5698
      %v5700 = vpop.f32.mrf.mxu0
      %v5701 = vadd.f32 0.0, %v5700
      %5702 = vmatmul.bf16.gmra.mxu0 %v5558
      %v5703 = vpop.f32.mrf.mxu0
      %v5704 = vadd.f32 0.0, %v5703
      %v5705 = vpop.f32.mrf.mxu0
      %v5706 = vadd.f32 0.0, %v5705
      %5707 = vmatmul.bf16.gmra.mxu0 %v5561
      %v5708 = vpop.f32.mrf.mxu0
      %v5709 = vadd.f32 0.0, %v5708
      %v5710 = vpop.f32.mrf.mxu0
      %v5711 = vadd.f32 0.0, %v5710
      %5712 = vmatmul.bf16.gmra.mxu0 %v5564
      %v5713 = vpop.f32.mrf.mxu0
      %v5714 = vadd.f32 0.0, %v5713
      %v5715 = vpop.f32.mrf.mxu0
      %v5716 = vadd.f32 0.0, %v5715
      %5717 = vmatmul.bf16.gmra.mxu0 %v5567
      %v5718 = vpop.f32.mrf.mxu0
      %v5719 = vadd.f32 0.0, %v5718
      %v5720 = vpop.f32.mrf.mxu0
      %v5721 = vadd.f32 0.0, %v5720
      %5722 = vmatmul.bf16.gmra.mxu0 %v5570
      %v5723 = vpop.f32.mrf.mxu0
      %v5724 = vadd.f32 0.0, %v5723
      %v5725 = vpop.f32.mrf.mxu0
      %v5726 = vadd.f32 0.0, %v5725
      %5727 = vmatmul.bf16.gmra.mxu0 %v5573
      %v5728 = vpop.f32.mrf.mxu0
      %v5729 = vadd.f32 0.0, %v5728
      %v5730 = vpop.f32.mrf.mxu0
      %v5731 = vadd.f32 0.0, %v5730
      %5732 = vmatmul.bf16.gmra.mxu0 %v5576
      %v5733 = vpop.f32.mrf.mxu0
      %v5734 = vadd.f32 0.0, %v5733
      %v5735 = vpop.f32.mrf.mxu0
      %v5736 = vadd.f32 0.0, %v5735
      %5737 = vmatmul.bf16.gmra.mxu0 %v5579
      %v5738 = vpop.f32.mrf.mxu0
      %v5739 = vadd.f32 0.0, %v5738
      %v5740 = vpop.f32.mrf.mxu0
      %v5741 = vadd.f32 0.0, %v5740
      %5742 = vmatmul.bf16.gmra.mxu0 %v5582
      %v5743 = vpop.f32.mrf.mxu0
      %v5744 = vadd.f32 0.0, %v5743
      %v5745 = vpop.f32.mrf.mxu0
      %v5746 = vadd.f32 0.0, %v5745
      %5747 = vmatmul.bf16.gmra.mxu0 %v5585
      %v5748 = vpop.f32.mrf.mxu0
      %v5749 = vadd.f32 0.0, %v5748
      %v5750 = vpop.f32.mrf.mxu0
      %v5751 = vadd.f32 0.0, %v5750
      %5752 = vmatmul.bf16.gmra.mxu0 %v5588
      %v5753 = vpop.f32.mrf.mxu0
      %v5754 = vadd.f32 0.0, %v5753
      %v5755 = vpop.f32.mrf.mxu0
      %v5756 = vadd.f32 0.0, %v5755
      %5757 = vmatmul.bf16.gmra.mxu0 %v5591
      %v5758 = vpop.f32.mrf.mxu0
      %v5759 = vadd.f32 0.0, %v5758
      %v5760 = vpop.f32.mrf.mxu0
      %v5761 = vadd.f32 0.0, %v5760
      %5762 = vmatmul.bf16.gmra.mxu0 %v5594
      %v5763 = vpop.f32.mrf.mxu0
      %v5764 = vadd.f32 0.0, %v5763
      %v5765 = vpop.f32.mrf.mxu0
      %v5766 = vadd.f32 0.0, %v5765
      %5767 = vmatmul.bf16.gmra.mxu0 %v5597
      %v5768 = vpop.f32.mrf.mxu0
      %v5769 = vadd.f32 0.0, %v5768
      %v5770 = vpop.f32.mrf.mxu0
      %v5771 = vadd.f32 0.0, %v5770
      %5772 = vmatmul.bf16.gmra.mxu0 %v5600
      %v5773 = vpop.f32.mrf.mxu0
      %v5774 = vadd.f32 0.0, %v5773
      %v5775 = vpop.f32.mrf.mxu0
      %v5776 = vadd.f32 0.0, %v5775
      %5777 = vmatmul.bf16.gmra.mxu0 %v5603
      %v5778 = vpop.f32.mrf.mxu0
      %v5779 = vadd.f32 0.0, %v5778
      %v5780 = vpop.f32.mrf.mxu0
      %v5781 = vadd.f32 0.0, %v5780
      %5782 = vmatmul.bf16.gmra.mxu0 %v5606
      %v5783 = vpop.f32.mrf.mxu0
      %v5784 = vadd.f32 0.0, %v5783
      %v5785 = vpop.f32.mrf.mxu0
      %v5786 = vadd.f32 0.0, %v5785
      %5787 = vmatmul.bf16.gmra.mxu0 %v5609
      %v5788 = vpop.f32.mrf.mxu0
      %v5789 = vadd.f32 0.0, %v5788
      %v5790 = vpop.f32.mrf.mxu0
      %v5791 = vadd.f32 0.0, %v5790
      %5792 = vmatmul.bf16.gmra.mxu0 %v5612
      %v5793 = vpop.f32.mrf.mxu0
      %v5794 = vadd.f32 0.0, %v5793
      %v5795 = vpop.f32.mrf.mxu0
      %v5796 = vadd.f32 0.0, %v5795
      %5797 = vmatmul.bf16.gmra.mxu0 %v5615
      %v5798 = vpop.f32.mrf.mxu0
      %v5799 = vadd.f32 0.0, %v5798
      %v5800 = vpop.f32.mrf.mxu0
      %v5801 = vadd.f32 0.0, %v5800
      %5802 = vmatmul.bf16.gmra.mxu0 %v5618
      %v5803 = vpop.f32.mrf.mxu0
      %v5804 = vadd.f32 0.0, %v5803
      %v5805 = vpop.f32.mrf.mxu0
      %v5806 = vadd.f32 0.0, %v5805
      %5807 = vmatmul.bf16.gmra.mxu0 %v5621
      %v5808 = vpop.f32.mrf.mxu0
      %v5809 = vadd.f32 0.0, %v5808
      %v5810 = vpop.f32.mrf.mxu0
      %v5811 = vadd.f32 0.0, %v5810
      %5812 = vmatmul.bf16.gmra.mxu0 %v5624
      %v5813 = vpop.f32.mrf.mxu0
      %v5814 = vadd.f32 0.0, %v5813
      %v5815 = vpop.f32.mrf.mxu0
      %v5816 = vadd.f32 0.0, %v5815
      %5817 = vmatmul.bf16.gmra.mxu0 %v5627
      %v5818 = vpop.f32.mrf.mxu0
      %v5819 = vadd.f32 0.0, %v5818
      %v5820 = vpop.f32.mrf.mxu0
      %v5821 = vadd.f32 0.0, %v5820
      %5822 = vmatmul.bf16.gmra.mxu0 %v5630
      %v5823 = vpop.f32.mrf.mxu0
      %v5824 = vadd.f32 0.0, %v5823
      %v5825 = vpop.f32.mrf.mxu0
      %v5826 = vadd.f32 0.0, %v5825
      %5827 = vmatmul.bf16.gmra.mxu0 %v5633
      %v5828 = vpop.f32.mrf.mxu0
      %v5829 = vadd.f32 0.0, %v5828
      %v5830 = vpop.f32.mrf.mxu0
      %v5831 = vadd.f32 0.0, %v5830
      %5832 = vmatmul.bf16.gmra.mxu0 %v5636
      %v5833 = vpop.f32.mrf.mxu0
      %v5834 = vadd.f32 0.0, %v5833
      %v5835 = vpop.f32.mrf.mxu0
      %v5836 = vadd.f32 0.0, %v5835
      %5837 = vmatmul.bf16.gmra.mxu0 %v5639
      %v5838 = vpop.f32.mrf.mxu0
      %v5839 = vadd.f32 0.0, %v5838
      %v5840 = vpop.f32.mrf.mxu0
      %v5841 = vadd.f32 0.0, %v5840
      %5842 = vmatmul.bf16.gmra.mxu0 %v5642
      %v5843 = vpop.f32.mrf.mxu0
      %v5844 = vadd.f32 0.0, %v5843
      %v5845 = vpop.f32.mrf.mxu0
      %v5846 = vadd.f32 0.0, %v5845
      %5847 = vdwg.mxu0
      %v5848 = vadd.f32 %v5068, %v5654
      %v5849 = vadd.f32 %v5069, %v5656
      %v5850 = vadd.f32 %v5070, %v5659
      %v5851 = vadd.f32 %v5071, %v5661
      %v5852 = vadd.f32 %v5072, %v5664
      %v5853 = vadd.f32 %v5073, %v5666
      %v5854 = vadd.f32 %v5074, %v5669
      %v5855 = vadd.f32 %v5075, %v5671
      %v5856 = vadd.f32 %v5076, %v5674
      %v5857 = vadd.f32 %v5077, %v5676
      %v5858 = vadd.f32 %v5078, %v5679
      %v5859 = vadd.f32 %v5079, %v5681
      %v5860 = vadd.f32 %v5080, %v5684
      %v5861 = vadd.f32 %v5081, %v5686
      %v5862 = vadd.f32 %v5082, %v5689
      %v5863 = vadd.f32 %v5083, %v5691
      %v5864 = vadd.f32 %v5084, %v5694
      %v5865 = vadd.f32 %v5085, %v5696
      %v5866 = vadd.f32 %v5086, %v5699
      %v5867 = vadd.f32 %v5087, %v5701
      %v5868 = vadd.f32 %v5088, %v5704
      %v5869 = vadd.f32 %v5089, %v5706
      %v5870 = vadd.f32 %v5090, %v5709
      %v5871 = vadd.f32 %v5091, %v5711
      %v5872 = vadd.f32 %v5092, %v5714
      %v5873 = vadd.f32 %v5093, %v5716
      %v5874 = vadd.f32 %v5094, %v5719
      %v5875 = vadd.f32 %v5095, %v5721
      %v5876 = vadd.f32 %v5096, %v5724
      %v5877 = vadd.f32 %v5097, %v5726
      %v5878 = vadd.f32 %v5098, %v5729
      %v5879 = vadd.f32 %v5099, %v5731
      %v5880 = vadd.f32 %v5100, %v5734
      %v5881 = vadd.f32 %v5101, %v5736
      %v5882 = vadd.f32 %v5102, %v5739
      %v5883 = vadd.f32 %v5103, %v5741
      %v5884 = vadd.f32 %v5104, %v5744
      %v5885 = vadd.f32 %v5105, %v5746
      %v5886 = vadd.f32 %v5106, %v5749
      %v5887 = vadd.f32 %v5107, %v5751
      %v5888 = vadd.f32 %v5108, %v5754
      %v5889 = vadd.f32 %v5109, %v5756
      %v5890 = vadd.f32 %v5110, %v5759
      %v5891 = vadd.f32 %v5111, %v5761
      %v5892 = vadd.f32 %v5112, %v5764
      %v5893 = vadd.f32 %v5113, %v5766
      %v5894 = vadd.f32 %v5114, %v5769
      %v5895 = vadd.f32 %v5115, %v5771
      %v5896 = vadd.f32 %v5116, %v5774
      %v5897 = vadd.f32 %v5117, %v5776
      %v5898 = vadd.f32 %v5118, %v5779
      %v5899 = vadd.f32 %v5119, %v5781
      %v5900 = vadd.f32 %v5120, %v5784
      %v5901 = vadd.f32 %v5121, %v5786
      %v5902 = vadd.f32 %v5122, %v5789
      %v5903 = vadd.f32 %v5123, %v5791
      %v5904 = vadd.f32 %v5124, %v5794
      %v5905 = vadd.f32 %v5125, %v5796
      %v5906 = vadd.f32 %v5126, %v5799
      %v5907 = vadd.f32 %v5127, %v5801
      %v5908 = vadd.f32 %v5128, %v5804
      %v5909 = vadd.f32 %v5129, %v5806
      %v5910 = vadd.f32 %v5130, %v5809
      %v5911 = vadd.f32 %v5131, %v5811
      %v5912 = vadd.f32 %v5132, %v5814
      %v5913 = vadd.f32 %v5133, %v5816
      %v5914 = vadd.f32 %v5134, %v5819
      %v5915 = vadd.f32 %v5135, %v5821
      %v5916 = vadd.f32 %v5136, %v5824
      %v5917 = vadd.f32 %v5137, %v5826
      %v5918 = vadd.f32 %v5138, %v5829
      %v5919 = vadd.f32 %v5139, %v5831
      %v5920 = vadd.f32 %v5140, %v5834
      %v5921 = vadd.f32 %v5141, %v5836
      %v5922 = vadd.f32 %v5142, %v5839
      %v5923 = vadd.f32 %v5143, %v5841
      %v5924 = vadd.f32 %v5144, %v5844
      %v5925 = vadd.f32 %v5145, %v5846
      %v5926 = vld [vmem:[%s327 + $0x18] sm:$0x8]
      %s5927 = scalar_lea.vmem %s1, 128
      %v5928 = vld [vmem:[%s5927] sm:$0xf]
      %v5929 = vld [vmem:[%s5927 + $0x4] sm:$0xf]
      %v5930 = vld [vmem:[%s5927 + $0x8] sm:$0xf]
      %v5931 = vld [vmem:[%s5927 + $0xc] sm:$0xf]
      %v5933 = vunpack.c.l.b16 %v5926
      %v5934 = vpack.c.b16 %v4538, %v5933
      %vm5935 = vcmask 1044480
      %v5936 = vrot.slane %v5934, 3
      %v5937 = vrot.slane %v4617, 3
      %v5938 = vsel %vm5935, %v5936, %v5937
      %v5939 = vrot.slane %v4618, 3
      %v5940 = vsel %vm5935, %v5937, %v5939
      %v5941 = vrot.slane %v4619, 3
      %v5942 = vsel %vm5935, %v5939, %v5941
      %v5943 = vrot.slane %v4620, 3
      %v5944 = vsel %vm5935, %v5941, %v5943
      %v5945 = vrot.slane %v4621, 3
      %v5946 = vsel %vm5935, %v5943, %v5945
      %v5947 = vrot.slane %v4622, 3
      %v5948 = vsel %vm5935, %v5945, %v5947
      %v5949 = vrot.slane %v4623, 3
      %v5950 = vsel %vm5935, %v5947, %v5949
      %v5951 = vrot.slane %v4624, 3
      %v5952 = vsel %vm5935, %v5949, %v5951
      %v5953 = vrot.slane %v4625, 3
      %v5954 = vsel %vm5935, %v5951, %v5953
      %v5955 = vrot.slane %v4626, 3
      %v5956 = vsel %vm5935, %v5953, %v5955
      %v5957 = vrot.slane %v4627, 3
      %v5958 = vsel %vm5935, %v5955, %v5957
      %v5959 = vrot.slane %v4628, 3
      %v5960 = vsel %vm5935, %v5957, %v5959
      %v5961 = vrot.slane %v4629, 3
      %v5962 = vsel %vm5935, %v5959, %v5961
      %v5963 = vrot.slane %v4630, 3
      %v5964 = vsel %vm5935, %v5961, %v5963
      %v5965 = vrot.slane %v4631, 3
      %v5966 = vsel %vm5935, %v5963, %v5965
      %v5967 = vrot.slane %v4632, 3
      %v5968 = vsel %vm5935, %v5965, %v5967
      %v5969 = vrot.slane %v4633, 3
      %v5970 = vsel %vm5935, %v5967, %v5969
      %v5971 = vrot.slane %v4634, 3
      %v5972 = vsel %vm5935, %v5969, %v5971
      %v5973 = vrot.slane %v4635, 3
      %v5974 = vsel %vm5935, %v5971, %v5973
      %v5975 = vrot.slane %v4636, 3
      %v5976 = vsel %vm5935, %v5973, %v5975
      %v5977 = vrot.slane %v4637, 3
      %v5978 = vsel %vm5935, %v5975, %v5977
      %v5979 = vrot.slane %v4638, 3
      %v5980 = vsel %vm5935, %v5977, %v5979
      %v5981 = vrot.slane %v4639, 3
      %v5982 = vsel %vm5935, %v5979, %v5981
      %v5983 = vrot.slane %v4640, 3
      %v5984 = vsel %vm5935, %v5981, %v5983
      %v5985 = vrot.slane %v4641, 3
      %v5986 = vsel %vm5935, %v5983, %v5985
      %v5987 = vrot.slane %v4642, 3
      %v5988 = vsel %vm5935, %v5985, %v5987
      %v5989 = vrot.slane %v4643, 3
      %v5990 = vsel %vm5935, %v5987, %v5989
      %v5991 = vrot.slane %v4644, 3
      %v5992 = vsel %vm5935, %v5989, %v5991
      %v5993 = vrot.slane %v4645, 3
      %v5994 = vsel %vm5935, %v5991, %v5993
      %v5995 = vrot.slane %v4646, 3
      %v5996 = vsel %vm5935, %v5993, %v5995
      %v5997 = vrot.slane %v4647, 3
      %v5998 = vsel %vm5935, %v5995, %v5997
      %v5999 = vrot.slane %v4648, 3
      %v6000 = vsel %vm5935, %v5997, %v5999
      %v6001 = vrot.slane %v4649, 3
      %v6002 = vsel %vm5935, %v5999, %v6001
      %v6003 = vrot.slane %v4650, 3
      %v6004 = vsel %vm5935, %v6001, %v6003
      %v6005 = vrot.slane %v4651, 3
      %v6006 = vsel %vm5935, %v6003, %v6005
      %v6007 = vrot.slane %v4652, 3
      %v6008 = vsel %vm5935, %v6005, %v6007
      %v6009 = vrot.slane %v4653, 3
      %v6010 = vsel %vm5935, %v6007, %v6009
      %v6011 = vrot.slane %v4654, 3
      %v6012 = vsel %vm5935, %v6009, %v6011
      %v6013 = vrot.slane %v5154, 3
      %v6014 = vsel %vm5935, %v6011, %v6013
      %v6019 = vunpack.c.l.b16 %v5928
      %v6020 = vunpack.c.l.b16 %v5929
      %v6021 = vunpack.c.l.b16 %v5930
      %v6022 = vunpack.c.l.b16 %v5931
      %v6023 = vpack.c.b16 %v6020, %v6019
      %v6024 = vpack.c.b16 %v6022, %v6021
      %v6028 = vsel %vm941, %v5938, 0
      %v6031 = vsel %vm941, %v5940, 0
      %v6034 = vsel %vm941, %v5942, 0
      %v6037 = vsel %vm941, %v5944, 0
      %v6040 = vsel %vm941, %v5946, 0
      %v6043 = vsel %vm941, %v5948, 0
      %v6046 = vsel %vm941, %v5950, 0
      %v6049 = vsel %vm941, %v5952, 0
      %v6052 = vsel %vm941, %v5954, 0
      %v6055 = vsel %vm941, %v5956, 0
      %v6058 = vsel %vm941, %v5958, 0
      %v6061 = vsel %vm941, %v5960, 0
      %v6064 = vsel %vm941, %v5962, 0
      %v6067 = vsel %vm941, %v5964, 0
      %v6070 = vsel %vm941, %v5966, 0
      %v6073 = vsel %vm941, %v5968, 0
      %v6076 = vsel %vm941, %v5970, 0
      %v6079 = vsel %vm941, %v5972, 0
      %v6082 = vsel %vm941, %v5974, 0
      %v6085 = vsel %vm941, %v5976, 0
      %v6088 = vsel %vm941, %v5978, 0
      %v6091 = vsel %vm941, %v5980, 0
      %v6094 = vsel %vm941, %v5982, 0
      %v6097 = vsel %vm941, %v5984, 0
      %v6100 = vsel %vm941, %v5986, 0
      %v6103 = vsel %vm941, %v5988, 0
      %v6106 = vsel %vm941, %v5990, 0
      %v6109 = vsel %vm941, %v5992, 0
      %v6112 = vsel %vm941, %v5994, 0
      %v6115 = vsel %vm941, %v5996, 0
      %v6118 = vsel %vm941, %v5998, 0
      %v6121 = vsel %vm941, %v6000, 0
      %v6124 = vsel %vm941, %v6002, 0
      %v6127 = vsel %vm941, %v6004, 0
      %v6130 = vsel %vm941, %v6006, 0
      %v6133 = vsel %vm941, %v6008, 0
      %v6136 = vsel %vm941, %v6010, 0
      %v6139 = vsel %vm941, %v6012, 0
      %v6142 = vsel %vm941, %v6014, 0
      %6144 = vmatpush.bf16.msra.mxu0 0
      %6145 = vmatpush.bf16.msra.mxu0 0
      %6146 = vmatpush.bf16.msra.mxu0 0
      %6147 = vmatpush.bf16.msra.mxu0 0
      %6148 = vmatpush.bf16.msra.mxu0 0
      %6149 = vmatpush.bf16.msra.mxu0 0
      %6150 = vmatpush.bf16.msra.mxu0 %v6024
      %6151 = vmatpush.bf16.msra.mxu0 %v6023
      %6152 = vmatmul.bf16.gmra.mxu0 %v6028
      %v6153 = vpop.f32.mrf.mxu0
      %v6154 = vadd.f32 0.0, %v6153
      %v6155 = vpop.f32.mrf.mxu0
      %v6156 = vadd.f32 0.0, %v6155
      %6157 = vmatmul.bf16.gmra.mxu0 %v6031
      %v6158 = vpop.f32.mrf.mxu0
      %v6159 = vadd.f32 0.0, %v6158
      %v6160 = vpop.f32.mrf.mxu0
      %v6161 = vadd.f32 0.0, %v6160
      %6162 = vmatmul.bf16.gmra.mxu0 %v6034
      %v6163 = vpop.f32.mrf.mxu0
      %v6164 = vadd.f32 0.0, %v6163
      %v6165 = vpop.f32.mrf.mxu0
      %v6166 = vadd.f32 0.0, %v6165
      %6167 = vmatmul.bf16.gmra.mxu0 %v6037
      %v6168 = vpop.f32.mrf.mxu0
      %v6169 = vadd.f32 0.0, %v6168
      %v6170 = vpop.f32.mrf.mxu0
      %v6171 = vadd.f32 0.0, %v6170
      %6172 = vmatmul.bf16.gmra.mxu0 %v6040
      %v6173 = vpop.f32.mrf.mxu0
      %v6174 = vadd.f32 0.0, %v6173
      %v6175 = vpop.f32.mrf.mxu0
      %v6176 = vadd.f32 0.0, %v6175
      %6177 = vmatmul.bf16.gmra.mxu0 %v6043
      %v6178 = vpop.f32.mrf.mxu0
      %v6179 = vadd.f32 0.0, %v6178
      %v6180 = vpop.f32.mrf.mxu0
      %v6181 = vadd.f32 0.0, %v6180
      %6182 = vmatmul.bf16.gmra.mxu0 %v6046
      %v6183 = vpop.f32.mrf.mxu0
      %v6184 = vadd.f32 0.0, %v6183
      %v6185 = vpop.f32.mrf.mxu0
      %v6186 = vadd.f32 0.0, %v6185
      %6187 = vmatmul.bf16.gmra.mxu0 %v6049
      %v6188 = vpop.f32.mrf.mxu0
      %v6189 = vadd.f32 0.0, %v6188
      %v6190 = vpop.f32.mrf.mxu0
      %v6191 = vadd.f32 0.0, %v6190
      %6192 = vmatmul.bf16.gmra.mxu0 %v6052
      %v6193 = vpop.f32.mrf.mxu0
      %v6194 = vadd.f32 0.0, %v6193
      %v6195 = vpop.f32.mrf.mxu0
      %v6196 = vadd.f32 0.0, %v6195
      %6197 = vmatmul.bf16.gmra.mxu0 %v6055
      %v6198 = vpop.f32.mrf.mxu0
      %v6199 = vadd.f32 0.0, %v6198
      %v6200 = vpop.f32.mrf.mxu0
      %v6201 = vadd.f32 0.0, %v6200
      %6202 = vmatmul.bf16.gmra.mxu0 %v6058
      %v6203 = vpop.f32.mrf.mxu0
      %v6204 = vadd.f32 0.0, %v6203
      %v6205 = vpop.f32.mrf.mxu0
      %v6206 = vadd.f32 0.0, %v6205
      %6207 = vmatmul.bf16.gmra.mxu0 %v6061
      %v6208 = vpop.f32.mrf.mxu0
      %v6209 = vadd.f32 0.0, %v6208
      %v6210 = vpop.f32.mrf.mxu0
      %v6211 = vadd.f32 0.0, %v6210
      %6212 = vmatmul.bf16.gmra.mxu0 %v6064
      %v6213 = vpop.f32.mrf.mxu0
      %v6214 = vadd.f32 0.0, %v6213
      %v6215 = vpop.f32.mrf.mxu0
      %v6216 = vadd.f32 0.0, %v6215
      %6217 = vmatmul.bf16.gmra.mxu0 %v6067
      %v6218 = vpop.f32.mrf.mxu0
      %v6219 = vadd.f32 0.0, %v6218
      %v6220 = vpop.f32.mrf.mxu0
      %v6221 = vadd.f32 0.0, %v6220
      %6222 = vmatmul.bf16.gmra.mxu0 %v6070
      %v6223 = vpop.f32.mrf.mxu0
      %v6224 = vadd.f32 0.0, %v6223
      %v6225 = vpop.f32.mrf.mxu0
      %v6226 = vadd.f32 0.0, %v6225
      %6227 = vmatmul.bf16.gmra.mxu0 %v6073
      %v6228 = vpop.f32.mrf.mxu0
      %v6229 = vadd.f32 0.0, %v6228
      %v6230 = vpop.f32.mrf.mxu0
      %v6231 = vadd.f32 0.0, %v6230
      %6232 = vmatmul.bf16.gmra.mxu0 %v6076
      %v6233 = vpop.f32.mrf.mxu0
      %v6234 = vadd.f32 0.0, %v6233
      %v6235 = vpop.f32.mrf.mxu0
      %v6236 = vadd.f32 0.0, %v6235
      %6237 = vmatmul.bf16.gmra.mxu0 %v6079
      %v6238 = vpop.f32.mrf.mxu0
      %v6239 = vadd.f32 0.0, %v6238
      %v6240 = vpop.f32.mrf.mxu0
      %v6241 = vadd.f32 0.0, %v6240
      %6242 = vmatmul.bf16.gmra.mxu0 %v6082
      %v6243 = vpop.f32.mrf.mxu0
      %v6244 = vadd.f32 0.0, %v6243
      %v6245 = vpop.f32.mrf.mxu0
      %v6246 = vadd.f32 0.0, %v6245
      %6247 = vmatmul.bf16.gmra.mxu0 %v6085
      %v6248 = vpop.f32.mrf.mxu0
      %v6249 = vadd.f32 0.0, %v6248
      %v6250 = vpop.f32.mrf.mxu0
      %v6251 = vadd.f32 0.0, %v6250
      %6252 = vmatmul.bf16.gmra.mxu0 %v6088
      %v6253 = vpop.f32.mrf.mxu0
      %v6254 = vadd.f32 0.0, %v6253
      %v6255 = vpop.f32.mrf.mxu0
      %v6256 = vadd.f32 0.0, %v6255
      %6257 = vmatmul.bf16.gmra.mxu0 %v6091
      %v6258 = vpop.f32.mrf.mxu0
      %v6259 = vadd.f32 0.0, %v6258
      %v6260 = vpop.f32.mrf.mxu0
      %v6261 = vadd.f32 0.0, %v6260
      %6262 = vmatmul.bf16.gmra.mxu0 %v6094
      %v6263 = vpop.f32.mrf.mxu0
      %v6264 = vadd.f32 0.0, %v6263
      %v6265 = vpop.f32.mrf.mxu0
      %v6266 = vadd.f32 0.0, %v6265
      %6267 = vmatmul.bf16.gmra.mxu0 %v6097
      %v6268 = vpop.f32.mrf.mxu0
      %v6269 = vadd.f32 0.0, %v6268
      %v6270 = vpop.f32.mrf.mxu0
      %v6271 = vadd.f32 0.0, %v6270
      %6272 = vmatmul.bf16.gmra.mxu0 %v6100
      %v6273 = vpop.f32.mrf.mxu0
      %v6274 = vadd.f32 0.0, %v6273
      %v6275 = vpop.f32.mrf.mxu0
      %v6276 = vadd.f32 0.0, %v6275
      %6277 = vmatmul.bf16.gmra.mxu0 %v6103
      %v6278 = vpop.f32.mrf.mxu0
      %v6279 = vadd.f32 0.0, %v6278
      %v6280 = vpop.f32.mrf.mxu0
      %v6281 = vadd.f32 0.0, %v6280
      %6282 = vmatmul.bf16.gmra.mxu0 %v6106
      %v6283 = vpop.f32.mrf.mxu0
      %v6284 = vadd.f32 0.0, %v6283
      %v6285 = vpop.f32.mrf.mxu0
      %v6286 = vadd.f32 0.0, %v6285
      %6287 = vmatmul.bf16.gmra.mxu0 %v6109
      %v6288 = vpop.f32.mrf.mxu0
      %v6289 = vadd.f32 0.0, %v6288
      %v6290 = vpop.f32.mrf.mxu0
      %v6291 = vadd.f32 0.0, %v6290
      %6292 = vmatmul.bf16.gmra.mxu0 %v6112
      %v6293 = vpop.f32.mrf.mxu0
      %v6294 = vadd.f32 0.0, %v6293
      %v6295 = vpop.f32.mrf.mxu0
      %v6296 = vadd.f32 0.0, %v6295
      %6297 = vmatmul.bf16.gmra.mxu0 %v6115
      %v6298 = vpop.f32.mrf.mxu0
      %v6299 = vadd.f32 0.0, %v6298
      %v6300 = vpop.f32.mrf.mxu0
      %v6301 = vadd.f32 0.0, %v6300
      %6302 = vmatmul.bf16.gmra.mxu0 %v6118
      %v6303 = vpop.f32.mrf.mxu0
      %v6304 = vadd.f32 0.0, %v6303
      %v6305 = vpop.f32.mrf.mxu0
      %v6306 = vadd.f32 0.0, %v6305
      %6307 = vmatmul.bf16.gmra.mxu0 %v6121
      %v6308 = vpop.f32.mrf.mxu0
      %v6309 = vadd.f32 0.0, %v6308
      %v6310 = vpop.f32.mrf.mxu0
      %v6311 = vadd.f32 0.0, %v6310
      %6312 = vmatmul.bf16.gmra.mxu0 %v6124
      %v6313 = vpop.f32.mrf.mxu0
      %v6314 = vadd.f32 0.0, %v6313
      %v6315 = vpop.f32.mrf.mxu0
      %v6316 = vadd.f32 0.0, %v6315
      %6317 = vmatmul.bf16.gmra.mxu0 %v6127
      %v6318 = vpop.f32.mrf.mxu0
      %v6319 = vadd.f32 0.0, %v6318
      %v6320 = vpop.f32.mrf.mxu0
      %v6321 = vadd.f32 0.0, %v6320
      %6322 = vmatmul.bf16.gmra.mxu0 %v6130
      %v6323 = vpop.f32.mrf.mxu0
      %v6324 = vadd.f32 0.0, %v6323
      %v6325 = vpop.f32.mrf.mxu0
      %v6326 = vadd.f32 0.0, %v6325
      %6327 = vmatmul.bf16.gmra.mxu0 %v6133
      %v6328 = vpop.f32.mrf.mxu0
      %v6329 = vadd.f32 0.0, %v6328
      %v6330 = vpop.f32.mrf.mxu0
      %v6331 = vadd.f32 0.0, %v6330
      %6332 = vmatmul.bf16.gmra.mxu0 %v6136
      %v6333 = vpop.f32.mrf.mxu0
      %v6334 = vadd.f32 0.0, %v6333
      %v6335 = vpop.f32.mrf.mxu0
      %v6336 = vadd.f32 0.0, %v6335
      %6337 = vmatmul.bf16.gmra.mxu0 %v6139
      %v6338 = vpop.f32.mrf.mxu0
      %v6339 = vadd.f32 0.0, %v6338
      %v6340 = vpop.f32.mrf.mxu0
      %v6341 = vadd.f32 0.0, %v6340
      %6342 = vmatmul.bf16.gmra.mxu0 %v6142
      %v6343 = vpop.f32.mrf.mxu0
      %v6344 = vadd.f32 0.0, %v6343
      %v6345 = vpop.f32.mrf.mxu0
      %v6346 = vadd.f32 0.0, %v6345
      %6347 = vdwg.mxu0
      %v6348 = vadd.f32 %v5848, %v6154
      %v6349 = vadd.f32 %v5849, %v6156
      %v6350 = vadd.f32 %v5850, %v6159
      %v6351 = vadd.f32 %v5851, %v6161
      %v6352 = vadd.f32 %v5852, %v6164
      %v6353 = vadd.f32 %v5853, %v6166
      %v6354 = vadd.f32 %v5854, %v6169
      %v6355 = vadd.f32 %v5855, %v6171
      %v6356 = vadd.f32 %v5856, %v6174
      %v6357 = vadd.f32 %v5857, %v6176
      %v6358 = vadd.f32 %v5858, %v6179
      %v6359 = vadd.f32 %v5859, %v6181
      %v6360 = vadd.f32 %v5860, %v6184
      %v6361 = vadd.f32 %v5861, %v6186
      %v6362 = vadd.f32 %v5862, %v6189
      %v6363 = vadd.f32 %v5863, %v6191
      %v6364 = vadd.f32 %v5864, %v6194
      %v6365 = vadd.f32 %v5865, %v6196
      %v6366 = vadd.f32 %v5866, %v6199
      %v6367 = vadd.f32 %v5867, %v6201
      %v6368 = vadd.f32 %v5868, %v6204
      %v6369 = vadd.f32 %v5869, %v6206
      %v6370 = vadd.f32 %v5870, %v6209
      %v6371 = vadd.f32 %v5871, %v6211
      %v6372 = vadd.f32 %v5872, %v6214
      %v6373 = vadd.f32 %v5873, %v6216
      %v6374 = vadd.f32 %v5874, %v6219
      %v6375 = vadd.f32 %v5875, %v6221
      %v6376 = vadd.f32 %v5876, %v6224
      %v6377 = vadd.f32 %v5877, %v6226
      %v6378 = vadd.f32 %v5878, %v6229
      %v6379 = vadd.f32 %v5879, %v6231
      %v6380 = vadd.f32 %v5880, %v6234
      %v6381 = vadd.f32 %v5881, %v6236
      %v6382 = vadd.f32 %v5882, %v6239
      %v6383 = vadd.f32 %v5883, %v6241
      %v6384 = vadd.f32 %v5884, %v6244
      %v6385 = vadd.f32 %v5885, %v6246
      %v6386 = vadd.f32 %v5886, %v6249
      %v6387 = vadd.f32 %v5887, %v6251
      %v6388 = vadd.f32 %v5888, %v6254
      %v6389 = vadd.f32 %v5889, %v6256
      %v6390 = vadd.f32 %v5890, %v6259
      %v6391 = vadd.f32 %v5891, %v6261
      %v6392 = vadd.f32 %v5892, %v6264
      %v6393 = vadd.f32 %v5893, %v6266
      %v6394 = vadd.f32 %v5894, %v6269
      %v6395 = vadd.f32 %v5895, %v6271
      %v6396 = vadd.f32 %v5896, %v6274
      %v6397 = vadd.f32 %v5897, %v6276
      %v6398 = vadd.f32 %v5898, %v6279
      %v6399 = vadd.f32 %v5899, %v6281
      %v6400 = vadd.f32 %v5900, %v6284
      %v6401 = vadd.f32 %v5901, %v6286
      %v6402 = vadd.f32 %v5902, %v6289
      %v6403 = vadd.f32 %v5903, %v6291
      %v6404 = vadd.f32 %v5904, %v6294
      %v6405 = vadd.f32 %v5905, %v6296
      %v6406 = vadd.f32 %v5906, %v6299
      %v6407 = vadd.f32 %v5907, %v6301
      %v6408 = vadd.f32 %v5908, %v6304
      %v6409 = vadd.f32 %v5909, %v6306
      %v6410 = vadd.f32 %v5910, %v6309
      %v6411 = vadd.f32 %v5911, %v6311
      %v6412 = vadd.f32 %v5912, %v6314
      %v6413 = vadd.f32 %v5913, %v6316
      %v6414 = vadd.f32 %v5914, %v6319
      %v6415 = vadd.f32 %v5915, %v6321
      %v6416 = vadd.f32 %v5916, %v6324
      %v6417 = vadd.f32 %v5917, %v6326
      %v6418 = vadd.f32 %v5918, %v6329
      %v6419 = vadd.f32 %v5919, %v6331
      %v6420 = vadd.f32 %v5920, %v6334
      %v6421 = vadd.f32 %v5921, %v6336
      %v6422 = vadd.f32 %v5922, %v6339
      %v6423 = vadd.f32 %v5923, %v6341
      %v6424 = vadd.f32 %v5924, %v6344
      %v6425 = vadd.f32 %v5925, %v6346
      %v6426 = vld [vmem:[%s2] sm:$0x1]
      %v6428 = vperm.slane %v6426, 0
      %v6430 = vadd.f32 %v6348, %v6428
      %v6431 = vadd.f32 %v6349, %v6428
      %v6432 = vadd.f32 %v6350, %v6428
      %v6433 = vadd.f32 %v6351, %v6428
      %v6434 = vadd.f32 %v6352, %v6428
      %v6435 = vadd.f32 %v6353, %v6428
      %v6436 = vadd.f32 %v6354, %v6428
      %v6437 = vadd.f32 %v6355, %v6428
      %v6438 = vadd.f32 %v6356, %v6428
      %v6439 = vadd.f32 %v6357, %v6428
      %v6440 = vadd.f32 %v6358, %v6428
      %v6441 = vadd.f32 %v6359, %v6428
      %v6442 = vadd.f32 %v6360, %v6428
      %v6443 = vadd.f32 %v6361, %v6428
      %v6444 = vadd.f32 %v6362, %v6428
      %v6445 = vadd.f32 %v6363, %v6428
      %v6446 = vadd.f32 %v6364, %v6428
      %v6447 = vadd.f32 %v6365, %v6428
      %v6448 = vadd.f32 %v6366, %v6428
      %v6449 = vadd.f32 %v6367, %v6428
      %v6450 = vadd.f32 %v6368, %v6428
      %v6451 = vadd.f32 %v6369, %v6428
      %v6452 = vadd.f32 %v6370, %v6428
      %v6453 = vadd.f32 %v6371, %v6428
      %v6454 = vadd.f32 %v6372, %v6428
      %v6455 = vadd.f32 %v6373, %v6428
      %v6456 = vadd.f32 %v6374, %v6428
      %v6457 = vadd.f32 %v6375, %v6428
      %v6458 = vadd.f32 %v6376, %v6428
      %v6459 = vadd.f32 %v6377, %v6428
      %v6460 = vadd.f32 %v6378, %v6428
      %v6461 = vadd.f32 %v6379, %v6428
      %v6462 = vadd.f32 %v6380, %v6428
      %v6463 = vadd.f32 %v6381, %v6428
      %v6464 = vadd.f32 %v6382, %v6428
      %v6465 = vadd.f32 %v6383, %v6428
      %v6466 = vadd.f32 %v6384, %v6428
      %v6467 = vadd.f32 %v6385, %v6428
      %v6468 = vadd.f32 %v6386, %v6428
      %v6469 = vadd.f32 %v6387, %v6428
      %v6470 = vadd.f32 %v6388, %v6428
      %v6471 = vadd.f32 %v6389, %v6428
      %v6472 = vadd.f32 %v6390, %v6428
      %v6473 = vadd.f32 %v6391, %v6428
      %v6474 = vadd.f32 %v6392, %v6428
      %v6475 = vadd.f32 %v6393, %v6428
      %v6476 = vadd.f32 %v6394, %v6428
      %v6477 = vadd.f32 %v6395, %v6428
      %v6478 = vadd.f32 %v6396, %v6428
      %v6479 = vadd.f32 %v6397, %v6428
      %v6480 = vadd.f32 %v6398, %v6428
      %v6481 = vadd.f32 %v6399, %v6428
      %v6482 = vadd.f32 %v6400, %v6428
      %v6483 = vadd.f32 %v6401, %v6428
      %v6484 = vadd.f32 %v6402, %v6428
      %v6485 = vadd.f32 %v6403, %v6428
      %v6486 = vadd.f32 %v6404, %v6428
      %v6487 = vadd.f32 %v6405, %v6428
      %v6488 = vadd.f32 %v6406, %v6428
      %v6489 = vadd.f32 %v6407, %v6428
      %v6490 = vadd.f32 %v6408, %v6428
      %v6491 = vadd.f32 %v6409, %v6428
      %v6492 = vadd.f32 %v6410, %v6428
      %v6493 = vadd.f32 %v6411, %v6428
      %v6494 = vadd.f32 %v6412, %v6428
      %v6495 = vadd.f32 %v6413, %v6428
      %v6496 = vadd.f32 %v6414, %v6428
      %v6497 = vadd.f32 %v6415, %v6428
      %v6498 = vadd.f32 %v6416, %v6428
      %v6499 = vadd.f32 %v6417, %v6428
      %v6500 = vadd.f32 %v6418, %v6428
      %v6501 = vadd.f32 %v6419, %v6428
      %v6502 = vadd.f32 %v6420, %v6428
      %v6503 = vadd.f32 %v6421, %v6428
      %v6504 = vadd.f32 %v6422, %v6428
      %v6505 = vadd.f32 %v6423, %v6428
      %v6506 = vadd.f32 %v6424, %v6428
      %v6507 = vadd.f32 %v6425, %v6428
      %6508 = vst.msk [vmem:[#allocation2] sm:$0xff] %vm941, %v6430
      %6509 = vst.msk [vmem:[#allocation2 + $0x8] sm:$0xff] %vm941, %v6431
      %6510 = vst.msk [vmem:[#allocation2 + $0x10] sm:$0xff] %vm941, %v6432
      %6511 = vst.msk [vmem:[#allocation2 + $0x18] sm:$0xff] %vm941, %v6433
      %6512 = vst.msk [vmem:[#allocation2 + $0x20] sm:$0xff] %vm941, %v6434
      %6513 = vst.msk [vmem:[#allocation2 + $0x28] sm:$0xff] %vm941, %v6435
      %6514 = vst.msk [vmem:[#allocation2 + $0x30] sm:$0xff] %vm941, %v6436
      %6515 = vst.msk [vmem:[#allocation2 + $0x38] sm:$0xff] %vm941, %v6437
      %6516 = vst.msk [vmem:[#allocation2 + $0x40] sm:$0xff] %vm941, %v6438
      %6517 = vst.msk [vmem:[#allocation2 + $0x48] sm:$0xff] %vm941, %v6439
      %6518 = vst.msk [vmem:[#allocation2 + $0x50] sm:$0xff] %vm941, %v6440
      %6519 = vst.msk [vmem:[#allocation2 + $0x58] sm:$0xff] %vm941, %v6441
      %6520 = vst.msk [vmem:[#allocation2 + $0x60] sm:$0xff] %vm941, %v6442
      %6521 = vst.msk [vmem:[#allocation2 + $0x68] sm:$0xff] %vm941, %v6443
      %6522 = vst.msk [vmem:[#allocation2 + $0x70] sm:$0xff] %vm941, %v6444
      %6523 = vst.msk [vmem:[#allocation2 + $0x78] sm:$0xff] %vm941, %v6445
      %6524 = vst.msk [vmem:[#allocation2 + $0x80] sm:$0xff] %vm941, %v6446
      %6525 = vst.msk [vmem:[#allocation2 + $0x88] sm:$0xff] %vm941, %v6447
      %6526 = vst.msk [vmem:[#allocation2 + $0x90] sm:$0xff] %vm941, %v6448
      %6527 = vst.msk [vmem:[#allocation2 + $0x98] sm:$0xff] %vm941, %v6449
      %6528 = vst.msk [vmem:[#allocation2 + $0xa0] sm:$0xff] %vm941, %v6450
      %6529 = vst.msk [vmem:[#allocation2 + $0xa8] sm:$0xff] %vm941, %v6451
      %6530 = vst.msk [vmem:[#allocation2 + $0xb0] sm:$0xff] %vm941, %v6452
      %6531 = vst.msk [vmem:[#allocation2 + $0xb8] sm:$0xff] %vm941, %v6453
      %6532 = vst.msk [vmem:[#allocation2 + $0xc0] sm:$0xff] %vm941, %v6454
      %6533 = vst.msk [vmem:[#allocation2 + $0xc8] sm:$0xff] %vm941, %v6455
      %6534 = vst.msk [vmem:[#allocation2 + $0xd0] sm:$0xff] %vm941, %v6456
      %6535 = vst.msk [vmem:[#allocation2 + $0xd8] sm:$0xff] %vm941, %v6457
      %6536 = vst.msk [vmem:[#allocation2 + $0xe0] sm:$0xff] %vm941, %v6458
      %6537 = vst.msk [vmem:[#allocation2 + $0xe8] sm:$0xff] %vm941, %v6459
      %6538 = vst.msk [vmem:[#allocation2 + $0xf0] sm:$0xff] %vm941, %v6460
      %6539 = vst.msk [vmem:[#allocation2 + $0xf8] sm:$0xff] %vm941, %v6461
      %6540 = vst.msk [vmem:[#allocation2 + $0x100] sm:$0xff] %vm941, %v6462
      %6541 = vst.msk [vmem:[#allocation2 + $0x108] sm:$0xff] %vm941, %v6463
      %6542 = vst.msk [vmem:[#allocation2 + $0x110] sm:$0xff] %vm941, %v6464
      %6543 = vst.msk [vmem:[#allocation2 + $0x118] sm:$0xff] %vm941, %v6465
      %6544 = vst.msk [vmem:[#allocation2 + $0x120] sm:$0xff] %vm941, %v6466
      %6545 = vst.msk [vmem:[#allocation2 + $0x128] sm:$0xff] %vm941, %v6467
      %6546 = vst.msk [vmem:[#allocation2 + $0x130] sm:$0xff] %vm941, %v6468
      %6547 = vst.msk [vmem:[#allocation2 + $0x138] sm:$0xff] %vm941, %v6469
      %6548 = vst.msk [vmem:[#allocation2 + $0x140] sm:$0xff] %vm941, %v6470
      %6549 = vst.msk [vmem:[#allocation2 + $0x148] sm:$0xff] %vm941, %v6471
      %6550 = vst.msk [vmem:[#allocation2 + $0x150] sm:$0xff] %vm941, %v6472
      %6551 = vst.msk [vmem:[#allocation2 + $0x158] sm:$0xff] %vm941, %v6473
      %6552 = vst.msk [vmem:[#allocation2 + $0x160] sm:$0xff] %vm941, %v6474
      %6553 = vst.msk [vmem:[#allocation2 + $0x168] sm:$0xff] %vm941, %v6475
      %6554 = vst.msk [vmem:[#allocation2 + $0x170] sm:$0xff] %vm941, %v6476
      %6555 = vst.msk [vmem:[#allocation2 + $0x178] sm:$0xff] %vm941, %v6477
      %6556 = vst.msk [vmem:[#allocation2 + $0x180] sm:$0xff] %vm941, %v6478
      %6557 = vst.msk [vmem:[#allocation2 + $0x188] sm:$0xff] %vm941, %v6479
      %6558 = vst.msk [vmem:[#allocation2 + $0x190] sm:$0xff] %vm941, %v6480
      %6559 = vst.msk [vmem:[#allocation2 + $0x198] sm:$0xff] %vm941, %v6481
      %6560 = vst.msk [vmem:[#allocation2 + $0x1a0] sm:$0xff] %vm941, %v6482
      %6561 = vst.msk [vmem:[#allocation2 + $0x1a8] sm:$0xff] %vm941, %v6483
      %6562 = vst.msk [vmem:[#allocation2 + $0x1b0] sm:$0xff] %vm941, %v6484
      %6563 = vst.msk [vmem:[#allocation2 + $0x1b8] sm:$0xff] %vm941, %v6485
      %6564 = vst.msk [vmem:[#allocation2 + $0x1c0] sm:$0xff] %vm941, %v6486
      %6565 = vst.msk [vmem:[#allocation2 + $0x1c8] sm:$0xff] %vm941, %v6487
      %6566 = vst.msk [vmem:[#allocation2 + $0x1d0] sm:$0xff] %vm941, %v6488
      %6567 = vst.msk [vmem:[#allocation2 + $0x1d8] sm:$0xff] %vm941, %v6489
      %6568 = vst.msk [vmem:[#allocation2 + $0x1e0] sm:$0xff] %vm941, %v6490
      %6569 = vst.msk [vmem:[#allocation2 + $0x1e8] sm:$0xff] %vm941, %v6491
      %6570 = vst.msk [vmem:[#allocation2 + $0x1f0] sm:$0xff] %vm941, %v6492
      %6571 = vst.msk [vmem:[#allocation2 + $0x1f8] sm:$0xff] %vm941, %v6493
      %6572 = vst.msk [vmem:[#allocation2 + $0x200] sm:$0xff] %vm941, %v6494
      %6573 = vst.msk [vmem:[#allocation2 + $0x208] sm:$0xff] %vm941, %v6495
      %6574 = vst.msk [vmem:[#allocation2 + $0x210] sm:$0xff] %vm941, %v6496
      %6575 = vst.msk [vmem:[#allocation2 + $0x218] sm:$0xff] %vm941, %v6497
      %6576 = vst.msk [vmem:[#allocation2 + $0x220] sm:$0xff] %vm941, %v6498
      %6577 = vst.msk [vmem:[#allocation2 + $0x228] sm:$0xff] %vm941, %v6499
      %6578 = vst.msk [vmem:[#allocation2 + $0x230] sm:$0xff] %vm941, %v6500
      %6579 = vst.msk [vmem:[#allocation2 + $0x238] sm:$0xff] %vm941, %v6501
      %6580 = vst.msk [vmem:[#allocation2 + $0x240] sm:$0xff] %vm941, %v6502
      %6581 = vst.msk [vmem:[#allocation2 + $0x248] sm:$0xff] %vm941, %v6503
      %6582 = vst.msk [vmem:[#allocation2 + $0x250] sm:$0xff] %vm941, %v6504
      %6583 = vst.msk [vmem:[#allocation2 + $0x258] sm:$0xff] %vm941, %v6505
      %6584 = vst.msk [vmem:[#allocation2 + $0x260] sm:$0xff] %vm941, %v6506
      %vm6585 = vcmask 259072
      %6586 = vst.msk [vmem:[#allocation2 + $0x268] sm:$0x3f] %vm6585, %v6507
      %v6587 = vld [vmem:[#allocation2] sm:$0xff]
      %v6588 = vld [vmem:[#allocation2 + $0x8] sm:$0xff]
      %v6589 = vld [vmem:[#allocation2 + $0x10] sm:$0xff]
      %v6590 = vld [vmem:[#allocation2 + $0x18] sm:$0xff]
      %v6591 = vld [vmem:[#allocation2 + $0x20] sm:$0xff]
      %v6592 = vld [vmem:[#allocation2 + $0x28] sm:$0xff]
      %v6593 = vld [vmem:[#allocation2 + $0x30] sm:$0xff]
      %v6594 = vld [vmem:[#allocation2 + $0x38] sm:$0xff]
      %v6595 = vld [vmem:[#allocation2 + $0x40] sm:$0xff]
      %v6596 = vld [vmem:[#allocation2 + $0x48] sm:$0xff]
      %v6597 = vld [vmem:[#allocation2 + $0x50] sm:$0xff]
      %v6598 = vld [vmem:[#allocation2 + $0x58] sm:$0xff]
      %v6599 = vld [vmem:[#allocation2 + $0x60] sm:$0xff]
      %v6600 = vld [vmem:[#allocation2 + $0x68] sm:$0xff]
      %v6601 = vld [vmem:[#allocation2 + $0x70] sm:$0xff]
      %v6602 = vld [vmem:[#allocation2 + $0x78] sm:$0xff]
      %v6603 = vld [vmem:[#allocation2 + $0x80] sm:$0xff]
      %v6604 = vld [vmem:[#allocation2 + $0x88] sm:$0xff]
      %v6605 = vld [vmem:[#allocation2 + $0x90] sm:$0xff]
      %v6606 = vld [vmem:[#allocation2 + $0x98] sm:$0xff]
      %v6607 = vld [vmem:[#allocation2 + $0xa0] sm:$0xff]
      %v6608 = vld [vmem:[#allocation2 + $0xa8] sm:$0xff]
      %v6609 = vld [vmem:[#allocation2 + $0xb0] sm:$0xff]
      %v6610 = vld [vmem:[#allocation2 + $0xb8] sm:$0xff]
      %v6611 = vld [vmem:[#allocation2 + $0xc0] sm:$0xff]
      %v6612 = vld [vmem:[#allocation2 + $0xc8] sm:$0xff]
      %v6613 = vld [vmem:[#allocation2 + $0xd0] sm:$0xff]
      %v6614 = vld [vmem:[#allocation2 + $0xd8] sm:$0xff]
      %v6615 = vld [vmem:[#allocation2 + $0xe0] sm:$0xff]
      %v6616 = vld [vmem:[#allocation2 + $0xe8] sm:$0xff]
      %v6617 = vld [vmem:[#allocation2 + $0xf0] sm:$0xff]
      %v6618 = vld [vmem:[#allocation2 + $0xf8] sm:$0xff]
      %v6619 = vld [vmem:[#allocation2 + $0x100] sm:$0xff]
      %v6620 = vld [vmem:[#allocation2 + $0x108] sm:$0xff]
      %v6621 = vld [vmem:[#allocation2 + $0x110] sm:$0xff]
      %v6622 = vld [vmem:[#allocation2 + $0x118] sm:$0xff]
      %v6623 = vld [vmem:[#allocation2 + $0x120] sm:$0xff]
      %v6624 = vld [vmem:[#allocation2 + $0x128] sm:$0xff]
      %v6625 = vld [vmem:[#allocation2 + $0x130] sm:$0xff]
      %v6626 = vld [vmem:[#allocation2 + $0x138] sm:$0xff]
      %v6627 = vld [vmem:[#allocation2 + $0x140] sm:$0xff]
      %v6628 = vld [vmem:[#allocation2 + $0x148] sm:$0xff]
      %v6629 = vld [vmem:[#allocation2 + $0x150] sm:$0xff]
      %v6630 = vld [vmem:[#allocation2 + $0x158] sm:$0xff]
      %v6631 = vld [vmem:[#allocation2 + $0x160] sm:$0xff]
      %v6632 = vld [vmem:[#allocation2 + $0x168] sm:$0xff]
      %v6633 = vld [vmem:[#allocation2 + $0x170] sm:$0xff]
      %v6634 = vld [vmem:[#allocation2 + $0x178] sm:$0xff]
      %v6635 = vld [vmem:[#allocation2 + $0x180] sm:$0xff]
      %v6636 = vld [vmem:[#allocation2 + $0x188] sm:$0xff]
      %v6637 = vld [vmem:[#allocation2 + $0x190] sm:$0xff]
      %v6638 = vld [vmem:[#allocation2 + $0x198] sm:$0xff]
      %v6639 = vld [vmem:[#allocation2 + $0x1a0] sm:$0xff]
      %v6640 = vld [vmem:[#allocation2 + $0x1a8] sm:$0xff]
      %v6641 = vld [vmem:[#allocation2 + $0x1b0] sm:$0xff]
      %v6642 = vld [vmem:[#allocation2 + $0x1b8] sm:$0xff]
      %v6643 = vld [vmem:[#allocation2 + $0x1c0] sm:$0xff]
      %v6644 = vld [vmem:[#allocation2 + $0x1c8] sm:$0xff]
      %v6645 = vld [vmem:[#allocation2 + $0x1d0] sm:$0xff]
      %v6646 = vld [vmem:[#allocation2 + $0x1d8] sm:$0xff]
      %v6647 = vld [vmem:[#allocation2 + $0x1e0] sm:$0xff]
      %v6648 = vld [vmem:[#allocation2 + $0x1e8] sm:$0xff]
      %v6649 = vld [vmem:[#allocation2 + $0x1f0] sm:$0xff]
      %v6650 = vld [vmem:[#allocation2 + $0x1f8] sm:$0xff]
      %v6651 = vld [vmem:[#allocation2 + $0x200] sm:$0xff]
      %v6652 = vld [vmem:[#allocation2 + $0x208] sm:$0xff]
      %v6653 = vld [vmem:[#allocation2 + $0x210] sm:$0xff]
      %v6654 = vld [vmem:[#allocation2 + $0x218] sm:$0xff]
      %v6655 = vld [vmem:[#allocation2 + $0x220] sm:$0xff]
      %v6656 = vld [vmem:[#allocation2 + $0x228] sm:$0xff]
      %v6657 = vld [vmem:[#allocation2 + $0x230] sm:$0xff]
      %v6658 = vld [vmem:[#allocation2 + $0x238] sm:$0xff]
      %v6659 = vld [vmem:[#allocation2 + $0x240] sm:$0xff]
      %v6660 = vld [vmem:[#allocation2 + $0x248] sm:$0xff]
      %v6661 = vld [vmem:[#allocation2 + $0x250] sm:$0x7]
      %v6662 = vld [vmem:[#allocation2 + $0x1] sm:$0xff]
      %v6663 = vld [vmem:[#allocation2 + $0x9] sm:$0xff]
      %v6664 = vld [vmem:[#allocation2 + $0x11] sm:$0xff]
      %v6665 = vld [vmem:[#allocation2 + $0x19] sm:$0xff]
      %v6666 = vld [vmem:[#allocation2 + $0x21] sm:$0xff]
      %v6667 = vld [vmem:[#allocation2 + $0x29] sm:$0xff]
      %v6668 = vld [vmem:[#allocation2 + $0x31] sm:$0xff]
      %v6669 = vld [vmem:[#allocation2 + $0x39] sm:$0xff]
      %v6670 = vld [vmem:[#allocation2 + $0x41] sm:$0xff]
      %v6671 = vld [vmem:[#allocation2 + $0x49] sm:$0xff]
      %v6672 = vld [vmem:[#allocation2 + $0x51] sm:$0xff]
      %v6673 = vld [vmem:[#allocation2 + $0x59] sm:$0xff]
      %v6674 = vld [vmem:[#allocation2 + $0x61] sm:$0xff]
      %v6675 = vld [vmem:[#allocation2 + $0x69] sm:$0xff]
      %v6676 = vld [vmem:[#allocation2 + $0x71] sm:$0xff]
      %v6677 = vld [vmem:[#allocation2 + $0x79] sm:$0xff]
      %v6678 = vld [vmem:[#allocation2 + $0x81] sm:$0xff]
      %v6679 = vld [vmem:[#allocation2 + $0x89] sm:$0xff]
      %v6680 = vld [vmem:[#allocation2 + $0x91] sm:$0xff]
      %v6681 = vld [vmem:[#allocation2 + $0x99] sm:$0xff]
      %v6682 = vld [vmem:[#allocation2 + $0xa1] sm:$0xff]
      %v6683 = vld [vmem:[#allocation2 + $0xa9] sm:$0xff]
      %v6684 = vld [vmem:[#allocation2 + $0xb1] sm:$0xff]
      %v6685 = vld [vmem:[#allocation2 + $0xb9] sm:$0xff]
      %v6686 = vld [vmem:[#allocation2 + $0xc1] sm:$0xff]
      %v6687 = vld [vmem:[#allocation2 + $0xc9] sm:$0xff]
      %v6688 = vld [vmem:[#allocation2 + $0xd1] sm:$0xff]
      %v6689 = vld [vmem:[#allocation2 + $0xd9] sm:$0xff]
      %v6690 = vld [vmem:[#allocation2 + $0xe1] sm:$0xff]
      %v6691 = vld [vmem:[#allocation2 + $0xe9] sm:$0xff]
      %v6692 = vld [vmem:[#allocation2 + $0xf1] sm:$0xff]
      %v6693 = vld [vmem:[#allocation2 + $0xf9] sm:$0xff]
      %v6694 = vld [vmem:[#allocation2 + $0x101] sm:$0xff]
      %v6695 = vld [vmem:[#allocation2 + $0x109] sm:$0xff]
      %v6696 = vld [vmem:[#allocation2 + $0x111] sm:$0xff]
      %v6697 = vld [vmem:[#allocation2 + $0x119] sm:$0xff]
      %v6698 = vld [vmem:[#allocation2 + $0x121] sm:$0xff]
      %v6699 = vld [vmem:[#allocation2 + $0x129] sm:$0xff]
      %v6700 = vld [vmem:[#allocation2 + $0x131] sm:$0xff]
      %v6701 = vld [vmem:[#allocation2 + $0x139] sm:$0xff]
      %v6702 = vld [vmem:[#allocation2 + $0x141] sm:$0xff]
      %v6703 = vld [vmem:[#allocation2 + $0x149] sm:$0xff]
      %v6704 = vld [vmem:[#allocation2 + $0x151] sm:$0xff]
      %v6705 = vld [vmem:[#allocation2 + $0x159] sm:$0xff]
      %v6706 = vld [vmem:[#allocation2 + $0x161] sm:$0xff]
      %v6707 = vld [vmem:[#allocation2 + $0x169] sm:$0xff]
      %v6708 = vld [vmem:[#allocation2 + $0x171] sm:$0xff]
      %v6709 = vld [vmem:[#allocation2 + $0x179] sm:$0xff]
      %v6710 = vld [vmem:[#allocation2 + $0x181] sm:$0xff]
      %v6711 = vld [vmem:[#allocation2 + $0x189] sm:$0xff]
      %v6712 = vld [vmem:[#allocation2 + $0x191] sm:$0xff]
      %v6713 = vld [vmem:[#allocation2 + $0x199] sm:$0xff]
      %v6714 = vld [vmem:[#allocation2 + $0x1a1] sm:$0xff]
      %v6715 = vld [vmem:[#allocation2 + $0x1a9] sm:$0xff]
      %v6716 = vld [vmem:[#allocation2 + $0x1b1] sm:$0xff]
      %v6717 = vld [vmem:[#allocation2 + $0x1b9] sm:$0xff]
      %v6718 = vld [vmem:[#allocation2 + $0x1c1] sm:$0xff]
      %v6719 = vld [vmem:[#allocation2 + $0x1c9] sm:$0xff]
      %v6720 = vld [vmem:[#allocation2 + $0x1d1] sm:$0xff]
      %v6721 = vld [vmem:[#allocation2 + $0x1d9] sm:$0xff]
      %v6722 = vld [vmem:[#allocation2 + $0x1e1] sm:$0xff]
      %v6723 = vld [vmem:[#allocation2 + $0x1e9] sm:$0xff]
      %v6724 = vld [vmem:[#allocation2 + $0x1f1] sm:$0xff]
      %v6725 = vld [vmem:[#allocation2 + $0x1f9] sm:$0xff]
      %v6726 = vld [vmem:[#allocation2 + $0x201] sm:$0xff]
      %v6727 = vld [vmem:[#allocation2 + $0x209] sm:$0xff]
      %v6728 = vld [vmem:[#allocation2 + $0x211] sm:$0xff]
      %v6729 = vld [vmem:[#allocation2 + $0x219] sm:$0xff]
      %v6730 = vld [vmem:[#allocation2 + $0x221] sm:$0xff]
      %v6731 = vld [vmem:[#allocation2 + $0x229] sm:$0xff]
      %v6732 = vld [vmem:[#allocation2 + $0x231] sm:$0xff]
      %v6733 = vld [vmem:[#allocation2 + $0x239] sm:$0xff]
      %v6734 = vld [vmem:[#allocation2 + $0x241] sm:$0xff]
      %v6735 = vld [vmem:[#allocation2 + $0x249] sm:$0xff]
      %v6736 = vld [vmem:[#allocation2 + $0x251] sm:$0x7]
      %v6737 = vmax.f32 %v6587, %v6662
      %v6738 = vmax.f32 %v6588, %v6663
      %v6739 = vmax.f32 %v6589, %v6664
      %v6740 = vmax.f32 %v6590, %v6665
      %v6741 = vmax.f32 %v6591, %v6666
      %v6742 = vmax.f32 %v6592, %v6667
      %v6743 = vmax.f32 %v6593, %v6668
      %v6744 = vmax.f32 %v6594, %v6669
      %v6745 = vmax.f32 %v6595, %v6670
      %v6746 = vmax.f32 %v6596, %v6671
      %v6747 = vmax.f32 %v6597, %v6672
      %v6748 = vmax.f32 %v6598, %v6673
      %v6749 = vmax.f32 %v6599, %v6674
      %v6750 = vmax.f32 %v6600, %v6675
      %v6751 = vmax.f32 %v6601, %v6676
      %v6752 = vmax.f32 %v6602, %v6677
      %v6753 = vmax.f32 %v6603, %v6678
      %v6754 = vmax.f32 %v6604, %v6679
      %v6755 = vmax.f32 %v6605, %v6680
      %v6756 = vmax.f32 %v6606, %v6681
      %v6757 = vmax.f32 %v6607, %v6682
      %v6758 = vmax.f32 %v6608, %v6683
      %v6759 = vmax.f32 %v6609, %v6684
      %v6760 = vmax.f32 %v6610, %v6685
      %v6761 = vmax.f32 %v6611, %v6686
      %v6762 = vmax.f32 %v6612, %v6687
      %v6763 = vmax.f32 %v6613, %v6688
      %v6764 = vmax.f32 %v6614, %v6689
      %v6765 = vmax.f32 %v6615, %v6690
      %v6766 = vmax.f32 %v6616, %v6691
      %v6767 = vmax.f32 %v6617, %v6692
      %v6768 = vmax.f32 %v6618, %v6693
      %v6769 = vmax.f32 %v6619, %v6694
      %v6770 = vmax.f32 %v6620, %v6695
      %v6771 = vmax.f32 %v6621, %v6696
      %v6772 = vmax.f32 %v6622, %v6697
      %v6773 = vmax.f32 %v6623, %v6698
      %v6774 = vmax.f32 %v6624, %v6699
      %v6775 = vmax.f32 %v6625, %v6700
      %v6776 = vmax.f32 %v6626, %v6701
      %v6777 = vmax.f32 %v6627, %v6702
      %v6778 = vmax.f32 %v6628, %v6703
      %v6779 = vmax.f32 %v6629, %v6704
      %v6780 = vmax.f32 %v6630, %v6705
      %v6781 = vmax.f32 %v6631, %v6706
      %v6782 = vmax.f32 %v6632, %v6707
      %v6783 = vmax.f32 %v6633, %v6708
      %v6784 = vmax.f32 %v6634, %v6709
      %v6785 = vmax.f32 %v6635, %v6710
      %v6786 = vmax.f32 %v6636, %v6711
      %v6787 = vmax.f32 %v6637, %v6712
      %v6788 = vmax.f32 %v6638, %v6713
      %v6789 = vmax.f32 %v6639, %v6714
      %v6790 = vmax.f32 %v6640, %v6715
      %v6791 = vmax.f32 %v6641, %v6716
      %v6792 = vmax.f32 %v6642, %v6717
      %v6793 = vmax.f32 %v6643, %v6718
      %v6794 = vmax.f32 %v6644, %v6719
      %v6795 = vmax.f32 %v6645, %v6720
      %v6796 = vmax.f32 %v6646, %v6721
      %v6797 = vmax.f32 %v6647, %v6722
      %v6798 = vmax.f32 %v6648, %v6723
      %v6799 = vmax.f32 %v6649, %v6724
      %v6800 = vmax.f32 %v6650, %v6725
      %v6801 = vmax.f32 %v6651, %v6726
      %v6802 = vmax.f32 %v6652, %v6727
      %v6803 = vmax.f32 %v6653, %v6728
      %v6804 = vmax.f32 %v6654, %v6729
      %v6805 = vmax.f32 %v6655, %v6730
      %v6806 = vmax.f32 %v6656, %v6731
      %v6807 = vmax.f32 %v6657, %v6732
      %v6808 = vmax.f32 %v6658, %v6733
      %v6809 = vmax.f32 %v6659, %v6734
      %v6810 = vmax.f32 %v6660, %v6735
      %v6811 = vmax.f32 %v6661, %v6736
      %v6812 = vld [vmem:[#allocation2 + $0x1a] sm:$0xff]
      %v6813 = vld [vmem:[#allocation2 + $0x22] sm:$0xff]
      %v6814 = vld [vmem:[#allocation2 + $0x2a] sm:$0xff]
      %v6815 = vld [vmem:[#allocation2 + $0x32] sm:$0xff]
      %v6816 = vld [vmem:[#allocation2 + $0x3a] sm:$0xff]
      %v6817 = vld [vmem:[#allocation2 + $0x42] sm:$0xff]
      %v6818 = vld [vmem:[#allocation2 + $0x4a] sm:$0xff]
      %v6819 = vld [vmem:[#allocation2 + $0x52] sm:$0xff]
      %v6820 = vld [vmem:[#allocation2 + $0x5a] sm:$0xff]
      %v6821 = vld [vmem:[#allocation2 + $0x62] sm:$0xff]
      %v6822 = vld [vmem:[#allocation2 + $0x6a] sm:$0xff]
      %v6823 = vld [vmem:[#allocation2 + $0x72] sm:$0xff]
      %v6824 = vld [vmem:[#allocation2 + $0x7a] sm:$0xff]
      %v6825 = vld [vmem:[#allocation2 + $0x82] sm:$0xff]
      %v6826 = vld [vmem:[#allocation2 + $0x8a] sm:$0xff]
      %v6827 = vld [vmem:[#allocation2 + $0x92] sm:$0xff]
      %v6828 = vld [vmem:[#allocation2 + $0x9a] sm:$0xff]
      %v6829 = vld [vmem:[#allocation2 + $0xa2] sm:$0xff]
      %v6830 = vld [vmem:[#allocation2 + $0xaa] sm:$0xff]
      %v6831 = vld [vmem:[#allocation2 + $0xb2] sm:$0xff]
      %v6832 = vld [vmem:[#allocation2 + $0xba] sm:$0xff]
      %v6833 = vld [vmem:[#allocation2 + $0xc2] sm:$0xff]
      %v6834 = vld [vmem:[#allocation2 + $0xca] sm:$0xff]
      %v6835 = vld [vmem:[#allocation2 + $0xd2] sm:$0xff]
      %v6836 = vld [vmem:[#allocation2 + $0xda] sm:$0xff]
      %v6837 = vld [vmem:[#allocation2 + $0xe2] sm:$0xff]
      %v6838 = vld [vmem:[#allocation2 + $0xea] sm:$0xff]
      %v6839 = vld [vmem:[#allocation2 + $0xf2] sm:$0xff]
      %v6840 = vld [vmem:[#allocation2 + $0xfa] sm:$0xff]
      %v6841 = vld [vmem:[#allocation2 + $0x102] sm:$0xff]
      %v6842 = vld [vmem:[#allocation2 + $0x10a] sm:$0xff]
      %v6843 = vld [vmem:[#allocation2 + $0x112] sm:$0xff]
      %v6844 = vld [vmem:[#allocation2 + $0x11a] sm:$0xff]
      %v6845 = vld [vmem:[#allocation2 + $0x122] sm:$0xff]
      %v6846 = vld [vmem:[#allocation2 + $0x12a] sm:$0xff]
      %v6847 = vld [vmem:[#allocation2 + $0x132] sm:$0xff]
      %v6848 = vld [vmem:[#allocation2 + $0x13a] sm:$0xff]
      %v6849 = vld [vmem:[#allocation2 + $0x142] sm:$0xff]
      %v6850 = vld [vmem:[#allocation2 + $0x14a] sm:$0xff]
      %v6851 = vld [vmem:[#allocation2 + $0x152] sm:$0xff]
      %v6852 = vld [vmem:[#allocation2 + $0x15a] sm:$0xff]
      %v6853 = vld [vmem:[#allocation2 + $0x162] sm:$0xff]
      %v6854 = vld [vmem:[#allocation2 + $0x16a] sm:$0xff]
      %v6855 = vld [vmem:[#allocation2 + $0x172] sm:$0xff]
      %v6856 = vld [vmem:[#allocation2 + $0x17a] sm:$0xff]
      %v6857 = vld [vmem:[#allocation2 + $0x182] sm:$0xff]
      %v6858 = vld [vmem:[#allocation2 + $0x18a] sm:$0xff]
      %v6859 = vld [vmem:[#allocation2 + $0x192] sm:$0xff]
      %v6860 = vld [vmem:[#allocation2 + $0x19a] sm:$0xff]
      %v6861 = vld [vmem:[#allocation2 + $0x1a2] sm:$0xff]
      %v6862 = vld [vmem:[#allocation2 + $0x1aa] sm:$0xff]
      %v6863 = vld [vmem:[#allocation2 + $0x1b2] sm:$0xff]
      %v6864 = vld [vmem:[#allocation2 + $0x1ba] sm:$0xff]
      %v6865 = vld [vmem:[#allocation2 + $0x1c2] sm:$0xff]
      %v6866 = vld [vmem:[#allocation2 + $0x1ca] sm:$0xff]
      %v6867 = vld [vmem:[#allocation2 + $0x1d2] sm:$0xff]
      %v6868 = vld [vmem:[#allocation2 + $0x1da] sm:$0xff]
      %v6869 = vld [vmem:[#allocation2 + $0x1e2] sm:$0xff]
      %v6870 = vld [vmem:[#allocation2 + $0x1ea] sm:$0xff]
      %v6871 = vld [vmem:[#allocation2 + $0x1f2] sm:$0xff]
      %v6872 = vld [vmem:[#allocation2 + $0x1fa] sm:$0xff]
      %v6873 = vld [vmem:[#allocation2 + $0x202] sm:$0xff]
      %v6874 = vld [vmem:[#allocation2 + $0x20a] sm:$0xff]
      %v6875 = vld [vmem:[#allocation2 + $0x212] sm:$0xff]
      %v6876 = vld [vmem:[#allocation2 + $0x21a] sm:$0xff]
      %v6877 = vld [vmem:[#allocation2 + $0x222] sm:$0xff]
      %v6878 = vld [vmem:[#allocation2 + $0x22a] sm:$0xff]
      %v6879 = vld [vmem:[#allocation2 + $0x232] sm:$0xff]
      %v6880 = vld [vmem:[#allocation2 + $0x23a] sm:$0xff]
      %v6881 = vld [vmem:[#allocation2 + $0x242] sm:$0xff]
      %v6882 = vld [vmem:[#allocation2 + $0x24a] sm:$0xff]
      %v6883 = vld [vmem:[#allocation2 + $0x252] sm:$0xff]
      %v6884 = vld [vmem:[#allocation2 + $0x25a] sm:$0xff]
      %v6885 = vld [vmem:[#allocation2 + $0x262] sm:$0xff]
      %v6886 = vld [vmem:[#allocation2 + $0x26a] sm:$0x7]
      %v6887 = vld [vmem:[#allocation2 + $0x1b] sm:$0xff]
      %v6888 = vld [vmem:[#allocation2 + $0x23] sm:$0xff]
      %v6889 = vld [vmem:[#allocation2 + $0x2b] sm:$0xff]
      %v6890 = vld [vmem:[#allocation2 + $0x33] sm:$0xff]
      %v6891 = vld [vmem:[#allocation2 + $0x3b] sm:$0xff]
      %v6892 = vld [vmem:[#allocation2 + $0x43] sm:$0xff]
      %v6893 = vld [vmem:[#allocation2 + $0x4b] sm:$0xff]
      %v6894 = vld [vmem:[#allocation2 + $0x53] sm:$0xff]
      %v6895 = vld [vmem:[#allocation2 + $0x5b] sm:$0xff]
      %v6896 = vld [vmem:[#allocation2 + $0x63] sm:$0xff]
      %v6897 = vld [vmem:[#allocation2 + $0x6b] sm:$0xff]
      %v6898 = vld [vmem:[#allocation2 + $0x73] sm:$0xff]
      %v6899 = vld [vmem:[#allocation2 + $0x7b] sm:$0xff]
      %v6900 = vld [vmem:[#allocation2 + $0x83] sm:$0xff]
      %v6901 = vld [vmem:[#allocation2 + $0x8b] sm:$0xff]
      %v6902 = vld [vmem:[#allocation2 + $0x93] sm:$0xff]
      %v6903 = vld [vmem:[#allocation2 + $0x9b] sm:$0xff]
      %v6904 = vld [vmem:[#allocation2 + $0xa3] sm:$0xff]
      %v6905 = vld [vmem:[#allocation2 + $0xab] sm:$0xff]
      %v6906 = vld [vmem:[#allocation2 + $0xb3] sm:$0xff]
      %v6907 = vld [vmem:[#allocation2 + $0xbb] sm:$0xff]
      %v6908 = vld [vmem:[#allocation2 + $0xc3] sm:$0xff]
      %v6909 = vld [vmem:[#allocation2 + $0xcb] sm:$0xff]
      %v6910 = vld [vmem:[#allocation2 + $0xd3] sm:$0xff]
      %v6911 = vld [vmem:[#allocation2 + $0xdb] sm:$0xff]
      %v6912 = vld [vmem:[#allocation2 + $0xe3] sm:$0xff]
      %v6913 = vld [vmem:[#allocation2 + $0xeb] sm:$0xff]
      %v6914 = vld [vmem:[#allocation2 + $0xf3] sm:$0xff]
      %v6915 = vld [vmem:[#allocation2 + $0xfb] sm:$0xff]
      %v6916 = vld [vmem:[#allocation2 + $0x103] sm:$0xff]
      %v6917 = vld [vmem:[#allocation2 + $0x10b] sm:$0xff]
      %v6918 = vld [vmem:[#allocation2 + $0x113] sm:$0xff]
      %v6919 = vld [vmem:[#allocation2 + $0x11b] sm:$0xff]
      %v6920 = vld [vmem:[#allocation2 + $0x123] sm:$0xff]
      %v6921 = vld [vmem:[#allocation2 + $0x12b] sm:$0xff]
      %v6922 = vld [vmem:[#allocation2 + $0x133] sm:$0xff]
      %v6923 = vld [vmem:[#allocation2 + $0x13b] sm:$0xff]
      %v6924 = vld [vmem:[#allocation2 + $0x143] sm:$0xff]
      %v6925 = vld [vmem:[#allocation2 + $0x14b] sm:$0xff]
      %v6926 = vld [vmem:[#allocation2 + $0x153] sm:$0xff]
      %v6927 = vld [vmem:[#allocation2 + $0x15b] sm:$0xff]
      %v6928 = vld [vmem:[#allocation2 + $0x163] sm:$0xff]
      %v6929 = vld [vmem:[#allocation2 + $0x16b] sm:$0xff]
      %v6930 = vld [vmem:[#allocation2 + $0x173] sm:$0xff]
      %v6931 = vld [vmem:[#allocation2 + $0x17b] sm:$0xff]
      %v6932 = vld [vmem:[#allocation2 + $0x183] sm:$0xff]
      %v6933 = vld [vmem:[#allocation2 + $0x18b] sm:$0xff]
      %v6934 = vld [vmem:[#allocation2 + $0x193] sm:$0xff]
      %v6935 = vld [vmem:[#allocation2 + $0x19b] sm:$0xff]
      %v6936 = vld [vmem:[#allocation2 + $0x1a3] sm:$0xff]
      %v6937 = vld [vmem:[#allocation2 + $0x1ab] sm:$0xff]
      %v6938 = vld [vmem:[#allocation2 + $0x1b3] sm:$0xff]
      %v6939 = vld [vmem:[#allocation2 + $0x1bb] sm:$0xff]
      %v6940 = vld [vmem:[#allocation2 + $0x1c3] sm:$0xff]
      %v6941 = vld [vmem:[#allocation2 + $0x1cb] sm:$0xff]
      %v6942 = vld [vmem:[#allocation2 + $0x1d3] sm:$0xff]
      %v6943 = vld [vmem:[#allocation2 + $0x1db] sm:$0xff]
      %v6944 = vld [vmem:[#allocation2 + $0x1e3] sm:$0xff]
      %v6945 = vld [vmem:[#allocation2 + $0x1eb] sm:$0xff]
      %v6946 = vld [vmem:[#allocation2 + $0x1f3] sm:$0xff]
      %v6947 = vld [vmem:[#allocation2 + $0x1fb] sm:$0xff]
      %v6948 = vld [vmem:[#allocation2 + $0x203] sm:$0xff]
      %v6949 = vld [vmem:[#allocation2 + $0x20b] sm:$0xff]
      %v6950 = vld [vmem:[#allocation2 + $0x213] sm:$0xff]
      %v6951 = vld [vmem:[#allocation2 + $0x21b] sm:$0xff]
      %v6952 = vld [vmem:[#allocation2 + $0x223] sm:$0xff]
      %v6953 = vld [vmem:[#allocation2 + $0x22b] sm:$0xff]
      %v6954 = vld [vmem:[#allocation2 + $0x233] sm:$0xff]
      %v6955 = vld [vmem:[#allocation2 + $0x23b] sm:$0xff]
      %v6956 = vld [vmem:[#allocation2 + $0x243] sm:$0xff]
      %v6957 = vld [vmem:[#allocation2 + $0x24b] sm:$0xff]
      %v6958 = vld [vmem:[#allocation2 + $0x253] sm:$0xff]
      %v6959 = vld [vmem:[#allocation2 + $0x25b] sm:$0xff]
      %v6960 = vld [vmem:[#allocation2 + $0x263] sm:$0xff]
      %v6961 = vld [vmem:[#allocation2 + $0x26b] sm:$0x7]
      %v6962 = vmax.f32 %v6812, %v6887
      %v6963 = vmax.f32 %v6813, %v6888
      %v6964 = vmax.f32 %v6814, %v6889
      %v6965 = vmax.f32 %v6815, %v6890
      %v6966 = vmax.f32 %v6816, %v6891
      %v6967 = vmax.f32 %v6817, %v6892
      %v6968 = vmax.f32 %v6818, %v6893
      %v6969 = vmax.f32 %v6819, %v6894
      %v6970 = vmax.f32 %v6820, %v6895
      %v6971 = vmax.f32 %v6821, %v6896
      %v6972 = vmax.f32 %v6822, %v6897
      %v6973 = vmax.f32 %v6823, %v6898
      %v6974 = vmax.f32 %v6824, %v6899
      %v6975 = vmax.f32 %v6825, %v6900
      %v6976 = vmax.f32 %v6826, %v6901
      %v6977 = vmax.f32 %v6827, %v6902
      %v6978 = vmax.f32 %v6828, %v6903
      %v6979 = vmax.f32 %v6829, %v6904
      %v6980 = vmax.f32 %v6830, %v6905
      %v6981 = vmax.f32 %v6831, %v6906
      %v6982 = vmax.f32 %v6832, %v6907
      %v6983 = vmax.f32 %v6833, %v6908
      %v6984 = vmax.f32 %v6834, %v6909
      %v6985 = vmax.f32 %v6835, %v6910
      %v6986 = vmax.f32 %v6836, %v6911
      %v6987 = vmax.f32 %v6837, %v6912
      %v6988 = vmax.f32 %v6838, %v6913
      %v6989 = vmax.f32 %v6839, %v6914
      %v6990 = vmax.f32 %v6840, %v6915
      %v6991 = vmax.f32 %v6841, %v6916
      %v6992 = vmax.f32 %v6842, %v6917
      %v6993 = vmax.f32 %v6843, %v6918
      %v6994 = vmax.f32 %v6844, %v6919
      %v6995 = vmax.f32 %v6845, %v6920
      %v6996 = vmax.f32 %v6846, %v6921
      %v6997 = vmax.f32 %v6847, %v6922
      %v6998 = vmax.f32 %v6848, %v6923
      %v6999 = vmax.f32 %v6849, %v6924
      %v7000 = vmax.f32 %v6850, %v6925
      %v7001 = vmax.f32 %v6851, %v6926
      %v7002 = vmax.f32 %v6852, %v6927
      %v7003 = vmax.f32 %v6853, %v6928
      %v7004 = vmax.f32 %v6854, %v6929
      %v7005 = vmax.f32 %v6855, %v6930
      %v7006 = vmax.f32 %v6856, %v6931
      %v7007 = vmax.f32 %v6857, %v6932
      %v7008 = vmax.f32 %v6858, %v6933
      %v7009 = vmax.f32 %v6859, %v6934
      %v7010 = vmax.f32 %v6860, %v6935
      %v7011 = vmax.f32 %v6861, %v6936
      %v7012 = vmax.f32 %v6862, %v6937
      %v7013 = vmax.f32 %v6863, %v6938
      %v7014 = vmax.f32 %v6864, %v6939
      %v7015 = vmax.f32 %v6865, %v6940
      %v7016 = vmax.f32 %v6866, %v6941
      %v7017 = vmax.f32 %v6867, %v6942
      %v7018 = vmax.f32 %v6868, %v6943
      %v7019 = vmax.f32 %v6869, %v6944
      %v7020 = vmax.f32 %v6870, %v6945
      %v7021 = vmax.f32 %v6871, %v6946
      %v7022 = vmax.f32 %v6872, %v6947
      %v7023 = vmax.f32 %v6873, %v6948
      %v7024 = vmax.f32 %v6874, %v6949
      %v7025 = vmax.f32 %v6875, %v6950
      %v7026 = vmax.f32 %v6876, %v6951
      %v7027 = vmax.f32 %v6877, %v6952
      %v7028 = vmax.f32 %v6878, %v6953
      %v7029 = vmax.f32 %v6879, %v6954
      %v7030 = vmax.f32 %v6880, %v6955
      %v7031 = vmax.f32 %v6881, %v6956
      %v7032 = vmax.f32 %v6882, %v6957
      %v7033 = vmax.f32 %v6883, %v6958
      %v7034 = vmax.f32 %v6884, %v6959
      %v7035 = vmax.f32 %v6885, %v6960
      %v7036 = vmax.f32 %v6886, %v6961
      %v7037 = vmax.f32 %v6737, %v6962
      %v7038 = vmax.f32 %v6738, %v6963
      %v7039 = vmax.f32 %v6739, %v6964
      %v7040 = vmax.f32 %v6740, %v6965
      %v7041 = vmax.f32 %v6741, %v6966
      %v7042 = vmax.f32 %v6742, %v6967
      %v7043 = vmax.f32 %v6743, %v6968
      %v7044 = vmax.f32 %v6744, %v6969
      %v7045 = vmax.f32 %v6745, %v6970
      %v7046 = vmax.f32 %v6746, %v6971
      %v7047 = vmax.f32 %v6747, %v6972
      %v7048 = vmax.f32 %v6748, %v6973
      %v7049 = vmax.f32 %v6749, %v6974
      %v7050 = vmax.f32 %v6750, %v6975
      %v7051 = vmax.f32 %v6751, %v6976
      %v7052 = vmax.f32 %v6752, %v6977
      %v7053 = vmax.f32 %v6753, %v6978
      %v7054 = vmax.f32 %v6754, %v6979
      %v7055 = vmax.f32 %v6755, %v6980
      %v7056 = vmax.f32 %v6756, %v6981
      %v7057 = vmax.f32 %v6757, %v6982
      %v7058 = vmax.f32 %v6758, %v6983
      %v7059 = vmax.f32 %v6759, %v6984
      %v7060 = vmax.f32 %v6760, %v6985
      %v7061 = vmax.f32 %v6761, %v6986
      %v7062 = vmax.f32 %v6762, %v6987
      %v7063 = vmax.f32 %v6763, %v6988
      %v7064 = vmax.f32 %v6764, %v6989
      %v7065 = vmax.f32 %v6765, %v6990
      %v7066 = vmax.f32 %v6766, %v6991
      %v7067 = vmax.f32 %v6767, %v6992
      %v7068 = vmax.f32 %v6768, %v6993
      %v7069 = vmax.f32 %v6769, %v6994
      %v7070 = vmax.f32 %v6770, %v6995
      %v7071 = vmax.f32 %v6771, %v6996
      %v7072 = vmax.f32 %v6772, %v6997
      %v7073 = vmax.f32 %v6773, %v6998
      %v7074 = vmax.f32 %v6774, %v6999
      %v7075 = vmax.f32 %v6775, %v7000
      %v7076 = vmax.f32 %v6776, %v7001
      %v7077 = vmax.f32 %v6777, %v7002
      %v7078 = vmax.f32 %v6778, %v7003
      %v7079 = vmax.f32 %v6779, %v7004
      %v7080 = vmax.f32 %v6780, %v7005
      %v7081 = vmax.f32 %v6781, %v7006
      %v7082 = vmax.f32 %v6782, %v7007
      %v7083 = vmax.f32 %v6783, %v7008
      %v7084 = vmax.f32 %v6784, %v7009
      %v7085 = vmax.f32 %v6785, %v7010
      %v7086 = vmax.f32 %v6786, %v7011
      %v7087 = vmax.f32 %v6787, %v7012
      %v7088 = vmax.f32 %v6788, %v7013
      %v7089 = vmax.f32 %v6789, %v7014
      %v7090 = vmax.f32 %v6790, %v7015
      %v7091 = vmax.f32 %v6791, %v7016
      %v7092 = vmax.f32 %v6792, %v7017
      %v7093 = vmax.f32 %v6793, %v7018
      %v7094 = vmax.f32 %v6794, %v7019
      %v7095 = vmax.f32 %v6795, %v7020
      %v7096 = vmax.f32 %v6796, %v7021
      %v7097 = vmax.f32 %v6797, %v7022
      %v7098 = vmax.f32 %v6798, %v7023
      %v7099 = vmax.f32 %v6799, %v7024
      %v7100 = vmax.f32 %v6800, %v7025
      %v7101 = vmax.f32 %v6801, %v7026
      %v7102 = vmax.f32 %v6802, %v7027
      %v7103 = vmax.f32 %v6803, %v7028
      %v7104 = vmax.f32 %v6804, %v7029
      %v7105 = vmax.f32 %v6805, %v7030
      %v7106 = vmax.f32 %v6806, %v7031
      %v7107 = vmax.f32 %v6807, %v7032
      %v7108 = vmax.f32 %v6808, %v7033
      %v7109 = vmax.f32 %v6809, %v7034
      %v7110 = vmax.f32 %v6810, %v7035
      %v7111 = vmax.f32 %v6811, %v7036
      %v7112 = vld [vmem:[%s3] sm:$0xff]
      %v7113 = vld [vmem:[%s3 + $0x8] sm:$0xff]
      %v7114 = vld [vmem:[%s3 + $0x10] sm:$0xf]
      %v7115 = vld [vmem:[%s3 + $0x14] sm:$0xff]
      %v7116 = vld [vmem:[%s3 + $0x1c] sm:$0xff]
      %v7117 = vld [vmem:[%s3 + $0x24] sm:$0xf]
      %v7118 = vld [vmem:[%s3 + $0x28] sm:$0xff]
      %v7119 = vld [vmem:[%s3 + $0x30] sm:$0xff]
      %v7120 = vld [vmem:[%s3 + $0x38] sm:$0xf]
      %v7121 = vld [vmem:[%s3 + $0x3c] sm:$0xff]
      %v7122 = vld [vmem:[%s3 + $0x44] sm:$0xff]
      %v7123 = vld [vmem:[%s3 + $0x4c] sm:$0xf]
      %v7124 = vld [vmem:[%s3 + $0x50] sm:$0xff]
      %v7125 = vld [vmem:[%s3 + $0x58] sm:$0xff]
      %v7126 = vld [vmem:[%s3 + $0x60] sm:$0xf]
      %v7127 = vld [vmem:[%s3 + $0x64] sm:$0xff]
      %v7128 = vld [vmem:[%s3 + $0x6c] sm:$0xff]
      %v7129 = vld [vmem:[%s3 + $0x74] sm:$0xf]
      %v7130 = vld [vmem:[%s3 + $0x78] sm:$0xff]
      %v7131 = vld [vmem:[%s3 + $0x80] sm:$0xff]
      %v7132 = vld [vmem:[%s3 + $0x88] sm:$0xf]
      %v7133 = vld [vmem:[%s3 + $0x8c] sm:$0xff]
      %v7134 = vld [vmem:[%s3 + $0x94] sm:$0xff]
      %v7135 = vld [vmem:[%s3 + $0x9c] sm:$0xf]
      %v7136 = vld [vmem:[%s3 + $0xa0] sm:$0xff]
      %v7137 = vld [vmem:[%s3 + $0xa8] sm:$0xff]
      %v7138 = vld [vmem:[%s3 + $0xb0] sm:$0xf]
      %v7139 = vld [vmem:[%s3 + $0xb4] sm:$0xff]
      %v7140 = vld [vmem:[%s3 + $0xbc] sm:$0xff]
      %v7141 = vld [vmem:[%s3 + $0xc4] sm:$0xf]
      %v7142 = vld [vmem:[%s3 + $0xc8] sm:$0xff]
      %v7143 = vld [vmem:[%s3 + $0xd0] sm:$0xff]
      %v7144 = vld [vmem:[%s3 + $0xd8] sm:$0xf]
      %v7145 = vld [vmem:[%s3 + $0xdc] sm:$0xff]
      %v7146 = vld [vmem:[%s3 + $0xe4] sm:$0xff]
      %v7147 = vld [vmem:[%s3 + $0xec] sm:$0xf]
      %v7148 = vld [vmem:[%s3 + $0xf0] sm:$0xff]
      %v7149 = vld [vmem:[%s3 + $0xf8] sm:$0xff]
      %v7150 = vld [vmem:[%s3 + $0x100] sm:$0xf]
      %v7151 = vld [vmem:[%s3 + $0x104] sm:$0xff]
      %v7152 = vld [vmem:[%s3 + $0x10c] sm:$0xff]
      %v7153 = vld [vmem:[%s3 + $0x114] sm:$0xf]
      %v7154 = vld [vmem:[%s3 + $0x118] sm:$0xff]
      %v7155 = vld [vmem:[%s3 + $0x120] sm:$0xff]
      %v7156 = vld [vmem:[%s3 + $0x128] sm:$0xf]
      %v7157 = vld [vmem:[%s3 + $0x12c] sm:$0xff]
      %v7158 = vld [vmem:[%s3 + $0x134] sm:$0xff]
      %v7159 = vld [vmem:[%s3 + $0x13c] sm:$0xf]
      %v7160 = vld [vmem:[%s3 + $0x140] sm:$0xff]
      %v7161 = vld [vmem:[%s3 + $0x148] sm:$0xff]
      %v7162 = vld [vmem:[%s3 + $0x150] sm:$0xf]
      %v7163 = vld [vmem:[%s3 + $0x154] sm:$0xff]
      %v7164 = vld [vmem:[%s3 + $0x15c] sm:$0xff]
      %v7165 = vld [vmem:[%s3 + $0x164] sm:$0xf]
      %v7166 = vpack.c.bf16 %v7038, %v7037
      %v7167 = vpack.c.bf16 %v7040, %v7039
      %v7168 = vpack.c.bf16 %v7042, %v7041
      %v7169 = vpack.c.bf16 %v7044, %v7043
      %v7170 = vpack.c.bf16 %v7046, %v7045
      %v7171 = vpack.c.bf16 %v7048, %v7047
      %v7172 = vpack.c.bf16 %v7050, %v7049
      %v7173 = vpack.c.bf16 %v7052, %v7051
      %v7174 = vpack.c.bf16 %v7054, %v7053
      %v7175 = vpack.c.bf16 %v7056, %v7055
      %v7176 = vpack.c.bf16 %v7058, %v7057
      %v7177 = vpack.c.bf16 %v7060, %v7059
      %v7178 = vpack.c.bf16 %v7062, %v7061
      %v7179 = vpack.c.bf16 %v7064, %v7063
      %v7180 = vpack.c.bf16 %v7066, %v7065
      %v7181 = vpack.c.bf16 %v7068, %v7067
      %v7182 = vpack.c.bf16 %v7070, %v7069
      %v7183 = vpack.c.bf16 %v7072, %v7071
      %v7184 = vpack.c.bf16 %v7074, %v7073
      %v7185 = vpack.c.bf16 %v7076, %v7075
      %v7186 = vpack.c.bf16 %v7078, %v7077
      %v7187 = vpack.c.bf16 %v7080, %v7079
      %v7188 = vpack.c.bf16 %v7082, %v7081
      %v7189 = vpack.c.bf16 %v7084, %v7083
      %v7190 = vpack.c.bf16 %v7086, %v7085
      %v7191 = vpack.c.bf16 %v7088, %v7087
      %v7192 = vpack.c.bf16 %v7090, %v7089
      %v7193 = vpack.c.bf16 %v7092, %v7091
      %v7194 = vpack.c.bf16 %v7094, %v7093
      %v7195 = vpack.c.bf16 %v7096, %v7095
      %v7196 = vpack.c.bf16 %v7098, %v7097
      %v7197 = vpack.c.bf16 %v7100, %v7099
      %v7198 = vpack.c.bf16 %v7102, %v7101
      %v7199 = vpack.c.bf16 %v7104, %v7103
      %v7200 = vpack.c.bf16 %v7106, %v7105
      %v7201 = vpack.c.bf16 %v7108, %v7107
      %v7202 = vpack.c.bf16 %v7110, %v7109
      %v7203 = vpack.c.bf16 %v7111, %v7111
      %v7258 = vunpack.c.l.b16 %v7112
      %v7259 = vunpack.c.h.b16 %v7112
      %v7260 = vunpack.c.l.b16 %v7113
      %v7261 = vunpack.c.h.b16 %v7113
      %v7262 = vunpack.c.l.b16 %v7114
      %v7263 = vunpack.c.l.b16 %v7115
      %v7264 = vunpack.c.h.b16 %v7115
      %v7265 = vunpack.c.l.b16 %v7116
      %v7266 = vunpack.c.h.b16 %v7116
      %v7267 = vunpack.c.l.b16 %v7117
      %v7268 = vunpack.c.l.b16 %v7118
      %v7269 = vunpack.c.h.b16 %v7118
      %v7270 = vunpack.c.l.b16 %v7119
      %v7271 = vunpack.c.h.b16 %v7119
      %v7272 = vunpack.c.l.b16 %v7120
      %v7273 = vunpack.c.l.b16 %v7121
      %v7274 = vunpack.c.h.b16 %v7121
      %v7275 = vunpack.c.l.b16 %v7122
      %v7276 = vunpack.c.h.b16 %v7122
      %v7277 = vunpack.c.l.b16 %v7123
      %v7278 = vunpack.c.l.b16 %v7124
      %v7279 = vunpack.c.h.b16 %v7124
      %v7280 = vunpack.c.l.b16 %v7125
      %v7281 = vunpack.c.h.b16 %v7125
      %v7282 = vunpack.c.l.b16 %v7126
      %v7283 = vunpack.c.l.b16 %v7127
      %v7284 = vunpack.c.h.b16 %v7127
      %v7285 = vunpack.c.l.b16 %v7128
      %v7286 = vunpack.c.h.b16 %v7128
      %v7287 = vunpack.c.l.b16 %v7129
      %v7288 = vunpack.c.l.b16 %v7130
      %v7289 = vunpack.c.h.b16 %v7130
      %v7290 = vunpack.c.l.b16 %v7131
      %v7291 = vunpack.c.h.b16 %v7131
      %v7292 = vunpack.c.l.b16 %v7132
      %v7293 = vunpack.c.l.b16 %v7133
      %v7294 = vunpack.c.h.b16 %v7133
      %v7295 = vunpack.c.l.b16 %v7134
      %v7296 = vunpack.c.h.b16 %v7134
      %v7297 = vunpack.c.l.b16 %v7135
      %v7298 = vunpack.c.l.b16 %v7136
      %v7299 = vunpack.c.h.b16 %v7136
      %v7300 = vunpack.c.l.b16 %v7137
      %v7301 = vunpack.c.h.b16 %v7137
      %v7302 = vunpack.c.l.b16 %v7138
      %v7303 = vunpack.c.l.b16 %v7139
      %v7304 = vunpack.c.h.b16 %v7139
      %v7305 = vunpack.c.l.b16 %v7140
      %v7306 = vunpack.c.h.b16 %v7140
      %v7307 = vunpack.c.l.b16 %v7141
      %v7308 = vunpack.c.l.b16 %v7142
      %v7309 = vunpack.c.h.b16 %v7142
      %v7310 = vunpack.c.l.b16 %v7143
      %v7311 = vunpack.c.h.b16 %v7143
      %v7312 = vunpack.c.l.b16 %v7144
      %v7313 = vunpack.c.l.b16 %v7145
      %v7314 = vunpack.c.h.b16 %v7145
      %v7315 = vunpack.c.l.b16 %v7146
      %v7316 = vunpack.c.h.b16 %v7146
      %v7317 = vunpack.c.l.b16 %v7147
      %v7318 = vunpack.c.l.b16 %v7148
      %v7319 = vunpack.c.h.b16 %v7148
      %v7320 = vunpack.c.l.b16 %v7149
      %v7321 = vunpack.c.h.b16 %v7149
      %v7322 = vunpack.c.l.b16 %v7150
      %v7323 = vunpack.c.l.b16 %v7151
      %v7324 = vunpack.c.h.b16 %v7151
      %v7325 = vunpack.c.l.b16 %v7152
      %v7326 = vunpack.c.h.b16 %v7152
      %v7327 = vunpack.c.l.b16 %v7153
      %v7328 = vunpack.c.l.b16 %v7154
      %v7329 = vunpack.c.h.b16 %v7154
      %v7330 = vunpack.c.l.b16 %v7155
      %v7331 = vunpack.c.h.b16 %v7155
      %v7332 = vunpack.c.l.b16 %v7156
      %v7333 = vunpack.c.l.b16 %v7157
      %v7334 = vunpack.c.h.b16 %v7157
      %v7335 = vunpack.c.l.b16 %v7158
      %v7336 = vunpack.c.h.b16 %v7158
      %v7337 = vunpack.c.l.b16 %v7159
      %v7338 = vunpack.c.l.b16 %v7160
      %v7339 = vunpack.c.h.b16 %v7160
      %v7340 = vunpack.c.l.b16 %v7161
      %v7341 = vunpack.c.h.b16 %v7161
      %v7342 = vunpack.c.l.b16 %v7162
      %v7343 = vunpack.c.l.b16 %v7163
      %v7344 = vunpack.c.h.b16 %v7163
      %v7345 = vunpack.c.l.b16 %v7164
      %v7346 = vunpack.c.h.b16 %v7164
      %v7347 = vunpack.c.l.b16 %v7165
      %v7348 = vpack.c.b16 %v7263, %v7258
      %v7349 = vpack.c.b16 %v7264, %v7259
      %v7350 = vpack.c.b16 %v7265, %v7260
      %v7351 = vpack.c.b16 %v7266, %v7261
      %v7352 = vpack.c.b16 %v7267, %v7262
      %v7353 = vpack.c.b16 %v7273, %v7268
      %v7354 = vpack.c.b16 %v7274, %v7269
      %v7355 = vpack.c.b16 %v7275, %v7270
      %v7356 = vpack.c.b16 %v7276, %v7271
      %v7357 = vpack.c.b16 %v7277, %v7272
      %v7358 = vpack.c.b16 %v7283, %v7278
      %v7359 = vpack.c.b16 %v7284, %v7279
      %v7360 = vpack.c.b16 %v7285, %v7280
      %v7361 = vpack.c.b16 %v7286, %v7281
      %v7362 = vpack.c.b16 %v7287, %v7282
      %v7363 = vpack.c.b16 %v7293, %v7288
      %v7364 = vpack.c.b16 %v7294, %v7289
      %v7365 = vpack.c.b16 %v7295, %v7290
      %v7366 = vpack.c.b16 %v7296, %v7291
      %v7367 = vpack.c.b16 %v7297, %v7292
      %v7368 = vpack.c.b16 %v7303, %v7298
      %v7369 = vpack.c.b16 %v7304, %v7299
      %v7370 = vpack.c.b16 %v7305, %v7300
      %v7371 = vpack.c.b16 %v7306, %v7301
      %v7372 = vpack.c.b16 %v7307, %v7302
      %v7373 = vpack.c.b16 %v7313, %v7308
      %v7374 = vpack.c.b16 %v7314, %v7309
      %v7375 = vpack.c.b16 %v7315, %v7310
      %v7376 = vpack.c.b16 %v7316, %v7311
      %v7377 = vpack.c.b16 %v7317, %v7312
      %v7378 = vpack.c.b16 %v7323, %v7318
      %v7379 = vpack.c.b16 %v7324, %v7319
      %v7380 = vpack.c.b16 %v7325, %v7320
      %v7381 = vpack.c.b16 %v7326, %v7321
      %v7382 = vpack.c.b16 %v7327, %v7322
      %v7383 = vpack.c.b16 %v7333, %v7328
      %v7384 = vpack.c.b16 %v7334, %v7329
      %v7385 = vpack.c.b16 %v7335, %v7330
      %v7386 = vpack.c.b16 %v7336, %v7331
      %v7387 = vpack.c.b16 %v7337, %v7332
      %v7388 = vpack.c.b16 %v7343, %v7338
      %v7389 = vpack.c.b16 %v7344, %v7339
      %v7390 = vpack.c.b16 %v7345, %v7340
      %v7391 = vpack.c.b16 %v7346, %v7341
      %v7392 = vpack.c.b16 %v7347, %v7342
      %vm7429 = vcmask 678912
      %v7431 = vsel %vm7429, %v7352, 0
      %v7434 = vsel %vm7429, %v7357, 0
      %v7437 = vsel %vm7429, %v7362, 0
      %v7440 = vsel %vm7429, %v7367, 0
      %v7443 = vsel %vm7429, %v7372, 0
      %v7446 = vsel %vm7429, %v7377, 0
      %v7449 = vsel %vm7429, %v7382, 0
      %v7452 = vsel %vm7429, %v7387, 0
      %v7455 = vsel %vm7429, %v7392, 0
      %vm7457 = vcmask 1040384
      %vm7458 = vcmask 1041408
      %v7459 = vsel %vm7457, 4294967295, 65535
      %v7460 = vsel %vm7458, %v7459, 0
      %v7462 = vand.u32 %v7203, %v7460
      %7464 = vmatpush.bf16.msra.mxu0 %v7173
      %7465 = vmatpush.bf16.msra.mxu0 %v7172
      %7466 = vmatpush.bf16.msra.mxu0 %v7171
      %7467 = vmatpush.bf16.msra.mxu0 %v7170
      %7468 = vmatpush.bf16.msra.mxu0 %v7169
      %7469 = vmatpush.bf16.msra.mxu0 %v7168
      %7470 = vmatpush.bf16.msra.mxu0 %v7167
      %7471 = vmatpush.bf16.msra.mxu0 %v7166
      %7472 = vmatmul.bf16.gmra.mxu0 %v7348
      %v7473 = vpop.f32.mrf.mxu0
      %v7474 = vadd.f32 0.0, %v7473
      %v7475 = vpop.f32.mrf.mxu0
      %v7476 = vadd.f32 0.0, %v7475
      %7477 = vmatmul.bf16.gmra.mxu0 %v7353
      %v7478 = vpop.f32.mrf.mxu0
      %v7479 = vadd.f32 0.0, %v7478
      %v7480 = vpop.f32.mrf.mxu0
      %v7481 = vadd.f32 0.0, %v7480
      %7482 = vmatmul.bf16.gmra.mxu0 %v7358
      %v7483 = vpop.f32.mrf.mxu0
      %v7484 = vadd.f32 0.0, %v7483
      %v7485 = vpop.f32.mrf.mxu0
      %v7486 = vadd.f32 0.0, %v7485
      %7487 = vmatmul.bf16.gmra.mxu0 %v7363
      %v7488 = vpop.f32.mrf.mxu0
      %v7489 = vadd.f32 0.0, %v7488
      %v7490 = vpop.f32.mrf.mxu0
      %v7491 = vadd.f32 0.0, %v7490
      %7492 = vmatmul.bf16.gmra.mxu0 %v7368
      %v7493 = vpop.f32.mrf.mxu0
      %v7494 = vadd.f32 0.0, %v7493
      %v7495 = vpop.f32.mrf.mxu0
      %v7496 = vadd.f32 0.0, %v7495
      %7497 = vmatmul.bf16.gmra.mxu0 %v7373
      %v7498 = vpop.f32.mrf.mxu0
      %v7499 = vadd.f32 0.0, %v7498
      %v7500 = vpop.f32.mrf.mxu0
      %v7501 = vadd.f32 0.0, %v7500
      %7502 = vmatmul.bf16.gmra.mxu0 %v7378
      %v7503 = vpop.f32.mrf.mxu0
      %v7504 = vadd.f32 0.0, %v7503
      %v7505 = vpop.f32.mrf.mxu0
      %v7506 = vadd.f32 0.0, %v7505
      %7507 = vmatmul.bf16.gmra.mxu0 %v7383
      %v7508 = vpop.f32.mrf.mxu0
      %v7509 = vadd.f32 0.0, %v7508
      %v7510 = vpop.f32.mrf.mxu0
      %v7511 = vadd.f32 0.0, %v7510
      %7512 = vmatmul.bf16.gmra.mxu0 %v7388
      %v7513 = vpop.f32.mrf.mxu0
      %v7514 = vadd.f32 0.0, %v7513
      %v7515 = vpop.f32.mrf.mxu0
      %v7516 = vadd.f32 0.0, %v7515
      %7517 = vdwg.mxu0
      %7518 = vmatpush.bf16.msra.mxu0 %v7181
      %7519 = vmatpush.bf16.msra.mxu0 %v7180
      %7520 = vmatpush.bf16.msra.mxu0 %v7179
      %7521 = vmatpush.bf16.msra.mxu0 %v7178
      %7522 = vmatpush.bf16.msra.mxu0 %v7177
      %7523 = vmatpush.bf16.msra.mxu0 %v7176
      %7524 = vmatpush.bf16.msra.mxu0 %v7175
      %7525 = vmatpush.bf16.msra.mxu0 %v7174
      %7526 = vmatmul.bf16.gmra.mxu0 %v7349
      %v7527 = vpop.f32.mrf.mxu0
      %v7528 = vadd.f32 %v7474, %v7527
      %v7529 = vpop.f32.mrf.mxu0
      %v7530 = vadd.f32 %v7476, %v7529
      %7531 = vmatmul.bf16.gmra.mxu0 %v7354
      %v7532 = vpop.f32.mrf.mxu0
      %v7533 = vadd.f32 %v7479, %v7532
      %v7534 = vpop.f32.mrf.mxu0
      %v7535 = vadd.f32 %v7481, %v7534
      %7536 = vmatmul.bf16.gmra.mxu0 %v7359
      %v7537 = vpop.f32.mrf.mxu0
      %v7538 = vadd.f32 %v7484, %v7537
      %v7539 = vpop.f32.mrf.mxu0
      %v7540 = vadd.f32 %v7486, %v7539
      %7541 = vmatmul.bf16.gmra.mxu0 %v7364
      %v7542 = vpop.f32.mrf.mxu0
      %v7543 = vadd.f32 %v7489, %v7542
      %v7544 = vpop.f32.mrf.mxu0
      %v7545 = vadd.f32 %v7491, %v7544
      %7546 = vmatmul.bf16.gmra.mxu0 %v7369
      %v7547 = vpop.f32.mrf.mxu0
      %v7548 = vadd.f32 %v7494, %v7547
      %v7549 = vpop.f32.mrf.mxu0
      %v7550 = vadd.f32 %v7496, %v7549
      %7551 = vmatmul.bf16.gmra.mxu0 %v7374
      %v7552 = vpop.f32.mrf.mxu0
      %v7553 = vadd.f32 %v7499, %v7552
      %v7554 = vpop.f32.mrf.mxu0
      %v7555 = vadd.f32 %v7501, %v7554
      %7556 = vmatmul.bf16.gmra.mxu0 %v7379
      %v7557 = vpop.f32.mrf.mxu0
      %v7558 = vadd.f32 %v7504, %v7557
      %v7559 = vpop.f32.mrf.mxu0
      %v7560 = vadd.f32 %v7506, %v7559
      %7561 = vmatmul.bf16.gmra.mxu0 %v7384
      %v7562 = vpop.f32.mrf.mxu0
      %v7563 = vadd.f32 %v7509, %v7562
      %v7564 = vpop.f32.mrf.mxu0
      %v7565 = vadd.f32 %v7511, %v7564
      %7566 = vmatmul.bf16.gmra.mxu0 %v7389
      %v7567 = vpop.f32.mrf.mxu0
      %v7568 = vadd.f32 %v7514, %v7567
      %v7569 = vpop.f32.mrf.mxu0
      %v7570 = vadd.f32 %v7516, %v7569
      %7571 = vdwg.mxu0
      %7572 = vmatpush.bf16.msra.mxu0 %v7189
      %7573 = vmatpush.bf16.msra.mxu0 %v7188
      %7574 = vmatpush.bf16.msra.mxu0 %v7187
      %7575 = vmatpush.bf16.msra.mxu0 %v7186
      %7576 = vmatpush.bf16.msra.mxu0 %v7185
      %7577 = vmatpush.bf16.msra.mxu0 %v7184
      %7578 = vmatpush.bf16.msra.mxu0 %v7183
      %7579 = vmatpush.bf16.msra.mxu0 %v7182
      %7580 = vmatmul.bf16.gmra.mxu0 %v7350
      %v7581 = vpop.f32.mrf.mxu0
      %v7582 = vadd.f32 %v7528, %v7581
      %v7583 = vpop.f32.mrf.mxu0
      %v7584 = vadd.f32 %v7530, %v7583
      %7585 = vmatmul.bf16.gmra.mxu0 %v7355
      %v7586 = vpop.f32.mrf.mxu0
      %v7587 = vadd.f32 %v7533, %v7586
      %v7588 = vpop.f32.mrf.mxu0
      %v7589 = vadd.f32 %v7535, %v7588
      %7590 = vmatmul.bf16.gmra.mxu0 %v7360
      %v7591 = vpop.f32.mrf.mxu0
      %v7592 = vadd.f32 %v7538, %v7591
      %v7593 = vpop.f32.mrf.mxu0
      %v7594 = vadd.f32 %v7540, %v7593
      %7595 = vmatmul.bf16.gmra.mxu0 %v7365
      %v7596 = vpop.f32.mrf.mxu0
      %v7597 = vadd.f32 %v7543, %v7596
      %v7598 = vpop.f32.mrf.mxu0
      %v7599 = vadd.f32 %v7545, %v7598
      %7600 = vmatmul.bf16.gmra.mxu0 %v7370
      %v7601 = vpop.f32.mrf.mxu0
      %v7602 = vadd.f32 %v7548, %v7601
      %v7603 = vpop.f32.mrf.mxu0
      %v7604 = vadd.f32 %v7550, %v7603
      %7605 = vmatmul.bf16.gmra.mxu0 %v7375
      %v7606 = vpop.f32.mrf.mxu0
      %v7607 = vadd.f32 %v7553, %v7606
      %v7608 = vpop.f32.mrf.mxu0
      %v7609 = vadd.f32 %v7555, %v7608
      %7610 = vmatmul.bf16.gmra.mxu0 %v7380
      %v7611 = vpop.f32.mrf.mxu0
      %v7612 = vadd.f32 %v7558, %v7611
      %v7613 = vpop.f32.mrf.mxu0
      %v7614 = vadd.f32 %v7560, %v7613
      %7615 = vmatmul.bf16.gmra.mxu0 %v7385
      %v7616 = vpop.f32.mrf.mxu0
      %v7617 = vadd.f32 %v7563, %v7616
      %v7618 = vpop.f32.mrf.mxu0
      %v7619 = vadd.f32 %v7565, %v7618
      %7620 = vmatmul.bf16.gmra.mxu0 %v7390
      %v7621 = vpop.f32.mrf.mxu0
      %v7622 = vadd.f32 %v7568, %v7621
      %v7623 = vpop.f32.mrf.mxu0
      %v7624 = vadd.f32 %v7570, %v7623
      %7625 = vdwg.mxu0
      %7626 = vmatpush.bf16.msra.mxu0 %v7197
      %7627 = vmatpush.bf16.msra.mxu0 %v7196
      %7628 = vmatpush.bf16.msra.mxu0 %v7195
      %7629 = vmatpush.bf16.msra.mxu0 %v7194
      %7630 = vmatpush.bf16.msra.mxu0 %v7193
      %7631 = vmatpush.bf16.msra.mxu0 %v7192
      %7632 = vmatpush.bf16.msra.mxu0 %v7191
      %7633 = vmatpush.bf16.msra.mxu0 %v7190
      %7634 = vmatmul.bf16.gmra.mxu0 %v7351
      %v7635 = vpop.f32.mrf.mxu0
      %v7636 = vadd.f32 %v7582, %v7635
      %v7637 = vpop.f32.mrf.mxu0
      %v7638 = vadd.f32 %v7584, %v7637
      %7639 = vmatmul.bf16.gmra.mxu0 %v7356
      %v7640 = vpop.f32.mrf.mxu0
      %v7641 = vadd.f32 %v7587, %v7640
      %v7642 = vpop.f32.mrf.mxu0
      %v7643 = vadd.f32 %v7589, %v7642
      %7644 = vmatmul.bf16.gmra.mxu0 %v7361
      %v7645 = vpop.f32.mrf.mxu0
      %v7646 = vadd.f32 %v7592, %v7645
      %v7647 = vpop.f32.mrf.mxu0
      %v7648 = vadd.f32 %v7594, %v7647
      %7649 = vmatmul.bf16.gmra.mxu0 %v7366
      %v7650 = vpop.f32.mrf.mxu0
      %v7651 = vadd.f32 %v7597, %v7650
      %v7652 = vpop.f32.mrf.mxu0
      %v7653 = vadd.f32 %v7599, %v7652
      %7654 = vmatmul.bf16.gmra.mxu0 %v7371
      %v7655 = vpop.f32.mrf.mxu0
      %v7656 = vadd.f32 %v7602, %v7655
      %v7657 = vpop.f32.mrf.mxu0
      %v7658 = vadd.f32 %v7604, %v7657
      %7659 = vmatmul.bf16.gmra.mxu0 %v7376
      %v7660 = vpop.f32.mrf.mxu0
      %v7661 = vadd.f32 %v7607, %v7660
      %v7662 = vpop.f32.mrf.mxu0
      %v7663 = vadd.f32 %v7609, %v7662
      %7664 = vmatmul.bf16.gmra.mxu0 %v7381
      %v7665 = vpop.f32.mrf.mxu0
      %v7666 = vadd.f32 %v7612, %v7665
      %v7667 = vpop.f32.mrf.mxu0
      %v7668 = vadd.f32 %v7614, %v7667
      %7669 = vmatmul.bf16.gmra.mxu0 %v7386
      %v7670 = vpop.f32.mrf.mxu0
      %v7671 = vadd.f32 %v7617, %v7670
      %v7672 = vpop.f32.mrf.mxu0
      %v7673 = vadd.f32 %v7619, %v7672
      %7674 = vmatmul.bf16.gmra.mxu0 %v7391
      %v7675 = vpop.f32.mrf.mxu0
      %v7676 = vadd.f32 %v7622, %v7675
      %v7677 = vpop.f32.mrf.mxu0
      %v7678 = vadd.f32 %v7624, %v7677
      %7679 = vdwg.mxu0
      %7680 = vmatpush.bf16.msra.mxu0 0
      %7681 = vmatpush.bf16.msra.mxu0 0
      %7682 = vmatpush.bf16.msra.mxu0 %v7462
      %7683 = vmatpush.bf16.msra.mxu0 %v7202
      %7684 = vmatpush.bf16.msra.mxu0 %v7201
      %7685 = vmatpush.bf16.msra.mxu0 %v7200
      %7686 = vmatpush.bf16.msra.mxu0 %v7199
      %7687 = vmatpush.bf16.msra.mxu0 %v7198
      %7688 = vmatmul.bf16.gmra.mxu0 %v7431
      %v7689 = vpop.f32.mrf.mxu0
      %v7690 = vadd.f32 %v7636, %v7689
      %v7691 = vpop.f32.mrf.mxu0
      %v7692 = vadd.f32 %v7638, %v7691
      %7693 = vmatmul.bf16.gmra.mxu0 %v7434
      %v7694 = vpop.f32.mrf.mxu0
      %v7695 = vadd.f32 %v7641, %v7694
      %v7696 = vpop.f32.mrf.mxu0
      %v7697 = vadd.f32 %v7643, %v7696
      %7698 = vmatmul.bf16.gmra.mxu0 %v7437
      %v7699 = vpop.f32.mrf.mxu0
      %v7700 = vadd.f32 %v7646, %v7699
      %v7701 = vpop.f32.mrf.mxu0
      %v7702 = vadd.f32 %v7648, %v7701
      %7703 = vmatmul.bf16.gmra.mxu0 %v7440
      %v7704 = vpop.f32.mrf.mxu0
      %v7705 = vadd.f32 %v7651, %v7704
      %v7706 = vpop.f32.mrf.mxu0
      %v7707 = vadd.f32 %v7653, %v7706
      %7708 = vmatmul.bf16.gmra.mxu0 %v7443
      %v7709 = vpop.f32.mrf.mxu0
      %v7710 = vadd.f32 %v7656, %v7709
      %v7711 = vpop.f32.mrf.mxu0
      %v7712 = vadd.f32 %v7658, %v7711
      %7713 = vmatmul.bf16.gmra.mxu0 %v7446
      %v7714 = vpop.f32.mrf.mxu0
      %v7715 = vadd.f32 %v7661, %v7714
      %v7716 = vpop.f32.mrf.mxu0
      %v7717 = vadd.f32 %v7663, %v7716
      %7718 = vmatmul.bf16.gmra.mxu0 %v7449
      %v7719 = vpop.f32.mrf.mxu0
      %v7720 = vadd.f32 %v7666, %v7719
      %v7721 = vpop.f32.mrf.mxu0
      %v7722 = vadd.f32 %v7668, %v7721
      %7723 = vmatmul.bf16.gmra.mxu0 %v7452
      %v7724 = vpop.f32.mrf.mxu0
      %v7725 = vadd.f32 %v7671, %v7724
      %v7726 = vpop.f32.mrf.mxu0
      %v7727 = vadd.f32 %v7673, %v7726
      %7728 = vmatmul.bf16.gmra.mxu0 %v7455
      %v7729 = vpop.f32.mrf.mxu0
      %v7730 = vadd.f32 %v7676, %v7729
      %v7731 = vpop.f32.mrf.mxu0
      %v7732 = vadd.f32 %v7678, %v7731
      %7733 = vdwg.mxu0
      %v7734 = vpack.c.bf16 %v7690, %v7690
      %v7735 = vpack.c.bf16 %v7692, %v7692
      %v7736 = vpack.c.bf16 %v7695, %v7695
      %v7737 = vpack.c.bf16 %v7697, %v7697
      %v7738 = vpack.c.bf16 %v7700, %v7700
      %v7739 = vpack.c.bf16 %v7702, %v7702
      %v7740 = vpack.c.bf16 %v7705, %v7705
      %v7741 = vpack.c.bf16 %v7707, %v7707
      %v7742 = vpack.c.bf16 %v7710, %v7710
      %v7743 = vpack.c.bf16 %v7712, %v7712
      %v7744 = vpack.c.bf16 %v7715, %v7715
      %v7745 = vpack.c.bf16 %v7717, %v7717
      %v7746 = vpack.c.bf16 %v7720, %v7720
      %v7747 = vpack.c.bf16 %v7722, %v7722
      %v7748 = vpack.c.bf16 %v7725, %v7725
      %v7749 = vpack.c.bf16 %v7727, %v7727
      %v7750 = vpack.c.bf16 %v7730, %v7730
      %v7751 = vpack.c.bf16 %v7732, %v7732
      %vm7752 = vcmask 257024
      %7753 = vst.msk [vmem:[#allocation3] sm:$0xf] %vm7752, %v7734
      %7754 = vst.msk [vmem:[#allocation3 + $0x4] sm:$0xf] %vm7752, %v7735
      %7755 = vst.msk [vmem:[#allocation3 + $0x8] sm:$0xf] %vm7752, %v7736
      %7756 = vst.msk [vmem:[#allocation3 + $0xc] sm:$0xf] %vm7752, %v7737
      %7757 = vst.msk [vmem:[#allocation3 + $0x10] sm:$0xf] %vm7752, %v7738
      %7758 = vst.msk [vmem:[#allocation3 + $0x14] sm:$0xf] %vm7752, %v7739
      %7759 = vst.msk [vmem:[#allocation3 + $0x18] sm:$0xf] %vm7752, %v7740
      %7760 = vst.msk [vmem:[#allocation3 + $0x1c] sm:$0xf] %vm7752, %v7741
      %7761 = vst.msk [vmem:[#allocation3 + $0x20] sm:$0xf] %vm7752, %v7742
      %7762 = vst.msk [vmem:[#allocation3 + $0x24] sm:$0xf] %vm7752, %v7743
      %7763 = vst.msk [vmem:[#allocation3 + $0x28] sm:$0xf] %vm7752, %v7744
      %7764 = vst.msk [vmem:[#allocation3 + $0x2c] sm:$0xf] %vm7752, %v7745
      %7765 = vst.msk [vmem:[#allocation3 + $0x30] sm:$0xf] %vm7752, %v7746
      %7766 = vst.msk [vmem:[#allocation3 + $0x34] sm:$0xf] %vm7752, %v7747
      %7767 = vst.msk [vmem:[#allocation3 + $0x38] sm:$0xf] %vm7752, %v7748
      %7768 = vst.msk [vmem:[#allocation3 + $0x3c] sm:$0xf] %vm7752, %v7749
      %7769 = vst.msk [vmem:[#allocation3 + $0x40] sm:$0xf] %vm7752, %v7750
      %7770 = vst.msk [vmem:[#allocation3 + $0x44] sm:$0xf] %vm7752, %v7751
      %v7771 = vld [vmem:[#allocation3] sm:$0xf]
      %v7772 = vld [vmem:[#allocation3 + $0x4] sm:$0xf]
      %v7773 = vld [vmem:[#allocation3 + $0x8] sm:$0xf]
      %v7774 = vld [vmem:[#allocation3 + $0xc] sm:$0xf]
      %v7775 = vld [vmem:[#allocation3 + $0x10] sm:$0xf]
      %v7776 = vld [vmem:[#allocation3 + $0x14] sm:$0xf]
      %v7777 = vld [vmem:[#allocation3 + $0x18] sm:$0xf]
      %v7778 = vld [vmem:[#allocation3 + $0x1c] sm:$0xf]
      %v7779 = vld [vmem:[#allocation3 + $0x20] sm:$0xf]
      %v7780 = vld [vmem:[#allocation3 + $0x24] sm:$0xf]
      %v7781 = vld [vmem:[#allocation3 + $0x28] sm:$0xf]
      %v7782 = vld [vmem:[#allocation3 + $0x2c] sm:$0xf]
      %v7783 = vld [vmem:[#allocation3 + $0x30] sm:$0xf]
      %v7784 = vld [vmem:[#allocation3 + $0x34] sm:$0xf]
      %v7785 = vld [vmem:[#allocation3 + $0x38] sm:$0x7]
      %v7786 = vld [vmem:[%s4] sm:$0xf]
      %v7787 = vld [vmem:[%s4 + $0x4] sm:$0xf]
      %v7788 = vld [vmem:[%s4 + $0x8] sm:$0xf]
      %v7789 = vld [vmem:[%s4 + $0xc] sm:$0xf]
      %v7790 = vld [vmem:[#allocation3 + $0x38] sm:$0xf]
      %s7791 = scalar_lea.vmem %s4, 16
      %v7792 = vld [vmem:[%s7791] sm:$0xf]
      %v7793 = vld [vmem:[%s7791 + $0x4] sm:$0xf]
      %v7794 = vld [vmem:[%s7791 + $0x8] sm:$0xf]
      %v7795 = vld [vmem:[%s7791 + $0xc] sm:$0xf]
      %v7811 = vunpack.c.l.b16 %v7771
      %v7812 = vunpack.c.l.b16 %v7772
      %v7813 = vunpack.c.l.b16 %v7773
      %v7814 = vunpack.c.l.b16 %v7774
      %v7815 = vunpack.c.l.b16 %v7775
      %v7816 = vunpack.c.l.b16 %v7776
      %v7817 = vunpack.c.l.b16 %v7777
      %v7818 = vunpack.c.l.b16 %v7778
      %v7819 = vunpack.c.l.b16 %v7779
      %v7820 = vunpack.c.l.b16 %v7780
      %v7821 = vunpack.c.l.b16 %v7781
      %v7822 = vunpack.c.l.b16 %v7782
      %v7823 = vunpack.c.l.b16 %v7783
      %v7824 = vunpack.c.l.b16 %v7784
      %v7825 = vunpack.c.l.b16 %v7790
      %v7826 = vpack.c.b16 %v7812, %v7811
      %v7827 = vpack.c.b16 %v7814, %v7813
      %v7828 = vpack.c.b16 %v7816, %v7815
      %v7829 = vpack.c.b16 %v7818, %v7817
      %v7830 = vpack.c.b16 %v7820, %v7819
      %v7831 = vpack.c.b16 %v7822, %v7821
      %v7832 = vpack.c.b16 %v7824, %v7823
      %v7833 = vpack.c.b16 %v7825, %v7825
      %v7835 = vshrl.u32 %v7826, 16
      %v7837 = vshll.u32 %v7826, 16
      %v7839 = vrot.slane %v7837, 1
      %v7840 = vor.u32 %v7835, %v7839
      %v7842 = vshll.u32 %v7827, 16
      %v7844 = vrot.slane %v7842, 1
      %v7845 = vsel %vm617, %v7840, %v7844
      %v7846 = vshrl.u32 %v7827, 16
      %v7848 = vor.u32 %v7846, %v7844
      %v7850 = vshll.u32 %v7828, 16
      %v7852 = vrot.slane %v7850, 1
      %v7853 = vsel %vm617, %v7848, %v7852
      %v7854 = vshrl.u32 %v7828, 16
      %v7856 = vor.u32 %v7854, %v7852
      %v7858 = vshll.u32 %v7829, 16
      %v7860 = vrot.slane %v7858, 1
      %v7861 = vsel %vm617, %v7856, %v7860
      %v7862 = vshrl.u32 %v7829, 16
      %v7864 = vor.u32 %v7862, %v7860
      %v7866 = vshll.u32 %v7830, 16
      %v7868 = vrot.slane %v7866, 1
      %v7869 = vsel %vm617, %v7864, %v7868
      %v7870 = vshrl.u32 %v7830, 16
      %v7872 = vor.u32 %v7870, %v7868
      %v7874 = vshll.u32 %v7831, 16
      %v7876 = vrot.slane %v7874, 1
      %v7877 = vsel %vm617, %v7872, %v7876
      %v7878 = vshrl.u32 %v7831, 16
      %v7880 = vor.u32 %v7878, %v7876
      %v7882 = vshll.u32 %v7832, 16
      %v7884 = vrot.slane %v7882, 1
      %v7885 = vsel %vm617, %v7880, %v7884
      %v7886 = vshrl.u32 %v7832, 16
      %v7888 = vor.u32 %v7886, %v7884
      %v7890 = vshll.u32 %v7833, 16
      %v7892 = vrot.slane %v7890, 1
      %v7893 = vsel %vm617, %v7888, %v7892
      %v7894 = vshrl.u32 %v7833, 16
      %v7896 = vor.u32 %v7894, %v7892
      %v7901 = vunpack.c.l.b16 %v7792
      %v7902 = vunpack.c.l.b16 %v7793
      %v7903 = vunpack.c.l.b16 %v7794
      %v7904 = vunpack.c.l.b16 %v7795
      %v7905 = vpack.c.b16 %v7902, %v7901
      %v7906 = vpack.c.b16 %v7904, %v7903
      %v7910 = vsel %vm941, %v7845, 0
      %v7913 = vsel %vm941, %v7853, 0
      %v7916 = vsel %vm941, %v7861, 0
      %v7919 = vsel %vm941, %v7869, 0
      %v7922 = vsel %vm941, %v7877, 0
      %v7925 = vsel %vm941, %v7885, 0
      %v7928 = vsel %vm941, %v7893, 0
      %v7931 = vsel %vm941, %v7896, 0
      %7933 = vmatpush.bf16.msra.mxu0 0
      %7934 = vmatpush.bf16.msra.mxu0 0
      %7935 = vmatpush.bf16.msra.mxu0 0
      %7936 = vmatpush.bf16.msra.mxu0 0
      %7937 = vmatpush.bf16.msra.mxu0 0
      %7938 = vmatpush.bf16.msra.mxu0 0
      %7939 = vmatpush.bf16.msra.mxu0 %v7906
      %7940 = vmatpush.bf16.msra.mxu0 %v7905
      %7941 = vmatmul.bf16.gmra.mxu0 %v7910
      %v7942 = vpop.f32.mrf.mxu0
      %v7943 = vadd.f32 0.0, %v7942
      %v7944 = vpop.f32.mrf.mxu0
      %v7945 = vadd.f32 0.0, %v7944
      %7946 = vmatmul.bf16.gmra.mxu0 %v7913
      %v7947 = vpop.f32.mrf.mxu0
      %v7948 = vadd.f32 0.0, %v7947
      %v7949 = vpop.f32.mrf.mxu0
      %v7950 = vadd.f32 0.0, %v7949
      %7951 = vmatmul.bf16.gmra.mxu0 %v7916
      %v7952 = vpop.f32.mrf.mxu0
      %v7953 = vadd.f32 0.0, %v7952
      %v7954 = vpop.f32.mrf.mxu0
      %v7955 = vadd.f32 0.0, %v7954
      %7956 = vmatmul.bf16.gmra.mxu0 %v7919
      %v7957 = vpop.f32.mrf.mxu0
      %v7958 = vadd.f32 0.0, %v7957
      %v7959 = vpop.f32.mrf.mxu0
      %v7960 = vadd.f32 0.0, %v7959
      %7961 = vmatmul.bf16.gmra.mxu0 %v7922
      %v7962 = vpop.f32.mrf.mxu0
      %v7963 = vadd.f32 0.0, %v7962
      %v7964 = vpop.f32.mrf.mxu0
      %v7965 = vadd.f32 0.0, %v7964
      %7966 = vmatmul.bf16.gmra.mxu0 %v7925
      %v7967 = vpop.f32.mrf.mxu0
      %v7968 = vadd.f32 0.0, %v7967
      %v7969 = vpop.f32.mrf.mxu0
      %v7970 = vadd.f32 0.0, %v7969
      %7971 = vmatmul.bf16.gmra.mxu0 %v7928
      %v7972 = vpop.f32.mrf.mxu0
      %v7973 = vadd.f32 0.0, %v7972
      %v7974 = vpop.f32.mrf.mxu0
      %v7975 = vadd.f32 0.0, %v7974
      %7976 = vmatmul.bf16.gmra.mxu0 %v7931
      %v7977 = vpop.f32.mrf.mxu0
      %v7978 = vadd.f32 0.0, %v7977
      %v7979 = vpop.f32.mrf.mxu0
      %7980 = vdwg.mxu0
      %v7982 = vunpack.c.l.b16 %v7785
      %v7983 = vpack.c.b16 %v7982, %v7982
      %v7988 = vunpack.c.l.b16 %v7786
      %v7989 = vunpack.c.l.b16 %v7787
      %v7990 = vunpack.c.l.b16 %v7788
      %v7991 = vunpack.c.l.b16 %v7789
      %v7992 = vpack.c.b16 %v7989, %v7988
      %v7993 = vpack.c.b16 %v7991, %v7990
      %v7996 = vsel %vm941, %v7826, 0
      %v7998 = vsel %vm941, %v7827, 0
      %v8000 = vsel %vm941, %v7828, 0
      %v8002 = vsel %vm941, %v7829, 0
      %v8004 = vsel %vm941, %v7830, 0
      %v8006 = vsel %vm941, %v7831, 0
      %v8008 = vsel %vm941, %v7832, 0
      %v8011 = vsel %vm941, %v7983, 0
      %8013 = vmatpush.bf16.msra.mxu0 0
      %8014 = vmatpush.bf16.msra.mxu0 0
      %8015 = vmatpush.bf16.msra.mxu0 0
      %8016 = vmatpush.bf16.msra.mxu0 0
      %8017 = vmatpush.bf16.msra.mxu0 0
      %8018 = vmatpush.bf16.msra.mxu0 0
      %8019 = vmatpush.bf16.msra.mxu0 %v7993
      %8020 = vmatpush.bf16.msra.mxu0 %v7992
      %8021 = vmatmul.bf16.gmra.mxu0 %v7996
      %v8022 = vpop.f32.mrf.mxu0
      %v8023 = vadd.f32 %v7943, %v8022
      %v8024 = vpop.f32.mrf.mxu0
      %v8025 = vadd.f32 %v7945, %v8024
      %8026 = vmatmul.bf16.gmra.mxu0 %v7998
      %v8027 = vpop.f32.mrf.mxu0
      %v8028 = vadd.f32 %v7948, %v8027
      %v8029 = vpop.f32.mrf.mxu0
      %v8030 = vadd.f32 %v7950, %v8029
      %8031 = vmatmul.bf16.gmra.mxu0 %v8000
      %v8032 = vpop.f32.mrf.mxu0
      %v8033 = vadd.f32 %v7953, %v8032
      %v8034 = vpop.f32.mrf.mxu0
      %v8035 = vadd.f32 %v7955, %v8034
      %8036 = vmatmul.bf16.gmra.mxu0 %v8002
      %v8037 = vpop.f32.mrf.mxu0
      %v8038 = vadd.f32 %v7958, %v8037
      %v8039 = vpop.f32.mrf.mxu0
      %v8040 = vadd.f32 %v7960, %v8039
      %8041 = vmatmul.bf16.gmra.mxu0 %v8004
      %v8042 = vpop.f32.mrf.mxu0
      %v8043 = vadd.f32 %v7963, %v8042
      %v8044 = vpop.f32.mrf.mxu0
      %v8045 = vadd.f32 %v7965, %v8044
      %8046 = vmatmul.bf16.gmra.mxu0 %v8006
      %v8047 = vpop.f32.mrf.mxu0
      %v8048 = vadd.f32 %v7968, %v8047
      %v8049 = vpop.f32.mrf.mxu0
      %v8050 = vadd.f32 %v7970, %v8049
      %8051 = vmatmul.bf16.gmra.mxu0 %v8008
      %v8052 = vpop.f32.mrf.mxu0
      %v8053 = vadd.f32 %v7973, %v8052
      %v8054 = vpop.f32.mrf.mxu0
      %v8055 = vadd.f32 %v7975, %v8054
      %8056 = vmatmul.bf16.gmra.mxu0 %v8011
      %v8057 = vpop.f32.mrf.mxu0
      %v8058 = vadd.f32 %v7978, %v8057
      %v8059 = vpop.f32.mrf.mxu0
      %8060 = vdwg.mxu0
      %v8061 = vld [vmem:[#allocation3] sm:$0xe]
      %s8062 = scalar_lea.vmem %s4, 32
      %v8063 = vld [vmem:[%s8062] sm:$0xf]
      %v8064 = vld [vmem:[%s8062 + $0x4] sm:$0xf]
      %v8065 = vld [vmem:[%s8062 + $0x8] sm:$0xf]
      %v8066 = vld [vmem:[%s8062 + $0xc] sm:$0xf]
      %v8068 = vunpack.c.l.b16 %v8061
      %v8069 = vpack.c.b16 %v7812, %v8068
      %v8070 = vrot.slane %v8069, 1
      %v8071 = vrot.slane %v7827, 1
      %v8072 = vsel %vm1570, %v8070, %v8071
      %v8073 = vrot.slane %v7828, 1
      %v8074 = vsel %vm1570, %v8071, %v8073
      %v8075 = vrot.slane %v7829, 1
      %v8076 = vsel %vm1570, %v8073, %v8075
      %v8077 = vrot.slane %v7830, 1
      %v8078 = vsel %vm1570, %v8075, %v8077
      %v8079 = vrot.slane %v7831, 1
      %v8080 = vsel %vm1570, %v8077, %v8079
      %v8081 = vrot.slane %v7832, 1
      %v8082 = vsel %vm1570, %v8079, %v8081
      %v8083 = vrot.slane %v7833, 1
      %v8084 = vsel %vm1570, %v8081, %v8083
      %v8089 = vunpack.c.l.b16 %v8063
      %v8090 = vunpack.c.l.b16 %v8064
      %v8091 = vunpack.c.l.b16 %v8065
      %v8092 = vunpack.c.l.b16 %v8066
      %v8093 = vpack.c.b16 %v8090, %v8089
      %v8094 = vpack.c.b16 %v8092, %v8091
      %v8098 = vsel %vm941, %v8072, 0
      %v8101 = vsel %vm941, %v8074, 0
      %v8104 = vsel %vm941, %v8076, 0
      %v8107 = vsel %vm941, %v8078, 0
      %v8110 = vsel %vm941, %v8080, 0
      %v8113 = vsel %vm941, %v8082, 0
      %v8116 = vsel %vm941, %v8084, 0
      %v8119 = vsel %vm941, %v8083, 0
      %8121 = vmatpush.bf16.msra.mxu0 0
      %8122 = vmatpush.bf16.msra.mxu0 0
      %8123 = vmatpush.bf16.msra.mxu0 0
      %8124 = vmatpush.bf16.msra.mxu0 0
      %8125 = vmatpush.bf16.msra.mxu0 0
      %8126 = vmatpush.bf16.msra.mxu0 0
      %8127 = vmatpush.bf16.msra.mxu0 %v8094
      %8128 = vmatpush.bf16.msra.mxu0 %v8093
      %8129 = vmatmul.bf16.gmra.mxu0 %v8098
      %v8130 = vpop.f32.mrf.mxu0
      %v8131 = vadd.f32 0.0, %v8130
      %v8132 = vpop.f32.mrf.mxu0
      %v8133 = vadd.f32 0.0, %v8132
      %8134 = vmatmul.bf16.gmra.mxu0 %v8101
      %v8135 = vpop.f32.mrf.mxu0
      %v8136 = vadd.f32 0.0, %v8135
      %v8137 = vpop.f32.mrf.mxu0
      %v8138 = vadd.f32 0.0, %v8137
      %8139 = vmatmul.bf16.gmra.mxu0 %v8104
      %v8140 = vpop.f32.mrf.mxu0
      %v8141 = vadd.f32 0.0, %v8140
      %v8142 = vpop.f32.mrf.mxu0
      %v8143 = vadd.f32 0.0, %v8142
      %8144 = vmatmul.bf16.gmra.mxu0 %v8107
      %v8145 = vpop.f32.mrf.mxu0
      %v8146 = vadd.f32 0.0, %v8145
      %v8147 = vpop.f32.mrf.mxu0
      %v8148 = vadd.f32 0.0, %v8147
      %8149 = vmatmul.bf16.gmra.mxu0 %v8110
      %v8150 = vpop.f32.mrf.mxu0
      %v8151 = vadd.f32 0.0, %v8150
      %v8152 = vpop.f32.mrf.mxu0
      %v8153 = vadd.f32 0.0, %v8152
      %8154 = vmatmul.bf16.gmra.mxu0 %v8113
      %v8155 = vpop.f32.mrf.mxu0
      %v8156 = vadd.f32 0.0, %v8155
      %v8157 = vpop.f32.mrf.mxu0
      %v8158 = vadd.f32 0.0, %v8157
      %8159 = vmatmul.bf16.gmra.mxu0 %v8116
      %v8160 = vpop.f32.mrf.mxu0
      %v8161 = vadd.f32 0.0, %v8160
      %v8162 = vpop.f32.mrf.mxu0
      %v8163 = vadd.f32 0.0, %v8162
      %8164 = vmatmul.bf16.gmra.mxu0 %v8119
      %v8165 = vpop.f32.mrf.mxu0
      %v8166 = vadd.f32 0.0, %v8165
      %v8167 = vpop.f32.mrf.mxu0
      %8168 = vdwg.mxu0
      %v8169 = vadd.f32 %v8023, %v8131
      %v8170 = vadd.f32 %v8025, %v8133
      %v8171 = vadd.f32 %v8028, %v8136
      %v8172 = vadd.f32 %v8030, %v8138
      %v8173 = vadd.f32 %v8033, %v8141
      %v8174 = vadd.f32 %v8035, %v8143
      %v8175 = vadd.f32 %v8038, %v8146
      %v8176 = vadd.f32 %v8040, %v8148
      %v8177 = vadd.f32 %v8043, %v8151
      %v8178 = vadd.f32 %v8045, %v8153
      %v8179 = vadd.f32 %v8048, %v8156
      %v8180 = vadd.f32 %v8050, %v8158
      %v8181 = vadd.f32 %v8053, %v8161
      %v8182 = vadd.f32 %v8055, %v8163
      %v8183 = vadd.f32 %v8058, %v8166
      %v8184 = vld [vmem:[#allocation3 + $0x4] sm:$0xc]
      %v8185 = vld [vmem:[#allocation3 + $0x8] sm:$0xf]
      %v8186 = vld [vmem:[#allocation3 + $0xc] sm:$0xf]
      %v8187 = vld [vmem:[#allocation3 + $0x10] sm:$0xf]
      %v8188 = vld [vmem:[#allocation3 + $0x14] sm:$0xf]
      %v8189 = vld [vmem:[#allocation3 + $0x18] sm:$0xf]
      %v8190 = vld [vmem:[#allocation3 + $0x1c] sm:$0xf]
      %v8191 = vld [vmem:[#allocation3 + $0x20] sm:$0xf]
      %v8192 = vld [vmem:[#allocation3 + $0x24] sm:$0xf]
      %v8193 = vld [vmem:[#allocation3 + $0x28] sm:$0xf]
      %v8194 = vld [vmem:[#allocation3 + $0x2c] sm:$0xf]
      %v8195 = vld [vmem:[#allocation3 + $0x30] sm:$0xf]
      %v8196 = vld [vmem:[#allocation3 + $0x34] sm:$0xf]
      %v8197 = vld [vmem:[#allocation3 + $0x38] sm:$0xf]
      %v8198 = vld [vmem:[#allocation3 + $0x3c] sm:$0xf]
      %v8199 = vld [vmem:[#allocation3 + $0x40] sm:$0x1]
      %s8200 = scalar_lea.vmem %s4, 48
      %v8201 = vld [vmem:[%s8200] sm:$0xf]
      %v8202 = vld [vmem:[%s8200 + $0x4] sm:$0xf]
      %v8203 = vld [vmem:[%s8200 + $0x8] sm:$0xf]
      %v8204 = vld [vmem:[%s8200 + $0xc] sm:$0xf]
      %v8221 = vunpack.c.l.b16 %v8184
      %v8222 = vunpack.c.l.b16 %v8185
      %v8223 = vunpack.c.l.b16 %v8186
      %v8224 = vunpack.c.l.b16 %v8187
      %v8225 = vunpack.c.l.b16 %v8188
      %v8226 = vunpack.c.l.b16 %v8189
      %v8227 = vunpack.c.l.b16 %v8190
      %v8228 = vunpack.c.l.b16 %v8191
      %v8229 = vunpack.c.l.b16 %v8192
      %v8230 = vunpack.c.l.b16 %v8193
      %v8231 = vunpack.c.l.b16 %v8194
      %v8232 = vunpack.c.l.b16 %v8195
      %v8233 = vunpack.c.l.b16 %v8196
      %v8234 = vunpack.c.l.b16 %v8197
      %v8235 = vunpack.c.l.b16 %v8198
      %v8236 = vunpack.c.l.b16 %v8199
      %v8237 = vpack.c.b16 %v8222, %v8221
      %v8238 = vpack.c.b16 %v8224, %v8223
      %v8239 = vpack.c.b16 %v8226, %v8225
      %v8240 = vpack.c.b16 %v8228, %v8227
      %v8241 = vpack.c.b16 %v8230, %v8229
      %v8242 = vpack.c.b16 %v8232, %v8231
      %v8243 = vpack.c.b16 %v8234, %v8233
      %v8244 = vpack.c.b16 %v8236, %v8235
      %v8245 = vrot.slane %v8237, 2
      %v8246 = vrot.slane %v8238, 2
      %v8247 = vsel %vm3883, %v8245, %v8246
      %v8248 = vrot.slane %v8239, 2
      %v8249 = vsel %vm3883, %v8246, %v8248
      %v8250 = vrot.slane %v8240, 2
      %v8251 = vsel %vm3883, %v8248, %v8250
      %v8252 = vrot.slane %v8241, 2
      %v8253 = vsel %vm3883, %v8250, %v8252
      %v8254 = vrot.slane %v8242, 2
      %v8255 = vsel %vm3883, %v8252, %v8254
      %v8256 = vrot.slane %v8243, 2
      %v8257 = vsel %vm3883, %v8254, %v8256
      %v8258 = vrot.slane %v8244, 2
      %v8259 = vsel %vm3883, %v8256, %v8258
      %v8264 = vunpack.c.l.b16 %v8201
      %v8265 = vunpack.c.l.b16 %v8202
      %v8266 = vunpack.c.l.b16 %v8203
      %v8267 = vunpack.c.l.b16 %v8204
      %v8268 = vpack.c.b16 %v8265, %v8264
      %v8269 = vpack.c.b16 %v8267, %v8266
      %v8273 = vsel %vm941, %v8247, 0
      %v8276 = vsel %vm941, %v8249, 0
      %v8279 = vsel %vm941, %v8251, 0
      %v8282 = vsel %vm941, %v8253, 0
      %v8285 = vsel %vm941, %v8255, 0
      %v8288 = vsel %vm941, %v8257, 0
      %v8291 = vsel %vm941, %v8259, 0
      %v8294 = vsel %vm941, %v8258, 0
      %8296 = vmatpush.bf16.msra.mxu0 0
      %8297 = vmatpush.bf16.msra.mxu0 0
      %8298 = vmatpush.bf16.msra.mxu0 0
      %8299 = vmatpush.bf16.msra.mxu0 0
      %8300 = vmatpush.bf16.msra.mxu0 0
      %8301 = vmatpush.bf16.msra.mxu0 0
      %8302 = vmatpush.bf16.msra.mxu0 %v8269
      %8303 = vmatpush.bf16.msra.mxu0 %v8268
      %8304 = vmatmul.bf16.gmra.mxu0 %v8273
      %v8305 = vpop.f32.mrf.mxu0
      %v8306 = vadd.f32 0.0, %v8305
      %v8307 = vpop.f32.mrf.mxu0
      %v8308 = vadd.f32 0.0, %v8307
      %8309 = vmatmul.bf16.gmra.mxu0 %v8276
      %v8310 = vpop.f32.mrf.mxu0
      %v8311 = vadd.f32 0.0, %v8310
      %v8312 = vpop.f32.mrf.mxu0
      %v8313 = vadd.f32 0.0, %v8312
      %8314 = vmatmul.bf16.gmra.mxu0 %v8279
      %v8315 = vpop.f32.mrf.mxu0
      %v8316 = vadd.f32 0.0, %v8315
      %v8317 = vpop.f32.mrf.mxu0
      %v8318 = vadd.f32 0.0, %v8317
      %8319 = vmatmul.bf16.gmra.mxu0 %v8282
      %v8320 = vpop.f32.mrf.mxu0
      %v8321 = vadd.f32 0.0, %v8320
      %v8322 = vpop.f32.mrf.mxu0
      %v8323 = vadd.f32 0.0, %v8322
      %8324 = vmatmul.bf16.gmra.mxu0 %v8285
      %v8325 = vpop.f32.mrf.mxu0
      %v8326 = vadd.f32 0.0, %v8325
      %v8327 = vpop.f32.mrf.mxu0
      %v8328 = vadd.f32 0.0, %v8327
      %8329 = vmatmul.bf16.gmra.mxu0 %v8288
      %v8330 = vpop.f32.mrf.mxu0
      %v8331 = vadd.f32 0.0, %v8330
      %v8332 = vpop.f32.mrf.mxu0
      %v8333 = vadd.f32 0.0, %v8332
      %8334 = vmatmul.bf16.gmra.mxu0 %v8291
      %v8335 = vpop.f32.mrf.mxu0
      %v8336 = vadd.f32 0.0, %v8335
      %v8337 = vpop.f32.mrf.mxu0
      %v8338 = vadd.f32 0.0, %v8337
      %8339 = vmatmul.bf16.gmra.mxu0 %v8294
      %v8340 = vpop.f32.mrf.mxu0
      %v8341 = vadd.f32 0.0, %v8340
      %v8342 = vpop.f32.mrf.mxu0
      %8343 = vdwg.mxu0
      %v8344 = vadd.f32 %v8169, %v8306
      %v8345 = vadd.f32 %v8170, %v8308
      %v8346 = vadd.f32 %v8171, %v8311
      %v8347 = vadd.f32 %v8172, %v8313
      %v8348 = vadd.f32 %v8173, %v8316
      %v8349 = vadd.f32 %v8174, %v8318
      %v8350 = vadd.f32 %v8175, %v8321
      %v8351 = vadd.f32 %v8176, %v8323
      %v8352 = vadd.f32 %v8177, %v8326
      %v8353 = vadd.f32 %v8178, %v8328
      %v8354 = vadd.f32 %v8179, %v8331
      %v8355 = vadd.f32 %v8180, %v8333
      %v8356 = vadd.f32 %v8181, %v8336
      %v8357 = vadd.f32 %v8182, %v8338
      %v8358 = vadd.f32 %v8183, %v8341
      %v8359 = vld [vmem:[#allocation3 + $0x40] sm:$0x3]
      %s8360 = scalar_lea.vmem %s4, 64
      %v8361 = vld [vmem:[%s8360] sm:$0xf]
      %v8362 = vld [vmem:[%s8360 + $0x4] sm:$0xf]
      %v8363 = vld [vmem:[%s8360 + $0x8] sm:$0xf]
      %v8364 = vld [vmem:[%s8360 + $0xc] sm:$0xf]
      %v8366 = vunpack.c.l.b16 %v8359
      %v8367 = vpack.c.b16 %v8366, %v8235
      %v8369 = vshrl.u32 %v8237, 16
      %v8371 = vrot.slane %v8369, 2
      %v8372 = vshll.u32 %v8237, 16
      %v8374 = vrot.slane %v8372, 3
      %v8375 = vor.u32 %v8371, %v8374
      %v8377 = vshrl.u32 %v8238, 16
      %v8379 = vrot.slane %v8377, 2
      %v8380 = vshll.u32 %v8238, 16
      %v8382 = vrot.slane %v8380, 3
      %v8383 = vor.u32 %v8379, %v8382
      %v8384 = vsel %vm5155, %v8375, %v8383
      %v8386 = vshrl.u32 %v8239, 16
      %v8388 = vrot.slane %v8386, 2
      %v8389 = vshll.u32 %v8239, 16
      %v8391 = vrot.slane %v8389, 3
      %v8392 = vor.u32 %v8388, %v8391
      %v8393 = vsel %vm5155, %v8383, %v8392
      %v8395 = vshrl.u32 %v8240, 16
      %v8397 = vrot.slane %v8395, 2
      %v8398 = vshll.u32 %v8240, 16
      %v8400 = vrot.slane %v8398, 3
      %v8401 = vor.u32 %v8397, %v8400
      %v8402 = vsel %vm5155, %v8392, %v8401
      %v8404 = vshrl.u32 %v8241, 16
      %v8406 = vrot.slane %v8404, 2
      %v8407 = vshll.u32 %v8241, 16
      %v8409 = vrot.slane %v8407, 3
      %v8410 = vor.u32 %v8406, %v8409
      %v8411 = vsel %vm5155, %v8401, %v8410
      %v8413 = vshrl.u32 %v8242, 16
      %v8415 = vrot.slane %v8413, 2
      %v8416 = vshll.u32 %v8242, 16
      %v8418 = vrot.slane %v8416, 3
      %v8419 = vor.u32 %v8415, %v8418
      %v8420 = vsel %vm5155, %v8410, %v8419
      %v8422 = vshrl.u32 %v8243, 16
      %v8424 = vrot.slane %v8422, 2
      %v8425 = vshll.u32 %v8243, 16
      %v8427 = vrot.slane %v8425, 3
      %v8428 = vor.u32 %v8424, %v8427
      %v8429 = vsel %vm5155, %v8419, %v8428
      %v8431 = vshrl.u32 %v8367, 16
      %v8433 = vrot.slane %v8431, 2
      %v8434 = vshll.u32 %v8367, 16
      %v8436 = vrot.slane %v8434, 3
      %v8437 = vor.u32 %v8433, %v8436
      %v8438 = vsel %vm5155, %v8428, %v8437
      %v8443 = vunpack.c.l.b16 %v8361
      %v8444 = vunpack.c.l.b16 %v8362
      %v8445 = vunpack.c.l.b16 %v8363
      %v8446 = vunpack.c.l.b16 %v8364
      %v8447 = vpack.c.b16 %v8444, %v8443
      %v8448 = vpack.c.b16 %v8446, %v8445
      %v8452 = vsel %vm941, %v8384, 0
      %v8455 = vsel %vm941, %v8393, 0
      %v8458 = vsel %vm941, %v8402, 0
      %v8461 = vsel %vm941, %v8411, 0
      %v8464 = vsel %vm941, %v8420, 0
      %v8467 = vsel %vm941, %v8429, 0
      %v8470 = vsel %vm941, %v8438, 0
      %v8473 = vsel %vm941, %v8437, 0
      %8475 = vmatpush.bf16.msra.mxu0 0
      %8476 = vmatpush.bf16.msra.mxu0 0
      %8477 = vmatpush.bf16.msra.mxu0 0
      %8478 = vmatpush.bf16.msra.mxu0 0
      %8479 = vmatpush.bf16.msra.mxu0 0
      %8480 = vmatpush.bf16.msra.mxu0 0
      %8481 = vmatpush.bf16.msra.mxu0 %v8448
      %8482 = vmatpush.bf16.msra.mxu0 %v8447
      %8483 = vmatmul.bf16.gmra.mxu0 %v8452
      %v8484 = vpop.f32.mrf.mxu0
      %v8485 = vadd.f32 0.0, %v8484
      %v8486 = vpop.f32.mrf.mxu0
      %v8487 = vadd.f32 0.0, %v8486
      %8488 = vmatmul.bf16.gmra.mxu0 %v8455
      %v8489 = vpop.f32.mrf.mxu0
      %v8490 = vadd.f32 0.0, %v8489
      %v8491 = vpop.f32.mrf.mxu0
      %v8492 = vadd.f32 0.0, %v8491
      %8493 = vmatmul.bf16.gmra.mxu0 %v8458
      %v8494 = vpop.f32.mrf.mxu0
      %v8495 = vadd.f32 0.0, %v8494
      %v8496 = vpop.f32.mrf.mxu0
      %v8497 = vadd.f32 0.0, %v8496
      %8498 = vmatmul.bf16.gmra.mxu0 %v8461
      %v8499 = vpop.f32.mrf.mxu0
      %v8500 = vadd.f32 0.0, %v8499
      %v8501 = vpop.f32.mrf.mxu0
      %v8502 = vadd.f32 0.0, %v8501
      %8503 = vmatmul.bf16.gmra.mxu0 %v8464
      %v8504 = vpop.f32.mrf.mxu0
      %v8505 = vadd.f32 0.0, %v8504
      %v8506 = vpop.f32.mrf.mxu0
      %v8507 = vadd.f32 0.0, %v8506
      %8508 = vmatmul.bf16.gmra.mxu0 %v8467
      %v8509 = vpop.f32.mrf.mxu0
      %v8510 = vadd.f32 0.0, %v8509
      %v8511 = vpop.f32.mrf.mxu0
      %v8512 = vadd.f32 0.0, %v8511
      %8513 = vmatmul.bf16.gmra.mxu0 %v8470
      %v8514 = vpop.f32.mrf.mxu0
      %v8515 = vadd.f32 0.0, %v8514
      %v8516 = vpop.f32.mrf.mxu0
      %v8517 = vadd.f32 0.0, %v8516
      %8518 = vmatmul.bf16.gmra.mxu0 %v8473
      %v8519 = vpop.f32.mrf.mxu0
      %v8520 = vadd.f32 0.0, %v8519
      %v8521 = vpop.f32.mrf.mxu0
      %8522 = vdwg.mxu0
      %v8523 = vadd.f32 %v8344, %v8485
      %v8524 = vadd.f32 %v8345, %v8487
      %v8525 = vadd.f32 %v8346, %v8490
      %v8526 = vadd.f32 %v8347, %v8492
      %v8527 = vadd.f32 %v8348, %v8495
      %v8528 = vadd.f32 %v8349, %v8497
      %v8529 = vadd.f32 %v8350, %v8500
      %v8530 = vadd.f32 %v8351, %v8502
      %v8531 = vadd.f32 %v8352, %v8505
      %v8532 = vadd.f32 %v8353, %v8507
      %v8533 = vadd.f32 %v8354, %v8510
      %v8534 = vadd.f32 %v8355, %v8512
      %v8535 = vadd.f32 %v8356, %v8515
      %v8536 = vadd.f32 %v8357, %v8517
      %v8537 = vadd.f32 %v8358, %v8520
      %v8538 = vld [vmem:[#allocation3 + $0x4] sm:$0x8]
      %s8539 = scalar_lea.vmem %s4, 80
      %v8540 = vld [vmem:[%s8539] sm:$0xf]
      %v8541 = vld [vmem:[%s8539 + $0x4] sm:$0xf]
      %v8542 = vld [vmem:[%s8539 + $0x8] sm:$0xf]
      %v8543 = vld [vmem:[%s8539 + $0xc] sm:$0xf]
      %v8545 = vunpack.c.l.b16 %v8538
      %v8546 = vpack.c.b16 %v8222, %v8545
      %v8547 = vrot.slane %v8546, 3
      %v8548 = vrot.slane %v8238, 3
      %v8549 = vsel %vm5935, %v8547, %v8548
      %v8550 = vrot.slane %v8239, 3
      %v8551 = vsel %vm5935, %v8548, %v8550
      %v8552 = vrot.slane %v8240, 3
      %v8553 = vsel %vm5935, %v8550, %v8552
      %v8554 = vrot.slane %v8241, 3
      %v8555 = vsel %vm5935, %v8552, %v8554
      %v8556 = vrot.slane %v8242, 3
      %v8557 = vsel %vm5935, %v8554, %v8556
      %v8558 = vrot.slane %v8243, 3
      %v8559 = vsel %vm5935, %v8556, %v8558
      %v8560 = vrot.slane %v8367, 3
      %v8561 = vsel %vm5935, %v8558, %v8560
      %v8566 = vunpack.c.l.b16 %v8540
      %v8567 = vunpack.c.l.b16 %v8541
      %v8568 = vunpack.c.l.b16 %v8542
      %v8569 = vunpack.c.l.b16 %v8543
      %v8570 = vpack.c.b16 %v8567, %v8566
      %v8571 = vpack.c.b16 %v8569, %v8568
      %v8575 = vsel %vm941, %v8549, 0
      %v8578 = vsel %vm941, %v8551, 0
      %v8581 = vsel %vm941, %v8553, 0
      %v8584 = vsel %vm941, %v8555, 0
      %v8587 = vsel %vm941, %v8557, 0
      %v8590 = vsel %vm941, %v8559, 0
      %v8593 = vsel %vm941, %v8561, 0
      %v8596 = vsel %vm941, %v8560, 0
      %8598 = vmatpush.bf16.msra.mxu0 0
      %8599 = vmatpush.bf16.msra.mxu0 0
      %8600 = vmatpush.bf16.msra.mxu0 0
      %8601 = vmatpush.bf16.msra.mxu0 0
      %8602 = vmatpush.bf16.msra.mxu0 0
      %8603 = vmatpush.bf16.msra.mxu0 0
      %8604 = vmatpush.bf16.msra.mxu0 %v8571
      %8605 = vmatpush.bf16.msra.mxu0 %v8570
      %8606 = vmatmul.bf16.gmra.mxu0 %v8575
      %v8607 = vpop.f32.mrf.mxu0
      %v8608 = vadd.f32 0.0, %v8607
      %v8609 = vpop.f32.mrf.mxu0
      %v8610 = vadd.f32 0.0, %v8609
      %8611 = vmatmul.bf16.gmra.mxu0 %v8578
      %v8612 = vpop.f32.mrf.mxu0
      %v8613 = vadd.f32 0.0, %v8612
      %v8614 = vpop.f32.mrf.mxu0
      %v8615 = vadd.f32 0.0, %v8614
      %8616 = vmatmul.bf16.gmra.mxu0 %v8581
      %v8617 = vpop.f32.mrf.mxu0
      %v8618 = vadd.f32 0.0, %v8617
      %v8619 = vpop.f32.mrf.mxu0
      %v8620 = vadd.f32 0.0, %v8619
      %8621 = vmatmul.bf16.gmra.mxu0 %v8584
      %v8622 = vpop.f32.mrf.mxu0
      %v8623 = vadd.f32 0.0, %v8622
      %v8624 = vpop.f32.mrf.mxu0
      %v8625 = vadd.f32 0.0, %v8624
      %8626 = vmatmul.bf16.gmra.mxu0 %v8587
      %v8627 = vpop.f32.mrf.mxu0
      %v8628 = vadd.f32 0.0, %v8627
      %v8629 = vpop.f32.mrf.mxu0
      %v8630 = vadd.f32 0.0, %v8629
      %8631 = vmatmul.bf16.gmra.mxu0 %v8590
      %v8632 = vpop.f32.mrf.mxu0
      %v8633 = vadd.f32 0.0, %v8632
      %v8634 = vpop.f32.mrf.mxu0
      %v8635 = vadd.f32 0.0, %v8634
      %8636 = vmatmul.bf16.gmra.mxu0 %v8593
      %v8637 = vpop.f32.mrf.mxu0
      %v8638 = vadd.f32 0.0, %v8637
      %v8639 = vpop.f32.mrf.mxu0
      %v8640 = vadd.f32 0.0, %v8639
      %8641 = vmatmul.bf16.gmra.mxu0 %v8596
      %v8642 = vpop.f32.mrf.mxu0
      %v8643 = vadd.f32 0.0, %v8642
      %v8644 = vpop.f32.mrf.mxu0
      %8645 = vdwg.mxu0
      %v8646 = vadd.f32 %v8523, %v8608
      %v8647 = vadd.f32 %v8524, %v8610
      %v8648 = vadd.f32 %v8525, %v8613
      %v8649 = vadd.f32 %v8526, %v8615
      %v8650 = vadd.f32 %v8527, %v8618
      %v8651 = vadd.f32 %v8528, %v8620
      %v8652 = vadd.f32 %v8529, %v8623
      %v8653 = vadd.f32 %v8530, %v8625
      %v8654 = vadd.f32 %v8531, %v8628
      %v8655 = vadd.f32 %v8532, %v8630
      %v8656 = vadd.f32 %v8533, %v8633
      %v8657 = vadd.f32 %v8534, %v8635
      %v8658 = vadd.f32 %v8535, %v8638
      %v8659 = vadd.f32 %v8536, %v8640
      %v8660 = vadd.f32 %v8537, %v8643
      %v8661 = vld [vmem:[#allocation3 + $0xc] sm:$0xf]
      %v8662 = vld [vmem:[#allocation3 + $0x10] sm:$0xf]
      %v8663 = vld [vmem:[#allocation3 + $0x14] sm:$0xf]
      %v8664 = vld [vmem:[#allocation3 + $0x18] sm:$0xf]
      %v8665 = vld [vmem:[#allocation3 + $0x1c] sm:$0xf]
      %v8666 = vld [vmem:[#allocation3 + $0x20] sm:$0xf]
      %v8667 = vld [vmem:[#allocation3 + $0x24] sm:$0xf]
      %v8668 = vld [vmem:[#allocation3 + $0x28] sm:$0xf]
      %v8669 = vld [vmem:[#allocation3 + $0x2c] sm:$0xf]
      %v8670 = vld [vmem:[#allocation3 + $0x30] sm:$0xf]
      %v8671 = vld [vmem:[#allocation3 + $0x34] sm:$0xf]
      %v8672 = vld [vmem:[#allocation3 + $0x38] sm:$0xf]
      %v8673 = vld [vmem:[#allocation3 + $0x3c] sm:$0xf]
      %v8674 = vld [vmem:[#allocation3 + $0x40] sm:$0xf]
      %v8675 = vld [vmem:[#allocation3 + $0x44] sm:$0x7]
      %s8676 = scalar_lea.vmem %s4, 96
      %v8677 = vld [vmem:[%s8676] sm:$0xf]
      %v8678 = vld [vmem:[%s8676 + $0x4] sm:$0xf]
      %v8679 = vld [vmem:[%s8676 + $0x8] sm:$0xf]
      %v8680 = vld [vmem:[%s8676 + $0xc] sm:$0xf]
      %v8696 = vunpack.c.l.b16 %v8661
      %v8697 = vunpack.c.l.b16 %v8662
      %v8698 = vunpack.c.l.b16 %v8663
      %v8699 = vunpack.c.l.b16 %v8664
      %v8700 = vunpack.c.l.b16 %v8665
      %v8701 = vunpack.c.l.b16 %v8666
      %v8702 = vunpack.c.l.b16 %v8667
      %v8703 = vunpack.c.l.b16 %v8668
      %v8704 = vunpack.c.l.b16 %v8669
      %v8705 = vunpack.c.l.b16 %v8670
      %v8706 = vunpack.c.l.b16 %v8671
      %v8707 = vunpack.c.l.b16 %v8672
      %v8708 = vunpack.c.l.b16 %v8673
      %v8709 = vunpack.c.l.b16 %v8674
      %v8710 = vunpack.c.l.b16 %v8675
      %v8711 = vpack.c.b16 %v8697, %v8696
      %v8712 = vpack.c.b16 %v8699, %v8698
      %v8713 = vpack.c.b16 %v8701, %v8700
      %v8714 = vpack.c.b16 %v8703, %v8702
      %v8715 = vpack.c.b16 %v8705, %v8704
      %v8716 = vpack.c.b16 %v8707, %v8706
      %v8717 = vpack.c.b16 %v8709, %v8708
      %v8718 = vpack.c.b16 %v8710, %v8710
      %v8723 = vunpack.c.l.b16 %v8677
      %v8724 = vunpack.c.l.b16 %v8678
      %v8725 = vunpack.c.l.b16 %v8679
      %v8726 = vunpack.c.l.b16 %v8680
      %v8727 = vpack.c.b16 %v8724, %v8723
      %v8728 = vpack.c.b16 %v8726, %v8725
      %v8732 = vsel %vm941, %v8711, 0
      %v8735 = vsel %vm941, %v8712, 0
      %v8738 = vsel %vm941, %v8713, 0
      %v8741 = vsel %vm941, %v8714, 0
      %v8744 = vsel %vm941, %v8715, 0
      %v8747 = vsel %vm941, %v8716, 0
      %v8750 = vsel %vm941, %v8717, 0
      %v8753 = vsel %vm941, %v8718, 0
      %8755 = vmatpush.bf16.msra.mxu0 0
      %8756 = vmatpush.bf16.msra.mxu0 0
      %8757 = vmatpush.bf16.msra.mxu0 0
      %8758 = vmatpush.bf16.msra.mxu0 0
      %8759 = vmatpush.bf16.msra.mxu0 0
      %8760 = vmatpush.bf16.msra.mxu0 0
      %8761 = vmatpush.bf16.msra.mxu0 %v8728
      %8762 = vmatpush.bf16.msra.mxu0 %v8727
      %8763 = vmatmul.bf16.gmra.mxu0 %v8732
      %v8764 = vpop.f32.mrf.mxu0
      %v8765 = vadd.f32 0.0, %v8764
      %v8766 = vpop.f32.mrf.mxu0
      %v8767 = vadd.f32 0.0, %v8766
      %8768 = vmatmul.bf16.gmra.mxu0 %v8735
      %v8769 = vpop.f32.mrf.mxu0
      %v8770 = vadd.f32 0.0, %v8769
      %v8771 = vpop.f32.mrf.mxu0
      %v8772 = vadd.f32 0.0, %v8771
      %8773 = vmatmul.bf16.gmra.mxu0 %v8738
      %v8774 = vpop.f32.mrf.mxu0
      %v8775 = vadd.f32 0.0, %v8774
      %v8776 = vpop.f32.mrf.mxu0
      %v8777 = vadd.f32 0.0, %v8776
      %8778 = vmatmul.bf16.gmra.mxu0 %v8741
      %v8779 = vpop.f32.mrf.mxu0
      %v8780 = vadd.f32 0.0, %v8779
      %v8781 = vpop.f32.mrf.mxu0
      %v8782 = vadd.f32 0.0, %v8781
      %8783 = vmatmul.bf16.gmra.mxu0 %v8744
      %v8784 = vpop.f32.mrf.mxu0
      %v8785 = vadd.f32 0.0, %v8784
      %v8786 = vpop.f32.mrf.mxu0
      %v8787 = vadd.f32 0.0, %v8786
      %8788 = vmatmul.bf16.gmra.mxu0 %v8747
      %v8789 = vpop.f32.mrf.mxu0
      %v8790 = vadd.f32 0.0, %v8789
      %v8791 = vpop.f32.mrf.mxu0
      %v8792 = vadd.f32 0.0, %v8791
      %8793 = vmatmul.bf16.gmra.mxu0 %v8750
      %v8794 = vpop.f32.mrf.mxu0
      %v8795 = vadd.f32 0.0, %v8794
      %v8796 = vpop.f32.mrf.mxu0
      %v8797 = vadd.f32 0.0, %v8796
      %8798 = vmatmul.bf16.gmra.mxu0 %v8753
      %v8799 = vpop.f32.mrf.mxu0
      %v8800 = vadd.f32 0.0, %v8799
      %v8801 = vpop.f32.mrf.mxu0
      %8802 = vdwg.mxu0
      %v8803 = vadd.f32 %v8646, %v8765
      %v8804 = vadd.f32 %v8647, %v8767
      %v8805 = vadd.f32 %v8648, %v8770
      %v8806 = vadd.f32 %v8649, %v8772
      %v8807 = vadd.f32 %v8650, %v8775
      %v8808 = vadd.f32 %v8651, %v8777
      %v8809 = vadd.f32 %v8652, %v8780
      %v8810 = vadd.f32 %v8653, %v8782
      %v8811 = vadd.f32 %v8654, %v8785
      %v8812 = vadd.f32 %v8655, %v8787
      %v8813 = vadd.f32 %v8656, %v8790
      %v8814 = vadd.f32 %v8657, %v8792
      %v8815 = vadd.f32 %v8658, %v8795
      %v8816 = vadd.f32 %v8659, %v8797
      %v8817 = vadd.f32 %v8660, %v8800
      %v8818 = vld [vmem:[#allocation3 + $0x44] sm:$0xf]
      %s8819 = scalar_lea.vmem %s4, 112
      %v8820 = vld [vmem:[%s8819] sm:$0xf]
      %v8821 = vld [vmem:[%s8819 + $0x4] sm:$0xf]
      %v8822 = vld [vmem:[%s8819 + $0x8] sm:$0xf]
      %v8823 = vld [vmem:[%s8819 + $0xc] sm:$0xf]
      %v8825 = vunpack.c.l.b16 %v8818
      %v8826 = vpack.c.b16 %v8825, %v8825
      %v8827 = vshrl.u32 %v8711, 16
      %v8829 = vshll.u32 %v8711, 16
      %v8831 = vrot.slane %v8829, 1
      %v8832 = vor.u32 %v8827, %v8831
      %v8833 = vshll.u32 %v8712, 16
      %v8835 = vrot.slane %v8833, 1
      %v8836 = vsel %vm617, %v8832, %v8835
      %v8837 = vshrl.u32 %v8712, 16
      %v8839 = vor.u32 %v8837, %v8835
      %v8840 = vshll.u32 %v8713, 16
      %v8842 = vrot.slane %v8840, 1
      %v8843 = vsel %vm617, %v8839, %v8842
      %v8844 = vshrl.u32 %v8713, 16
      %v8846 = vor.u32 %v8844, %v8842
      %v8847 = vshll.u32 %v8714, 16
      %v8849 = vrot.slane %v8847, 1
      %v8850 = vsel %vm617, %v8846, %v8849
      %v8851 = vshrl.u32 %v8714, 16
      %v8853 = vor.u32 %v8851, %v8849
      %v8854 = vshll.u32 %v8715, 16
      %v8856 = vrot.slane %v8854, 1
      %v8857 = vsel %vm617, %v8853, %v8856
      %v8858 = vshrl.u32 %v8715, 16
      %v8860 = vor.u32 %v8858, %v8856
      %v8861 = vshll.u32 %v8716, 16
      %v8863 = vrot.slane %v8861, 1
      %v8864 = vsel %vm617, %v8860, %v8863
      %v8865 = vshrl.u32 %v8716, 16
      %v8867 = vor.u32 %v8865, %v8863
      %v8868 = vshll.u32 %v8717, 16
      %v8870 = vrot.slane %v8868, 1
      %v8871 = vsel %vm617, %v8867, %v8870
      %v8872 = vshrl.u32 %v8717, 16
      %v8874 = vor.u32 %v8872, %v8870
      %v8876 = vshll.u32 %v8826, 16
      %v8878 = vrot.slane %v8876, 1
      %v8879 = vsel %vm617, %v8874, %v8878
      %v8880 = vshrl.u32 %v8826, 16
      %v8882 = vor.u32 %v8880, %v8878
      %v8887 = vunpack.c.l.b16 %v8820
      %v8888 = vunpack.c.l.b16 %v8821
      %v8889 = vunpack.c.l.b16 %v8822
      %v8890 = vunpack.c.l.b16 %v8823
      %v8891 = vpack.c.b16 %v8888, %v8887
      %v8892 = vpack.c.b16 %v8890, %v8889
      %v8896 = vsel %vm941, %v8836, 0
      %v8899 = vsel %vm941, %v8843, 0
      %v8902 = vsel %vm941, %v8850, 0
      %v8905 = vsel %vm941, %v8857, 0
      %v8908 = vsel %vm941, %v8864, 0
      %v8911 = vsel %vm941, %v8871, 0
      %v8914 = vsel %vm941, %v8879, 0
      %v8917 = vsel %vm941, %v8882, 0
      %8919 = vmatpush.bf16.msra.mxu0 0
      %8920 = vmatpush.bf16.msra.mxu0 0
      %8921 = vmatpush.bf16.msra.mxu0 0
      %8922 = vmatpush.bf16.msra.mxu0 0
      %8923 = vmatpush.bf16.msra.mxu0 0
      %8924 = vmatpush.bf16.msra.mxu0 0
      %8925 = vmatpush.bf16.msra.mxu0 %v8892
      %8926 = vmatpush.bf16.msra.mxu0 %v8891
      %8927 = vmatmul.bf16.gmra.mxu0 %v8896
      %v8928 = vpop.f32.mrf.mxu0
      %v8929 = vadd.f32 0.0, %v8928
      %v8930 = vpop.f32.mrf.mxu0
      %v8931 = vadd.f32 0.0, %v8930
      %8932 = vmatmul.bf16.gmra.mxu0 %v8899
      %v8933 = vpop.f32.mrf.mxu0
      %v8934 = vadd.f32 0.0, %v8933
      %v8935 = vpop.f32.mrf.mxu0
      %v8936 = vadd.f32 0.0, %v8935
      %8937 = vmatmul.bf16.gmra.mxu0 %v8902
      %v8938 = vpop.f32.mrf.mxu0
      %v8939 = vadd.f32 0.0, %v8938
      %v8940 = vpop.f32.mrf.mxu0
      %v8941 = vadd.f32 0.0, %v8940
      %8942 = vmatmul.bf16.gmra.mxu0 %v8905
      %v8943 = vpop.f32.mrf.mxu0
      %v8944 = vadd.f32 0.0, %v8943
      %v8945 = vpop.f32.mrf.mxu0
      %v8946 = vadd.f32 0.0, %v8945
      %8947 = vmatmul.bf16.gmra.mxu0 %v8908
      %v8948 = vpop.f32.mrf.mxu0
      %v8949 = vadd.f32 0.0, %v8948
      %v8950 = vpop.f32.mrf.mxu0
      %v8951 = vadd.f32 0.0, %v8950
      %8952 = vmatmul.bf16.gmra.mxu0 %v8911
      %v8953 = vpop.f32.mrf.mxu0
      %v8954 = vadd.f32 0.0, %v8953
      %v8955 = vpop.f32.mrf.mxu0
      %v8956 = vadd.f32 0.0, %v8955
      %8957 = vmatmul.bf16.gmra.mxu0 %v8914
      %v8958 = vpop.f32.mrf.mxu0
      %v8959 = vadd.f32 0.0, %v8958
      %v8960 = vpop.f32.mrf.mxu0
      %v8961 = vadd.f32 0.0, %v8960
      %8962 = vmatmul.bf16.gmra.mxu0 %v8917
      %v8963 = vpop.f32.mrf.mxu0
      %v8964 = vadd.f32 0.0, %v8963
      %v8965 = vpop.f32.mrf.mxu0
      %8966 = vdwg.mxu0
      %v8967 = vadd.f32 %v8803, %v8929
      %v8968 = vadd.f32 %v8804, %v8931
      %v8969 = vadd.f32 %v8805, %v8934
      %v8970 = vadd.f32 %v8806, %v8936
      %v8971 = vadd.f32 %v8807, %v8939
      %v8972 = vadd.f32 %v8808, %v8941
      %v8973 = vadd.f32 %v8809, %v8944
      %v8974 = vadd.f32 %v8810, %v8946
      %v8975 = vadd.f32 %v8811, %v8949
      %v8976 = vadd.f32 %v8812, %v8951
      %v8977 = vadd.f32 %v8813, %v8954
      %v8978 = vadd.f32 %v8814, %v8956
      %v8979 = vadd.f32 %v8815, %v8959
      %v8980 = vadd.f32 %v8816, %v8961
      %v8981 = vadd.f32 %v8817, %v8964
      %v8982 = vld [vmem:[#allocation3 + $0xc] sm:$0xe]
      %s8983 = scalar_lea.vmem %s4, 128
      %v8984 = vld [vmem:[%s8983] sm:$0xf]
      %v8985 = vld [vmem:[%s8983 + $0x4] sm:$0xf]
      %v8986 = vld [vmem:[%s8983 + $0x8] sm:$0xf]
      %v8987 = vld [vmem:[%s8983 + $0xc] sm:$0xf]
      %v8989 = vunpack.c.l.b16 %v8982
      %v8990 = vpack.c.b16 %v8697, %v8989
      %v8991 = vrot.slane %v8990, 1
      %v8992 = vrot.slane %v8712, 1
      %v8993 = vsel %vm1570, %v8991, %v8992
      %v8994 = vrot.slane %v8713, 1
      %v8995 = vsel %vm1570, %v8992, %v8994
      %v8996 = vrot.slane %v8714, 1
      %v8997 = vsel %vm1570, %v8994, %v8996
      %v8998 = vrot.slane %v8715, 1
      %v8999 = vsel %vm1570, %v8996, %v8998
      %v9000 = vrot.slane %v8716, 1
      %v9001 = vsel %vm1570, %v8998, %v9000
      %v9002 = vrot.slane %v8717, 1
      %v9003 = vsel %vm1570, %v9000, %v9002
      %v9004 = vrot.slane %v8826, 1
      %v9005 = vsel %vm1570, %v9002, %v9004
      %v9010 = vunpack.c.l.b16 %v8984
      %v9011 = vunpack.c.l.b16 %v8985
      %v9012 = vunpack.c.l.b16 %v8986
      %v9013 = vunpack.c.l.b16 %v8987
      %v9014 = vpack.c.b16 %v9011, %v9010
      %v9015 = vpack.c.b16 %v9013, %v9012
      %v9019 = vsel %vm941, %v8993, 0
      %v9022 = vsel %vm941, %v8995, 0
      %v9025 = vsel %vm941, %v8997, 0
      %v9028 = vsel %vm941, %v8999, 0
      %v9031 = vsel %vm941, %v9001, 0
      %v9034 = vsel %vm941, %v9003, 0
      %v9037 = vsel %vm941, %v9005, 0
      %v9040 = vsel %vm941, %v9004, 0
      %9042 = vmatpush.bf16.msra.mxu0 0
      %9043 = vmatpush.bf16.msra.mxu0 0
      %9044 = vmatpush.bf16.msra.mxu0 0
      %9045 = vmatpush.bf16.msra.mxu0 0
      %9046 = vmatpush.bf16.msra.mxu0 0
      %9047 = vmatpush.bf16.msra.mxu0 0
      %9048 = vmatpush.bf16.msra.mxu0 %v9015
      %9049 = vmatpush.bf16.msra.mxu0 %v9014
      %9050 = vmatmul.bf16.gmra.mxu0 %v9019
      %v9051 = vpop.f32.mrf.mxu0
      %v9052 = vadd.f32 0.0, %v9051
      %v9053 = vpop.f32.mrf.mxu0
      %v9054 = vadd.f32 0.0, %v9053
      %9055 = vmatmul.bf16.gmra.mxu0 %v9022
      %v9056 = vpop.f32.mrf.mxu0
      %v9057 = vadd.f32 0.0, %v9056
      %v9058 = vpop.f32.mrf.mxu0
      %v9059 = vadd.f32 0.0, %v9058
      %9060 = vmatmul.bf16.gmra.mxu0 %v9025
      %v9061 = vpop.f32.mrf.mxu0
      %v9062 = vadd.f32 0.0, %v9061
      %v9063 = vpop.f32.mrf.mxu0
      %v9064 = vadd.f32 0.0, %v9063
      %9065 = vmatmul.bf16.gmra.mxu0 %v9028
      %v9066 = vpop.f32.mrf.mxu0
      %v9067 = vadd.f32 0.0, %v9066
      %v9068 = vpop.f32.mrf.mxu0
      %v9069 = vadd.f32 0.0, %v9068
      %9070 = vmatmul.bf16.gmra.mxu0 %v9031
      %v9071 = vpop.f32.mrf.mxu0
      %v9072 = vadd.f32 0.0, %v9071
      %v9073 = vpop.f32.mrf.mxu0
      %v9074 = vadd.f32 0.0, %v9073
      %9075 = vmatmul.bf16.gmra.mxu0 %v9034
      %v9076 = vpop.f32.mrf.mxu0
      %v9077 = vadd.f32 0.0, %v9076
      %v9078 = vpop.f32.mrf.mxu0
      %v9079 = vadd.f32 0.0, %v9078
      %9080 = vmatmul.bf16.gmra.mxu0 %v9037
      %v9081 = vpop.f32.mrf.mxu0
      %v9082 = vadd.f32 0.0, %v9081
      %v9083 = vpop.f32.mrf.mxu0
      %v9084 = vadd.f32 0.0, %v9083
      %9085 = vmatmul.bf16.gmra.mxu0 %v9040
      %v9086 = vpop.f32.mrf.mxu0
      %v9087 = vadd.f32 0.0, %v9086
      %v9088 = vpop.f32.mrf.mxu0
      %9089 = vdwg.mxu0
      %v9090 = vadd.f32 %v8967, %v9052
      %v9091 = vadd.f32 %v8968, %v9054
      %v9092 = vadd.f32 %v8969, %v9057
      %v9093 = vadd.f32 %v8970, %v9059
      %v9094 = vadd.f32 %v8971, %v9062
      %v9095 = vadd.f32 %v8972, %v9064
      %v9096 = vadd.f32 %v8973, %v9067
      %v9097 = vadd.f32 %v8974, %v9069
      %v9098 = vadd.f32 %v8975, %v9072
      %v9099 = vadd.f32 %v8976, %v9074
      %v9100 = vadd.f32 %v8977, %v9077
      %v9101 = vadd.f32 %v8978, %v9079
      %v9102 = vadd.f32 %v8979, %v9082
      %v9103 = vadd.f32 %v8980, %v9084
      %v9104 = vadd.f32 %v8981, %v9087
      %v9105 = vld [vmem:[%s5] sm:$0x1]
      %v9107 = vperm.slane %v9105, 0
      %v9109 = vadd.f32 %v9090, %v9107
      %v9110 = vadd.f32 %v9091, %v9107
      %v9111 = vadd.f32 %v9092, %v9107
      %v9112 = vadd.f32 %v9093, %v9107
      %v9113 = vadd.f32 %v9094, %v9107
      %v9114 = vadd.f32 %v9095, %v9107
      %v9115 = vadd.f32 %v9096, %v9107
      %v9116 = vadd.f32 %v9097, %v9107
      %v9117 = vadd.f32 %v9098, %v9107
      %v9118 = vadd.f32 %v9099, %v9107
      %v9119 = vadd.f32 %v9100, %v9107
      %v9120 = vadd.f32 %v9101, %v9107
      %v9121 = vadd.f32 %v9102, %v9107
      %v9122 = vadd.f32 %v9103, %v9107
      %v9123 = vadd.f32 %v9104, %v9107
      %v9124 = vmax.f32 %v9109, 0.0
      %v9125 = vmax.f32 %v9110, 0.0
      %v9126 = vmax.f32 %v9111, 0.0
      %v9127 = vmax.f32 %v9112, 0.0
      %v9128 = vmax.f32 %v9113, 0.0
      %v9129 = vmax.f32 %v9114, 0.0
      %v9130 = vmax.f32 %v9115, 0.0
      %v9131 = vmax.f32 %v9116, 0.0
      %v9132 = vmax.f32 %v9117, 0.0
      %v9133 = vmax.f32 %v9118, 0.0
      %v9134 = vmax.f32 %v9119, 0.0
      %v9135 = vmax.f32 %v9120, 0.0
      %v9136 = vmax.f32 %v9121, 0.0
      %v9137 = vmax.f32 %v9122, 0.0
      %v9138 = vmax.f32 %v9123, 0.0
      %v9139 = vpack.c.bf16 %v9124, %v9124
      %v9140 = vpack.c.bf16 %v9125, %v9125
      %v9141 = vpack.c.bf16 %v9126, %v9126
      %v9142 = vpack.c.bf16 %v9127, %v9127
      %v9143 = vpack.c.bf16 %v9128, %v9128
      %v9144 = vpack.c.bf16 %v9129, %v9129
      %v9145 = vpack.c.bf16 %v9130, %v9130
      %v9146 = vpack.c.bf16 %v9131, %v9131
      %v9147 = vpack.c.bf16 %v9132, %v9132
      %v9148 = vpack.c.bf16 %v9133, %v9133
      %v9149 = vpack.c.bf16 %v9134, %v9134
      %v9150 = vpack.c.bf16 %v9135, %v9135
      %v9151 = vpack.c.bf16 %v9136, %v9136
      %v9152 = vpack.c.bf16 %v9137, %v9137
      %v9153 = vpack.c.bf16 %v9138, %v9138
      %vm9154 = vcmask 519168
      %9155 = vst.msk [vmem:[#allocation4] sm:$0xf] %vm9154, %v9139
      %9156 = vst.msk [vmem:[#allocation4 + $0x4] sm:$0xf] %vm9154, %v9140
      %9157 = vst.msk [vmem:[#allocation4 + $0x8] sm:$0xf] %vm9154, %v9141
      %9158 = vst.msk [vmem:[#allocation4 + $0xc] sm:$0xf] %vm9154, %v9142
      %9159 = vst.msk [vmem:[#allocation4 + $0x10] sm:$0xf] %vm9154, %v9143
      %9160 = vst.msk [vmem:[#allocation4 + $0x14] sm:$0xf] %vm9154, %v9144
      %9161 = vst.msk [vmem:[#allocation4 + $0x18] sm:$0xf] %vm9154, %v9145
      %9162 = vst.msk [vmem:[#allocation4 + $0x1c] sm:$0xf] %vm9154, %v9146
      %9163 = vst.msk [vmem:[#allocation4 + $0x20] sm:$0xf] %vm9154, %v9147
      %9164 = vst.msk [vmem:[#allocation4 + $0x24] sm:$0xf] %vm9154, %v9148
      %9165 = vst.msk [vmem:[#allocation4 + $0x28] sm:$0xf] %vm9154, %v9149
      %9166 = vst.msk [vmem:[#allocation4 + $0x2c] sm:$0xf] %vm9154, %v9150
      %9167 = vst.msk [vmem:[#allocation4 + $0x30] sm:$0xf] %vm9154, %v9151
      %9168 = vst.msk [vmem:[#allocation4 + $0x34] sm:$0xf] %vm9154, %v9152
      %vm9169 = vcmask 518144
      %9170 = vst.msk [vmem:[#allocation4 + $0x38] sm:$0x7] %vm9169, %v9153
      %v9171 = vld [vmem:[#allocation4] sm:$0xf]
      %v9172 = vld [vmem:[#allocation4 + $0x4] sm:$0xf]
      %v9173 = vld [vmem:[#allocation4 + $0x8] sm:$0xf]
      %v9174 = vld [vmem:[#allocation4 + $0xc] sm:$0xf]
      %v9175 = vld [vmem:[#allocation4 + $0x10] sm:$0xf]
      %v9176 = vld [vmem:[#allocation4 + $0x14] sm:$0xf]
      %v9177 = vld [vmem:[#allocation4 + $0x18] sm:$0xf]
      %v9178 = vld [vmem:[#allocation4 + $0x1c] sm:$0xf]
      %v9179 = vld [vmem:[#allocation4 + $0x20] sm:$0xf]
      %v9180 = vld [vmem:[#allocation4 + $0x24] sm:$0xf]
      %v9181 = vld [vmem:[#allocation4 + $0x28] sm:$0xf]
      %v9182 = vld [vmem:[#allocation4 + $0x2c] sm:$0x3]
      %v9183 = vld [vmem:[%s6] sm:$0xf]
      %v9184 = vld [vmem:[%s6 + $0x4] sm:$0xf]
      %v9185 = vld [vmem:[%s6 + $0x8] sm:$0xf]
      %v9186 = vld [vmem:[%s6 + $0xc] sm:$0xf]
      %v9187 = vld [vmem:[%s6 + $0x10] sm:$0xf]
      %v9188 = vld [vmem:[%s6 + $0x14] sm:$0xf]
      %v9189 = vld [vmem:[%s6 + $0x18] sm:$0xf]
      %v9190 = vld [vmem:[%s6 + $0x1c] sm:$0xf]
      %v9191 = vld [vmem:[#allocation4 + $0x2c] sm:$0x7]
      %s9192 = scalar_lea.vmem %s6, 32
      %v9193 = vld [vmem:[%s9192] sm:$0xf]
      %v9194 = vld [vmem:[%s9192 + $0x4] sm:$0xf]
      %v9195 = vld [vmem:[%s9192 + $0x8] sm:$0xf]
      %v9196 = vld [vmem:[%s9192 + $0xc] sm:$0xf]
      %v9197 = vld [vmem:[%s9192 + $0x10] sm:$0xf]
      %v9198 = vld [vmem:[%s9192 + $0x14] sm:$0xf]
      %v9199 = vld [vmem:[%s9192 + $0x18] sm:$0xf]
      %v9200 = vld [vmem:[%s9192 + $0x1c] sm:$0xf]
      %v9213 = vunpack.c.l.b16 %v9171
      %v9214 = vunpack.c.l.b16 %v9172
      %v9215 = vunpack.c.l.b16 %v9173
      %v9216 = vunpack.c.l.b16 %v9174
      %v9217 = vunpack.c.l.b16 %v9175
      %v9218 = vunpack.c.l.b16 %v9176
      %v9219 = vunpack.c.l.b16 %v9177
      %v9220 = vunpack.c.l.b16 %v9178
      %v9221 = vunpack.c.l.b16 %v9179
      %v9222 = vunpack.c.l.b16 %v9180
      %v9223 = vunpack.c.l.b16 %v9181
      %v9224 = vunpack.c.l.b16 %v9191
      %v9225 = vpack.c.b16 %v9214, %v9213
      %v9226 = vpack.c.b16 %v9216, %v9215
      %v9227 = vpack.c.b16 %v9218, %v9217
      %v9228 = vpack.c.b16 %v9220, %v9219
      %v9229 = vpack.c.b16 %v9222, %v9221
      %v9230 = vpack.c.b16 %v9224, %v9223
      %v9232 = vshrl.u32 %v9225, 16
      %v9234 = vshll.u32 %v9225, 16
      %v9236 = vrot.slane %v9234, 1
      %v9237 = vor.u32 %v9232, %v9236
      %v9239 = vshll.u32 %v9226, 16
      %v9241 = vrot.slane %v9239, 1
      %v9242 = vsel %vm617, %v9237, %v9241
      %v9243 = vshrl.u32 %v9226, 16
      %v9245 = vor.u32 %v9243, %v9241
      %v9247 = vshll.u32 %v9227, 16
      %v9249 = vrot.slane %v9247, 1
      %v9250 = vsel %vm617, %v9245, %v9249
      %v9251 = vshrl.u32 %v9227, 16
      %v9253 = vor.u32 %v9251, %v9249
      %v9255 = vshll.u32 %v9228, 16
      %v9257 = vrot.slane %v9255, 1
      %v9258 = vsel %vm617, %v9253, %v9257
      %v9259 = vshrl.u32 %v9228, 16
      %v9261 = vor.u32 %v9259, %v9257
      %v9263 = vshll.u32 %v9229, 16
      %v9265 = vrot.slane %v9263, 1
      %v9266 = vsel %vm617, %v9261, %v9265
      %v9267 = vshrl.u32 %v9229, 16
      %v9269 = vor.u32 %v9267, %v9265
      %v9271 = vshll.u32 %v9230, 16
      %v9273 = vrot.slane %v9271, 1
      %v9274 = vsel %vm617, %v9269, %v9273
      %v9275 = vshrl.u32 %v9230, 16
      %v9277 = vor.u32 %v9275, %v9273
      %v9286 = vunpack.c.l.b16 %v9193
      %v9287 = vunpack.c.l.b16 %v9194
      %v9288 = vunpack.c.l.b16 %v9195
      %v9289 = vunpack.c.l.b16 %v9196
      %v9290 = vunpack.c.l.b16 %v9197
      %v9291 = vunpack.c.l.b16 %v9198
      %v9292 = vunpack.c.l.b16 %v9199
      %v9293 = vunpack.c.l.b16 %v9200
      %v9294 = vpack.c.b16 %v9287, %v9286
      %v9295 = vpack.c.b16 %v9289, %v9288
      %v9296 = vpack.c.b16 %v9291, %v9290
      %v9297 = vpack.c.b16 %v9293, %v9292
      %vm9302 = vcmask 523264
      %v9304 = vsel %vm9302, %v9242, 0
      %v9307 = vsel %vm9302, %v9250, 0
      %v9310 = vsel %vm9302, %v9258, 0
      %v9313 = vsel %vm9302, %v9266, 0
      %v9316 = vsel %vm9302, %v9274, 0
      %v9319 = vsel %vm9302, %v9277, 0
      %9321 = vmatpush.bf16.msra.mxu0 0
      %9322 = vmatpush.bf16.msra.mxu0 0
      %9323 = vmatpush.bf16.msra.mxu0 0
      %9324 = vmatpush.bf16.msra.mxu0 0
      %9325 = vmatpush.bf16.msra.mxu0 %v9297
      %9326 = vmatpush.bf16.msra.mxu0 %v9296
      %9327 = vmatpush.bf16.msra.mxu0 %v9295
      %9328 = vmatpush.bf16.msra.mxu0 %v9294
      %9329 = vmatmul.bf16.gmra.mxu0 %v9304
      %v9330 = vpop.f32.mrf.mxu0
      %v9331 = vadd.f32 0.0, %v9330
      %v9332 = vpop.f32.mrf.mxu0
      %v9333 = vadd.f32 0.0, %v9332
      %9334 = vmatmul.bf16.gmra.mxu0 %v9307
      %v9335 = vpop.f32.mrf.mxu0
      %v9336 = vadd.f32 0.0, %v9335
      %v9337 = vpop.f32.mrf.mxu0
      %v9338 = vadd.f32 0.0, %v9337
      %9339 = vmatmul.bf16.gmra.mxu0 %v9310
      %v9340 = vpop.f32.mrf.mxu0
      %v9341 = vadd.f32 0.0, %v9340
      %v9342 = vpop.f32.mrf.mxu0
      %v9343 = vadd.f32 0.0, %v9342
      %9344 = vmatmul.bf16.gmra.mxu0 %v9313
      %v9345 = vpop.f32.mrf.mxu0
      %v9346 = vadd.f32 0.0, %v9345
      %v9347 = vpop.f32.mrf.mxu0
      %v9348 = vadd.f32 0.0, %v9347
      %9349 = vmatmul.bf16.gmra.mxu0 %v9316
      %v9350 = vpop.f32.mrf.mxu0
      %v9351 = vadd.f32 0.0, %v9350
      %v9352 = vpop.f32.mrf.mxu0
      %v9353 = vadd.f32 0.0, %v9352
      %9354 = vmatmul.bf16.gmra.mxu0 %v9319
      %v9355 = vpop.f32.mrf.mxu0
      %v9356 = vadd.f32 0.0, %v9355
      %v9357 = vpop.f32.mrf.mxu0
      %v9358 = vadd.f32 0.0, %v9357
      %9359 = vdwg.mxu0
      %v9361 = vunpack.c.l.b16 %v9182
      %v9362 = vpack.c.b16 %v9361, %v9223
      %v9371 = vunpack.c.l.b16 %v9183
      %v9372 = vunpack.c.l.b16 %v9184
      %v9373 = vunpack.c.l.b16 %v9185
      %v9374 = vunpack.c.l.b16 %v9186
      %v9375 = vunpack.c.l.b16 %v9187
      %v9376 = vunpack.c.l.b16 %v9188
      %v9377 = vunpack.c.l.b16 %v9189
      %v9378 = vunpack.c.l.b16 %v9190
      %v9379 = vpack.c.b16 %v9372, %v9371
      %v9380 = vpack.c.b16 %v9374, %v9373
      %v9381 = vpack.c.b16 %v9376, %v9375
      %v9382 = vpack.c.b16 %v9378, %v9377
      %v9387 = vsel %vm9302, %v9225, 0
      %v9389 = vsel %vm9302, %v9226, 0
      %v9391 = vsel %vm9302, %v9227, 0
      %v9393 = vsel %vm9302, %v9228, 0
      %v9395 = vsel %vm9302, %v9229, 0
      %v9398 = vsel %vm9302, %v9362, 0
      %9400 = vmatpush.bf16.msra.mxu0 0
      %9401 = vmatpush.bf16.msra.mxu0 0
      %9402 = vmatpush.bf16.msra.mxu0 0
      %9403 = vmatpush.bf16.msra.mxu0 0
      %9404 = vmatpush.bf16.msra.mxu0 %v9382
      %9405 = vmatpush.bf16.msra.mxu0 %v9381
      %9406 = vmatpush.bf16.msra.mxu0 %v9380
      %9407 = vmatpush.bf16.msra.mxu0 %v9379
      %9408 = vmatmul.bf16.gmra.mxu0 %v9387
      %v9409 = vpop.f32.mrf.mxu0
      %v9410 = vadd.f32 %v9331, %v9409
      %v9411 = vpop.f32.mrf.mxu0
      %v9412 = vadd.f32 %v9333, %v9411
      %9413 = vmatmul.bf16.gmra.mxu0 %v9389
      %v9414 = vpop.f32.mrf.mxu0
      %v9415 = vadd.f32 %v9336, %v9414
      %v9416 = vpop.f32.mrf.mxu0
      %v9417 = vadd.f32 %v9338, %v9416
      %9418 = vmatmul.bf16.gmra.mxu0 %v9391
      %v9419 = vpop.f32.mrf.mxu0
      %v9420 = vadd.f32 %v9341, %v9419
      %v9421 = vpop.f32.mrf.mxu0
      %v9422 = vadd.f32 %v9343, %v9421
      %9423 = vmatmul.bf16.gmra.mxu0 %v9393
      %v9424 = vpop.f32.mrf.mxu0
      %v9425 = vadd.f32 %v9346, %v9424
      %v9426 = vpop.f32.mrf.mxu0
      %v9427 = vadd.f32 %v9348, %v9426
      %9428 = vmatmul.bf16.gmra.mxu0 %v9395
      %v9429 = vpop.f32.mrf.mxu0
      %v9430 = vadd.f32 %v9351, %v9429
      %v9431 = vpop.f32.mrf.mxu0
      %v9432 = vadd.f32 %v9353, %v9431
      %9433 = vmatmul.bf16.gmra.mxu0 %v9398
      %v9434 = vpop.f32.mrf.mxu0
      %v9435 = vadd.f32 %v9356, %v9434
      %v9436 = vpop.f32.mrf.mxu0
      %v9437 = vadd.f32 %v9358, %v9436
      %9438 = vdwg.mxu0
      %v9439 = vld [vmem:[#allocation4] sm:$0xe]
      %s9440 = scalar_lea.vmem %s6, 64
      %v9441 = vld [vmem:[%s9440] sm:$0xf]
      %v9442 = vld [vmem:[%s9440 + $0x4] sm:$0xf]
      %v9443 = vld [vmem:[%s9440 + $0x8] sm:$0xf]
      %v9444 = vld [vmem:[%s9440 + $0xc] sm:$0xf]
      %v9445 = vld [vmem:[%s9440 + $0x10] sm:$0xf]
      %v9446 = vld [vmem:[%s9440 + $0x14] sm:$0xf]
      %v9447 = vld [vmem:[%s9440 + $0x18] sm:$0xf]
      %v9448 = vld [vmem:[%s9440 + $0x1c] sm:$0xf]
      %v9450 = vunpack.c.l.b16 %v9439
      %v9451 = vpack.c.b16 %v9214, %v9450
      %v9452 = vrot.slane %v9451, 1
      %v9453 = vrot.slane %v9226, 1
      %v9454 = vsel %vm1570, %v9452, %v9453
      %v9455 = vrot.slane %v9227, 1
      %v9456 = vsel %vm1570, %v9453, %v9455
      %v9457 = vrot.slane %v9228, 1
      %v9458 = vsel %vm1570, %v9455, %v9457
      %v9459 = vrot.slane %v9229, 1
      %v9460 = vsel %vm1570, %v9457, %v9459
      %v9461 = vrot.slane %v9230, 1
      %v9462 = vsel %vm1570, %v9459, %v9461
      %v9471 = vunpack.c.l.b16 %v9441
      %v9472 = vunpack.c.l.b16 %v9442
      %v9473 = vunpack.c.l.b16 %v9443
      %v9474 = vunpack.c.l.b16 %v9444
      %v9475 = vunpack.c.l.b16 %v9445
      %v9476 = vunpack.c.l.b16 %v9446
      %v9477 = vunpack.c.l.b16 %v9447
      %v9478 = vunpack.c.l.b16 %v9448
      %v9479 = vpack.c.b16 %v9472, %v9471
      %v9480 = vpack.c.b16 %v9474, %v9473
      %v9481 = vpack.c.b16 %v9476, %v9475
      %v9482 = vpack.c.b16 %v9478, %v9477
      %v9488 = vsel %vm9302, %v9454, 0
      %v9491 = vsel %vm9302, %v9456, 0
      %v9494 = vsel %vm9302, %v9458, 0
      %v9497 = vsel %vm9302, %v9460, 0
      %v9500 = vsel %vm9302, %v9462, 0
      %v9503 = vsel %vm9302, %v9461, 0
      %9505 = vmatpush.bf16.msra.mxu0 0
      %9506 = vmatpush.bf16.msra.mxu0 0
      %9507 = vmatpush.bf16.msra.mxu0 0
      %9508 = vmatpush.bf16.msra.mxu0 0
      %9509 = vmatpush.bf16.msra.mxu0 %v9482
      %9510 = vmatpush.bf16.msra.mxu0 %v9481
      %9511 = vmatpush.bf16.msra.mxu0 %v9480
      %9512 = vmatpush.bf16.msra.mxu0 %v9479
      %9513 = vmatmul.bf16.gmra.mxu0 %v9488
      %v9514 = vpop.f32.mrf.mxu0
      %v9515 = vadd.f32 0.0, %v9514
      %v9516 = vpop.f32.mrf.mxu0
      %v9517 = vadd.f32 0.0, %v9516
      %9518 = vmatmul.bf16.gmra.mxu0 %v9491
      %v9519 = vpop.f32.mrf.mxu0
      %v9520 = vadd.f32 0.0, %v9519
      %v9521 = vpop.f32.mrf.mxu0
      %v9522 = vadd.f32 0.0, %v9521
      %9523 = vmatmul.bf16.gmra.mxu0 %v9494
      %v9524 = vpop.f32.mrf.mxu0
      %v9525 = vadd.f32 0.0, %v9524
      %v9526 = vpop.f32.mrf.mxu0
      %v9527 = vadd.f32 0.0, %v9526
      %9528 = vmatmul.bf16.gmra.mxu0 %v9497
      %v9529 = vpop.f32.mrf.mxu0
      %v9530 = vadd.f32 0.0, %v9529
      %v9531 = vpop.f32.mrf.mxu0
      %v9532 = vadd.f32 0.0, %v9531
      %9533 = vmatmul.bf16.gmra.mxu0 %v9500
      %v9534 = vpop.f32.mrf.mxu0
      %v9535 = vadd.f32 0.0, %v9534
      %v9536 = vpop.f32.mrf.mxu0
      %v9537 = vadd.f32 0.0, %v9536
      %9538 = vmatmul.bf16.gmra.mxu0 %v9503
      %v9539 = vpop.f32.mrf.mxu0
      %v9540 = vadd.f32 0.0, %v9539
      %v9541 = vpop.f32.mrf.mxu0
      %v9542 = vadd.f32 0.0, %v9541
      %9543 = vdwg.mxu0
      %v9544 = vadd.f32 %v9410, %v9515
      %v9545 = vadd.f32 %v9412, %v9517
      %v9546 = vadd.f32 %v9415, %v9520
      %v9547 = vadd.f32 %v9417, %v9522
      %v9548 = vadd.f32 %v9420, %v9525
      %v9549 = vadd.f32 %v9422, %v9527
      %v9550 = vadd.f32 %v9425, %v9530
      %v9551 = vadd.f32 %v9427, %v9532
      %v9552 = vadd.f32 %v9430, %v9535
      %v9553 = vadd.f32 %v9432, %v9537
      %v9554 = vadd.f32 %v9435, %v9540
      %v9555 = vadd.f32 %v9437, %v9542
      %v9556 = vld [vmem:[#allocation4 + $0x4] sm:$0xc]
      %v9557 = vld [vmem:[#allocation4 + $0x8] sm:$0xf]
      %v9558 = vld [vmem:[#allocation4 + $0xc] sm:$0xf]
      %v9559 = vld [vmem:[#allocation4 + $0x10] sm:$0xf]
      %v9560 = vld [vmem:[#allocation4 + $0x14] sm:$0xf]
      %v9561 = vld [vmem:[#allocation4 + $0x18] sm:$0xf]
      %v9562 = vld [vmem:[#allocation4 + $0x1c] sm:$0xf]
      %v9563 = vld [vmem:[#allocation4 + $0x20] sm:$0xf]
      %v9564 = vld [vmem:[#allocation4 + $0x24] sm:$0xf]
      %v9565 = vld [vmem:[#allocation4 + $0x28] sm:$0xf]
      %v9566 = vld [vmem:[#allocation4 + $0x2c] sm:$0xf]
      %v9567 = vld [vmem:[#allocation4 + $0x30] sm:$0xf]
      %s9568 = scalar_lea.vmem %s6, 96
      %v9569 = vld [vmem:[%s9568] sm:$0xf]
      %v9570 = vld [vmem:[%s9568 + $0x4] sm:$0xf]
      %v9571 = vld [vmem:[%s9568 + $0x8] sm:$0xf]
      %v9572 = vld [vmem:[%s9568 + $0xc] sm:$0xf]
      %v9573 = vld [vmem:[%s9568 + $0x10] sm:$0xf]
      %v9574 = vld [vmem:[%s9568 + $0x14] sm:$0xf]
      %v9575 = vld [vmem:[%s9568 + $0x18] sm:$0xf]
      %v9576 = vld [vmem:[%s9568 + $0x1c] sm:$0xf]
      %v9589 = vunpack.c.l.b16 %v9556
      %v9590 = vunpack.c.l.b16 %v9557
      %v9591 = vunpack.c.l.b16 %v9558
      %v9592 = vunpack.c.l.b16 %v9559
      %v9593 = vunpack.c.l.b16 %v9560
      %v9594 = vunpack.c.l.b16 %v9561
      %v9595 = vunpack.c.l.b16 %v9562
      %v9596 = vunpack.c.l.b16 %v9563
      %v9597 = vunpack.c.l.b16 %v9564
      %v9598 = vunpack.c.l.b16 %v9565
      %v9599 = vunpack.c.l.b16 %v9566
      %v9600 = vunpack.c.l.b16 %v9567
      %v9601 = vpack.c.b16 %v9590, %v9589
      %v9602 = vpack.c.b16 %v9592, %v9591
      %v9603 = vpack.c.b16 %v9594, %v9593
      %v9604 = vpack.c.b16 %v9596, %v9595
      %v9605 = vpack.c.b16 %v9598, %v9597
      %v9606 = vpack.c.b16 %v9600, %v9599
      %v9607 = vrot.slane %v9601, 2
      %v9608 = vrot.slane %v9602, 2
      %v9609 = vsel %vm3883, %v9607, %v9608
      %v9610 = vrot.slane %v9603, 2
      %v9611 = vsel %vm3883, %v9608, %v9610
      %v9612 = vrot.slane %v9604, 2
      %v9613 = vsel %vm3883, %v9610, %v9612
      %v9614 = vrot.slane %v9605, 2
      %v9615 = vsel %vm3883, %v9612, %v9614
      %v9616 = vrot.slane %v9606, 2
      %v9617 = vsel %vm3883, %v9614, %v9616
      %v9626 = vunpack.c.l.b16 %v9569
      %v9627 = vunpack.c.l.b16 %v9570
      %v9628 = vunpack.c.l.b16 %v9571
      %v9629 = vunpack.c.l.b16 %v9572
      %v9630 = vunpack.c.l.b16 %v9573
      %v9631 = vunpack.c.l.b16 %v9574
      %v9632 = vunpack.c.l.b16 %v9575
      %v9633 = vunpack.c.l.b16 %v9576
      %v9634 = vpack.c.b16 %v9627, %v9626
      %v9635 = vpack.c.b16 %v9629, %v9628
      %v9636 = vpack.c.b16 %v9631, %v9630
      %v9637 = vpack.c.b16 %v9633, %v9632
      %v9643 = vsel %vm9302, %v9609, 0
      %v9646 = vsel %vm9302, %v9611, 0
      %v9649 = vsel %vm9302, %v9613, 0
      %v9652 = vsel %vm9302, %v9615, 0
      %v9655 = vsel %vm9302, %v9617, 0
      %v9658 = vsel %vm9302, %v9616, 0
      %9660 = vmatpush.bf16.msra.mxu0 0
      %9661 = vmatpush.bf16.msra.mxu0 0
      %9662 = vmatpush.bf16.msra.mxu0 0
      %9663 = vmatpush.bf16.msra.mxu0 0
      %9664 = vmatpush.bf16.msra.mxu0 %v9637
      %9665 = vmatpush.bf16.msra.mxu0 %v9636
      %9666 = vmatpush.bf16.msra.mxu0 %v9635
      %9667 = vmatpush.bf16.msra.mxu0 %v9634
      %9668 = vmatmul.bf16.gmra.mxu0 %v9643
      %v9669 = vpop.f32.mrf.mxu0
      %v9670 = vadd.f32 0.0, %v9669
      %v9671 = vpop.f32.mrf.mxu0
      %v9672 = vadd.f32 0.0, %v9671
      %9673 = vmatmul.bf16.gmra.mxu0 %v9646
      %v9674 = vpop.f32.mrf.mxu0
      %v9675 = vadd.f32 0.0, %v9674
      %v9676 = vpop.f32.mrf.mxu0
      %v9677 = vadd.f32 0.0, %v9676
      %9678 = vmatmul.bf16.gmra.mxu0 %v9649
      %v9679 = vpop.f32.mrf.mxu0
      %v9680 = vadd.f32 0.0, %v9679
      %v9681 = vpop.f32.mrf.mxu0
      %v9682 = vadd.f32 0.0, %v9681
      %9683 = vmatmul.bf16.gmra.mxu0 %v9652
      %v9684 = vpop.f32.mrf.mxu0
      %v9685 = vadd.f32 0.0, %v9684
      %v9686 = vpop.f32.mrf.mxu0
      %v9687 = vadd.f32 0.0, %v9686
      %9688 = vmatmul.bf16.gmra.mxu0 %v9655
      %v9689 = vpop.f32.mrf.mxu0
      %v9690 = vadd.f32 0.0, %v9689
      %v9691 = vpop.f32.mrf.mxu0
      %v9692 = vadd.f32 0.0, %v9691
      %9693 = vmatmul.bf16.gmra.mxu0 %v9658
      %v9694 = vpop.f32.mrf.mxu0
      %v9695 = vadd.f32 0.0, %v9694
      %v9696 = vpop.f32.mrf.mxu0
      %v9697 = vadd.f32 0.0, %v9696
      %9698 = vdwg.mxu0
      %v9699 = vadd.f32 %v9544, %v9670
      %v9700 = vadd.f32 %v9545, %v9672
      %v9701 = vadd.f32 %v9546, %v9675
      %v9702 = vadd.f32 %v9547, %v9677
      %v9703 = vadd.f32 %v9548, %v9680
      %v9704 = vadd.f32 %v9549, %v9682
      %v9705 = vadd.f32 %v9550, %v9685
      %v9706 = vadd.f32 %v9551, %v9687
      %v9707 = vadd.f32 %v9552, %v9690
      %v9708 = vadd.f32 %v9553, %v9692
      %v9709 = vadd.f32 %v9554, %v9695
      %v9710 = vadd.f32 %v9555, %v9697
      %v9711 = vld [vmem:[#allocation4 + $0x4] sm:$0xc]
      %v9712 = vld [vmem:[#allocation4 + $0x8] sm:$0xf]
      %v9713 = vld [vmem:[#allocation4 + $0xc] sm:$0xf]
      %v9714 = vld [vmem:[#allocation4 + $0x10] sm:$0xf]
      %v9715 = vld [vmem:[#allocation4 + $0x14] sm:$0xf]
      %v9716 = vld [vmem:[#allocation4 + $0x18] sm:$0xf]
      %v9717 = vld [vmem:[#allocation4 + $0x1c] sm:$0xf]
      %v9718 = vld [vmem:[#allocation4 + $0x20] sm:$0xf]
      %v9719 = vld [vmem:[#allocation4 + $0x24] sm:$0xf]
      %v9720 = vld [vmem:[#allocation4 + $0x28] sm:$0xf]
      %v9721 = vld [vmem:[#allocation4 + $0x2c] sm:$0xf]
      %v9722 = vld [vmem:[#allocation4 + $0x30] sm:$0xf]
      %v9723 = vld [vmem:[#allocation4 + $0x34] sm:$0x1]
      %s9724 = scalar_lea.vmem %s6, 128
      %v9725 = vld [vmem:[%s9724] sm:$0xf]
      %v9726 = vld [vmem:[%s9724 + $0x4] sm:$0xf]
      %v9727 = vld [vmem:[%s9724 + $0x8] sm:$0xf]
      %v9728 = vld [vmem:[%s9724 + $0xc] sm:$0xf]
      %v9729 = vld [vmem:[%s9724 + $0x10] sm:$0xf]
      %v9730 = vld [vmem:[%s9724 + $0x14] sm:$0xf]
      %v9731 = vld [vmem:[%s9724 + $0x18] sm:$0xf]
      %v9732 = vld [vmem:[%s9724 + $0x1c] sm:$0xf]
      %v9746 = vunpack.c.l.b16 %v9711
      %v9747 = vunpack.c.l.b16 %v9712
      %v9748 = vunpack.c.l.b16 %v9713
      %v9749 = vunpack.c.l.b16 %v9714
      %v9750 = vunpack.c.l.b16 %v9715
      %v9751 = vunpack.c.l.b16 %v9716
      %v9752 = vunpack.c.l.b16 %v9717
      %v9753 = vunpack.c.l.b16 %v9718
      %v9754 = vunpack.c.l.b16 %v9719
      %v9755 = vunpack.c.l.b16 %v9720
      %v9756 = vunpack.c.l.b16 %v9721
      %v9757 = vunpack.c.l.b16 %v9722
      %v9758 = vunpack.c.l.b16 %v9723
      %v9759 = vpack.c.b16 %v9747, %v9746
      %v9760 = vpack.c.b16 %v9749, %v9748
      %v9761 = vpack.c.b16 %v9751, %v9750
      %v9762 = vpack.c.b16 %v9753, %v9752
      %v9763 = vpack.c.b16 %v9755, %v9754
      %v9764 = vpack.c.b16 %v9757, %v9756
      %v9765 = vpack.c.b16 %v9758, %v9758
      %v9767 = vshrl.u32 %v9759, 16
      %v9769 = vrot.slane %v9767, 2
      %v9770 = vshll.u32 %v9759, 16
      %v9772 = vrot.slane %v9770, 3
      %v9773 = vor.u32 %v9769, %v9772
      %v9775 = vshrl.u32 %v9760, 16
      %v9777 = vrot.slane %v9775, 2
      %v9778 = vshll.u32 %v9760, 16
      %v9780 = vrot.slane %v9778, 3
      %v9781 = vor.u32 %v9777, %v9780
      %v9782 = vsel %vm5155, %v9773, %v9781
      %v9784 = vshrl.u32 %v9761, 16
      %v9786 = vrot.slane %v9784, 2
      %v9787 = vshll.u32 %v9761, 16
      %v9789 = vrot.slane %v9787, 3
      %v9790 = vor.u32 %v9786, %v9789
      %v9791 = vsel %vm5155, %v9781, %v9790
      %v9793 = vshrl.u32 %v9762, 16
      %v9795 = vrot.slane %v9793, 2
      %v9796 = vshll.u32 %v9762, 16
      %v9798 = vrot.slane %v9796, 3
      %v9799 = vor.u32 %v9795, %v9798
      %v9800 = vsel %vm5155, %v9790, %v9799
      %v9802 = vshrl.u32 %v9763, 16
      %v9804 = vrot.slane %v9802, 2
      %v9805 = vshll.u32 %v9763, 16
      %v9807 = vrot.slane %v9805, 3
      %v9808 = vor.u32 %v9804, %v9807
      %v9809 = vsel %vm5155, %v9799, %v9808
      %v9811 = vshrl.u32 %v9764, 16
      %v9813 = vrot.slane %v9811, 2
      %v9814 = vshll.u32 %v9764, 16
      %v9816 = vrot.slane %v9814, 3
      %v9817 = vor.u32 %v9813, %v9816
      %v9818 = vsel %vm5155, %v9808, %v9817
      %v9820 = vshll.u32 %v9765, 16
      %v9822 = vrot.slane %v9820, 3
      %v9823 = vsel %vm5155, %v9817, %v9822
      %v9832 = vunpack.c.l.b16 %v9725
      %v9833 = vunpack.c.l.b16 %v9726
      %v9834 = vunpack.c.l.b16 %v9727
      %v9835 = vunpack.c.l.b16 %v9728
      %v9836 = vunpack.c.l.b16 %v9729
      %v9837 = vunpack.c.l.b16 %v9730
      %v9838 = vunpack.c.l.b16 %v9731
      %v9839 = vunpack.c.l.b16 %v9732
      %v9840 = vpack.c.b16 %v9833, %v9832
      %v9841 = vpack.c.b16 %v9835, %v9834
      %v9842 = vpack.c.b16 %v9837, %v9836
      %v9843 = vpack.c.b16 %v9839, %v9838
      %v9849 = vsel %vm9302, %v9782, 0
      %v9852 = vsel %vm9302, %v9791, 0
      %v9855 = vsel %vm9302, %v9800, 0
      %v9858 = vsel %vm9302, %v9809, 0
      %v9861 = vsel %vm9302, %v9818, 0
      %v9864 = vsel %vm9302, %v9823, 0
      %9866 = vmatpush.bf16.msra.mxu0 0
      %9867 = vmatpush.bf16.msra.mxu0 0
      %9868 = vmatpush.bf16.msra.mxu0 0
      %9869 = vmatpush.bf16.msra.mxu0 0
      %9870 = vmatpush.bf16.msra.mxu0 %v9843
      %9871 = vmatpush.bf16.msra.mxu0 %v9842
      %9872 = vmatpush.bf16.msra.mxu0 %v9841
      %9873 = vmatpush.bf16.msra.mxu0 %v9840
      %9874 = vmatmul.bf16.gmra.mxu0 %v9849
      %v9875 = vpop.f32.mrf.mxu0
      %v9876 = vadd.f32 0.0, %v9875
      %v9877 = vpop.f32.mrf.mxu0
      %v9878 = vadd.f32 0.0, %v9877
      %9879 = vmatmul.bf16.gmra.mxu0 %v9852
      %v9880 = vpop.f32.mrf.mxu0
      %v9881 = vadd.f32 0.0, %v9880
      %v9882 = vpop.f32.mrf.mxu0
      %v9883 = vadd.f32 0.0, %v9882
      %9884 = vmatmul.bf16.gmra.mxu0 %v9855
      %v9885 = vpop.f32.mrf.mxu0
      %v9886 = vadd.f32 0.0, %v9885
      %v9887 = vpop.f32.mrf.mxu0
      %v9888 = vadd.f32 0.0, %v9887
      %9889 = vmatmul.bf16.gmra.mxu0 %v9858
      %v9890 = vpop.f32.mrf.mxu0
      %v9891 = vadd.f32 0.0, %v9890
      %v9892 = vpop.f32.mrf.mxu0
      %v9893 = vadd.f32 0.0, %v9892
      %9894 = vmatmul.bf16.gmra.mxu0 %v9861
      %v9895 = vpop.f32.mrf.mxu0
      %v9896 = vadd.f32 0.0, %v9895
      %v9897 = vpop.f32.mrf.mxu0
      %v9898 = vadd.f32 0.0, %v9897
      %9899 = vmatmul.bf16.gmra.mxu0 %v9864
      %v9900 = vpop.f32.mrf.mxu0
      %v9901 = vadd.f32 0.0, %v9900
      %v9902 = vpop.f32.mrf.mxu0
      %v9903 = vadd.f32 0.0, %v9902
      %9904 = vdwg.mxu0
      %v9905 = vadd.f32 %v9699, %v9876
      %v9906 = vadd.f32 %v9700, %v9878
      %v9907 = vadd.f32 %v9701, %v9881
      %v9908 = vadd.f32 %v9702, %v9883
      %v9909 = vadd.f32 %v9703, %v9886
      %v9910 = vadd.f32 %v9704, %v9888
      %v9911 = vadd.f32 %v9705, %v9891
      %v9912 = vadd.f32 %v9706, %v9893
      %v9913 = vadd.f32 %v9707, %v9896
      %v9914 = vadd.f32 %v9708, %v9898
      %v9915 = vadd.f32 %v9709, %v9901
      %v9916 = vadd.f32 %v9710, %v9903
      %v9917 = vld [vmem:[#allocation4 + $0x4] sm:$0x8]
      %s9918 = scalar_lea.vmem %s6, 160
      %v9919 = vld [vmem:[%s9918] sm:$0xf]
      %v9920 = vld [vmem:[%s9918 + $0x4] sm:$0xf]
      %v9921 = vld [vmem:[%s9918 + $0x8] sm:$0xf]
      %v9922 = vld [vmem:[%s9918 + $0xc] sm:$0xf]
      %v9923 = vld [vmem:[%s9918 + $0x10] sm:$0xf]
      %v9924 = vld [vmem:[%s9918 + $0x14] sm:$0xf]
      %v9925 = vld [vmem:[%s9918 + $0x18] sm:$0xf]
      %v9926 = vld [vmem:[%s9918 + $0x1c] sm:$0xf]
      %v9928 = vunpack.c.l.b16 %v9917
      %v9929 = vpack.c.b16 %v9747, %v9928
      %v9930 = vrot.slane %v9929, 3
      %v9931 = vrot.slane %v9760, 3
      %v9932 = vsel %vm5935, %v9930, %v9931
      %v9933 = vrot.slane %v9761, 3
      %v9934 = vsel %vm5935, %v9931, %v9933
      %v9935 = vrot.slane %v9762, 3
      %v9936 = vsel %vm5935, %v9933, %v9935
      %v9937 = vrot.slane %v9763, 3
      %v9938 = vsel %vm5935, %v9935, %v9937
      %v9939 = vrot.slane %v9764, 3
      %v9940 = vsel %vm5935, %v9937, %v9939
      %v9941 = vrot.slane %v9765, 3
      %v9942 = vsel %vm5935, %v9939, %v9941
      %v9951 = vunpack.c.l.b16 %v9919
      %v9952 = vunpack.c.l.b16 %v9920
      %v9953 = vunpack.c.l.b16 %v9921
      %v9954 = vunpack.c.l.b16 %v9922
      %v9955 = vunpack.c.l.b16 %v9923
      %v9956 = vunpack.c.l.b16 %v9924
      %v9957 = vunpack.c.l.b16 %v9925
      %v9958 = vunpack.c.l.b16 %v9926
      %v9959 = vpack.c.b16 %v9952, %v9951
      %v9960 = vpack.c.b16 %v9954, %v9953
      %v9961 = vpack.c.b16 %v9956, %v9955
      %v9962 = vpack.c.b16 %v9958, %v9957
      %v9968 = vsel %vm9302, %v9932, 0
      %v9971 = vsel %vm9302, %v9934, 0
      %v9974 = vsel %vm9302, %v9936, 0
      %v9977 = vsel %vm9302, %v9938, 0
      %v9980 = vsel %vm9302, %v9940, 0
      %v9983 = vsel %vm9302, %v9942, 0
      %9985 = vmatpush.bf16.msra.mxu0 0
      %9986 = vmatpush.bf16.msra.mxu0 0
      %9987 = vmatpush.bf16.msra.mxu0 0
      %9988 = vmatpush.bf16.msra.mxu0 0
      %9989 = vmatpush.bf16.msra.mxu0 %v9962
      %9990 = vmatpush.bf16.msra.mxu0 %v9961
      %9991 = vmatpush.bf16.msra.mxu0 %v9960
      %9992 = vmatpush.bf16.msra.mxu0 %v9959
      %9993 = vmatmul.bf16.gmra.mxu0 %v9968
      %v9994 = vpop.f32.mrf.mxu0
      %v9995 = vadd.f32 0.0, %v9994
      %v9996 = vpop.f32.mrf.mxu0
      %v9997 = vadd.f32 0.0, %v9996
      %9998 = vmatmul.bf16.gmra.mxu0 %v9971
      %v9999 = vpop.f32.mrf.mxu0
      %v10000 = vadd.f32 0.0, %v9999
      %v10001 = vpop.f32.mrf.mxu0
      %v10002 = vadd.f32 0.0, %v10001
      %10003 = vmatmul.bf16.gmra.mxu0 %v9974
      %v10004 = vpop.f32.mrf.mxu0
      %v10005 = vadd.f32 0.0, %v10004
      %v10006 = vpop.f32.mrf.mxu0
      %v10007 = vadd.f32 0.0, %v10006
      %10008 = vmatmul.bf16.gmra.mxu0 %v9977
      %v10009 = vpop.f32.mrf.mxu0
      %v10010 = vadd.f32 0.0, %v10009
      %v10011 = vpop.f32.mrf.mxu0
      %v10012 = vadd.f32 0.0, %v10011
      %10013 = vmatmul.bf16.gmra.mxu0 %v9980
      %v10014 = vpop.f32.mrf.mxu0
      %v10015 = vadd.f32 0.0, %v10014
      %v10016 = vpop.f32.mrf.mxu0
      %v10017 = vadd.f32 0.0, %v10016
      %10018 = vmatmul.bf16.gmra.mxu0 %v9983
      %v10019 = vpop.f32.mrf.mxu0
      %v10020 = vadd.f32 0.0, %v10019
      %v10021 = vpop.f32.mrf.mxu0
      %v10022 = vadd.f32 0.0, %v10021
      %10023 = vdwg.mxu0
      %v10024 = vadd.f32 %v9905, %v9995
      %v10025 = vadd.f32 %v9906, %v9997
      %v10026 = vadd.f32 %v9907, %v10000
      %v10027 = vadd.f32 %v9908, %v10002
      %v10028 = vadd.f32 %v9909, %v10005
      %v10029 = vadd.f32 %v9910, %v10007
      %v10030 = vadd.f32 %v9911, %v10010
      %v10031 = vadd.f32 %v9912, %v10012
      %v10032 = vadd.f32 %v9913, %v10015
      %v10033 = vadd.f32 %v9914, %v10017
      %v10034 = vadd.f32 %v9915, %v10020
      %v10035 = vadd.f32 %v9916, %v10022
      %v10036 = vld [vmem:[#allocation4 + $0xc] sm:$0xf]
      %v10037 = vld [vmem:[#allocation4 + $0x10] sm:$0xf]
      %v10038 = vld [vmem:[#allocation4 + $0x14] sm:$0xf]
      %v10039 = vld [vmem:[#allocation4 + $0x18] sm:$0xf]
      %v10040 = vld [vmem:[#allocation4 + $0x1c] sm:$0xf]
      %v10041 = vld [vmem:[#allocation4 + $0x20] sm:$0xf]
      %v10042 = vld [vmem:[#allocation4 + $0x24] sm:$0xf]
      %v10043 = vld [vmem:[#allocation4 + $0x28] sm:$0xf]
      %v10044 = vld [vmem:[#allocation4 + $0x2c] sm:$0xf]
      %v10045 = vld [vmem:[#allocation4 + $0x30] sm:$0xf]
      %v10046 = vld [vmem:[#allocation4 + $0x34] sm:$0xf]
      %v10047 = vld [vmem:[#allocation4 + $0x38] sm:$0x3]
      %s10048 = scalar_lea.vmem %s6, 192
      %v10049 = vld [vmem:[%s10048] sm:$0xf]
      %v10050 = vld [vmem:[%s10048 + $0x4] sm:$0xf]
      %v10051 = vld [vmem:[%s10048 + $0x8] sm:$0xf]
      %v10052 = vld [vmem:[%s10048 + $0xc] sm:$0xf]
      %v10053 = vld [vmem:[%s10048 + $0x10] sm:$0xf]
      %v10054 = vld [vmem:[%s10048 + $0x14] sm:$0xf]
      %v10055 = vld [vmem:[%s10048 + $0x18] sm:$0xf]
      %v10056 = vld [vmem:[%s10048 + $0x1c] sm:$0xf]
      %v10069 = vunpack.c.l.b16 %v10036
      %v10070 = vunpack.c.l.b16 %v10037
      %v10071 = vunpack.c.l.b16 %v10038
      %v10072 = vunpack.c.l.b16 %v10039
      %v10073 = vunpack.c.l.b16 %v10040
      %v10074 = vunpack.c.l.b16 %v10041
      %v10075 = vunpack.c.l.b16 %v10042
      %v10076 = vunpack.c.l.b16 %v10043
      %v10077 = vunpack.c.l.b16 %v10044
      %v10078 = vunpack.c.l.b16 %v10045
      %v10079 = vunpack.c.l.b16 %v10046
      %v10080 = vunpack.c.l.b16 %v10047
      %v10081 = vpack.c.b16 %v10070, %v10069
      %v10082 = vpack.c.b16 %v10072, %v10071
      %v10083 = vpack.c.b16 %v10074, %v10073
      %v10084 = vpack.c.b16 %v10076, %v10075
      %v10085 = vpack.c.b16 %v10078, %v10077
      %v10086 = vpack.c.b16 %v10080, %v10079
      %v10095 = vunpack.c.l.b16 %v10049
      %v10096 = vunpack.c.l.b16 %v10050
      %v10097 = vunpack.c.l.b16 %v10051
      %v10098 = vunpack.c.l.b16 %v10052
      %v10099 = vunpack.c.l.b16 %v10053
      %v10100 = vunpack.c.l.b16 %v10054
      %v10101 = vunpack.c.l.b16 %v10055
      %v10102 = vunpack.c.l.b16 %v10056
      %v10103 = vpack.c.b16 %v10096, %v10095
      %v10104 = vpack.c.b16 %v10098, %v10097
      %v10105 = vpack.c.b16 %v10100, %v10099
      %v10106 = vpack.c.b16 %v10102, %v10101
      %v10112 = vsel %vm9302, %v10081, 0
      %v10115 = vsel %vm9302, %v10082, 0
      %v10118 = vsel %vm9302, %v10083, 0
      %v10121 = vsel %vm9302, %v10084, 0
      %v10124 = vsel %vm9302, %v10085, 0
      %v10127 = vsel %vm9302, %v10086, 0
      %10129 = vmatpush.bf16.msra.mxu0 0
      %10130 = vmatpush.bf16.msra.mxu0 0
      %10131 = vmatpush.bf16.msra.mxu0 0
      %10132 = vmatpush.bf16.msra.mxu0 0
      %10133 = vmatpush.bf16.msra.mxu0 %v10106
      %10134 = vmatpush.bf16.msra.mxu0 %v10105
      %10135 = vmatpush.bf16.msra.mxu0 %v10104
      %10136 = vmatpush.bf16.msra.mxu0 %v10103
      %10137 = vmatmul.bf16.gmra.mxu0 %v10112
      %v10138 = vpop.f32.mrf.mxu0
      %v10139 = vadd.f32 0.0, %v10138
      %v10140 = vpop.f32.mrf.mxu0
      %v10141 = vadd.f32 0.0, %v10140
      %10142 = vmatmul.bf16.gmra.mxu0 %v10115
      %v10143 = vpop.f32.mrf.mxu0
      %v10144 = vadd.f32 0.0, %v10143
      %v10145 = vpop.f32.mrf.mxu0
      %v10146 = vadd.f32 0.0, %v10145
      %10147 = vmatmul.bf16.gmra.mxu0 %v10118
      %v10148 = vpop.f32.mrf.mxu0
      %v10149 = vadd.f32 0.0, %v10148
      %v10150 = vpop.f32.mrf.mxu0
      %v10151 = vadd.f32 0.0, %v10150
      %10152 = vmatmul.bf16.gmra.mxu0 %v10121
      %v10153 = vpop.f32.mrf.mxu0
      %v10154 = vadd.f32 0.0, %v10153
      %v10155 = vpop.f32.mrf.mxu0
      %v10156 = vadd.f32 0.0, %v10155
      %10157 = vmatmul.bf16.gmra.mxu0 %v10124
      %v10158 = vpop.f32.mrf.mxu0
      %v10159 = vadd.f32 0.0, %v10158
      %v10160 = vpop.f32.mrf.mxu0
      %v10161 = vadd.f32 0.0, %v10160
      %10162 = vmatmul.bf16.gmra.mxu0 %v10127
      %v10163 = vpop.f32.mrf.mxu0
      %v10164 = vadd.f32 0.0, %v10163
      %v10165 = vpop.f32.mrf.mxu0
      %v10166 = vadd.f32 0.0, %v10165
      %10167 = vdwg.mxu0
      %v10168 = vadd.f32 %v10024, %v10139
      %v10169 = vadd.f32 %v10025, %v10141
      %v10170 = vadd.f32 %v10026, %v10144
      %v10171 = vadd.f32 %v10027, %v10146
      %v10172 = vadd.f32 %v10028, %v10149
      %v10173 = vadd.f32 %v10029, %v10151
      %v10174 = vadd.f32 %v10030, %v10154
      %v10175 = vadd.f32 %v10031, %v10156
      %v10176 = vadd.f32 %v10032, %v10159
      %v10177 = vadd.f32 %v10033, %v10161
      %v10178 = vadd.f32 %v10034, %v10164
      %v10179 = vadd.f32 %v10035, %v10166
      %v10180 = vld [vmem:[#allocation4 + $0x38] sm:$0x7]
      %s10181 = scalar_lea.vmem %s6, 224
      %v10182 = vld [vmem:[%s10181] sm:$0xf]
      %v10183 = vld [vmem:[%s10181 + $0x4] sm:$0xf]
      %v10184 = vld [vmem:[%s10181 + $0x8] sm:$0xf]
      %v10185 = vld [vmem:[%s10181 + $0xc] sm:$0xf]
      %v10186 = vld [vmem:[%s10181 + $0x10] sm:$0xf]
      %v10187 = vld [vmem:[%s10181 + $0x14] sm:$0xf]
      %v10188 = vld [vmem:[%s10181 + $0x18] sm:$0xf]
      %v10189 = vld [vmem:[%s10181 + $0x1c] sm:$0xf]
      %v10191 = vunpack.c.l.b16 %v10180
      %v10192 = vpack.c.b16 %v10191, %v10079
      %v10193 = vshrl.u32 %v10081, 16
      %v10195 = vshll.u32 %v10081, 16
      %v10197 = vrot.slane %v10195, 1
      %v10198 = vor.u32 %v10193, %v10197
      %v10199 = vshll.u32 %v10082, 16
      %v10201 = vrot.slane %v10199, 1
      %v10202 = vsel %vm617, %v10198, %v10201
      %v10203 = vshrl.u32 %v10082, 16
      %v10205 = vor.u32 %v10203, %v10201
      %v10206 = vshll.u32 %v10083, 16
      %v10208 = vrot.slane %v10206, 1
      %v10209 = vsel %vm617, %v10205, %v10208
      %v10210 = vshrl.u32 %v10083, 16
      %v10212 = vor.u32 %v10210, %v10208
      %v10213 = vshll.u32 %v10084, 16
      %v10215 = vrot.slane %v10213, 1
      %v10216 = vsel %vm617, %v10212, %v10215
      %v10217 = vshrl.u32 %v10084, 16
      %v10219 = vor.u32 %v10217, %v10215
      %v10220 = vshll.u32 %v10085, 16
      %v10222 = vrot.slane %v10220, 1
      %v10223 = vsel %vm617, %v10219, %v10222
      %v10224 = vshrl.u32 %v10085, 16
      %v10226 = vor.u32 %v10224, %v10222
      %v10228 = vshll.u32 %v10192, 16
      %v10230 = vrot.slane %v10228, 1
      %v10231 = vsel %vm617, %v10226, %v10230
      %v10232 = vshrl.u32 %v10192, 16
      %v10234 = vor.u32 %v10232, %v10230
      %v10243 = vunpack.c.l.b16 %v10182
      %v10244 = vunpack.c.l.b16 %v10183
      %v10245 = vunpack.c.l.b16 %v10184
      %v10246 = vunpack.c.l.b16 %v10185
      %v10247 = vunpack.c.l.b16 %v10186
      %v10248 = vunpack.c.l.b16 %v10187
      %v10249 = vunpack.c.l.b16 %v10188
      %v10250 = vunpack.c.l.b16 %v10189
      %v10251 = vpack.c.b16 %v10244, %v10243
      %v10252 = vpack.c.b16 %v10246, %v10245
      %v10253 = vpack.c.b16 %v10248, %v10247
      %v10254 = vpack.c.b16 %v10250, %v10249
      %v10260 = vsel %vm9302, %v10202, 0
      %v10263 = vsel %vm9302, %v10209, 0
      %v10266 = vsel %vm9302, %v10216, 0
      %v10269 = vsel %vm9302, %v10223, 0
      %v10272 = vsel %vm9302, %v10231, 0
      %v10275 = vsel %vm9302, %v10234, 0
      %10277 = vmatpush.bf16.msra.mxu0 0
      %10278 = vmatpush.bf16.msra.mxu0 0
      %10279 = vmatpush.bf16.msra.mxu0 0
      %10280 = vmatpush.bf16.msra.mxu0 0
      %10281 = vmatpush.bf16.msra.mxu0 %v10254
      %10282 = vmatpush.bf16.msra.mxu0 %v10253
      %10283 = vmatpush.bf16.msra.mxu0 %v10252
      %10284 = vmatpush.bf16.msra.mxu0 %v10251
      %10285 = vmatmul.bf16.gmra.mxu0 %v10260
      %v10286 = vpop.f32.mrf.mxu0
      %v10287 = vadd.f32 0.0, %v10286
      %v10288 = vpop.f32.mrf.mxu0
      %v10289 = vadd.f32 0.0, %v10288
      %10290 = vmatmul.bf16.gmra.mxu0 %v10263
      %v10291 = vpop.f32.mrf.mxu0
      %v10292 = vadd.f32 0.0, %v10291
      %v10293 = vpop.f32.mrf.mxu0
      %v10294 = vadd.f32 0.0, %v10293
      %10295 = vmatmul.bf16.gmra.mxu0 %v10266
      %v10296 = vpop.f32.mrf.mxu0
      %v10297 = vadd.f32 0.0, %v10296
      %v10298 = vpop.f32.mrf.mxu0
      %v10299 = vadd.f32 0.0, %v10298
      %10300 = vmatmul.bf16.gmra.mxu0 %v10269
      %v10301 = vpop.f32.mrf.mxu0
      %v10302 = vadd.f32 0.0, %v10301
      %v10303 = vpop.f32.mrf.mxu0
      %v10304 = vadd.f32 0.0, %v10303
      %10305 = vmatmul.bf16.gmra.mxu0 %v10272
      %v10306 = vpop.f32.mrf.mxu0
      %v10307 = vadd.f32 0.0, %v10306
      %v10308 = vpop.f32.mrf.mxu0
      %v10309 = vadd.f32 0.0, %v10308
      %10310 = vmatmul.bf16.gmra.mxu0 %v10275
      %v10311 = vpop.f32.mrf.mxu0
      %v10312 = vadd.f32 0.0, %v10311
      %v10313 = vpop.f32.mrf.mxu0
      %v10314 = vadd.f32 0.0, %v10313
      %10315 = vdwg.mxu0
      %v10316 = vadd.f32 %v10168, %v10287
      %v10317 = vadd.f32 %v10169, %v10289
      %v10318 = vadd.f32 %v10170, %v10292
      %v10319 = vadd.f32 %v10171, %v10294
      %v10320 = vadd.f32 %v10172, %v10297
      %v10321 = vadd.f32 %v10173, %v10299
      %v10322 = vadd.f32 %v10174, %v10302
      %v10323 = vadd.f32 %v10175, %v10304
      %v10324 = vadd.f32 %v10176, %v10307
      %v10325 = vadd.f32 %v10177, %v10309
      %v10326 = vadd.f32 %v10178, %v10312
      %v10327 = vadd.f32 %v10179, %v10314
      %v10328 = vld [vmem:[#allocation4 + $0xc] sm:$0xe]
      %s10329 = scalar_lea.vmem %s6, 256
      %v10330 = vld [vmem:[%s10329] sm:$0xf]
      %v10331 = vld [vmem:[%s10329 + $0x4] sm:$0xf]
      %v10332 = vld [vmem:[%s10329 + $0x8] sm:$0xf]
      %v10333 = vld [vmem:[%s10329 + $0xc] sm:$0xf]
      %v10334 = vld [vmem:[%s10329 + $0x10] sm:$0xf]
      %v10335 = vld [vmem:[%s10329 + $0x14] sm:$0xf]
      %v10336 = vld [vmem:[%s10329 + $0x18] sm:$0xf]
      %v10337 = vld [vmem:[%s10329 + $0x1c] sm:$0xf]
      %v10339 = vunpack.c.l.b16 %v10328
      %v10340 = vpack.c.b16 %v10070, %v10339
      %v10341 = vrot.slane %v10340, 1
      %v10342 = vrot.slane %v10082, 1
      %v10343 = vsel %vm1570, %v10341, %v10342
      %v10344 = vrot.slane %v10083, 1
      %v10345 = vsel %vm1570, %v10342, %v10344
      %v10346 = vrot.slane %v10084, 1
      %v10347 = vsel %vm1570, %v10344, %v10346
      %v10348 = vrot.slane %v10085, 1
      %v10349 = vsel %vm1570, %v10346, %v10348
      %v10350 = vrot.slane %v10192, 1
      %v10351 = vsel %vm1570, %v10348, %v10350
      %v10360 = vunpack.c.l.b16 %v10330
      %v10361 = vunpack.c.l.b16 %v10331
      %v10362 = vunpack.c.l.b16 %v10332
      %v10363 = vunpack.c.l.b16 %v10333
      %v10364 = vunpack.c.l.b16 %v10334
      %v10365 = vunpack.c.l.b16 %v10335
      %v10366 = vunpack.c.l.b16 %v10336
      %v10367 = vunpack.c.l.b16 %v10337
      %v10368 = vpack.c.b16 %v10361, %v10360
      %v10369 = vpack.c.b16 %v10363, %v10362
      %v10370 = vpack.c.b16 %v10365, %v10364
      %v10371 = vpack.c.b16 %v10367, %v10366
      %v10377 = vsel %vm9302, %v10343, 0
      %v10380 = vsel %vm9302, %v10345, 0
      %v10383 = vsel %vm9302, %v10347, 0
      %v10386 = vsel %vm9302, %v10349, 0
      %v10389 = vsel %vm9302, %v10351, 0
      %v10392 = vsel %vm9302, %v10350, 0
      %10394 = vmatpush.bf16.msra.mxu0 0
      %10395 = vmatpush.bf16.msra.mxu0 0
      %10396 = vmatpush.bf16.msra.mxu0 0
      %10397 = vmatpush.bf16.msra.mxu0 0
      %10398 = vmatpush.bf16.msra.mxu0 %v10371
      %10399 = vmatpush.bf16.msra.mxu0 %v10370
      %10400 = vmatpush.bf16.msra.mxu0 %v10369
      %10401 = vmatpush.bf16.msra.mxu0 %v10368
      %10402 = vmatmul.bf16.gmra.mxu0 %v10377
      %v10403 = vpop.f32.mrf.mxu0
      %v10404 = vadd.f32 0.0, %v10403
      %v10405 = vpop.f32.mrf.mxu0
      %v10406 = vadd.f32 0.0, %v10405
      %10407 = vmatmul.bf16.gmra.mxu0 %v10380
      %v10408 = vpop.f32.mrf.mxu0
      %v10409 = vadd.f32 0.0, %v10408
      %v10410 = vpop.f32.mrf.mxu0
      %v10411 = vadd.f32 0.0, %v10410
      %10412 = vmatmul.bf16.gmra.mxu0 %v10383
      %v10413 = vpop.f32.mrf.mxu0
      %v10414 = vadd.f32 0.0, %v10413
      %v10415 = vpop.f32.mrf.mxu0
      %v10416 = vadd.f32 0.0, %v10415
      %10417 = vmatmul.bf16.gmra.mxu0 %v10386
      %v10418 = vpop.f32.mrf.mxu0
      %v10419 = vadd.f32 0.0, %v10418
      %v10420 = vpop.f32.mrf.mxu0
      %v10421 = vadd.f32 0.0, %v10420
      %10422 = vmatmul.bf16.gmra.mxu0 %v10389
      %v10423 = vpop.f32.mrf.mxu0
      %v10424 = vadd.f32 0.0, %v10423
      %v10425 = vpop.f32.mrf.mxu0
      %v10426 = vadd.f32 0.0, %v10425
      %10427 = vmatmul.bf16.gmra.mxu0 %v10392
      %v10428 = vpop.f32.mrf.mxu0
      %v10429 = vadd.f32 0.0, %v10428
      %v10430 = vpop.f32.mrf.mxu0
      %v10431 = vadd.f32 0.0, %v10430
      %10432 = vdwg.mxu0
      %v10433 = vadd.f32 %v10316, %v10404
      %v10434 = vadd.f32 %v10317, %v10406
      %v10435 = vadd.f32 %v10318, %v10409
      %v10436 = vadd.f32 %v10319, %v10411
      %v10437 = vadd.f32 %v10320, %v10414
      %v10438 = vadd.f32 %v10321, %v10416
      %v10439 = vadd.f32 %v10322, %v10419
      %v10440 = vadd.f32 %v10323, %v10421
      %v10441 = vadd.f32 %v10324, %v10424
      %v10442 = vadd.f32 %v10325, %v10426
      %v10443 = vadd.f32 %v10326, %v10429
      %v10444 = vadd.f32 %v10327, %v10431
      %v10445 = vld [vmem:[%s7] sm:$0x1]
      %v10447 = vperm.slane %v10445, 0
      %v10449 = vadd.f32 %v10433, %v10447
      %v10450 = vadd.f32 %v10434, %v10447
      %v10451 = vadd.f32 %v10435, %v10447
      %v10452 = vadd.f32 %v10436, %v10447
      %v10453 = vadd.f32 %v10437, %v10447
      %v10454 = vadd.f32 %v10438, %v10447
      %v10455 = vadd.f32 %v10439, %v10447
      %v10456 = vadd.f32 %v10440, %v10447
      %v10457 = vadd.f32 %v10441, %v10447
      %v10458 = vadd.f32 %v10442, %v10447
      %v10459 = vadd.f32 %v10443, %v10447
      %v10460 = vadd.f32 %v10444, %v10447
      %v10461 = vmax.f32 %v10449, 0.0
      %v10462 = vmax.f32 %v10450, 0.0
      %v10463 = vmax.f32 %v10451, 0.0
      %v10464 = vmax.f32 %v10452, 0.0
      %v10465 = vmax.f32 %v10453, 0.0
      %v10466 = vmax.f32 %v10454, 0.0
      %v10467 = vmax.f32 %v10455, 0.0
      %v10468 = vmax.f32 %v10456, 0.0
      %v10469 = vmax.f32 %v10457, 0.0
      %v10470 = vmax.f32 %v10458, 0.0
      %v10471 = vmax.f32 %v10459, 0.0
      %v10472 = vmax.f32 %v10460, 0.0
      %10473 = vst.msk [vmem:[#allocation5] sm:$0xff] %vm9302, %v10461
      %10474 = vst.msk [vmem:[#allocation5 + $0x8] sm:$0xff] %vm9302, %v10462
      %10475 = vst.msk [vmem:[#allocation5 + $0x10] sm:$0xff] %vm9302, %v10463
      %10476 = vst.msk [vmem:[#allocation5 + $0x18] sm:$0xff] %vm9302, %v10464
      %10477 = vst.msk [vmem:[#allocation5 + $0x20] sm:$0xff] %vm9302, %v10465
      %10478 = vst.msk [vmem:[#allocation5 + $0x28] sm:$0xff] %vm9302, %v10466
      %10479 = vst.msk [vmem:[#allocation5 + $0x30] sm:$0xff] %vm9302, %v10467
      %10480 = vst.msk [vmem:[#allocation5 + $0x38] sm:$0xff] %vm9302, %v10468
      %10481 = vst.msk [vmem:[#allocation5 + $0x40] sm:$0xff] %vm9302, %v10469
      %10482 = vst.msk [vmem:[#allocation5 + $0x48] sm:$0xff] %vm9302, %v10470
      %10483 = vst.msk [vmem:[#allocation5 + $0x50] sm:$0xff] %vm9302, %v10471
      %10484 = vst.msk [vmem:[#allocation5 + $0x58] sm:$0xf] %vm9154, %v10472
      %v10485 = vld [vmem:[#allocation5] sm:$0xff]
      %v10486 = vld [vmem:[#allocation5 + $0x8] sm:$0xff]
      %v10487 = vld [vmem:[#allocation5 + $0x10] sm:$0xff]
      %v10488 = vld [vmem:[#allocation5 + $0x18] sm:$0xff]
      %v10489 = vld [vmem:[#allocation5 + $0x20] sm:$0xff]
      %v10490 = vld [vmem:[#allocation5 + $0x28] sm:$0xff]
      %v10491 = vld [vmem:[#allocation5 + $0x30] sm:$0xff]
      %v10492 = vld [vmem:[#allocation5 + $0x38] sm:$0xff]
      %v10493 = vld [vmem:[#allocation5 + $0x40] sm:$0xff]
      %v10494 = vld [vmem:[#allocation5 + $0x48] sm:$0x7f]
      %v10495 = vld [vmem:[#allocation5 + $0x1] sm:$0xff]
      %v10496 = vld [vmem:[#allocation5 + $0x9] sm:$0xff]
      %v10497 = vld [vmem:[#allocation5 + $0x11] sm:$0xff]
      %v10498 = vld [vmem:[#allocation5 + $0x19] sm:$0xff]
      %v10499 = vld [vmem:[#allocation5 + $0x21] sm:$0xff]
      %v10500 = vld [vmem:[#allocation5 + $0x29] sm:$0xff]
      %v10501 = vld [vmem:[#allocation5 + $0x31] sm:$0xff]
      %v10502 = vld [vmem:[#allocation5 + $0x39] sm:$0xff]
      %v10503 = vld [vmem:[#allocation5 + $0x41] sm:$0xff]
      %v10504 = vld [vmem:[#allocation5 + $0x49] sm:$0x7f]
      %v10505 = vmax.f32 %v10485, %v10495
      %v10506 = vmax.f32 %v10486, %v10496
      %v10507 = vmax.f32 %v10487, %v10497
      %v10508 = vmax.f32 %v10488, %v10498
      %v10509 = vmax.f32 %v10489, %v10499
      %v10510 = vmax.f32 %v10490, %v10500
      %v10511 = vmax.f32 %v10491, %v10501
      %v10512 = vmax.f32 %v10492, %v10502
      %v10513 = vmax.f32 %v10493, %v10503
      %v10514 = vmax.f32 %v10494, %v10504
      %v10515 = vld [vmem:[#allocation5 + $0xc] sm:$0xff]
      %v10516 = vld [vmem:[#allocation5 + $0x14] sm:$0xff]
      %v10517 = vld [vmem:[#allocation5 + $0x1c] sm:$0xff]
      %v10518 = vld [vmem:[#allocation5 + $0x24] sm:$0xff]
      %v10519 = vld [vmem:[#allocation5 + $0x2c] sm:$0xff]
      %v10520 = vld [vmem:[#allocation5 + $0x34] sm:$0xff]
      %v10521 = vld [vmem:[#allocation5 + $0x3c] sm:$0xff]
      %v10522 = vld [vmem:[#allocation5 + $0x44] sm:$0xff]
      %v10523 = vld [vmem:[#allocation5 + $0x4c] sm:$0xff]
      %v10524 = vld [vmem:[#allocation5 + $0x54] sm:$0x7f]
      %v10525 = vld [vmem:[#allocation5 + $0xd] sm:$0xff]
      %v10526 = vld [vmem:[#allocation5 + $0x15] sm:$0xff]
      %v10527 = vld [vmem:[#allocation5 + $0x1d] sm:$0xff]
      %v10528 = vld [vmem:[#allocation5 + $0x25] sm:$0xff]
      %v10529 = vld [vmem:[#allocation5 + $0x2d] sm:$0xff]
      %v10530 = vld [vmem:[#allocation5 + $0x35] sm:$0xff]
      %v10531 = vld [vmem:[#allocation5 + $0x3d] sm:$0xff]
      %v10532 = vld [vmem:[#allocation5 + $0x45] sm:$0xff]
      %v10533 = vld [vmem:[#allocation5 + $0x4d] sm:$0xff]
      %v10534 = vld [vmem:[#allocation5 + $0x55] sm:$0x7f]
      %v10535 = vmax.f32 %v10515, %v10525
      %v10536 = vmax.f32 %v10516, %v10526
      %v10537 = vmax.f32 %v10517, %v10527
      %v10538 = vmax.f32 %v10518, %v10528
      %v10539 = vmax.f32 %v10519, %v10529
      %v10540 = vmax.f32 %v10520, %v10530
      %v10541 = vmax.f32 %v10521, %v10531
      %v10542 = vmax.f32 %v10522, %v10532
      %v10543 = vmax.f32 %v10523, %v10533
      %v10544 = vmax.f32 %v10524, %v10534
      %v10545 = vmax.f32 %v10505, %v10535
      %v10546 = vmax.f32 %v10506, %v10536
      %v10547 = vmax.f32 %v10507, %v10537
      %v10548 = vmax.f32 %v10508, %v10538
      %v10549 = vmax.f32 %v10509, %v10539
      %v10550 = vmax.f32 %v10510, %v10540
      %v10551 = vmax.f32 %v10511, %v10541
      %v10552 = vmax.f32 %v10512, %v10542
      %v10553 = vmax.f32 %v10513, %v10543
      %v10554 = vmax.f32 %v10514, %v10544
      %v10555 = vld [vmem:[%s8] sm:$0xf]
      %v10556 = vld [vmem:[%s8 + $0x4] sm:$0xf]
      %v10557 = vpack.c.bf16 %v10546, %v10545
      %v10558 = vpack.c.bf16 %v10548, %v10547
      %v10559 = vpack.c.bf16 %v10550, %v10549
      %v10560 = vpack.c.bf16 %v10552, %v10551
      %v10561 = vpack.c.bf16 %v10554, %v10553
      %v10564 = vunpack.c.l.b16 %v10555
      %v10565 = vunpack.c.l.b16 %v10556
      %v10566 = vpack.c.b16 %v10565, %v10564
      %vm10567 = vcmask 646144
      %v10569 = vsel %vm10567, %v10566, 0
      %vm10571 = vcmask 1046528
      %vm10572 = vcmask 1047552
      %v10573 = vsel %vm10571, 4294967295, 65535
      %v10574 = vsel %vm10572, %v10573, 0
      %v10576 = vand.u32 %v10561, %v10574
      %10578 = vmatpush.bf16.msra.mxu0 0
      %10579 = vmatpush.bf16.msra.mxu0 0
      %10580 = vmatpush.bf16.msra.mxu0 0
      %10581 = vmatpush.bf16.msra.mxu0 %v10576
      %10582 = vmatpush.bf16.msra.mxu0 %v10560
      %10583 = vmatpush.bf16.msra.mxu0 %v10559
      %10584 = vmatpush.bf16.msra.mxu0 %v10558
      %10585 = vmatpush.bf16.msra.mxu0 %v10557
      %10586 = vmatmul.bf16.gmra.mxu0 %v10569
      %v10587 = vpop.f32.mrf.mxu0
      %v10588 = vadd.f32 0.0, %v10587
      %v10589 = vpop.f32.mrf.mxu0
      %v10590 = vadd.f32 0.0, %v10589
      %10591 = vdwg.mxu0
      %v10592 = vpack.c.bf16 %v10588, %v10588
      %v10593 = vpack.c.bf16 %v10590, %v10590
      %10594 = vst.msk [vmem:[%s332] sm:$0xf] %vm9154, %v10592
      %10595 = vst.msk [vmem:[%s332 + $0x4] sm:$0xf] %vm9154, %v10593
      %p10596 = scmp.lt.s32.totalorder %s20, 1
      %s10597 = scalar_select %p10596, %s20, 1
      %s10598 = smul.addr %s10597, 2
      %s10599 = smul.addr %s10598, 4
      %s10600 = scalar_lea.vmem %s9, %s10599
      // Predicated region
      $region57: #{net_forward.2} parent=55 // pred_check
        %p10601 = pneg %p232
      $region58: #{net_forward.2} parent=55 // pred_check_branch
        %10603 = sbr.rel (%p10601) target = $region60
      $region59: #{net_forward.2} parent=55 // pred_region
        _
      $region60: #{net_forward.2} parent=55 // pred_fallthru
        _
    $region56: #{net_forward.2} parent=5 // pred_fallthru
      _
    %p10604 = scmp.le.s32.totalorder 2, %s15
    // Predicated region
    $region61: #{net_forward.2} parent=5 // pred_check
      %p10605 = pneg %p10604
    $region62: #{net_forward.2} parent=5 // pred_check_branch
      %10607 = sbr.rel (%p10605) target = $region64
    $region63: #{net_forward.2} parent=5 // pred_region
      %s10608 = ssub.s32 %s15, 2
      // Predicated region
      $region65: #{net_forward.2} parent=63 // pred_check
        %p10609 = pneg %p238
      $region66: #{net_forward.2} parent=63 // pred_check_branch
        %10611 = sbr.rel (%p10609) target = $region68
      $region67: #{net_forward.2} parent=63 // pred_region
        %p10612 = scmp.lt.s32.totalorder %s21, 1
        %s10613 = scalar_select %p10612, %s21, 1
        %s10614 = smul.addr %s10613, 2
        %s10615 = smul.addr %s10614, 4
        %s10616 = scalar_lea.vmem %s9, %s10615
      $region68: #{net_forward.2} parent=63 // pred_fallthru
        _
    $region64: #{net_forward.2} parent=5 // pred_fallthru
      _
  $region6: #{net_forward.2} parent=0 // loop_footer
    %s19 = sadd.s32 1, %s15
  $region7: #{net_forward.2} parent=0 // loop_footer_branch
    %14 = sbr.rel target = $region3
  $region8: #{net_forward.2} parent=0 // loop_exit
    _

</llo_original>
